<compile_context>
chip_gen: v7x
topology: tpu7x:2x2x1
jax: 0.10.0
libtpu: 0.0.40
codegen_flags: <defaults>
</compile_context>

<pallas_src>
import functools

import jax
import jax.numpy as jnp
from jax.experimental import pallas as pl
from jax.experimental.pallas import tpu as pltpu

_EPS = 1e-5


# ---------------------------------------------------------------------------
# Fused Pallas kernels
# ---------------------------------------------------------------------------
def _conv_fused_kernel(*refs, apply_norm, apply_relu, apply_tanh, has_residual):
    """One grid step == one sample: full-K matmul + bias (+ instance-norm)
    (+ ReLU) (+ residual add) (+ tanh), all in VMEM."""
    if has_residual:
        a_ref, b_ref, bias_ref, res_ref, o_ref = refs
    else:
        a_ref, b_ref, bias_ref, o_ref = refs
        res_ref = None

    acc = jnp.dot(a_ref[...], b_ref[...], preferred_element_type=jnp.float32)
    acc = acc + bias_ref[...]
    if apply_norm:
        # Instance norm: stats over the sample's full spatial extent (rows),
        # per channel (lanes); biased variance, affine=False.
        mean = jnp.mean(acc, axis=0, keepdims=True)
        var = jnp.mean((acc - mean) ** 2, axis=0, keepdims=True)
        acc = (acc - mean) * jax.lax.rsqrt(var + _EPS)
    if apply_relu:
        acc = jnp.maximum(acc, 0.0)
    if has_residual:
        acc = acc + res_ref[...]
    if apply_tanh:
        acc = jnp.tanh(acc)
    o_ref[...] = acc.astype(o_ref.dtype)


def _deconv_fused_kernel(a_ref, b_ref, o_ref, *, hw, apply_relu):
    """Sub-pixel ConvTranspose2d(k=4, s=2, p=1); grid = (batch, phase).

    Each phase's stride-1 matmul writes its rows into the per-sample resident
    output block; the final phase applies instance-norm + ReLU over the full
    4*hw spatial extent in the epilogue."""
    p = pl.program_id(1)
    acc = jnp.dot(a_ref[...], b_ref[0], preferred_element_type=jnp.float32)
    start = pl.multiple_of(p * hw, hw)
    o_ref[pl.ds(start, hw), :] = acc

    @pl.when(p == pl.num_programs(1) - 1)
    def _():
        y = o_ref[...]                       # all 4 phases == full output plane
        mean = jnp.mean(y, axis=0, keepdims=True)
        var = jnp.mean((y - mean) ** 2, axis=0, keepdims=True)
        y = (y - mean) * jax.lax.rsqrt(var + _EPS)
        if apply_relu:
            y = jnp.maximum(y, 0.0)
        o_ref[...] = y


# ---------------------------------------------------------------------------
# Layer wrappers (im2col / depth-to-space are thin XLA glue around the kernels)
# ---------------------------------------------------------------------------
def _im2col_nhwc(x, kh, kw, stride, pad):
    """NHWC im2col; K ordered (ky, kx, Cin) to match the repacked weights."""
    # TODO(synk): for large images, fold patch extraction into the kernel's K
    # traversal instead of materializing the (kh*kw)x blow-up in HBM.
    N, H, W, C = x.shape
    xp = jnp.pad(x, ((0, 0), (pad, pad), (pad, pad), (0, 0)))
    Ho = (H + 2 * pad - kh) // stride + 1
    Wo = (W + 2 * pad - kw) // stride + 1
    cols = []
    for i in range(kh):
        for j in range(kw):
            cols.append(xp[:, i:i + stride * (Ho - 1) + 1:stride,
                           j:j + stride * (Wo - 1) + 1:stride, :])
    patches = jnp.concatenate(cols, axis=-1)          # [N, Ho, Wo, kh*kw*C]
    return patches, Ho, Wo


def conv2d_fused(x, wmat, bias_row, *, stride, pad, kh, kw,
                 apply_norm=False, apply_relu=False, apply_tanh=False,
                 residual=None):
    """NHWC Conv2d + fused epilogue.  x: [N,H,W,Cin] f32; wmat: [K,Cout] bf16."""
    N = x.shape[0]
    patches, Ho, Wo = _im2col_nhwc(x, kh, kw, stride, pad)
    Ms = Ho * Wo
    K = patches.shape[-1]
    Cout = wmat.shape[-1]
    # TODO(synk): for large spatial sizes use a two-pass (stats, then normalize)
    # spatially-tiled instance norm instead of whole-sample output blocks.
    assert Ms % 8 == 0, "per-sample spatial extent must be a multiple of 8"
    a = patches.reshape(N * Ms, K).astype(jnp.bfloat16)

    inputs = [a, wmat, bias_row]
    in_specs = [
        pl.BlockSpec((Ms, K), lambda b: (b, 0)),
        pl.BlockSpec((K, Cout), lambda b: (0, 0)),
        pl.BlockSpec((1, Cout), lambda b: (0, 0)),
    ]
    if residual is not None:
        inputs.append(residual.reshape(N * Ms, Cout))
        in_specs.append(pl.BlockSpec((Ms, Cout), lambda b: (b, 0)))

    out = pl.pallas_call(
        functools.partial(_conv_fused_kernel, apply_norm=apply_norm,
                          apply_relu=apply_relu, apply_tanh=apply_tanh,
                          has_residual=residual is not None),
        out_shape=jax.ShapeDtypeStruct((N * Ms, Cout), jnp.float32),
        grid_spec=pltpu.PrefetchScalarGridSpec(
            num_scalar_prefetch=0,
            grid=(N,),
            in_specs=in_specs,
            out_specs=pl.BlockSpec((Ms, Cout), lambda b: (b, 0)),
        ),
        compiler_params=pltpu.CompilerParams(
            dimension_semantics=("parallel",)),
    )(*inputs)
    return out.reshape(N, Ho, Wo, Cout)


def conv_transpose2d_fused(x, wstack, *, apply_relu=True):
    """ConvTranspose2d(Cin, Cout, k=4, s=2, p=1, bias=False) in NHWC via
    sub-pixel decomposition (4 phase matmuls, K=4*Cin), fused norm + ReLU."""
    N, H, W, C = x.shape
    Cout = wstack.shape[-1]
    hw = H * W
    assert hw % 8 == 0

    xp = jnp.pad(x, ((0, 0), (1, 1), (1, 1), (0, 0)))
    # 2x2 patches at every start (H+1)x(W+1); K ordered (r, c, ci).
    cols = []
    for r in range(2):
        for c in range(2):
            cols.append(xp[:, r:r + H + 1, c:c + W + 1, :])
    p2 = jnp.concatenate(cols, axis=-1)                 # [N, H+1, W+1, 4C]
    phases = []
    for dy in range(2):
        for dx in range(2):
            phases.append(p2[:, dy:dy + H, dx:dx + W, :])
    a = jnp.stack(phases, axis=1).reshape(N * 4 * hw, 4 * C).astype(jnp.bfloat16)

    out = pl.pallas_call(
        functools.partial(_deconv_fused_kernel, hw=hw, apply_relu=apply_relu),
        out_shape=jax.ShapeDtypeStruct((N * 4 * hw, Cout), jnp.float32),
        grid_spec=pltpu.PrefetchScalarGridSpec(
            num_scalar_prefetch=0,
            grid=(N, 4),
            in_specs=[
                pl.BlockSpec((hw, 4 * C), lambda b, p: (b * 4 + p, 0)),
                pl.BlockSpec((1, 4 * C, Cout), lambda b, p: (p, 0, 0)),
            ],
            out_specs=pl.BlockSpec((4 * hw, Cout), lambda b, p: (b, 0)),
        ),
        compiler_params=pltpu.CompilerParams(
            dimension_semantics=("parallel", "arbitrary")),
    )(a, wstack)

    # rows ordered (n, dy, dx, u, v)  ->  depth-to-space  ->  [N, 2H, 2W, Cout]
    out = out.reshape(N, 2, 2, H, W, Cout)
    return out.transpose(0, 3, 1, 4, 2, 5).reshape(N, 2 * H, 2 * W, Cout)


# ---------------------------------------------------------------------------
# Parameters (PyTorch layout) + one-time repacking for the kernels
# ---------------------------------------------------------------------------
def _init_w(key, shape):
    fan_in = shape[1] * shape[2] * shape[3]
    bound = 1.0 / jnp.sqrt(jnp.float32(fan_in))
    return jax.random.uniform(key, shape, jnp.float32, -bound, bound)


def init_generator_params(key):
    """Weights in PyTorch layout: Conv [Cout,Cin,kh,kw], ConvT [Cin,Cout,kh,kw]."""
    keys = jax.random.split(key, 64)
    ki = iter(range(64))
    p = {
        "conv1": _init_w(keys[next(ki)], (32, 3, 7, 7)),
        "conv2": _init_w(keys[next(ki)], (64, 32, 3, 3)),
        "conv3": _init_w(keys[next(ki)], (128, 64, 3, 3)),
        "dconv1": _init_w(keys[next(ki)], (128, 64, 4, 4)),
        "dconv2": _init_w(keys[next(ki)], (64, 32, 4, 4)),
        "conv4_w": _init_w(keys[next(ki)], (3, 32, 7, 7)),
        "conv4_b": jax.random.uniform(keys[next(ki)], (3,), jnp.float32, -0.1, 0.1),
    }
    for r in range(1, 10):
        p[f"res{r}"] = {
            "conv1_w": _init_w(keys[next(ki)], (128, 128, 3, 3)),
            "conv2_w": _init_w(keys[next(ki)], (128, 128, 3, 3)),
            "conv2_b": jax.random.uniform(keys[next(ki)], (128,),
                                          jnp.float32, -0.03, 0.03),
        }
    return p


def preprocess_params(p):
    """One-time conversion to matmul-ready bf16 weight matrices / f32 bias rows."""
    def conv_wmat(w):                        # [Cout,Cin,kh,kw] -> [kh*kw*Cin,Cout]
        cout = w.shape[0]
        return w.transpose(2, 3, 1, 0).reshape(-1, cout).astype(jnp.bfloat16)

    def bias_row(b, cout):
        if b is None:
            return jnp.zeros((1, cout), jnp.float32)
        return jnp.asarray(b, jnp.float32).reshape(1, cout)

    def deconv_wstack(w):                    # [Cin,Cout,4,4] -> [4, 4*Cin, Cout]
        cin, cout = w.shape[0], w.shape[1]
        mats = []
        for dy in range(2):
            for dx in range(2):
                # effective 2x2 kernel of output phase (dy, dx)
                w_eff = w[:, :, 3 - dy::-2, 3 - dx::-2]       # [Cin,Cout,2,2]
                mats.append(w_eff.transpose(2, 3, 0, 1).reshape(4 * cin, cout))
        return jnp.stack(mats, axis=0).astype(jnp.bfloat16)

    q = {
        "conv1_w": conv_wmat(p["conv1"]), "conv1_b": bias_row(None, 32),
        "conv2_w": conv_wmat(p["conv2"]), "conv2_b": bias_row(None, 64),
        "conv3_w": conv_wmat(p["conv3"]), "conv3_b": bias_row(None, 128),
        "dconv1_w": deconv_wstack(p["dconv1"]),
        "dconv2_w": deconv_wstack(p["dconv2"]),
        "conv4_w": conv_wmat(p["conv4_w"]), "conv4_b": bias_row(p["conv4_b"], 3),
    }
    for r in range(1, 10):
        rp = p[f"res{r}"]
        q[f"res{r}"] = {
            "w1": conv_wmat(rp["conv1_w"]), "b1": bias_row(None, 128),
            "w2": conv_wmat(rp["conv2_w"]), "b2": bias_row(rp["conv2_b"], 128),
        }
    return q


# ---------------------------------------------------------------------------
# Generator forward
# ---------------------------------------------------------------------------
def res_block(rp, x):
    y = conv2d_fused(x, rp["w1"], rp["b1"], stride=1, pad=1, kh=3, kw=3,
                     apply_norm=True, apply_relu=True)
    return conv2d_fused(y, rp["w2"], rp["b2"], stride=1, pad=1, kh=3, kw=3,
                        apply_norm=True, apply_relu=False, residual=x)


@jax.jit
def generator_forward(prep, x_nchw):
    x = x_nchw.transpose(0, 2, 3, 1)                    # NCHW -> NHWC
    x = conv2d_fused(x, prep["conv1_w"], prep["conv1_b"], stride=1, pad=3,
                     kh=7, kw=7, apply_norm=True, apply_relu=True)
    x = conv2d_fused(x, prep["conv2_w"], prep["conv2_b"], stride=2, pad=1,
                     kh=3, kw=3, apply_norm=True, apply_relu=True)
    x = conv2d_fused(x, prep["conv3_w"], prep["conv3_b"], stride=2, pad=1,
                     kh=3, kw=3, apply_norm=True, apply_relu=True)
    for r in range(1, 10):
        x = res_block(prep[f"res{r}"], x)
    x = conv_transpose2d_fused(x, prep["dconv1_w"], apply_relu=True)
    x = conv_transpose2d_fused(x, prep["dconv2_w"], apply_relu=True)
    x = conv2d_fused(x, prep["conv4_w"], prep["conv4_b"], stride=1, pad=3,
                     kh=7, kw=7, apply_tanh=True)
    return x.transpose(0, 3, 1, 2)                      # NHWC -> NCHW


if __name__ == "__main__":
    key = jax.random.PRNGKey(0)
    pkey, xkey = jax.random.split(key)
    params = init_generator_params(pkey)
    prep = preprocess_params(params)          # one-time weight repacking (bf16)
    x = jax.random.normal(xkey, (2, 3, 16, 16), jnp.float32)  # NCHW input

    out = generator_forward(prep, x)
    out = jax.block_until_ready(out)
    assert out.shape == (2, 3, 16, 16), out.shape
    assert bool(jnp.all(jnp.isfinite(out)))
    print("KERNEL_OK")
</pallas_src>

<mosaic_0001>
module attributes {stable_mosaic.version = 11 : i64} {
  func.func @_conv_fused_kernel(%arg0: i32, %arg1: memref<256x147xbf16, #tpu.memory_space<vmem>>, %arg2: memref<147x32xbf16, #tpu.memory_space<vmem>>, %arg3: memref<1x32xf32, #tpu.memory_space<vmem>>, %arg4: memref<256x32xf32, #tpu.memory_space<vmem>>) attributes {dimension_semantics = [#tpu.dimension_semantics<parallel>], iteration_bounds = array<i64: 2>, scalar_prefetch = 0 : i64, scratch_operands = 0 : i64, tpu.core_type = #tpu.core_type<tc>, window_params = [{transform_indices = @transform_0, window_bounds = array<i64: 256, 147>}, {pipeline_mode = #tpu.pipeline_mode<synchronous>, transform_indices = @transform_1, window_bounds = array<i64: 147, 32>}, {pipeline_mode = #tpu.pipeline_mode<synchronous>, transform_indices = @transform_2, window_bounds = array<i64: 1, 32>}, {transform_indices = @transform_3, window_bounds = array<i64: 256, 32>}]} {
    %c0 = arith.constant 0 : index
    %c0_0 = arith.constant 0 : index
    %0 = vector.load %arg1[%c0, %c0_0] : memref<256x147xbf16, #tpu.memory_space<vmem>>, vector<256x147xbf16>
    %c0_1 = arith.constant 0 : index
    %c0_2 = arith.constant 0 : index
    %1 = vector.load %arg2[%c0_1, %c0_2] : memref<147x32xbf16, #tpu.memory_space<vmem>>, vector<147x32xbf16>
    %cst = arith.constant dense<0.000000e+00> : vector<256x32xf32>
    %2 = tpu.matmul %0, %1, %cst {dimension_numbers = #tpu.dot_dimension_numbers<[1], [0], [0], [1], [0, 0, 1, 1], [], []>} : vector<256x147xbf16>, vector<147x32xbf16>, vector<256x32xf32> -> vector<256x32xf32>
    %c0_3 = arith.constant 0 : index
    %c0_4 = arith.constant 0 : index
    %3 = vector.load %arg3[%c0_3, %c0_4] : memref<1x32xf32, #tpu.memory_space<vmem>>, vector<1x32xf32>
    %4 = vector.broadcast %3 : vector<1x32xf32> to vector<256x32xf32>
    %5 = arith.addf %2, %4 : vector<256x32xf32>
    %cst_5 = arith.constant dense<0.000000e+00> : vector<32xf32>
    %6 = vector.multi_reduction <add>, %5, %cst_5 [0] : vector<256x32xf32> to vector<32xf32>
    %7 = vector.shape_cast %6 : vector<32xf32> to vector<1x32xf32>
    %cst_6 = arith.constant 2.560000e+02 : f32
    %8 = vector.broadcast %cst_6 : f32 to vector<1x32xf32>
    %9 = arith.divf %7, %8 : vector<1x32xf32>
    %10 = vector.broadcast %9 : vector<1x32xf32> to vector<256x32xf32>
    %11 = arith.subf %5, %10 : vector<256x32xf32>
    %12 = arith.mulf %11, %11 : vector<256x32xf32>
    %cst_7 = arith.constant dense<0.000000e+00> : vector<32xf32>
    %13 = vector.multi_reduction <add>, %12, %cst_7 [0] : vector<256x32xf32> to vector<32xf32>
    %14 = vector.shape_cast %13 : vector<32xf32> to vector<1x32xf32>
    %cst_8 = arith.constant 2.560000e+02 : f32
    %15 = vector.broadcast %cst_8 : f32 to vector<1x32xf32>
    %16 = arith.divf %14, %15 : vector<1x32xf32>
    %17 = vector.broadcast %9 : vector<1x32xf32> to vector<256x32xf32>
    %18 = arith.subf %5, %17 : vector<256x32xf32>
    %cst_9 = arith.constant 9.99999974E-6 : f32
    %19 = vector.broadcast %cst_9 : f32 to vector<1x32xf32>
    %20 = arith.addf %16, %19 : vector<1x32xf32>
    %21 = math.rsqrt %20 : vector<1x32xf32>
    %22 = vector.broadcast %21 : vector<1x32xf32> to vector<256x32xf32>
    %23 = arith.mulf %18, %22 : vector<256x32xf32>
    %cst_10 = arith.constant 0.000000e+00 : f32
    %24 = vector.broadcast %cst_10 : f32 to vector<256x32xf32>
    %25 = arith.maximumf %23, %24 : vector<256x32xf32>
    %c0_11 = arith.constant 0 : index
    %c0_12 = arith.constant 0 : index
    %26 = vector.load %arg4[%c0_11, %c0_12] : memref<256x32xf32, #tpu.memory_space<vmem>>, vector<256x32xf32>
    tpu.vector_store %arg4[%c0_11, %c0_12], %25 {strides = array<i32>} : memref<256x32xf32, #tpu.memory_space<vmem>>, vector<256x32xf32>,
    return
  }
  func.func @transform_0(%arg0: i32) -> (i32, i32) {
    %c0_i32 = arith.constant 0 : i32
    %c0_i32_0 = arith.constant 0 : i32
    return %arg0, %c0_i32 : i32, i32
  }
  func.func @transform_1(%arg0: i32) -> (i32, i32) {
    %c0_i32 = arith.constant 0 : i32
    %c0_i32_0 = arith.constant 0 : i32
    %c0_i32_1 = arith.constant 0 : i32
    return %c0_i32, %c0_i32_0 : i32, i32
  }
  func.func @transform_2(%arg0: i32) -> (i32, i32) {
    %c0_i32 = arith.constant 0 : i32
    %c0_i32_0 = arith.constant 0 : i32
    %c0_i32_1 = arith.constant 0 : i32
    return %c0_i32, %c0_i32_0 : i32, i32
  }
  func.func @transform_3(%arg0: i32) -> (i32, i32) {
    %c0_i32 = arith.constant 0 : i32
    %c0_i32_0 = arith.constant 0 : i32
    return %arg0, %c0_i32 : i32, i32
  }
}

module attributes {stable_mosaic.version = 11 : i64} {
  func.func @_conv_fused_kernel(%arg0: i32, %arg1: memref<64x288xbf16, #tpu.memory_space<vmem>>, %arg2: memref<288x64xbf16, #tpu.memory_space<vmem>>, %arg3: memref<1x64xf32, #tpu.memory_space<vmem>>, %arg4: memref<64x64xf32, #tpu.memory_space<vmem>>) attributes {dimension_semantics = [#tpu.dimension_semantics<parallel>], iteration_bounds = array<i64: 2>, scalar_prefetch = 0 : i64, scratch_operands = 0 : i64, tpu.core_type = #tpu.core_type<tc>, window_params = [{transform_indices = @transform_0, window_bounds = array<i64: 64, 288>}, {pipeline_mode = #tpu.pipeline_mode<synchronous>, transform_indices = @transform_1, window_bounds = array<i64: 288, 64>}, {pipeline_mode = #tpu.pipeline_mode<synchronous>, transform_indices = @transform_2, window_bounds = array<i64: 1, 64>}, {transform_indices = @transform_3, window_bounds = array<i64: 64, 64>}]} {
    %c0 = arith.constant 0 : index
    %c0_0 = arith.constant 0 : index
    %0 = vector.load %arg1[%c0, %c0_0] : memref<64x288xbf16, #tpu.memory_space<vmem>>, vector<64x288xbf16>
    %c0_1 = arith.constant 0 : index
    %c0_2 = arith.constant 0 : index
    %1 = vector.load %arg2[%c0_1, %c0_2] : memref<288x64xbf16, #tpu.memory_space<vmem>>, vector<288x64xbf16>
    %cst = arith.constant dense<0.000000e+00> : vector<64x64xf32>
    %2 = tpu.matmul %0, %1, %cst {dimension_numbers = #tpu.dot_dimension_numbers<[1], [0], [0], [1], [0, 0, 1, 1], [], []>} : vector<64x288xbf16>, vector<288x64xbf16>, vector<64x64xf32> -> vector<64x64xf32>
    %c0_3 = arith.constant 0 : index
    %c0_4 = arith.constant 0 : index
    %3 = vector.load %arg3[%c0_3, %c0_4] : memref<1x64xf32, #tpu.memory_space<vmem>>, vector<1x64xf32>
    %4 = vector.broadcast %3 : vector<1x64xf32> to vector<64x64xf32>
    %5 = arith.addf %2, %4 : vector<64x64xf32>
    %cst_5 = arith.constant dense<0.000000e+00> : vector<64xf32>
    %6 = vector.multi_reduction <add>, %5, %cst_5 [0] : vector<64x64xf32> to vector<64xf32>
    %7 = vector.shape_cast %6 : vector<64xf32> to vector<1x64xf32>
    %cst_6 = arith.constant 6.400000e+01 : f32
    %8 = vector.broadcast %cst_6 : f32 to vector<1x64xf32>
    %9 = arith.divf %7, %8 : vector<1x64xf32>
    %10 = vector.broadcast %9 : vector<1x64xf32> to vector<64x64xf32>
    %11 = arith.subf %5, %10 : vector<64x64xf32>
    %12 = arith.mulf %11, %11 : vector<64x64xf32>
    %cst_7 = arith.constant dense<0.000000e+00> : vector<64xf32>
    %13 = vector.multi_reduction <add>, %12, %cst_7 [0] : vector<64x64xf32> to vector<64xf32>
    %14 = vector.shape_cast %13 : vector<64xf32> to vector<1x64xf32>
    %cst_8 = arith.constant 6.400000e+01 : f32
    %15 = vector.broadcast %cst_8 : f32 to vector<1x64xf32>
    %16 = arith.divf %14, %15 : vector<1x64xf32>
    %17 = vector.broadcast %9 : vector<1x64xf32> to vector<64x64xf32>
    %18 = arith.subf %5, %17 : vector<64x64xf32>
    %cst_9 = arith.constant 9.99999974E-6 : f32
    %19 = vector.broadcast %cst_9 : f32 to vector<1x64xf32>
    %20 = arith.addf %16, %19 : vector<1x64xf32>
    %21 = math.rsqrt %20 : vector<1x64xf32>
    %22 = vector.broadcast %21 : vector<1x64xf32> to vector<64x64xf32>
    %23 = arith.mulf %18, %22 : vector<64x64xf32>
    %cst_10 = arith.constant 0.000000e+00 : f32
    %24 = vector.broadcast %cst_10 : f32 to vector<64x64xf32>
    %25 = arith.maximumf %23, %24 : vector<64x64xf32>
    %c0_11 = arith.constant 0 : index
    %c0_12 = arith.constant 0 : index
    %26 = vector.load %arg4[%c0_11, %c0_12] : memref<64x64xf32, #tpu.memory_space<vmem>>, vector<64x64xf32>
    tpu.vector_store %arg4[%c0_11, %c0_12], %25 {strides = array<i32>} : memref<64x64xf32, #tpu.memory_space<vmem>>, vector<64x64xf32>,
    return
  }
  func.func @transform_0(%arg0: i32) -> (i32, i32) {
    %c0_i32 = arith.constant 0 : i32
    %c0_i32_0 = arith.constant 0 : i32
    return %arg0, %c0_i32 : i32, i32
  }
  func.func @transform_1(%arg0: i32) -> (i32, i32) {
    %c0_i32 = arith.constant 0 : i32
    %c0_i32_0 = arith.constant 0 : i32
    %c0_i32_1 = arith.constant 0 : i32
    return %c0_i32, %c0_i32_0 : i32, i32
  }
  func.func @transform_2(%arg0: i32) -> (i32, i32) {
    %c0_i32 = arith.constant 0 : i32
    %c0_i32_0 = arith.constant 0 : i32
    %c0_i32_1 = arith.constant 0 : i32
    return %c0_i32, %c0_i32_0 : i32, i32
  }
  func.func @transform_3(%arg0: i32) -> (i32, i32) {
    %c0_i32 = arith.constant 0 : i32
    %c0_i32_0 = arith.constant 0 : i32
    return %arg0, %c0_i32 : i32, i32
  }
}

module attributes {stable_mosaic.version = 11 : i64} {
  func.func @_conv_fused_kernel(%arg0: i32, %arg1: memref<16x576xbf16, #tpu.memory_space<vmem>>, %arg2: memref<576x128xbf16, #tpu.memory_space<vmem>>, %arg3: memref<1x128xf32, #tpu.memory_space<vmem>>, %arg4: memref<16x128xf32, #tpu.memory_space<vmem>>) attributes {dimension_semantics = [#tpu.dimension_semantics<parallel>], iteration_bounds = array<i64: 2>, scalar_prefetch = 0 : i64, scratch_operands = 0 : i64, tpu.core_type = #tpu.core_type<tc>, window_params = [{transform_indices = @transform_0, window_bounds = array<i64: 16, 576>}, {pipeline_mode = #tpu.pipeline_mode<synchronous>, transform_indices = @transform_1, window_bounds = array<i64: 576, 128>}, {pipeline_mode = #tpu.pipeline_mode<synchronous>, transform_indices = @transform_2, window_bounds = array<i64: 1, 128>}, {transform_indices = @transform_3, window_bounds = array<i64: 16, 128>}]} {
    %c0 = arith.constant 0 : index
    %c0_0 = arith.constant 0 : index
    %0 = vector.load %arg1[%c0, %c0_0] : memref<16x576xbf16, #tpu.memory_space<vmem>>, vector<16x576xbf16>
    %c0_1 = arith.constant 0 : index
    %c0_2 = arith.constant 0 : index
    %1 = vector.load %arg2[%c0_1, %c0_2] : memref<576x128xbf16, #tpu.memory_space<vmem>>, vector<576x128xbf16>
    %cst = arith.constant dense<0.000000e+00> : vector<16x128xf32>
    %2 = tpu.matmul %0, %1, %cst {dimension_numbers = #tpu.dot_dimension_numbers<[1], [0], [0], [1], [0, 0, 1, 1], [], []>} : vector<16x576xbf16>, vector<576x128xbf16>, vector<16x128xf32> -> vector<16x128xf32>
    %c0_3 = arith.constant 0 : index
    %c0_4 = arith.constant 0 : index
    %3 = vector.load %arg3[%c0_3, %c0_4] : memref<1x128xf32, #tpu.memory_space<vmem>>, vector<1x128xf32>
    %4 = vector.broadcast %3 : vector<1x128xf32> to vector<16x128xf32>
    %5 = arith.addf %2, %4 : vector<16x128xf32>
    %cst_5 = arith.constant dense<0.000000e+00> : vector<128xf32>
    %6 = vector.multi_reduction <add>, %5, %cst_5 [0] : vector<16x128xf32> to vector<128xf32>
    %7 = vector.shape_cast %6 : vector<128xf32> to vector<1x128xf32>
    %cst_6 = arith.constant 1.600000e+01 : f32
    %8 = vector.broadcast %cst_6 : f32 to vector<1x128xf32>
    %9 = arith.divf %7, %8 : vector<1x128xf32>
    %10 = vector.broadcast %9 : vector<1x128xf32> to vector<16x128xf32>
    %11 = arith.subf %5, %10 : vector<16x128xf32>
    %12 = arith.mulf %11, %11 : vector<16x128xf32>
    %cst_7 = arith.constant dense<0.000000e+00> : vector<128xf32>
    %13 = vector.multi_reduction <add>, %12, %cst_7 [0] : vector<16x128xf32> to vector<128xf32>
    %14 = vector.shape_cast %13 : vector<128xf32> to vector<1x128xf32>
    %cst_8 = arith.constant 1.600000e+01 : f32
    %15 = vector.broadcast %cst_8 : f32 to vector<1x128xf32>
    %16 = arith.divf %14, %15 : vector<1x128xf32>
    %17 = vector.broadcast %9 : vector<1x128xf32> to vector<16x128xf32>
    %18 = arith.subf %5, %17 : vector<16x128xf32>
    %cst_9 = arith.constant 9.99999974E-6 : f32
    %19 = vector.broadcast %cst_9 : f32 to vector<1x128xf32>
    %20 = arith.addf %16, %19 : vector<1x128xf32>
    %21 = math.rsqrt %20 : vector<1x128xf32>
    %22 = vector.broadcast %21 : vector<1x128xf32> to vector<16x128xf32>
    %23 = arith.mulf %18, %22 : vector<16x128xf32>
    %cst_10 = arith.constant 0.000000e+00 : f32
    %24 = vector.broadcast %cst_10 : f32 to vector<16x128xf32>
    %25 = arith.maximumf %23, %24 : vector<16x128xf32>
    %c0_11 = arith.constant 0 : index
    %c0_12 = arith.constant 0 : index
    %26 = vector.load %arg4[%c0_11, %c0_12] : memref<16x128xf32, #tpu.memory_space<vmem>>, vector<16x128xf32>
    tpu.vector_store %arg4[%c0_11, %c0_12], %25 {strides = array<i32>} : memref<16x128xf32, #tpu.memory_space<vmem>>, vector<16x128xf32>,
    return
  }
  func.func @transform_0(%arg0: i32) -> (i32, i32) {
    %c0_i32 = arith.constant 0 : i32
    %c0_i32_0 = arith.constant 0 : i32
    return %arg0, %c0_i32 : i32, i32
  }
  func.func @transform_1(%arg0: i32) -> (i32, i32) {
    %c0_i32 = arith.constant 0 : i32
    %c0_i32_0 = arith.constant 0 : i32
    %c0_i32_1 = arith.constant 0 : i32
    return %c0_i32, %c0_i32_0 : i32, i32
  }
  func.func @transform_2(%arg0: i32) -> (i32, i32) {
    %c0_i32 = arith.constant 0 : i32
    %c0_i32_0 = arith.constant 0 : i32
    %c0_i32_1 = arith.constant 0 : i32
    return %c0_i32, %c0_i32_0 : i32, i32
  }
  func.func @transform_3(%arg0: i32) -> (i32, i32) {
    %c0_i32 = arith.constant 0 : i32
    %c0_i32_0 = arith.constant 0 : i32
    return %arg0, %c0_i32 : i32, i32
  }
}

module attributes {stable_mosaic.version = 11 : i64} {
  func.func @_conv_fused_kernel(%arg0: i32, %arg1: memref<16x1152xbf16, #tpu.memory_space<vmem>>, %arg2: memref<1152x128xbf16, #tpu.memory_space<vmem>>, %arg3: memref<1x128xf32, #tpu.memory_space<vmem>>, %arg4: memref<16x128xf32, #tpu.memory_space<vmem>>) attributes {dimension_semantics = [#tpu.dimension_semantics<parallel>], iteration_bounds = array<i64: 2>, scalar_prefetch = 0 : i64, scratch_operands = 0 : i64, tpu.core_type = #tpu.core_type<tc>, window_params = [{transform_indices = @transform_0, window_bounds = array<i64: 16, 1152>}, {pipeline_mode = #tpu.pipeline_mode<synchronous>, transform_indices = @transform_1, window_bounds = array<i64: 1152, 128>}, {pipeline_mode = #tpu.pipeline_mode<synchronous>, transform_indices = @transform_2, window_bounds = array<i64: 1, 128>}, {transform_indices = @transform_3, window_bounds = array<i64: 16, 128>}]} {
    %c0 = arith.constant 0 : index
    %c0_0 = arith.constant 0 : index
    %0 = vector.load %arg1[%c0, %c0_0] : memref<16x1152xbf16, #tpu.memory_space<vmem>>, vector<16x1152xbf16>
    %c0_1 = arith.constant 0 : index
    %c0_2 = arith.constant 0 : index
    %1 = vector.load %arg2[%c0_1, %c0_2] : memref<1152x128xbf16, #tpu.memory_space<vmem>>, vector<1152x128xbf16>
    %cst = arith.constant dense<0.000000e+00> : vector<16x128xf32>
    %2 = tpu.matmul %0, %1, %cst {dimension_numbers = #tpu.dot_dimension_numbers<[1], [0], [0], [1], [0, 0, 1, 1], [], []>} : vector<16x1152xbf16>, vector<1152x128xbf16>, vector<16x128xf32> -> vector<16x128xf32>
    %c0_3 = arith.constant 0 : index
    %c0_4 = arith.constant 0 : index
    %3 = vector.load %arg3[%c0_3, %c0_4] : memref<1x128xf32, #tpu.memory_space<vmem>>, vector<1x128xf32>
    %4 = vector.broadcast %3 : vector<1x128xf32> to vector<16x128xf32>
    %5 = arith.addf %2, %4 : vector<16x128xf32>
    %cst_5 = arith.constant dense<0.000000e+00> : vector<128xf32>
    %6 = vector.multi_reduction <add>, %5, %cst_5 [0] : vector<16x128xf32> to vector<128xf32>
    %7 = vector.shape_cast %6 : vector<128xf32> to vector<1x128xf32>
    %cst_6 = arith.constant 1.600000e+01 : f32
    %8 = vector.broadcast %cst_6 : f32 to vector<1x128xf32>
    %9 = arith.divf %7, %8 : vector<1x128xf32>
    %10 = vector.broadcast %9 : vector<1x128xf32> to vector<16x128xf32>
    %11 = arith.subf %5, %10 : vector<16x128xf32>
    %12 = arith.mulf %11, %11 : vector<16x128xf32>
    %cst_7 = arith.constant dense<0.000000e+00> : vector<128xf32>
    %13 = vector.multi_reduction <add>, %12, %cst_7 [0] : vector<16x128xf32> to vector<128xf32>
    %14 = vector.shape_cast %13 : vector<128xf32> to vector<1x128xf32>
    %cst_8 = arith.constant 1.600000e+01 : f32
    %15 = vector.broadcast %cst_8 : f32 to vector<1x128xf32>
    %16 = arith.divf %14, %15 : vector<1x128xf32>
    %17 = vector.broadcast %9 : vector<1x128xf32> to vector<16x128xf32>
    %18 = arith.subf %5, %17 : vector<16x128xf32>
    %cst_9 = arith.constant 9.99999974E-6 : f32
    %19 = vector.broadcast %cst_9 : f32 to vector<1x128xf32>
    %20 = arith.addf %16, %19 : vector<1x128xf32>
    %21 = math.rsqrt %20 : vector<1x128xf32>
    %22 = vector.broadcast %21 : vector<1x128xf32> to vector<16x128xf32>
    %23 = arith.mulf %18, %22 : vector<16x128xf32>
    %cst_10 = arith.constant 0.000000e+00 : f32
    %24 = vector.broadcast %cst_10 : f32 to vector<16x128xf32>
    %25 = arith.maximumf %23, %24 : vector<16x128xf32>
    %c0_11 = arith.constant 0 : index
    %c0_12 = arith.constant 0 : index
    %26 = vector.load %arg4[%c0_11, %c0_12] : memref<16x128xf32, #tpu.memory_space<vmem>>, vector<16x128xf32>
    tpu.vector_store %arg4[%c0_11, %c0_12], %25 {strides = array<i32>} : memref<16x128xf32, #tpu.memory_space<vmem>>, vector<16x128xf32>,
    return
  }
  func.func @transform_0(%arg0: i32) -> (i32, i32) {
    %c0_i32 = arith.constant 0 : i32
    %c0_i32_0 = arith.constant 0 : i32
    return %arg0, %c0_i32 : i32, i32
  }
  func.func @transform_1(%arg0: i32) -> (i32, i32) {
    %c0_i32 = arith.constant 0 : i32
    %c0_i32_0 = arith.constant 0 : i32
    %c0_i32_1 = arith.constant 0 : i32
    return %c0_i32, %c0_i32_0 : i32, i32
  }
  func.func @transform_2(%arg0: i32) -> (i32, i32) {
    %c0_i32 = arith.constant 0 : i32
    %c0_i32_0 = arith.constant 0 : i32
    %c0_i32_1 = arith.constant 0 : i32
    return %c0_i32, %c0_i32_0 : i32, i32
  }
  func.func @transform_3(%arg0: i32) -> (i32, i32) {
    %c0_i32 = arith.constant 0 : i32
    %c0_i32_0 = arith.constant 0 : i32
    return %arg0, %c0_i32 : i32, i32
  }
}

module attributes {stable_mosaic.version = 11 : i64} {
  func.func @_conv_fused_kernel(%arg0: i32, %arg1: memref<16x1152xbf16, #tpu.memory_space<vmem>>, %arg2: memref<1152x128xbf16, #tpu.memory_space<vmem>>, %arg3: memref<1x128xf32, #tpu.memory_space<vmem>>, %arg4: memref<16x128xf32, #tpu.memory_space<vmem>>, %arg5: memref<16x128xf32, #tpu.memory_space<vmem>>) attributes {dimension_semantics = [#tpu.dimension_semantics<parallel>], iteration_bounds = array<i64: 2>, scalar_prefetch = 0 : i64, scratch_operands = 0 : i64, tpu.core_type = #tpu.core_type<tc>, window_params = [{transform_indices = @transform_0, window_bounds = array<i64: 16, 1152>}, {pipeline_mode = #tpu.pipeline_mode<synchronous>, transform_indices = @transform_1, window_bounds = array<i64: 1152, 128>}, {pipeline_mode = #tpu.pipeline_mode<synchronous>, transform_indices = @transform_2, window_bounds = array<i64: 1, 128>}, {transform_indices = @transform_3, window_bounds = array<i64: 16, 128>}, {transform_indices = @transform_4, window_bounds = array<i64: 16, 128>}]} {
    %c0 = arith.constant 0 : index
    %c0_0 = arith.constant 0 : index
    %0 = vector.load %arg1[%c0, %c0_0] : memref<16x1152xbf16, #tpu.memory_space<vmem>>, vector<16x1152xbf16>
    %c0_1 = arith.constant 0 : index
    %c0_2 = arith.constant 0 : index
    %1 = vector.load %arg2[%c0_1, %c0_2] : memref<1152x128xbf16, #tpu.memory_space<vmem>>, vector<1152x128xbf16>
    %cst = arith.constant dense<0.000000e+00> : vector<16x128xf32>
    %2 = tpu.matmul %0, %1, %cst {dimension_numbers = #tpu.dot_dimension_numbers<[1], [0], [0], [1], [0, 0, 1, 1], [], []>} : vector<16x1152xbf16>, vector<1152x128xbf16>, vector<16x128xf32> -> vector<16x128xf32>
    %c0_3 = arith.constant 0 : index
    %c0_4 = arith.constant 0 : index
    %3 = vector.load %arg3[%c0_3, %c0_4] : memref<1x128xf32, #tpu.memory_space<vmem>>, vector<1x128xf32>
    %4 = vector.broadcast %3 : vector<1x128xf32> to vector<16x128xf32>
    %5 = arith.addf %2, %4 : vector<16x128xf32>
    %cst_5 = arith.constant dense<0.000000e+00> : vector<128xf32>
    %6 = vector.multi_reduction <add>, %5, %cst_5 [0] : vector<16x128xf32> to vector<128xf32>
    %7 = vector.shape_cast %6 : vector<128xf32> to vector<1x128xf32>
    %cst_6 = arith.constant 1.600000e+01 : f32
    %8 = vector.broadcast %cst_6 : f32 to vector<1x128xf32>
    %9 = arith.divf %7, %8 : vector<1x128xf32>
    %10 = vector.broadcast %9 : vector<1x128xf32> to vector<16x128xf32>
    %11 = arith.subf %5, %10 : vector<16x128xf32>
    %12 = arith.mulf %11, %11 : vector<16x128xf32>
    %cst_7 = arith.constant dense<0.000000e+00> : vector<128xf32>
    %13 = vector.multi_reduction <add>, %12, %cst_7 [0] : vector<16x128xf32> to vector<128xf32>
    %14 = vector.shape_cast %13 : vector<128xf32> to vector<1x128xf32>
    %cst_8 = arith.constant 1.600000e+01 : f32
    %15 = vector.broadcast %cst_8 : f32 to vector<1x128xf32>
    %16 = arith.divf %14, %15 : vector<1x128xf32>
    %17 = vector.broadcast %9 : vector<1x128xf32> to vector<16x128xf32>
    %18 = arith.subf %5, %17 : vector<16x128xf32>
    %cst_9 = arith.constant 9.99999974E-6 : f32
    %19 = vector.broadcast %cst_9 : f32 to vector<1x128xf32>
    %20 = arith.addf %16, %19 : vector<1x128xf32>
    %21 = math.rsqrt %20 : vector<1x128xf32>
    %22 = vector.broadcast %21 : vector<1x128xf32> to vector<16x128xf32>
    %23 = arith.mulf %18, %22 : vector<16x128xf32>
    %c0_10 = arith.constant 0 : index
    %c0_11 = arith.constant 0 : index
    %24 = vector.load %arg4[%c0_10, %c0_11] : memref<16x128xf32, #tpu.memory_space<vmem>>, vector<16x128xf32>
    %25 = arith.addf %23, %24 : vector<16x128xf32>
    %c0_12 = arith.constant 0 : index
    %c0_13 = arith.constant 0 : index
    %26 = vector.load %arg5[%c0_12, %c0_13] : memref<16x128xf32, #tpu.memory_space<vmem>>, vector<16x128xf32>
    tpu.vector_store %arg5[%c0_12, %c0_13], %25 {strides = array<i32>} : memref<16x128xf32, #tpu.memory_space<vmem>>, vector<16x128xf32>,
    return
  }
  func.func @transform_0(%arg0: i32) -> (i32, i32) {
    %c0_i32 = arith.constant 0 : i32
    %c0_i32_0 = arith.constant 0 : i32
    return %arg0, %c0_i32 : i32, i32
  }
  func.func @transform_1(%arg0: i32) -> (i32, i32) {
    %c0_i32 = arith.constant 0 : i32
    %c0_i32_0 = arith.constant 0 : i32
    %c0_i32_1 = arith.constant 0 : i32
    return %c0_i32, %c0_i32_0 : i32, i32
  }
  func.func @transform_2(%arg0: i32) -> (i32, i32) {
    %c0_i32 = arith.constant 0 : i32
    %c0_i32_0 = arith.constant 0 : i32
    %c0_i32_1 = arith.constant 0 : i32
    return %c0_i32, %c0_i32_0 : i32, i32
  }
  func.func @transform_3(%arg0: i32) -> (i32, i32) {
    %c0_i32 = arith.constant 0 : i32
    %c0_i32_0 = arith.constant 0 : i32
    return %arg0, %c0_i32 : i32, i32
  }
  func.func @transform_4(%arg0: i32) -> (i32, i32) {
    %c0_i32 = arith.constant 0 : i32
    %c0_i32_0 = arith.constant 0 : i32
    return %arg0, %c0_i32 : i32, i32
  }
}

module attributes {stable_mosaic.version = 11 : i64} {
  func.func @_deconv_fused_kernel(%arg0: i32, %arg1: i32, %arg2: memref<16x512xbf16, #tpu.memory_space<vmem>>, %arg3: memref<1x512x64xbf16, #tpu.memory_space<vmem>>, %arg4: memref<64x64xf32, #tpu.memory_space<vmem>>) attributes {dimension_semantics = [#tpu.dimension_semantics<parallel>, #tpu.dimension_semantics<arbitrary>], iteration_bounds = array<i64: 2, 4>, scalar_prefetch = 0 : i64, scratch_operands = 0 : i64, tpu.core_type = #tpu.core_type<tc>, window_params = [{transform_indices = @transform_0, window_bounds = array<i64: 16, 512>}, {transform_indices = @transform_1, window_bounds = array<i64: 1, 512, 64>}, {transform_indices = @transform_2, window_bounds = array<i64: 64, 64>}]} {
    %c0 = arith.constant 0 : index
    %c0_0 = arith.constant 0 : index
    %0 = vector.load %arg2[%c0, %c0_0] : memref<16x512xbf16, #tpu.memory_space<vmem>>, vector<16x512xbf16>
    %c0_1 = arith.constant 0 : index
    %c0_2 = arith.constant 0 : index
    %c0_3 = arith.constant 0 : index
    %1 = vector.load %arg3[%c0_1, %c0_2, %c0_3] : memref<1x512x64xbf16, #tpu.memory_space<vmem>>, vector<1x512x64xbf16>
    %2 = vector.shape_cast %1 : vector<1x512x64xbf16> to vector<512x64xbf16>
    %cst = arith.constant dense<0.000000e+00> : vector<16x64xf32>
    %3 = tpu.matmul %0, %2, %cst {dimension_numbers = #tpu.dot_dimension_numbers<[1], [0], [0], [1], [0, 0, 1, 1], [], []>} : vector<16x512xbf16>, vector<512x64xbf16>, vector<16x64xf32> -> vector<16x64xf32>
    %c16_i32 = arith.constant 16 : i32
    %4 = arith.muli %arg1, %c16_i32 : i32
    %5 = tpu.assume_multiple %4, 16 : i32
    %6 = arith.index_cast %5 : i32 to index
    %c0_4 = arith.constant 0 : index
    %7 = vector.load %arg4[%6, %c0_4] : memref<64x64xf32, #tpu.memory_space<vmem>>, vector<16x64xf32>
    tpu.vector_store %arg4[%6, %c0_4], %3 {strides = array<i32>} : memref<64x64xf32, #tpu.memory_space<vmem>>, vector<16x64xf32>,
    %c3_i32 = arith.constant 3 : i32
    %8 = arith.cmpi eq, %arg1, %c3_i32 : i32
    %9 = arith.extui %8 : i1 to i32
    %c0_i32 = arith.constant 0 : i32
    %10 = arith.cmpi ne, %9, %c0_i32 : i32
    scf.if %10 {
      %c0_5 = arith.constant 0 : index
      %c0_6 = arith.constant 0 : index
      %11 = vector.load %arg4[%c0_5, %c0_6] : memref<64x64xf32, #tpu.memory_space<vmem>>, vector<64x64xf32>
      %cst_7 = arith.constant dense<0.000000e+00> : vector<64xf32>
      %12 = vector.multi_reduction <add>, %11, %cst_7 [0] : vector<64x64xf32> to vector<64xf32>
      %13 = vector.shape_cast %12 : vector<64xf32> to vector<1x64xf32>
      %cst_8 = arith.constant 6.400000e+01 : f32
      %14 = vector.broadcast %cst_8 : f32 to vector<1x64xf32>
      %15 = arith.divf %13, %14 : vector<1x64xf32>
      %16 = vector.broadcast %15 : vector<1x64xf32> to vector<64x64xf32>
      %17 = arith.subf %11, %16 : vector<64x64xf32>
      %18 = arith.mulf %17, %17 : vector<64x64xf32>
      %cst_9 = arith.constant dense<0.000000e+00> : vector<64xf32>
      %19 = vector.multi_reduction <add>, %18, %cst_9 [0] : vector<64x64xf32> to vector<64xf32>
      %20 = vector.shape_cast %19 : vector<64xf32> to vector<1x64xf32>
      %cst_10 = arith.constant 6.400000e+01 : f32
      %21 = vector.broadcast %cst_10 : f32 to vector<1x64xf32>
      %22 = arith.divf %20, %21 : vector<1x64xf32>
      %23 = vector.broadcast %15 : vector<1x64xf32> to vector<64x64xf32>
      %24 = arith.subf %11, %23 : vector<64x64xf32>
      %cst_11 = arith.constant 9.99999974E-6 : f32
      %25 = vector.broadcast %cst_11 : f32 to vector<1x64xf32>
      %26 = arith.addf %22, %25 : vector<1x64xf32>
      %27 = math.rsqrt %26 : vector<1x64xf32>
      %28 = vector.broadcast %27 : vector<1x64xf32> to vector<64x64xf32>
      %29 = arith.mulf %24, %28 : vector<64x64xf32>
      %cst_12 = arith.constant 0.000000e+00 : f32
      %30 = vector.broadcast %cst_12 : f32 to vector<64x64xf32>
      %31 = arith.maximumf %29, %30 : vector<64x64xf32>
      %c0_13 = arith.constant 0 : index
      %c0_14 = arith.constant 0 : index
      %32 = vector.load %arg4[%c0_13, %c0_14] : memref<64x64xf32, #tpu.memory_space<vmem>>, vector<64x64xf32>
      tpu.vector_store %arg4[%c0_13, %c0_14], %31 {strides = array<i32>} : memref<64x64xf32, #tpu.memory_space<vmem>>, vector<64x64xf32>,
    } else {
    }
    return
  }
  func.func @transform_0(%arg0: i32, %arg1: i32) -> (i32, i32) {
    %c4_i32 = arith.constant 4 : i32
    %0 = arith.muli %arg0, %c4_i32 : i32
    %1 = arith.addi %0, %arg1 : i32
    %c0_i32 = arith.constant 0 : i32
    %c0_i32_0 = arith.constant 0 : i32
    return %1, %c0_i32 : i32, i32
  }
  func.func @transform_1(%arg0: i32, %arg1: i32) -> (i32, i32, i32) {
    %c0_i32 = arith.constant 0 : i32
    %c0_i32_0 = arith.constant 0 : i32
    %c0_i32_1 = arith.constant 0 : i32
    return %arg1, %c0_i32, %c0_i32_0 : i32, i32, i32
  }
  func.func @transform_2(%arg0: i32, %arg1: i32) -> (i32, i32) {
    %c0_i32 = arith.constant 0 : i32
    %c0_i32_0 = arith.constant 0 : i32
    return %arg0, %c0_i32 : i32, i32
  }
}

module attributes {stable_mosaic.version = 11 : i64} {
  func.func @_deconv_fused_kernel(%arg0: i32, %arg1: i32, %arg2: memref<64x256xbf16, #tpu.memory_space<vmem>>, %arg3: memref<1x256x32xbf16, #tpu.memory_space<vmem>>, %arg4: memref<256x32xf32, #tpu.memory_space<vmem>>) attributes {dimension_semantics = [#tpu.dimension_semantics<parallel>, #tpu.dimension_semantics<arbitrary>], iteration_bounds = array<i64: 2, 4>, scalar_prefetch = 0 : i64, scratch_operands = 0 : i64, tpu.core_type = #tpu.core_type<tc>, window_params = [{transform_indices = @transform_0, window_bounds = array<i64: 64, 256>}, {transform_indices = @transform_1, window_bounds = array<i64: 1, 256, 32>}, {transform_indices = @transform_2, window_bounds = array<i64: 256, 32>}]} {
    %c0 = arith.constant 0 : index
    %c0_0 = arith.constant 0 : index
    %0 = vector.load %arg2[%c0, %c0_0] : memref<64x256xbf16, #tpu.memory_space<vmem>>, vector<64x256xbf16>
    %c0_1 = arith.constant 0 : index
    %c0_2 = arith.constant 0 : index
    %c0_3 = arith.constant 0 : index
    %1 = vector.load %arg3[%c0_1, %c0_2, %c0_3] : memref<1x256x32xbf16, #tpu.memory_space<vmem>>, vector<1x256x32xbf16>
    %2 = vector.shape_cast %1 : vector<1x256x32xbf16> to vector<256x32xbf16>
    %cst = arith.constant dense<0.000000e+00> : vector<64x32xf32>
    %3 = tpu.matmul %0, %2, %cst {dimension_numbers = #tpu.dot_dimension_numbers<[1], [0], [0], [1], [0, 0, 1, 1], [], []>} : vector<64x256xbf16>, vector<256x32xbf16>, vector<64x32xf32> -> vector<64x32xf32>
    %c64_i32 = arith.constant 64 : i32
    %4 = arith.muli %arg1, %c64_i32 : i32
    %5 = tpu.assume_multiple %4, 64 : i32
    %6 = arith.index_cast %5 : i32 to index
    %c0_4 = arith.constant 0 : index
    %7 = vector.load %arg4[%6, %c0_4] : memref<256x32xf32, #tpu.memory_space<vmem>>, vector<64x32xf32>
    tpu.vector_store %arg4[%6, %c0_4], %3 {strides = array<i32>} : memref<256x32xf32, #tpu.memory_space<vmem>>, vector<64x32xf32>,
    %c3_i32 = arith.constant 3 : i32
    %8 = arith.cmpi eq, %arg1, %c3_i32 : i32
    %9 = arith.extui %8 : i1 to i32
    %c0_i32 = arith.constant 0 : i32
    %10 = arith.cmpi ne, %9, %c0_i32 : i32
    scf.if %10 {
      %c0_5 = arith.constant 0 : index
      %c0_6 = arith.constant 0 : index
      %11 = vector.load %arg4[%c0_5, %c0_6] : memref<256x32xf32, #tpu.memory_space<vmem>>, vector<256x32xf32>
      %cst_7 = arith.constant dense<0.000000e+00> : vector<32xf32>
      %12 = vector.multi_reduction <add>, %11, %cst_7 [0] : vector<256x32xf32> to vector<32xf32>
      %13 = vector.shape_cast %12 : vector<32xf32> to vector<1x32xf32>
      %cst_8 = arith.constant 2.560000e+02 : f32
      %14 = vector.broadcast %cst_8 : f32 to vector<1x32xf32>
      %15 = arith.divf %13, %14 : vector<1x32xf32>
      %16 = vector.broadcast %15 : vector<1x32xf32> to vector<256x32xf32>
      %17 = arith.subf %11, %16 : vector<256x32xf32>
      %18 = arith.mulf %17, %17 : vector<256x32xf32>
      %cst_9 = arith.constant dense<0.000000e+00> : vector<32xf32>
      %19 = vector.multi_reduction <add>, %18, %cst_9 [0] : vector<256x32xf32> to vector<32xf32>
      %20 = vector.shape_cast %19 : vector<32xf32> to vector<1x32xf32>
      %cst_10 = arith.constant 2.560000e+02 : f32
      %21 = vector.broadcast %cst_10 : f32 to vector<1x32xf32>
      %22 = arith.divf %20, %21 : vector<1x32xf32>
      %23 = vector.broadcast %15 : vector<1x32xf32> to vector<256x32xf32>
      %24 = arith.subf %11, %23 : vector<256x32xf32>
      %cst_11 = arith.constant 9.99999974E-6 : f32
      %25 = vector.broadcast %cst_11 : f32 to vector<1x32xf32>
      %26 = arith.addf %22, %25 : vector<1x32xf32>
      %27 = math.rsqrt %26 : vector<1x32xf32>
      %28 = vector.broadcast %27 : vector<1x32xf32> to vector<256x32xf32>
      %29 = arith.mulf %24, %28 : vector<256x32xf32>
      %cst_12 = arith.constant 0.000000e+00 : f32
      %30 = vector.broadcast %cst_12 : f32 to vector<256x32xf32>
      %31 = arith.maximumf %29, %30 : vector<256x32xf32>
      %c0_13 = arith.constant 0 : index
      %c0_14 = arith.constant 0 : index
      %32 = vector.load %arg4[%c0_13, %c0_14] : memref<256x32xf32, #tpu.memory_space<vmem>>, vector<256x32xf32>
      tpu.vector_store %arg4[%c0_13, %c0_14], %31 {strides = array<i32>} : memref<256x32xf32, #tpu.memory_space<vmem>>, vector<256x32xf32>,
    } else {
    }
    return
  }
  func.func @transform_0(%arg0: i32, %arg1: i32) -> (i32, i32) {
    %c4_i32 = arith.constant 4 : i32
    %0 = arith.muli %arg0, %c4_i32 : i32
    %1 = arith.addi %0, %arg1 : i32
    %c0_i32 = arith.constant 0 : i32
    %c0_i32_0 = arith.constant 0 : i32
    return %1, %c0_i32 : i32, i32
  }
  func.func @transform_1(%arg0: i32, %arg1: i32) -> (i32, i32, i32) {
    %c0_i32 = arith.constant 0 : i32
    %c0_i32_0 = arith.constant 0 : i32
    %c0_i32_1 = arith.constant 0 : i32
    return %arg1, %c0_i32, %c0_i32_0 : i32, i32, i32
  }
  func.func @transform_2(%arg0: i32, %arg1: i32) -> (i32, i32) {
    %c0_i32 = arith.constant 0 : i32
    %c0_i32_0 = arith.constant 0 : i32
    return %arg0, %c0_i32 : i32, i32
  }
}

module attributes {stable_mosaic.version = 11 : i64} {
  func.func @_conv_fused_kernel(%arg0: i32, %arg1: memref<256x1568xbf16, #tpu.memory_space<vmem>>, %arg2: memref<1568x3xbf16, #tpu.memory_space<vmem>>, %arg3: memref<1x3xf32, #tpu.memory_space<vmem>>, %arg4: memref<256x3xf32, #tpu.memory_space<vmem>>) attributes {dimension_semantics = [#tpu.dimension_semantics<parallel>], iteration_bounds = array<i64: 2>, scalar_prefetch = 0 : i64, scratch_operands = 0 : i64, tpu.core_type = #tpu.core_type<tc>, window_params = [{transform_indices = @transform_0, window_bounds = array<i64: 256, 1568>}, {pipeline_mode = #tpu.pipeline_mode<synchronous>, transform_indices = @transform_1, window_bounds = array<i64: 1568, 3>}, {pipeline_mode = #tpu.pipeline_mode<synchronous>, transform_indices = @transform_2, window_bounds = array<i64: 1, 3>}, {transform_indices = @transform_3, window_bounds = array<i64: 256, 3>}]} {
    %c0 = arith.constant 0 : index
    %c0_0 = arith.constant 0 : index
    %0 = vector.load %arg1[%c0, %c0_0] : memref<256x1568xbf16, #tpu.memory_space<vmem>>, vector<256x1568xbf16>
    %c0_1 = arith.constant 0 : index
    %c0_2 = arith.constant 0 : index
    %1 = vector.load %arg2[%c0_1, %c0_2] : memref<1568x3xbf16, #tpu.memory_space<vmem>>, vector<1568x3xbf16>
    %cst = arith.constant dense<0.000000e+00> : vector<256x3xf32>
    %2 = tpu.matmul %0, %1, %cst {dimension_numbers = #tpu.dot_dimension_numbers<[1], [0], [0], [1], [0, 0, 1, 1], [], []>} : vector<256x1568xbf16>, vector<1568x3xbf16>, vector<256x3xf32> -> vector<256x3xf32>
    %c0_3 = arith.constant 0 : index
    %c0_4 = arith.constant 0 : index
    %3 = vector.load %arg3[%c0_3, %c0_4] : memref<1x3xf32, #tpu.memory_space<vmem>>, vector<1x3xf32>
    %4 = vector.broadcast %3 : vector<1x3xf32> to vector<256x3xf32>
    %5 = arith.addf %2, %4 : vector<256x3xf32>
    %6 = math.tanh %5 : vector<256x3xf32>
    %c0_5 = arith.constant 0 : index
    %c0_6 = arith.constant 0 : index
    %7 = vector.load %arg4[%c0_5, %c0_6] : memref<256x3xf32, #tpu.memory_space<vmem>>, vector<256x3xf32>
    tpu.vector_store %arg4[%c0_5, %c0_6], %6 {strides = array<i32>} : memref<256x3xf32, #tpu.memory_space<vmem>>, vector<256x3xf32>,
    return
  }
  func.func @transform_0(%arg0: i32) -> (i32, i32) {
    %c0_i32 = arith.constant 0 : i32
    %c0_i32_0 = arith.constant 0 : i32
    return %arg0, %c0_i32 : i32, i32
  }
  func.func @transform_1(%arg0: i32) -> (i32, i32) {
    %c0_i32 = arith.constant 0 : i32
    %c0_i32_0 = arith.constant 0 : i32
    %c0_i32_1 = arith.constant 0 : i32
    return %c0_i32, %c0_i32_0 : i32, i32
  }
  func.func @transform_2(%arg0: i32) -> (i32, i32) {
    %c0_i32 = arith.constant 0 : i32
    %c0_i32_0 = arith.constant 0 : i32
    %c0_i32_1 = arith.constant 0 : i32
    return %c0_i32, %c0_i32_0 : i32, i32
  }
  func.func @transform_3(%arg0: i32) -> (i32, i32) {
    %c0_i32 = arith.constant 0 : i32
    %c0_i32_0 = arith.constant 0 : i32
    return %arg0, %c0_i32 : i32, i32
  }
}

</mosaic_0001>

<llo_original>
// kernel: generator_forward.24
$region0: #{generator_forward.24}
  #allocation0 [shape = 'u32[]', space=smem, size = 0x4, offset = 0x4, fixed_abs, tag = 'smem constant byte address 0x4 - core index']
  #allocation1 [shape = 'u32[144,128]{1,0:T(1,128)}', space=vmem, size = 0x12000, scoped, tag = 'internal scratch']
  %s0 = inlined_call_operand.vmem [shape: bf16[512,147], index: 0, kind: input, shape index: {}]
  %s1 = inlined_call_operand.vmem [shape: bf16[147,32], index: 1, kind: input, shape index: {}]
  %s2 = inlined_call_operand.vmem [shape: f32[1,32], index: 2, kind: input, shape index: {}]
  %s3 = inlined_call_operand.vmem [shape: f32[512,32], index: 3, kind: output, shape index: {}]
  %s4 = sld [smem:[#allocation0]]
  $region45: #{generator_forward.24} parent=0
    _
  %s6 = ssub.s32 1, %s4
  %s7 = scalar_select 0, %s6, %s4
  loop: start=0, step=1, limit=4
  $region2: #{generator_forward.24} parent=0 // loop_pre_header
    _
  $region3: #{generator_forward.24} parent=0 // loop_header
    %s9 = sphi 0, %s13
    %p10 = scmp.ge.s32.totalorder %s9, 4
    %s19 = sphi 0, %s21
    %s22 = sphi 0, %s19
    %s23 = sphi 0, %s22
    %s39 = sphi 0, %s23
    %s43 = sphi 0, %s43
    %s45 = sphi 0, %s43
    %s46 = sphi 0, %s45
    %s60 = sphi 0, %s46
    %s64 = sphi 0, %s64
    %s66 = sphi 0, %s64
    %s67 = sphi 0, %s66
    %s81 = sphi 0, %s67
    %s87 = sphi 0, %s89
    %s90 = sphi 0, %s87
    %s91 = sphi 0, %s90
    %s107 = sphi 0, %s91
  $region4: #{generator_forward.24} parent=0 // loop_header_branch
    %12 = sbr.rel (%p10) target = $region8
  $region5: #{generator_forward.24} parent=0 // loop_body
    %s14 = ssub.s32 %s9, 1
    %s15 = ssub.s32 %s9, 2
    %s16 = sadd.s32 %s9, 1
    %s17 = ssub.s32 %s9, %s16
    %p18 = scmp.eq.s32.totalorder %s17, 0
    %s20 = sadd.s32 %s19, 1
    %s21 = scalar_select %p18, %s19, %s20
    %p24 = pneg %p18
    %p25 = scmp.eq.s32.totalorder %s9, 1
    %p26 = por %p24, %p25
    %p27 = scmp.ne.s32.totalorder %s19, %s22
    %p28 = scmp.eq.s32.totalorder %s9, 0
    %p29 = por %p27, %p28
    %p30 = scmp.ne.s32.totalorder %s19, %s22
    %p31 = scmp.eq.s32.totalorder %s14, 1
    %p32 = por %p30, %p31
    %p33 = scmp.ne.s32.totalorder %s22, %s23
    %p34 = scmp.eq.s32.totalorder %s14, 0
    %p35 = por %p33, %p34
    %p36 = scmp.ne.s32.totalorder %s22, %s23
    %p37 = scmp.eq.s32.totalorder %s15, 1
    %p38 = por %p36, %p37
    %p40 = scmp.ne.s32.totalorder %s23, %s39
    %p41 = scmp.eq.s32.totalorder %s15, 0
    %p42 = por %p40, %p41
    %s44 = sadd.s32 %s43, 1
    %p47 = scmp.eq.s32.totalorder %s9, 1
    %p48 = scmp.ne.s32.totalorder %s43, %s45
    %p49 = scmp.eq.s32.totalorder %s9, 0
    %p50 = por %p48, %p49
    %p51 = scmp.ne.s32.totalorder %s43, %s45
    %p52 = scmp.eq.s32.totalorder %s14, 1
    %p53 = por %p51, %p52
    %p54 = scmp.ne.s32.totalorder %s45, %s46
    %p55 = scmp.eq.s32.totalorder %s14, 0
    %p56 = por %p54, %p55
    %p57 = scmp.ne.s32.totalorder %s45, %s46
    %p58 = scmp.eq.s32.totalorder %s15, 1
    %p59 = por %p57, %p58
    %p61 = scmp.ne.s32.totalorder %s46, %s60
    %p62 = scmp.eq.s32.totalorder %s15, 0
    %p63 = por %p61, %p62
    %s65 = sadd.s32 %s64, 1
    %p68 = scmp.eq.s32.totalorder %s9, 1
    %p69 = scmp.ne.s32.totalorder %s64, %s66
    %p70 = scmp.eq.s32.totalorder %s9, 0
    %p71 = por %p69, %p70
    %p72 = scmp.ne.s32.totalorder %s64, %s66
    %p73 = scmp.eq.s32.totalorder %s14, 1
    %p74 = por %p72, %p73
    %p75 = scmp.ne.s32.totalorder %s66, %s67
    %p76 = scmp.eq.s32.totalorder %s14, 0
    %p77 = por %p75, %p76
    %p78 = scmp.ne.s32.totalorder %s66, %s67
    %p79 = scmp.eq.s32.totalorder %s15, 1
    %p80 = por %p78, %p79
    %p82 = scmp.ne.s32.totalorder %s67, %s81
    %p83 = scmp.eq.s32.totalorder %s15, 0
    %p84 = por %p82, %p83
    %s85 = ssub.s32 %s9, %s16
    %p86 = scmp.eq.s32.totalorder %s85, 0
    %s88 = sadd.s32 %s87, 1
    %s89 = scalar_select %p86, %s87, %s88
    %p92 = pneg %p86
    %p93 = scmp.eq.s32.totalorder %s9, 1
    %p94 = por %p92, %p93
    %p95 = scmp.ne.s32.totalorder %s87, %s90
    %p96 = scmp.eq.s32.totalorder %s9, 0
    %p97 = por %p95, %p96
    %p98 = scmp.ne.s32.totalorder %s87, %s90
    %p99 = scmp.eq.s32.totalorder %s14, 1
    %p100 = por %p98, %p99
    %p101 = scmp.ne.s32.totalorder %s90, %s91
    %p102 = scmp.eq.s32.totalorder %s14, 0
    %p103 = por %p101, %p102
    %p104 = scmp.ne.s32.totalorder %s90, %s91
    %p105 = scmp.eq.s32.totalorder %s15, 1
    %p106 = por %p104, %p105
    %p108 = scmp.ne.s32.totalorder %s91, %s107
    %p109 = scmp.eq.s32.totalorder %s15, 0
    %p110 = por %p108, %p109
    %p111 = scmp.le.s32.totalorder 1, %s9
    %p112 = scmp.lt.s32.totalorder %s9, 3
    %p113 = pnand %p111, %p112
    %p114 = pneg %p113
    // Predicated region
    $region9: #{generator_forward.24} parent=5 // pred_check
      _
    $region10: #{generator_forward.24} parent=5 // pred_check_branch
      %116 = sbr.rel (%p113) target = $region12
    $region11: #{generator_forward.24} parent=5 // pred_region
      %s117 = ssub.s32 %s9, 1
      // Predicated region
      $region13: #{generator_forward.24} parent=11 // pred_check
        %p118 = pneg %p56
      $region14: #{generator_forward.24} parent=11 // pred_check_branch
        %120 = sbr.rel (%p118) target = $region16
      $region15: #{generator_forward.24} parent=11 // pred_region
        _
      $region16: #{generator_forward.24} parent=11 // pred_fallthru
        _
      // Predicated region
      $region17: #{generator_forward.24} parent=11 // pred_check
        %p121 = pneg %p77
      $region18: #{generator_forward.24} parent=11 // pred_check_branch
        %123 = sbr.rel (%p121) target = $region20
      $region19: #{generator_forward.24} parent=11 // pred_region
        _
      $region20: #{generator_forward.24} parent=11 // pred_fallthru
        _
    $region12: #{generator_forward.24} parent=5 // pred_fallthru
      _
    %p124 = scmp.lt.s32.totalorder %s9, 2
    // Predicated region
    $region21: #{generator_forward.24} parent=5 // pred_check
      %p125 = pneg %p124
    $region22: #{generator_forward.24} parent=5 // pred_check_branch
      %127 = sbr.rel (%p125) target = $region24
    $region23: #{generator_forward.24} parent=5 // pred_region
      // Predicated region
      $region25: #{generator_forward.24} parent=23 // pred_check
        %p128 = pneg %p29
      $region26: #{generator_forward.24} parent=23 // pred_check_branch
        %130 = sbr.rel (%p128) target = $region28
      $region27: #{generator_forward.24} parent=23 // pred_region
        %s131 = smul.u32 32, %s9
        %p132 = scmp.lt.s32.totalorder %s131, 63
        %s133 = scalar_select %p132, %s131, 63
        %s134 = smul.addr %s133, 2
        %s135 = smul.addr %s134, 4
        %s136 = scalar_lea.vmem %s0, %s135
        %s137 = smul.u32 32, %s9
      $region28: #{generator_forward.24} parent=23 // pred_fallthru
        _
    $region24: #{generator_forward.24} parent=5 // pred_fallthru
      _
    %p138 = scmp.le.s32.totalorder 1, %s9
    %p139 = scmp.lt.s32.totalorder %s9, 3
    %p140 = pnand %p138, %p139
    %p141 = pneg %p140
    // Predicated region
    $region29: #{generator_forward.24} parent=5 // pred_check
      _
    $region30: #{generator_forward.24} parent=5 // pred_check_branch
      %143 = sbr.rel (%p140) target = $region32
    $region31: #{generator_forward.24} parent=5 // pred_region
      %s144 = ssub.s32 %s9, 1
      %s145 = smul.u32 32, %s14
      %p146 = scmp.lt.s32.totalorder %s145, 63
      %s147 = scalar_select %p146, %s145, 63
      %s148 = smul.addr %s147, 2
      %s149 = smul.addr %s148, 4
      %s150 = scalar_lea.vmem %s0, %s149
      %p151 = pneg %p35
      %p152 = pneg %p32
      %p153 = pneg %p56
      %p154 = pneg %p53
      %p155 = pneg %p77
      %p156 = pneg %p74
      %p157 = pneg %p103
      %p158 = pneg %p100
      %s159 = smul.u32 32, %s14
      %p160 = scmp.lt.s32.totalorder %s159, 63
      %s161 = scalar_select %p160, %s159, 63
      %s162 = smul.addr %s161, 8
      %s163 = scalar_lea.vmem %s3, %s162
      %s164 = smul.u32 32, %s14
      %p165 = scmp.lt.s32.totalorder %s164, 63
      %s166 = scalar_select %p165, %s164, 63
      %s167 = smul.addr %s166, 2
      %s168 = smul.addr %s167, 4
      %s169 = scalar_lea.vmem %s0, %s168
      %s170 = smul.u32 32, %s14
      %s171 = smul.u32 32, %s14
      %p172 = scmp.lt.s32.totalorder %s171, 63
      %s173 = scalar_select %p172, %s171, 63
      %s174 = smul.addr %s173, 8
      %s175 = scalar_lea.vmem %s3, %s174
      %s176 = smul.u32 32, %s14
      %v178 = vld [vmem:[%s169] sm:$0xff]
      %v179 = vld [vmem:[%s169 + $0x8] sm:$0xff]
      %v180 = vld [vmem:[%s169 + $0x10] sm:$0xff]
      %v181 = vld [vmem:[%s169 + $0x18] sm:$0xff]
      %v182 = vld [vmem:[%s169 + $0x20] sm:$0xff]
      %v183 = vld [vmem:[%s169 + $0x28] sm:$0xff]
      %v184 = vld [vmem:[%s169 + $0x30] sm:$0xff]
      %v185 = vld [vmem:[%s169 + $0x38] sm:$0xff]
      %v186 = vld [vmem:[%s169 + $0x40] sm:$0xff]
      %v187 = vld [vmem:[%s169 + $0x48] sm:$0xff]
      %v188 = vld [vmem:[%s169 + $0x50] sm:$0xff]
      %v189 = vld [vmem:[%s169 + $0x58] sm:$0xff]
      %v190 = vld [vmem:[%s169 + $0x60] sm:$0xff]
      %v191 = vld [vmem:[%s169 + $0x68] sm:$0xff]
      %v192 = vld [vmem:[%s169 + $0x70] sm:$0xff]
      %v193 = vld [vmem:[%s169 + $0x78] sm:$0xff]
      %v194 = vld [vmem:[%s169 + $0x80] sm:$0xff]
      %v195 = vld [vmem:[%s169 + $0x88] sm:$0xff]
      %v196 = vld [vmem:[%s169 + $0x90] sm:$0xff]
      %v197 = vld [vmem:[%s169 + $0x98] sm:$0xff]
      %v198 = vld [vmem:[%s169 + $0xa0] sm:$0xff]
      %v199 = vld [vmem:[%s169 + $0xa8] sm:$0xff]
      %v200 = vld [vmem:[%s169 + $0xb0] sm:$0xff]
      %v201 = vld [vmem:[%s169 + $0xb8] sm:$0xff]
      %v202 = vld [vmem:[%s169 + $0xc0] sm:$0xff]
      %v203 = vld [vmem:[%s169 + $0xc8] sm:$0xff]
      %v204 = vld [vmem:[%s169 + $0xd0] sm:$0xff]
      %v205 = vld [vmem:[%s169 + $0xd8] sm:$0xff]
      %v206 = vld [vmem:[%s169 + $0xe0] sm:$0xff]
      %v207 = vld [vmem:[%s169 + $0xe8] sm:$0xff]
      %v208 = vld [vmem:[%s169 + $0xf0] sm:$0xff]
      %v209 = vld [vmem:[%s169 + $0xf8] sm:$0xff]
      %v210 = vld [vmem:[%s1] sm:$0xf]
      %v211 = vld [vmem:[%s1 + $0x4] sm:$0xf]
      %v212 = vld [vmem:[%s1 + $0x8] sm:$0xf]
      %v213 = vld [vmem:[%s1 + $0xc] sm:$0xf]
      %v214 = vld [vmem:[%s1 + $0x10] sm:$0xf]
      %v215 = vld [vmem:[%s1 + $0x14] sm:$0xf]
      %v216 = vld [vmem:[%s1 + $0x18] sm:$0xf]
      %v217 = vld [vmem:[%s1 + $0x1c] sm:$0xf]
      %v218 = vld [vmem:[%s1 + $0x20] sm:$0xf]
      %v219 = vld [vmem:[%s1 + $0x24] sm:$0xf]
      %v220 = vld [vmem:[%s1 + $0x28] sm:$0xf]
      %v221 = vld [vmem:[%s1 + $0x2c] sm:$0xf]
      %v222 = vld [vmem:[%s1 + $0x30] sm:$0xf]
      %v223 = vld [vmem:[%s1 + $0x34] sm:$0xf]
      %v224 = vld [vmem:[%s1 + $0x38] sm:$0xf]
      %v225 = vld [vmem:[%s1 + $0x3c] sm:$0xf]
      %v226 = vld [vmem:[%s1 + $0x40] sm:$0xf]
      %v227 = vld [vmem:[%s1 + $0x44] sm:$0xf]
      %v228 = vld [vmem:[%s1 + $0x48] sm:$0x3]
      %v229 = vld [vmem:[%s2] sm:$0x1]
      %v231 = vlaneseq
      %v232 = vshrl.u32 %v231, 7
      %v233 = vsub.s32 0, %v232
      %v234 = vrot.slane %v229, %v233
      %v268 = vunpack.c.l.b16 %v178
      %v269 = vunpack.c.h.b16 %v178
      %v270 = vunpack.c.l.b16 %v179
      %v271 = vunpack.c.h.b16 %v179
      %v272 = vunpack.c.l.b16 %v180
      %v273 = vunpack.c.h.b16 %v180
      %v274 = vunpack.c.l.b16 %v181
      %v275 = vunpack.c.h.b16 %v181
      %v276 = vunpack.c.l.b16 %v182
      %v277 = vunpack.c.h.b16 %v182
      %v278 = vunpack.c.l.b16 %v183
      %v279 = vunpack.c.h.b16 %v183
      %v280 = vunpack.c.l.b16 %v184
      %v281 = vunpack.c.h.b16 %v184
      %v282 = vunpack.c.l.b16 %v185
      %v283 = vunpack.c.h.b16 %v185
      %v284 = vunpack.c.l.b16 %v186
      %v285 = vunpack.c.h.b16 %v186
      %v286 = vunpack.c.l.b16 %v187
      %v287 = vunpack.c.h.b16 %v187
      %v288 = vunpack.c.l.b16 %v188
      %v289 = vunpack.c.h.b16 %v188
      %v290 = vunpack.c.l.b16 %v189
      %v291 = vunpack.c.h.b16 %v189
      %v292 = vunpack.c.l.b16 %v190
      %v293 = vunpack.c.h.b16 %v190
      %v294 = vunpack.c.l.b16 %v191
      %v295 = vunpack.c.h.b16 %v191
      %v296 = vunpack.c.l.b16 %v192
      %v297 = vunpack.c.h.b16 %v192
      %v298 = vunpack.c.l.b16 %v193
      %v299 = vunpack.c.h.b16 %v193
      %v300 = vunpack.c.l.b16 %v194
      %v301 = vunpack.c.h.b16 %v194
      %v302 = vunpack.c.l.b16 %v195
      %v303 = vunpack.c.h.b16 %v195
      %v304 = vunpack.c.l.b16 %v196
      %v305 = vunpack.c.h.b16 %v196
      %v306 = vunpack.c.l.b16 %v197
      %v307 = vunpack.c.h.b16 %v197
      %v308 = vunpack.c.l.b16 %v198
      %v309 = vunpack.c.h.b16 %v198
      %v310 = vunpack.c.l.b16 %v199
      %v311 = vunpack.c.h.b16 %v199
      %v312 = vunpack.c.l.b16 %v200
      %v313 = vunpack.c.h.b16 %v200
      %v314 = vunpack.c.l.b16 %v201
      %v315 = vunpack.c.h.b16 %v201
      %v316 = vunpack.c.l.b16 %v202
      %v317 = vunpack.c.h.b16 %v202
      %v318 = vunpack.c.l.b16 %v203
      %v319 = vunpack.c.h.b16 %v203
      %v320 = vunpack.c.l.b16 %v204
      %v321 = vunpack.c.h.b16 %v204
      %v322 = vunpack.c.l.b16 %v205
      %v323 = vunpack.c.h.b16 %v205
      %v324 = vunpack.c.l.b16 %v206
      %v325 = vunpack.c.h.b16 %v206
      %v326 = vunpack.c.l.b16 %v207
      %v327 = vunpack.c.h.b16 %v207
      %v328 = vunpack.c.l.b16 %v208
      %v329 = vunpack.c.h.b16 %v208
      %v330 = vunpack.c.l.b16 %v209
      %v331 = vunpack.c.h.b16 %v209
      %v332 = vpack.c.b16 %v270, %v268
      %v333 = vpack.c.b16 %v271, %v269
      %v334 = vpack.c.b16 %v274, %v272
      %v335 = vpack.c.b16 %v275, %v273
      %v336 = vpack.c.b16 %v278, %v276
      %v337 = vpack.c.b16 %v279, %v277
      %v338 = vpack.c.b16 %v282, %v280
      %v339 = vpack.c.b16 %v283, %v281
      %v340 = vpack.c.b16 %v286, %v284
      %v341 = vpack.c.b16 %v287, %v285
      %v342 = vpack.c.b16 %v290, %v288
      %v343 = vpack.c.b16 %v291, %v289
      %v344 = vpack.c.b16 %v294, %v292
      %v345 = vpack.c.b16 %v295, %v293
      %v346 = vpack.c.b16 %v298, %v296
      %v347 = vpack.c.b16 %v299, %v297
      %v348 = vpack.c.b16 %v302, %v300
      %v349 = vpack.c.b16 %v303, %v301
      %v350 = vpack.c.b16 %v306, %v304
      %v351 = vpack.c.b16 %v307, %v305
      %v352 = vpack.c.b16 %v310, %v308
      %v353 = vpack.c.b16 %v311, %v309
      %v354 = vpack.c.b16 %v314, %v312
      %v355 = vpack.c.b16 %v315, %v313
      %v356 = vpack.c.b16 %v318, %v316
      %v357 = vpack.c.b16 %v319, %v317
      %v358 = vpack.c.b16 %v322, %v320
      %v359 = vpack.c.b16 %v323, %v321
      %v360 = vpack.c.b16 %v326, %v324
      %v361 = vpack.c.b16 %v327, %v325
      %v362 = vpack.c.b16 %v330, %v328
      %v363 = vpack.c.b16 %v331, %v329
      %v399 = vunpack.c.l.b16 %v210
      %v400 = vunpack.c.l.b16 %v211
      %v401 = vunpack.c.l.b16 %v212
      %v402 = vunpack.c.l.b16 %v213
      %v403 = vunpack.c.l.b16 %v214
      %v404 = vunpack.c.l.b16 %v215
      %v405 = vunpack.c.l.b16 %v216
      %v406 = vunpack.c.l.b16 %v217
      %v407 = vunpack.c.l.b16 %v218
      %v408 = vunpack.c.l.b16 %v219
      %v409 = vunpack.c.l.b16 %v220
      %v410 = vunpack.c.l.b16 %v221
      %v411 = vunpack.c.l.b16 %v222
      %v412 = vunpack.c.l.b16 %v223
      %v413 = vunpack.c.l.b16 %v224
      %v414 = vunpack.c.l.b16 %v225
      %v415 = vunpack.c.l.b16 %v226
      %v416 = vunpack.c.l.b16 %v227
      %v417 = vunpack.c.l.b16 %v228
      %v418 = vpack.c.b16 %v400, %v399
      %v419 = vpack.c.b16 %v402, %v401
      %v420 = vpack.c.b16 %v404, %v403
      %v421 = vpack.c.b16 %v406, %v405
      %v422 = vpack.c.b16 %v408, %v407
      %v423 = vpack.c.b16 %v410, %v409
      %v424 = vpack.c.b16 %v412, %v411
      %v425 = vpack.c.b16 %v414, %v413
      %v426 = vpack.c.b16 %v416, %v415
      %v427 = vpack.c.b16 %v417, %v417
      %vm437 = vcmask 154624
      %v439 = vsel %vm437, %v333, 0
      %v442 = vsel %vm437, %v335, 0
      %v445 = vsel %vm437, %v337, 0
      %v448 = vsel %vm437, %v339, 0
      %v451 = vsel %vm437, %v341, 0
      %v454 = vsel %vm437, %v343, 0
      %v457 = vsel %vm437, %v345, 0
      %v460 = vsel %vm437, %v347, 0
      %v463 = vsel %vm437, %v349, 0
      %v466 = vsel %vm437, %v351, 0
      %v469 = vsel %vm437, %v353, 0
      %v472 = vsel %vm437, %v355, 0
      %v475 = vsel %vm437, %v357, 0
      %v478 = vsel %vm437, %v359, 0
      %v481 = vsel %vm437, %v361, 0
      %v484 = vsel %vm437, %v363, 0
      %vm486 = vcmask 1040384
      %vm487 = vcmask 1041408
      %v488 = vsel %vm486, 4294967295, 65535
      %v489 = vsel %vm487, %v488, 0
      %v491 = vand.u32 %v427, %v489
      %493 = vmatprep.subr.bf16.mxu0 0
      %494 = vmatpush1.bf16.msra.mxu0 %v418
      %495 = vmatprep.subr.bf16.mxu0 0
      %496 = vmatpush1.bf16.msra.mxu0 %v419
      %497 = vmatprep.subr.bf16.mxu0 0
      %498 = vmatpush1.bf16.msra.mxu0 %v420
      %499 = vmatprep.subr.bf16.mxu0 0
      %500 = vmatpush1.bf16.msra.mxu0 %v421
      %501 = vmatprep.subr.bf16.mxu0 0
      %502 = vmatpush1.bf16.msra.mxu0 %v422
      %503 = vmatprep.subr.bf16.mxu0 0
      %504 = vmatpush1.bf16.msra.mxu0 %v423
      %505 = vmatprep.subr.bf16.mxu0 0
      %506 = vmatpush1.bf16.msra.mxu0 %v424
      %507 = vmatprep.subr.bf16.mxu0 0
      %508 = vmatpush1.bf16.msra.mxu0 %v425
      %509 = vmatprep.subr.bf16.mxu0 0
      %510 = vmatpush1.bf16.msra.mxu0 %v426
      %511 = vmatprep.subr.bf16.mxu0 0
      %512 = vmatpush1.bf16.msra.mxu0 %v491
      %513 = vmatprep.subr.bf16.mxu0 0
      %514 = vmatpush1.bf16.msra.mxu0 0
      %515 = vmatprep.subr.bf16.mxu0 0
      %516 = vmatpush1.bf16.msra.mxu0 0
      %517 = vmatprep.subr.bf16.mxu0 0
      %518 = vmatpush1.bf16.msra.mxu0 0
      %519 = vmatprep.subr.bf16.mxu0 0
      %520 = vmatpush1.bf16.msra.mxu0 0
      %521 = vmatprep.subr.bf16.mxu0 0
      %522 = vmatpush1.bf16.msra.mxu0 0
      %523 = vmatprep.subr.bf16.mxu0 0
      %524 = vmatpush1.bf16.msra.mxu0 0
      %525 = vmatprep.mubr.bf16.mxu0 %v439
      %526 = vmatmul.mubr.bf16.gmra.mrb[0].mxu0 %v332
      %v527 = vpop.f32.mrb[0].mxu0
      %v528 = vadd.f32 %v234, %v527
      %v529 = vpop.f32.mrb[0].mxu0
      %v530 = vpop.f32.mrb[0].mxu0
      %v531 = vadd.f32 %v234, %v530
      %v532 = vpop.f32.mrb[0].mxu0
      %533 = vmatprep.mubr.bf16.mxu0 %v442
      %534 = vmatmul.mubr.bf16.gmra.mrb[0].mxu0 %v334
      %v535 = vpop.f32.mrb[0].mxu0
      %v536 = vadd.f32 %v234, %v535
      %v537 = vpop.f32.mrb[0].mxu0
      %v538 = vpop.f32.mrb[0].mxu0
      %v539 = vadd.f32 %v234, %v538
      %v540 = vpop.f32.mrb[0].mxu0
      %541 = vmatprep.mubr.bf16.mxu0 %v445
      %542 = vmatmul.mubr.bf16.gmra.mrb[0].mxu0 %v336
      %v543 = vpop.f32.mrb[0].mxu0
      %v544 = vadd.f32 %v234, %v543
      %v545 = vpop.f32.mrb[0].mxu0
      %v546 = vpop.f32.mrb[0].mxu0
      %v547 = vadd.f32 %v234, %v546
      %v548 = vpop.f32.mrb[0].mxu0
      %549 = vmatprep.mubr.bf16.mxu0 %v448
      %550 = vmatmul.mubr.bf16.gmra.mrb[0].mxu0 %v338
      %v551 = vpop.f32.mrb[0].mxu0
      %v552 = vadd.f32 %v234, %v551
      %v553 = vpop.f32.mrb[0].mxu0
      %v554 = vpop.f32.mrb[0].mxu0
      %v555 = vadd.f32 %v234, %v554
      %v556 = vpop.f32.mrb[0].mxu0
      %557 = vmatprep.mubr.bf16.mxu0 %v451
      %558 = vmatmul.mubr.bf16.gmra.mrb[0].mxu0 %v340
      %v559 = vpop.f32.mrb[0].mxu0
      %v560 = vadd.f32 %v234, %v559
      %v561 = vpop.f32.mrb[0].mxu0
      %v562 = vpop.f32.mrb[0].mxu0
      %v563 = vadd.f32 %v234, %v562
      %v564 = vpop.f32.mrb[0].mxu0
      %565 = vmatprep.mubr.bf16.mxu0 %v454
      %566 = vmatmul.mubr.bf16.gmra.mrb[0].mxu0 %v342
      %v567 = vpop.f32.mrb[0].mxu0
      %v568 = vadd.f32 %v234, %v567
      %v569 = vpop.f32.mrb[0].mxu0
      %v570 = vpop.f32.mrb[0].mxu0
      %v571 = vadd.f32 %v234, %v570
      %v572 = vpop.f32.mrb[0].mxu0
      %573 = vmatprep.mubr.bf16.mxu0 %v457
      %574 = vmatmul.mubr.bf16.gmra.mrb[0].mxu0 %v344
      %v575 = vpop.f32.mrb[0].mxu0
      %v576 = vadd.f32 %v234, %v575
      %v577 = vpop.f32.mrb[0].mxu0
      %v578 = vpop.f32.mrb[0].mxu0
      %v579 = vadd.f32 %v234, %v578
      %v580 = vpop.f32.mrb[0].mxu0
      %581 = vmatprep.mubr.bf16.mxu0 %v460
      %582 = vmatmul.mubr.bf16.gmra.mrb[0].mxu0 %v346
      %v583 = vpop.f32.mrb[0].mxu0
      %v584 = vadd.f32 %v234, %v583
      %v585 = vpop.f32.mrb[0].mxu0
      %v586 = vpop.f32.mrb[0].mxu0
      %v587 = vadd.f32 %v234, %v586
      %v588 = vpop.f32.mrb[0].mxu0
      %589 = vmatprep.mubr.bf16.mxu0 %v463
      %590 = vmatmul.mubr.bf16.gmra.mrb[0].mxu0 %v348
      %v591 = vpop.f32.mrb[0].mxu0
      %v592 = vadd.f32 %v234, %v591
      %v593 = vpop.f32.mrb[0].mxu0
      %v594 = vpop.f32.mrb[0].mxu0
      %v595 = vadd.f32 %v234, %v594
      %v596 = vpop.f32.mrb[0].mxu0
      %597 = vmatprep.mubr.bf16.mxu0 %v466
      %598 = vmatmul.mubr.bf16.gmra.mrb[0].mxu0 %v350
      %v599 = vpop.f32.mrb[0].mxu0
      %v600 = vadd.f32 %v234, %v599
      %v601 = vpop.f32.mrb[0].mxu0
      %v602 = vpop.f32.mrb[0].mxu0
      %v603 = vadd.f32 %v234, %v602
      %v604 = vpop.f32.mrb[0].mxu0
      %605 = vmatprep.mubr.bf16.mxu0 %v469
      %606 = vmatmul.mubr.bf16.gmra.mrb[0].mxu0 %v352
      %v607 = vpop.f32.mrb[0].mxu0
      %v608 = vadd.f32 %v234, %v607
      %v609 = vpop.f32.mrb[0].mxu0
      %v610 = vpop.f32.mrb[0].mxu0
      %v611 = vadd.f32 %v234, %v610
      %v612 = vpop.f32.mrb[0].mxu0
      %613 = vmatprep.mubr.bf16.mxu0 %v472
      %614 = vmatmul.mubr.bf16.gmra.mrb[0].mxu0 %v354
      %v615 = vpop.f32.mrb[0].mxu0
      %v616 = vadd.f32 %v234, %v615
      %v617 = vpop.f32.mrb[0].mxu0
      %v618 = vpop.f32.mrb[0].mxu0
      %v619 = vadd.f32 %v234, %v618
      %v620 = vpop.f32.mrb[0].mxu0
      %621 = vmatprep.mubr.bf16.mxu0 %v475
      %622 = vmatmul.mubr.bf16.gmra.mrb[0].mxu0 %v356
      %v623 = vpop.f32.mrb[0].mxu0
      %v624 = vadd.f32 %v234, %v623
      %v625 = vpop.f32.mrb[0].mxu0
      %v626 = vpop.f32.mrb[0].mxu0
      %v627 = vadd.f32 %v234, %v626
      %v628 = vpop.f32.mrb[0].mxu0
      %629 = vmatprep.mubr.bf16.mxu0 %v478
      %630 = vmatmul.mubr.bf16.gmra.mrb[0].mxu0 %v358
      %v631 = vpop.f32.mrb[0].mxu0
      %v632 = vadd.f32 %v234, %v631
      %v633 = vpop.f32.mrb[0].mxu0
      %v634 = vpop.f32.mrb[0].mxu0
      %v635 = vadd.f32 %v234, %v634
      %v636 = vpop.f32.mrb[0].mxu0
      %637 = vmatprep.mubr.bf16.mxu0 %v481
      %638 = vmatmul.mubr.bf16.gmra.mrb[0].mxu0 %v360
      %v639 = vpop.f32.mrb[0].mxu0
      %v640 = vadd.f32 %v234, %v639
      %v641 = vpop.f32.mrb[0].mxu0
      %v642 = vpop.f32.mrb[0].mxu0
      %v643 = vadd.f32 %v234, %v642
      %v644 = vpop.f32.mrb[0].mxu0
      %645 = vmatprep.mubr.bf16.mxu0 %v484
      %646 = vmatmul.mubr.bf16.gmra.mrb[0].mxu0 %v362
      %v647 = vpop.f32.mrb[0].mxu0
      %v648 = vadd.f32 %v234, %v647
      %v649 = vpop.f32.mrb[0].mxu0
      %v650 = vpop.f32.mrb[0].mxu0
      %v651 = vadd.f32 %v234, %v650
      %v652 = vpop.f32.mrb[0].mxu0
      %653 = vdwg.mxu0
      %vm654 = vcmask 261120
      %v655 = vsel %vm654, %v528, 0.0
      %v656 = vsel %vm654, %v531, 0.0
      %v657 = vadd.f32 %v655, %v656
      %v658 = vsel %vm654, %v536, 0.0
      %v659 = vadd.f32 %v657, %v658
      %v660 = vsel %vm654, %v539, 0.0
      %v661 = vadd.f32 %v659, %v660
      %v662 = vsel %vm654, %v544, 0.0
      %v663 = vadd.f32 %v661, %v662
      %v664 = vsel %vm654, %v547, 0.0
      %v665 = vadd.f32 %v663, %v664
      %v666 = vsel %vm654, %v552, 0.0
      %v667 = vadd.f32 %v665, %v666
      %v668 = vsel %vm654, %v555, 0.0
      %v669 = vadd.f32 %v667, %v668
      %v670 = vsel %vm654, %v560, 0.0
      %v671 = vadd.f32 %v669, %v670
      %v672 = vsel %vm654, %v563, 0.0
      %v673 = vadd.f32 %v671, %v672
      %v674 = vsel %vm654, %v568, 0.0
      %v675 = vadd.f32 %v673, %v674
      %v676 = vsel %vm654, %v571, 0.0
      %v677 = vadd.f32 %v675, %v676
      %v678 = vsel %vm654, %v576, 0.0
      %v679 = vadd.f32 %v677, %v678
      %v680 = vsel %vm654, %v579, 0.0
      %v681 = vadd.f32 %v679, %v680
      %v682 = vsel %vm654, %v584, 0.0
      %v683 = vadd.f32 %v681, %v682
      %v684 = vsel %vm654, %v587, 0.0
      %v685 = vadd.f32 %v683, %v684
      %v686 = vsel %vm654, %v592, 0.0
      %v687 = vadd.f32 %v685, %v686
      %v688 = vsel %vm654, %v595, 0.0
      %v689 = vadd.f32 %v687, %v688
      %v690 = vsel %vm654, %v600, 0.0
      %v691 = vadd.f32 %v689, %v690
      %v692 = vsel %vm654, %v603, 0.0
      %v693 = vadd.f32 %v691, %v692
      %v694 = vsel %vm654, %v608, 0.0
      %v695 = vadd.f32 %v693, %v694
      %v696 = vsel %vm654, %v611, 0.0
      %v697 = vadd.f32 %v695, %v696
      %v698 = vsel %vm654, %v616, 0.0
      %v699 = vadd.f32 %v697, %v698
      %v700 = vsel %vm654, %v619, 0.0
      %v701 = vadd.f32 %v699, %v700
      %v702 = vsel %vm654, %v624, 0.0
      %v703 = vadd.f32 %v701, %v702
      %v704 = vsel %vm654, %v627, 0.0
      %v705 = vadd.f32 %v703, %v704
      %v706 = vsel %vm654, %v632, 0.0
      %v707 = vadd.f32 %v705, %v706
      %v708 = vsel %vm654, %v635, 0.0
      %v709 = vadd.f32 %v707, %v708
      %v710 = vsel %vm654, %v640, 0.0
      %v711 = vadd.f32 %v709, %v710
      %v712 = vsel %vm654, %v643, 0.0
      %v713 = vadd.f32 %v711, %v712
      %v714 = vsel %vm654, %v648, 0.0
      %v715 = vadd.f32 %v713, %v714
      %v716 = vsel %vm654, %v651, 0.0
      %v717 = vadd.f32 %v715, %v716
      %v718 = vrot.slane %v717, 4
      %v719 = vadd.f32 %v717, %v718
      %v720 = vrot.slane %v719, 2
      %v721 = vadd.f32 %v719, %v720
      %v722 = vrot.slane %v721, 1
      %v723 = vadd.f32 %v721, %v722
      %v724 = vrcp.pop 256.0
      %v725 = vmul.f32 %v723, %v724
      %v726 = vsub.f32 %v528, %v725
      %v727 = vsub.f32 %v531, %v725
      %v728 = vsub.f32 %v536, %v725
      %v729 = vsub.f32 %v539, %v725
      %v730 = vsub.f32 %v544, %v725
      %v731 = vsub.f32 %v547, %v725
      %v732 = vsub.f32 %v552, %v725
      %v733 = vsub.f32 %v555, %v725
      %v734 = vsub.f32 %v560, %v725
      %v735 = vsub.f32 %v563, %v725
      %v736 = vsub.f32 %v568, %v725
      %v737 = vsub.f32 %v571, %v725
      %v738 = vsub.f32 %v576, %v725
      %v739 = vsub.f32 %v579, %v725
      %v740 = vsub.f32 %v584, %v725
      %v741 = vsub.f32 %v587, %v725
      %v742 = vsub.f32 %v592, %v725
      %v743 = vsub.f32 %v595, %v725
      %v744 = vsub.f32 %v600, %v725
      %v745 = vsub.f32 %v603, %v725
      %v746 = vsub.f32 %v608, %v725
      %v747 = vsub.f32 %v611, %v725
      %v748 = vsub.f32 %v616, %v725
      %v749 = vsub.f32 %v619, %v725
      %v750 = vsub.f32 %v624, %v725
      %v751 = vsub.f32 %v627, %v725
      %v752 = vsub.f32 %v632, %v725
      %v753 = vsub.f32 %v635, %v725
      %v754 = vsub.f32 %v640, %v725
      %v755 = vsub.f32 %v643, %v725
      %v756 = vsub.f32 %v648, %v725
      %v757 = vsub.f32 %v651, %v725
      %v758 = vmul.f32 %v726, %v726
      %v759 = vmul.f32 %v727, %v727
      %v760 = vmul.f32 %v728, %v728
      %v761 = vmul.f32 %v729, %v729
      %v762 = vmul.f32 %v730, %v730
      %v763 = vmul.f32 %v731, %v731
      %v764 = vmul.f32 %v732, %v732
      %v765 = vmul.f32 %v733, %v733
      %v766 = vmul.f32 %v734, %v734
      %v767 = vmul.f32 %v735, %v735
      %v768 = vmul.f32 %v736, %v736
      %v769 = vmul.f32 %v737, %v737
      %v770 = vmul.f32 %v738, %v738
      %v771 = vmul.f32 %v739, %v739
      %v772 = vmul.f32 %v740, %v740
      %v773 = vmul.f32 %v741, %v741
      %v774 = vmul.f32 %v742, %v742
      %v775 = vmul.f32 %v743, %v743
      %v776 = vmul.f32 %v744, %v744
      %v777 = vmul.f32 %v745, %v745
      %v778 = vmul.f32 %v746, %v746
      %v779 = vmul.f32 %v747, %v747
      %v780 = vmul.f32 %v748, %v748
      %v781 = vmul.f32 %v749, %v749
      %v782 = vmul.f32 %v750, %v750
      %v783 = vmul.f32 %v751, %v751
      %v784 = vmul.f32 %v752, %v752
      %v785 = vmul.f32 %v753, %v753
      %v786 = vmul.f32 %v754, %v754
      %v787 = vmul.f32 %v755, %v755
      %v788 = vmul.f32 %v756, %v756
      %v789 = vmul.f32 %v757, %v757
      %v790 = vsel %vm654, %v758, 0.0
      %v791 = vsel %vm654, %v759, 0.0
      %v792 = vadd.f32 %v790, %v791
      %v793 = vsel %vm654, %v760, 0.0
      %v794 = vadd.f32 %v792, %v793
      %v795 = vsel %vm654, %v761, 0.0
      %v796 = vadd.f32 %v794, %v795
      %v797 = vsel %vm654, %v762, 0.0
      %v798 = vadd.f32 %v796, %v797
      %v799 = vsel %vm654, %v763, 0.0
      %v800 = vadd.f32 %v798, %v799
      %v801 = vsel %vm654, %v764, 0.0
      %v802 = vadd.f32 %v800, %v801
      %v803 = vsel %vm654, %v765, 0.0
      %v804 = vadd.f32 %v802, %v803
      %v805 = vsel %vm654, %v766, 0.0
      %v806 = vadd.f32 %v804, %v805
      %v807 = vsel %vm654, %v767, 0.0
      %v808 = vadd.f32 %v806, %v807
      %v809 = vsel %vm654, %v768, 0.0
      %v810 = vadd.f32 %v808, %v809
      %v811 = vsel %vm654, %v769, 0.0
      %v812 = vadd.f32 %v810, %v811
      %v813 = vsel %vm654, %v770, 0.0
      %v814 = vadd.f32 %v812, %v813
      %v815 = vsel %vm654, %v771, 0.0
      %v816 = vadd.f32 %v814, %v815
      %v817 = vsel %vm654, %v772, 0.0
      %v818 = vadd.f32 %v816, %v817
      %v819 = vsel %vm654, %v773, 0.0
      %v820 = vadd.f32 %v818, %v819
      %v821 = vsel %vm654, %v774, 0.0
      %v822 = vadd.f32 %v820, %v821
      %v823 = vsel %vm654, %v775, 0.0
      %v824 = vadd.f32 %v822, %v823
      %v825 = vsel %vm654, %v776, 0.0
      %v826 = vadd.f32 %v824, %v825
      %v827 = vsel %vm654, %v777, 0.0
      %v828 = vadd.f32 %v826, %v827
      %v829 = vsel %vm654, %v778, 0.0
      %v830 = vadd.f32 %v828, %v829
      %v831 = vsel %vm654, %v779, 0.0
      %v832 = vadd.f32 %v830, %v831
      %v833 = vsel %vm654, %v780, 0.0
      %v834 = vadd.f32 %v832, %v833
      %v835 = vsel %vm654, %v781, 0.0
      %v836 = vadd.f32 %v834, %v835
      %v837 = vsel %vm654, %v782, 0.0
      %v838 = vadd.f32 %v836, %v837
      %v839 = vsel %vm654, %v783, 0.0
      %v840 = vadd.f32 %v838, %v839
      %v841 = vsel %vm654, %v784, 0.0
      %v842 = vadd.f32 %v840, %v841
      %v843 = vsel %vm654, %v785, 0.0
      %v844 = vadd.f32 %v842, %v843
      %v845 = vsel %vm654, %v786, 0.0
      %v846 = vadd.f32 %v844, %v845
      %v847 = vsel %vm654, %v787, 0.0
      %v848 = vadd.f32 %v846, %v847
      %v849 = vsel %vm654, %v788, 0.0
      %v850 = vadd.f32 %v848, %v849
      %v851 = vsel %vm654, %v789, 0.0
      %v852 = vadd.f32 %v850, %v851
      %v853 = vrot.slane %v852, 4
      %v854 = vadd.f32 %v852, %v853
      %v855 = vrot.slane %v854, 2
      %v856 = vadd.f32 %v854, %v855
      %v857 = vrot.slane %v856, 1
      %v858 = vadd.f32 %v856, %v857
      %v859 = vmul.f32 %v858, %v724
      %v860 = vadd.f32 %v859, 1e-05
      %v861 = vrsqrt.pop %v860
      %v862 = vmul.f32 %v726, %v861
      %v863 = vmul.f32 %v727, %v861
      %v864 = vmul.f32 %v728, %v861
      %v865 = vmul.f32 %v729, %v861
      %v866 = vmul.f32 %v730, %v861
      %v867 = vmul.f32 %v731, %v861
      %v868 = vmul.f32 %v732, %v861
      %v869 = vmul.f32 %v733, %v861
      %v870 = vmul.f32 %v734, %v861
      %v871 = vmul.f32 %v735, %v861
      %v872 = vmul.f32 %v736, %v861
      %v873 = vmul.f32 %v737, %v861
      %v874 = vmul.f32 %v738, %v861
      %v875 = vmul.f32 %v739, %v861
      %v876 = vmul.f32 %v740, %v861
      %v877 = vmul.f32 %v741, %v861
      %v878 = vmul.f32 %v742, %v861
      %v879 = vmul.f32 %v743, %v861
      %v880 = vmul.f32 %v744, %v861
      %v881 = vmul.f32 %v745, %v861
      %v882 = vmul.f32 %v746, %v861
      %v883 = vmul.f32 %v747, %v861
      %v884 = vmul.f32 %v748, %v861
      %v885 = vmul.f32 %v749, %v861
      %v886 = vmul.f32 %v750, %v861
      %v887 = vmul.f32 %v751, %v861
      %v888 = vmul.f32 %v752, %v861
      %v889 = vmul.f32 %v753, %v861
      %v890 = vmul.f32 %v754, %v861
      %v891 = vmul.f32 %v755, %v861
      %v892 = vmul.f32 %v756, %v861
      %v893 = vmul.f32 %v757, %v861
      %v894 = vmax.f32 %v862, 0.0
      %v895 = vmax.f32 %v863, 0.0
      %v896 = vmax.f32 %v864, 0.0
      %v897 = vmax.f32 %v865, 0.0
      %v898 = vmax.f32 %v866, 0.0
      %v899 = vmax.f32 %v867, 0.0
      %v900 = vmax.f32 %v868, 0.0
      %v901 = vmax.f32 %v869, 0.0
      %v902 = vmax.f32 %v870, 0.0
      %v903 = vmax.f32 %v871, 0.0
      %v904 = vmax.f32 %v872, 0.0
      %v905 = vmax.f32 %v873, 0.0
      %v906 = vmax.f32 %v874, 0.0
      %v907 = vmax.f32 %v875, 0.0
      %v908 = vmax.f32 %v876, 0.0
      %v909 = vmax.f32 %v877, 0.0
      %v910 = vmax.f32 %v878, 0.0
      %v911 = vmax.f32 %v879, 0.0
      %v912 = vmax.f32 %v880, 0.0
      %v913 = vmax.f32 %v881, 0.0
      %v914 = vmax.f32 %v882, 0.0
      %v915 = vmax.f32 %v883, 0.0
      %v916 = vmax.f32 %v884, 0.0
      %v917 = vmax.f32 %v885, 0.0
      %v918 = vmax.f32 %v886, 0.0
      %v919 = vmax.f32 %v887, 0.0
      %v920 = vmax.f32 %v888, 0.0
      %v921 = vmax.f32 %v889, 0.0
      %v922 = vmax.f32 %v890, 0.0
      %v923 = vmax.f32 %v891, 0.0
      %v924 = vmax.f32 %v892, 0.0
      %v925 = vmax.f32 %v893, 0.0
      %926 = vst.msk [vmem:[%s175] sm:$0xff] %vm654, %v894
      %927 = vst.msk [vmem:[%s175 + $0x8] sm:$0xff] %vm654, %v895
      %928 = vst.msk [vmem:[%s175 + $0x10] sm:$0xff] %vm654, %v896
      %929 = vst.msk [vmem:[%s175 + $0x18] sm:$0xff] %vm654, %v897
      %930 = vst.msk [vmem:[%s175 + $0x20] sm:$0xff] %vm654, %v898
      %931 = vst.msk [vmem:[%s175 + $0x28] sm:$0xff] %vm654, %v899
      %932 = vst.msk [vmem:[%s175 + $0x30] sm:$0xff] %vm654, %v900
      %933 = vst.msk [vmem:[%s175 + $0x38] sm:$0xff] %vm654, %v901
      %934 = vst.msk [vmem:[%s175 + $0x40] sm:$0xff] %vm654, %v902
      %935 = vst.msk [vmem:[%s175 + $0x48] sm:$0xff] %vm654, %v903
      %936 = vst.msk [vmem:[%s175 + $0x50] sm:$0xff] %vm654, %v904
      %937 = vst.msk [vmem:[%s175 + $0x58] sm:$0xff] %vm654, %v905
      %938 = vst.msk [vmem:[%s175 + $0x60] sm:$0xff] %vm654, %v906
      %939 = vst.msk [vmem:[%s175 + $0x68] sm:$0xff] %vm654, %v907
      %940 = vst.msk [vmem:[%s175 + $0x70] sm:$0xff] %vm654, %v908
      %941 = vst.msk [vmem:[%s175 + $0x78] sm:$0xff] %vm654, %v909
      %942 = vst.msk [vmem:[%s175 + $0x80] sm:$0xff] %vm654, %v910
      %943 = vst.msk [vmem:[%s175 + $0x88] sm:$0xff] %vm654, %v911
      %944 = vst.msk [vmem:[%s175 + $0x90] sm:$0xff] %vm654, %v912
      %945 = vst.msk [vmem:[%s175 + $0x98] sm:$0xff] %vm654, %v913
      %946 = vst.msk [vmem:[%s175 + $0xa0] sm:$0xff] %vm654, %v914
      %947 = vst.msk [vmem:[%s175 + $0xa8] sm:$0xff] %vm654, %v915
      %948 = vst.msk [vmem:[%s175 + $0xb0] sm:$0xff] %vm654, %v916
      %949 = vst.msk [vmem:[%s175 + $0xb8] sm:$0xff] %vm654, %v917
      %950 = vst.msk [vmem:[%s175 + $0xc0] sm:$0xff] %vm654, %v918
      %951 = vst.msk [vmem:[%s175 + $0xc8] sm:$0xff] %vm654, %v919
      %952 = vst.msk [vmem:[%s175 + $0xd0] sm:$0xff] %vm654, %v920
      %953 = vst.msk [vmem:[%s175 + $0xd8] sm:$0xff] %vm654, %v921
      %954 = vst.msk [vmem:[%s175 + $0xe0] sm:$0xff] %vm654, %v922
      %955 = vst.msk [vmem:[%s175 + $0xe8] sm:$0xff] %vm654, %v923
      %956 = vst.msk [vmem:[%s175 + $0xf0] sm:$0xff] %vm654, %v924
      %957 = vst.msk [vmem:[%s175 + $0xf8] sm:$0xff] %vm654, %v925
      %s958 = smul.u32 32, %s14
      %p959 = scmp.lt.s32.totalorder %s958, 63
      %s960 = scalar_select %p959, %s958, 63
      %s961 = smul.addr %s960, 8
      %s962 = scalar_lea.vmem %s3, %s961
      // Predicated region
      $region33: #{generator_forward.24} parent=31 // pred_check
        %p963 = pneg %p100
      $region34: #{generator_forward.24} parent=31 // pred_check_branch
        %965 = sbr.rel (%p963) target = $region36
      $region35: #{generator_forward.24} parent=31 // pred_region
        %s966 = smul.u32 32, %s14
      $region36: #{generator_forward.24} parent=31 // pred_fallthru
        _
    $region32: #{generator_forward.24} parent=5 // pred_fallthru
      _
    %p967 = scmp.le.s32.totalorder 2, %s9
    // Predicated region
    $region37: #{generator_forward.24} parent=5 // pred_check
      %p968 = pneg %p967
    $region38: #{generator_forward.24} parent=5 // pred_check_branch
      %970 = sbr.rel (%p968) target = $region40
    $region39: #{generator_forward.24} parent=5 // pred_region
      %s971 = ssub.s32 %s9, 2
      // Predicated region
      $region41: #{generator_forward.24} parent=39 // pred_check
        %p972 = pneg %p106
      $region42: #{generator_forward.24} parent=39 // pred_check_branch
        %974 = sbr.rel (%p972) target = $region44
      $region43: #{generator_forward.24} parent=39 // pred_region
        %s975 = smul.u32 32, %s15
        %p976 = scmp.lt.s32.totalorder %s975, 63
        %s977 = scalar_select %p976, %s975, 63
        %s978 = smul.addr %s977, 8
        %s979 = scalar_lea.vmem %s3, %s978
      $region44: #{generator_forward.24} parent=39 // pred_fallthru
        _
    $region40: #{generator_forward.24} parent=5 // pred_fallthru
      _
  $region6: #{generator_forward.24} parent=0 // loop_footer
    %s13 = sadd.s32 1, %s9
  $region7: #{generator_forward.24} parent=0 // loop_footer_branch
    %8 = sbr.rel target = $region3
  $region8: #{generator_forward.24} parent=0 // loop_exit
    _

// kernel: generator_forward.25
$region0: #{generator_forward.25}
  #allocation0 [shape = 'u32[]', space=smem, size = 0x4, offset = 0x4, fixed_abs, tag = 'smem constant byte address 0x4 - core index']
  #allocation1 [shape = 'u32[144,128]{1,0:T(1,128)}', space=vmem, size = 0x12000, scoped, tag = 'internal scratch']
  %s0 = inlined_call_operand.vmem [shape: bf16[128,288], index: 0, kind: input, shape index: {}]
  %s1 = inlined_call_operand.vmem [shape: bf16[288,64], index: 1, kind: input, shape index: {}]
  %s2 = inlined_call_operand.vmem [shape: f32[1,64], index: 2, kind: input, shape index: {}]
  %s3 = inlined_call_operand.vmem [shape: f32[128,64], index: 3, kind: output, shape index: {}]
  %s4 = sld [smem:[#allocation0]]
  $region45: #{generator_forward.25} parent=0
    _
  %s6 = ssub.s32 1, %s4
  %s7 = scalar_select 0, %s6, %s4
  loop: start=0, step=1, limit=4
  $region2: #{generator_forward.25} parent=0 // loop_pre_header
    _
  $region3: #{generator_forward.25} parent=0 // loop_header
    %s9 = sphi 0, %s13
    %p10 = scmp.ge.s32.totalorder %s9, 4
    %s19 = sphi 0, %s21
    %s22 = sphi 0, %s19
    %s23 = sphi 0, %s22
    %s39 = sphi 0, %s23
    %s43 = sphi 0, %s43
    %s45 = sphi 0, %s43
    %s46 = sphi 0, %s45
    %s60 = sphi 0, %s46
    %s64 = sphi 0, %s64
    %s66 = sphi 0, %s64
    %s67 = sphi 0, %s66
    %s81 = sphi 0, %s67
    %s87 = sphi 0, %s89
    %s90 = sphi 0, %s87
    %s91 = sphi 0, %s90
    %s107 = sphi 0, %s91
  $region4: #{generator_forward.25} parent=0 // loop_header_branch
    %12 = sbr.rel (%p10) target = $region8
  $region5: #{generator_forward.25} parent=0 // loop_body
    %s14 = ssub.s32 %s9, 1
    %s15 = ssub.s32 %s9, 2
    %s16 = sadd.s32 %s9, 1
    %s17 = ssub.s32 %s9, %s16
    %p18 = scmp.eq.s32.totalorder %s17, 0
    %s20 = sadd.s32 %s19, 1
    %s21 = scalar_select %p18, %s19, %s20
    %p24 = pneg %p18
    %p25 = scmp.eq.s32.totalorder %s9, 1
    %p26 = por %p24, %p25
    %p27 = scmp.ne.s32.totalorder %s19, %s22
    %p28 = scmp.eq.s32.totalorder %s9, 0
    %p29 = por %p27, %p28
    %p30 = scmp.ne.s32.totalorder %s19, %s22
    %p31 = scmp.eq.s32.totalorder %s14, 1
    %p32 = por %p30, %p31
    %p33 = scmp.ne.s32.totalorder %s22, %s23
    %p34 = scmp.eq.s32.totalorder %s14, 0
    %p35 = por %p33, %p34
    %p36 = scmp.ne.s32.totalorder %s22, %s23
    %p37 = scmp.eq.s32.totalorder %s15, 1
    %p38 = por %p36, %p37
    %p40 = scmp.ne.s32.totalorder %s23, %s39
    %p41 = scmp.eq.s32.totalorder %s15, 0
    %p42 = por %p40, %p41
    %s44 = sadd.s32 %s43, 1
    %p47 = scmp.eq.s32.totalorder %s9, 1
    %p48 = scmp.ne.s32.totalorder %s43, %s45
    %p49 = scmp.eq.s32.totalorder %s9, 0
    %p50 = por %p48, %p49
    %p51 = scmp.ne.s32.totalorder %s43, %s45
    %p52 = scmp.eq.s32.totalorder %s14, 1
    %p53 = por %p51, %p52
    %p54 = scmp.ne.s32.totalorder %s45, %s46
    %p55 = scmp.eq.s32.totalorder %s14, 0
    %p56 = por %p54, %p55
    %p57 = scmp.ne.s32.totalorder %s45, %s46
    %p58 = scmp.eq.s32.totalorder %s15, 1
    %p59 = por %p57, %p58
    %p61 = scmp.ne.s32.totalorder %s46, %s60
    %p62 = scmp.eq.s32.totalorder %s15, 0
    %p63 = por %p61, %p62
    %s65 = sadd.s32 %s64, 1
    %p68 = scmp.eq.s32.totalorder %s9, 1
    %p69 = scmp.ne.s32.totalorder %s64, %s66
    %p70 = scmp.eq.s32.totalorder %s9, 0
    %p71 = por %p69, %p70
    %p72 = scmp.ne.s32.totalorder %s64, %s66
    %p73 = scmp.eq.s32.totalorder %s14, 1
    %p74 = por %p72, %p73
    %p75 = scmp.ne.s32.totalorder %s66, %s67
    %p76 = scmp.eq.s32.totalorder %s14, 0
    %p77 = por %p75, %p76
    %p78 = scmp.ne.s32.totalorder %s66, %s67
    %p79 = scmp.eq.s32.totalorder %s15, 1
    %p80 = por %p78, %p79
    %p82 = scmp.ne.s32.totalorder %s67, %s81
    %p83 = scmp.eq.s32.totalorder %s15, 0
    %p84 = por %p82, %p83
    %s85 = ssub.s32 %s9, %s16
    %p86 = scmp.eq.s32.totalorder %s85, 0
    %s88 = sadd.s32 %s87, 1
    %s89 = scalar_select %p86, %s87, %s88
    %p92 = pneg %p86
    %p93 = scmp.eq.s32.totalorder %s9, 1
    %p94 = por %p92, %p93
    %p95 = scmp.ne.s32.totalorder %s87, %s90
    %p96 = scmp.eq.s32.totalorder %s9, 0
    %p97 = por %p95, %p96
    %p98 = scmp.ne.s32.totalorder %s87, %s90
    %p99 = scmp.eq.s32.totalorder %s14, 1
    %p100 = por %p98, %p99
    %p101 = scmp.ne.s32.totalorder %s90, %s91
    %p102 = scmp.eq.s32.totalorder %s14, 0
    %p103 = por %p101, %p102
    %p104 = scmp.ne.s32.totalorder %s90, %s91
    %p105 = scmp.eq.s32.totalorder %s15, 1
    %p106 = por %p104, %p105
    %p108 = scmp.ne.s32.totalorder %s91, %s107
    %p109 = scmp.eq.s32.totalorder %s15, 0
    %p110 = por %p108, %p109
    %p111 = scmp.le.s32.totalorder 1, %s9
    %p112 = scmp.lt.s32.totalorder %s9, 3
    %p113 = pnand %p111, %p112
    %p114 = pneg %p113
    // Predicated region
    $region9: #{generator_forward.25} parent=5 // pred_check
      _
    $region10: #{generator_forward.25} parent=5 // pred_check_branch
      %116 = sbr.rel (%p113) target = $region12
    $region11: #{generator_forward.25} parent=5 // pred_region
      %s117 = ssub.s32 %s9, 1
      // Predicated region
      $region13: #{generator_forward.25} parent=11 // pred_check
        %p118 = pneg %p56
      $region14: #{generator_forward.25} parent=11 // pred_check_branch
        %120 = sbr.rel (%p118) target = $region16
      $region15: #{generator_forward.25} parent=11 // pred_region
        _
      $region16: #{generator_forward.25} parent=11 // pred_fallthru
        _
      // Predicated region
      $region17: #{generator_forward.25} parent=11 // pred_check
        %p121 = pneg %p77
      $region18: #{generator_forward.25} parent=11 // pred_check_branch
        %123 = sbr.rel (%p121) target = $region20
      $region19: #{generator_forward.25} parent=11 // pred_region
        _
      $region20: #{generator_forward.25} parent=11 // pred_fallthru
        _
    $region12: #{generator_forward.25} parent=5 // pred_fallthru
      _
    %p124 = scmp.lt.s32.totalorder %s9, 2
    // Predicated region
    $region21: #{generator_forward.25} parent=5 // pred_check
      %p125 = pneg %p124
    $region22: #{generator_forward.25} parent=5 // pred_check_branch
      %127 = sbr.rel (%p125) target = $region24
    $region23: #{generator_forward.25} parent=5 // pred_region
      // Predicated region
      $region25: #{generator_forward.25} parent=23 // pred_check
        %p128 = pneg %p29
      $region26: #{generator_forward.25} parent=23 // pred_check_branch
        %130 = sbr.rel (%p128) target = $region28
      $region27: #{generator_forward.25} parent=23 // pred_region
        %s131 = smul.u32 8, %s9
        %p132 = scmp.lt.s32.totalorder %s131, 15
        %s133 = scalar_select %p132, %s131, 15
        %s134 = smul.addr %s133, 3
        %s135 = smul.addr %s134, 4
        %s136 = scalar_lea.vmem %s0, %s135
        %s137 = smul.u32 8, %s9
      $region28: #{generator_forward.25} parent=23 // pred_fallthru
        _
    $region24: #{generator_forward.25} parent=5 // pred_fallthru
      _
    %p138 = scmp.le.s32.totalorder 1, %s9
    %p139 = scmp.lt.s32.totalorder %s9, 3
    %p140 = pnand %p138, %p139
    %p141 = pneg %p140
    // Predicated region
    $region29: #{generator_forward.25} parent=5 // pred_check
      _
    $region30: #{generator_forward.25} parent=5 // pred_check_branch
      %143 = sbr.rel (%p140) target = $region32
    $region31: #{generator_forward.25} parent=5 // pred_region
      %s144 = ssub.s32 %s9, 1
      %s145 = smul.u32 8, %s14
      %p146 = scmp.lt.s32.totalorder %s145, 15
      %s147 = scalar_select %p146, %s145, 15
      %s148 = smul.addr %s147, 3
      %s149 = smul.addr %s148, 4
      %s150 = scalar_lea.vmem %s0, %s149
      %p151 = pneg %p35
      %p152 = pneg %p32
      %p153 = pneg %p56
      %p154 = pneg %p53
      %p155 = pneg %p77
      %p156 = pneg %p74
      %p157 = pneg %p103
      %p158 = pneg %p100
      %s159 = smul.u32 8, %s14
      %p160 = scmp.lt.s32.totalorder %s159, 15
      %s161 = scalar_select %p160, %s159, 15
      %s162 = smul.addr %s161, 8
      %s163 = scalar_lea.vmem %s3, %s162
      %s164 = smul.u32 8, %s14
      %p165 = scmp.lt.s32.totalorder %s164, 15
      %s166 = scalar_select %p165, %s164, 15
      %s167 = smul.addr %s166, 3
      %s168 = smul.addr %s167, 4
      %s169 = scalar_lea.vmem %s0, %s168
      %s170 = smul.u32 8, %s14
      %s171 = smul.u32 8, %s14
      %p172 = scmp.lt.s32.totalorder %s171, 15
      %s173 = scalar_select %p172, %s171, 15
      %s174 = smul.addr %s173, 8
      %s175 = scalar_lea.vmem %s3, %s174
      %s176 = smul.u32 8, %s14
      %v178 = vld [vmem:[%s169] sm:$0xff]
      %v179 = vld [vmem:[%s169 + $0x8] sm:$0xf]
      %v180 = vld [vmem:[%s169 + $0xc] sm:$0xff]
      %v181 = vld [vmem:[%s169 + $0x14] sm:$0xf]
      %v182 = vld [vmem:[%s169 + $0x18] sm:$0xff]
      %v183 = vld [vmem:[%s169 + $0x20] sm:$0xf]
      %v184 = vld [vmem:[%s169 + $0x24] sm:$0xff]
      %v185 = vld [vmem:[%s169 + $0x2c] sm:$0xf]
      %v186 = vld [vmem:[%s169 + $0x30] sm:$0xff]
      %v187 = vld [vmem:[%s169 + $0x38] sm:$0xf]
      %v188 = vld [vmem:[%s169 + $0x3c] sm:$0xff]
      %v189 = vld [vmem:[%s169 + $0x44] sm:$0xf]
      %v190 = vld [vmem:[%s169 + $0x48] sm:$0xff]
      %v191 = vld [vmem:[%s169 + $0x50] sm:$0xf]
      %v192 = vld [vmem:[%s169 + $0x54] sm:$0xff]
      %v193 = vld [vmem:[%s169 + $0x5c] sm:$0xf]
      %v194 = vld [vmem:[%s1] sm:$0xf]
      %v195 = vld [vmem:[%s1 + $0x4] sm:$0xf]
      %v196 = vld [vmem:[%s1 + $0x8] sm:$0xf]
      %v197 = vld [vmem:[%s1 + $0xc] sm:$0xf]
      %v198 = vld [vmem:[%s1 + $0x10] sm:$0xf]
      %v199 = vld [vmem:[%s1 + $0x14] sm:$0xf]
      %v200 = vld [vmem:[%s1 + $0x18] sm:$0xf]
      %v201 = vld [vmem:[%s1 + $0x1c] sm:$0xf]
      %v202 = vld [vmem:[%s1 + $0x20] sm:$0xf]
      %v203 = vld [vmem:[%s1 + $0x24] sm:$0xf]
      %v204 = vld [vmem:[%s1 + $0x28] sm:$0xf]
      %v205 = vld [vmem:[%s1 + $0x2c] sm:$0xf]
      %v206 = vld [vmem:[%s1 + $0x30] sm:$0xf]
      %v207 = vld [vmem:[%s1 + $0x34] sm:$0xf]
      %v208 = vld [vmem:[%s1 + $0x38] sm:$0xf]
      %v209 = vld [vmem:[%s1 + $0x3c] sm:$0xf]
      %v210 = vld [vmem:[%s1 + $0x40] sm:$0xf]
      %v211 = vld [vmem:[%s1 + $0x44] sm:$0xf]
      %v212 = vld [vmem:[%s1 + $0x48] sm:$0xf]
      %v213 = vld [vmem:[%s1 + $0x4c] sm:$0xf]
      %v214 = vld [vmem:[%s1 + $0x50] sm:$0xf]
      %v215 = vld [vmem:[%s1 + $0x54] sm:$0xf]
      %v216 = vld [vmem:[%s1 + $0x58] sm:$0xf]
      %v217 = vld [vmem:[%s1 + $0x5c] sm:$0xf]
      %v218 = vld [vmem:[%s1 + $0x60] sm:$0xf]
      %v219 = vld [vmem:[%s1 + $0x64] sm:$0xf]
      %v220 = vld [vmem:[%s1 + $0x68] sm:$0xf]
      %v221 = vld [vmem:[%s1 + $0x6c] sm:$0xf]
      %v222 = vld [vmem:[%s1 + $0x70] sm:$0xf]
      %v223 = vld [vmem:[%s1 + $0x74] sm:$0xf]
      %v224 = vld [vmem:[%s1 + $0x78] sm:$0xf]
      %v225 = vld [vmem:[%s1 + $0x7c] sm:$0xf]
      %v226 = vld [vmem:[%s1 + $0x80] sm:$0xf]
      %v227 = vld [vmem:[%s1 + $0x84] sm:$0xf]
      %v228 = vld [vmem:[%s1 + $0x88] sm:$0xf]
      %v229 = vld [vmem:[%s1 + $0x8c] sm:$0xf]
      %v230 = vld [vmem:[%s2] sm:$0x1]
      %v232 = vlaneseq
      %v233 = vshrl.u32 %v232, 7
      %v234 = vsub.s32 0, %v233
      %v235 = vrot.slane %v230, %v234
      %v253 = vunpack.c.l.b16 %v178
      %v254 = vunpack.c.h.b16 %v178
      %v255 = vunpack.c.l.b16 %v179
      %v256 = vunpack.c.l.b16 %v180
      %v257 = vunpack.c.h.b16 %v180
      %v258 = vunpack.c.l.b16 %v181
      %v259 = vunpack.c.l.b16 %v182
      %v260 = vunpack.c.h.b16 %v182
      %v261 = vunpack.c.l.b16 %v183
      %v262 = vunpack.c.l.b16 %v184
      %v263 = vunpack.c.h.b16 %v184
      %v264 = vunpack.c.l.b16 %v185
      %v265 = vunpack.c.l.b16 %v186
      %v266 = vunpack.c.h.b16 %v186
      %v267 = vunpack.c.l.b16 %v187
      %v268 = vunpack.c.l.b16 %v188
      %v269 = vunpack.c.h.b16 %v188
      %v270 = vunpack.c.l.b16 %v189
      %v271 = vunpack.c.l.b16 %v190
      %v272 = vunpack.c.h.b16 %v190
      %v273 = vunpack.c.l.b16 %v191
      %v274 = vunpack.c.l.b16 %v192
      %v275 = vunpack.c.h.b16 %v192
      %v276 = vunpack.c.l.b16 %v193
      %v277 = vpack.c.b16 %v256, %v253
      %v278 = vpack.c.b16 %v257, %v254
      %v279 = vpack.c.b16 %v258, %v255
      %v280 = vpack.c.b16 %v262, %v259
      %v281 = vpack.c.b16 %v263, %v260
      %v282 = vpack.c.b16 %v264, %v261
      %v283 = vpack.c.b16 %v268, %v265
      %v284 = vpack.c.b16 %v269, %v266
      %v285 = vpack.c.b16 %v270, %v267
      %v286 = vpack.c.b16 %v274, %v271
      %v287 = vpack.c.b16 %v275, %v272
      %v288 = vpack.c.b16 %v276, %v273
      %v333 = vunpack.c.l.b16 %v194
      %v334 = vunpack.c.l.b16 %v195
      %v335 = vunpack.c.l.b16 %v196
      %v336 = vunpack.c.l.b16 %v197
      %v337 = vunpack.c.l.b16 %v198
      %v338 = vunpack.c.l.b16 %v199
      %v339 = vunpack.c.l.b16 %v200
      %v340 = vunpack.c.l.b16 %v201
      %v341 = vunpack.c.l.b16 %v202
      %v342 = vunpack.c.l.b16 %v203
      %v343 = vunpack.c.l.b16 %v204
      %v344 = vunpack.c.l.b16 %v205
      %v345 = vunpack.c.l.b16 %v206
      %v346 = vunpack.c.l.b16 %v207
      %v347 = vunpack.c.l.b16 %v208
      %v348 = vunpack.c.l.b16 %v209
      %v349 = vunpack.c.l.b16 %v210
      %v350 = vunpack.c.l.b16 %v211
      %v351 = vunpack.c.l.b16 %v212
      %v352 = vunpack.c.l.b16 %v213
      %v353 = vunpack.c.l.b16 %v214
      %v354 = vunpack.c.l.b16 %v215
      %v355 = vunpack.c.l.b16 %v216
      %v356 = vunpack.c.l.b16 %v217
      %v357 = vunpack.c.l.b16 %v218
      %v358 = vunpack.c.l.b16 %v219
      %v359 = vunpack.c.l.b16 %v220
      %v360 = vunpack.c.l.b16 %v221
      %v361 = vunpack.c.l.b16 %v222
      %v362 = vunpack.c.l.b16 %v223
      %v363 = vunpack.c.l.b16 %v224
      %v364 = vunpack.c.l.b16 %v225
      %v365 = vunpack.c.l.b16 %v226
      %v366 = vunpack.c.l.b16 %v227
      %v367 = vunpack.c.l.b16 %v228
      %v368 = vunpack.c.l.b16 %v229
      %v369 = vpack.c.b16 %v334, %v333
      %v370 = vpack.c.b16 %v336, %v335
      %v371 = vpack.c.b16 %v338, %v337
      %v372 = vpack.c.b16 %v340, %v339
      %v373 = vpack.c.b16 %v342, %v341
      %v374 = vpack.c.b16 %v344, %v343
      %v375 = vpack.c.b16 %v346, %v345
      %v376 = vpack.c.b16 %v348, %v347
      %v377 = vpack.c.b16 %v350, %v349
      %v378 = vpack.c.b16 %v352, %v351
      %v379 = vpack.c.b16 %v354, %v353
      %v380 = vpack.c.b16 %v356, %v355
      %v381 = vpack.c.b16 %v358, %v357
      %v382 = vpack.c.b16 %v360, %v359
      %v383 = vpack.c.b16 %v362, %v361
      %v384 = vpack.c.b16 %v364, %v363
      %v385 = vpack.c.b16 %v366, %v365
      %v386 = vpack.c.b16 %v368, %v367
      %vm405 = vcmask 261120
      %v407 = vsel %vm405, %v279, 0
      %v410 = vsel %vm405, %v282, 0
      %v413 = vsel %vm405, %v285, 0
      %v416 = vsel %vm405, %v288, 0
      %418 = vmatprep.subr.bf16.mxu0 0
      %419 = vmatpush1.bf16.msra.mxu0 %v369
      %420 = vmatprep.subr.bf16.mxu0 0
      %421 = vmatpush1.bf16.msra.mxu0 %v370
      %422 = vmatprep.subr.bf16.mxu0 0
      %423 = vmatpush1.bf16.msra.mxu0 %v371
      %424 = vmatprep.subr.bf16.mxu0 0
      %425 = vmatpush1.bf16.msra.mxu0 %v372
      %426 = vmatprep.subr.bf16.mxu0 0
      %427 = vmatpush1.bf16.msra.mxu0 %v373
      %428 = vmatprep.subr.bf16.mxu0 0
      %429 = vmatpush1.bf16.msra.mxu0 %v374
      %430 = vmatprep.subr.bf16.mxu0 0
      %431 = vmatpush1.bf16.msra.mxu0 %v375
      %432 = vmatprep.subr.bf16.mxu0 0
      %433 = vmatpush1.bf16.msra.mxu0 %v376
      %434 = vmatprep.subr.bf16.mxu0 0
      %435 = vmatpush1.bf16.msra.mxu0 %v377
      %436 = vmatprep.subr.bf16.mxu0 0
      %437 = vmatpush1.bf16.msra.mxu0 %v378
      %438 = vmatprep.subr.bf16.mxu0 0
      %439 = vmatpush1.bf16.msra.mxu0 %v379
      %440 = vmatprep.subr.bf16.mxu0 0
      %441 = vmatpush1.bf16.msra.mxu0 %v380
      %442 = vmatprep.subr.bf16.mxu0 0
      %443 = vmatpush1.bf16.msra.mxu0 %v381
      %444 = vmatprep.subr.bf16.mxu0 0
      %445 = vmatpush1.bf16.msra.mxu0 %v382
      %446 = vmatprep.subr.bf16.mxu0 0
      %447 = vmatpush1.bf16.msra.mxu0 %v383
      %448 = vmatprep.subr.bf16.mxu0 0
      %449 = vmatpush1.bf16.msra.mxu0 %v384
      %450 = vmatprep.mubr.bf16.mxu0 %v278
      %451 = vmatmul.mubr.bf16.gmra.mrb[0].mxu0 %v277
      %v452 = vpop.f32.mrb[0].mxu0
      %v453 = vadd.f32 %v235, %v452
      %v454 = vpop.f32.mrb[0].mxu0
      %v455 = vpop.f32.mrb[0].mxu0
      %v456 = vadd.f32 %v235, %v455
      %v457 = vpop.f32.mrb[0].mxu0
      %458 = vmatprep.mubr.bf16.mxu0 %v281
      %459 = vmatmul.mubr.bf16.gmra.mrb[0].mxu0 %v280
      %v460 = vpop.f32.mrb[0].mxu0
      %v461 = vadd.f32 %v235, %v460
      %v462 = vpop.f32.mrb[0].mxu0
      %v463 = vpop.f32.mrb[0].mxu0
      %v464 = vadd.f32 %v235, %v463
      %v465 = vpop.f32.mrb[0].mxu0
      %466 = vmatprep.mubr.bf16.mxu0 %v284
      %467 = vmatmul.mubr.bf16.gmra.mrb[0].mxu0 %v283
      %v468 = vpop.f32.mrb[0].mxu0
      %v469 = vadd.f32 %v235, %v468
      %v470 = vpop.f32.mrb[0].mxu0
      %v471 = vpop.f32.mrb[0].mxu0
      %v472 = vadd.f32 %v235, %v471
      %v473 = vpop.f32.mrb[0].mxu0
      %474 = vmatprep.mubr.bf16.mxu0 %v287
      %475 = vmatmul.mubr.bf16.gmra.mrb[0].mxu0 %v286
      %v476 = vpop.f32.mrb[0].mxu0
      %v477 = vadd.f32 %v235, %v476
      %v478 = vpop.f32.mrb[0].mxu0
      %v479 = vpop.f32.mrb[0].mxu0
      %v480 = vadd.f32 %v235, %v479
      %v481 = vpop.f32.mrb[0].mxu0
      %482 = vdwg.mxu0
      %483 = vmatprep.subr.bf16.mxu0 0
      %484 = vmatpush1.bf16.msra.mxu0 %v385
      %485 = vmatprep.subr.bf16.mxu0 0
      %486 = vmatpush1.bf16.msra.mxu0 %v386
      %487 = vmatprep.subr.bf16.mxu0 0
      %488 = vmatpush1.bf16.msra.mxu0 0
      %489 = vmatprep.subr.bf16.mxu0 0
      %490 = vmatpush1.bf16.msra.mxu0 0
      %491 = vmatprep.subr.bf16.mxu0 0
      %492 = vmatpush1.bf16.msra.mxu0 0
      %493 = vmatprep.subr.bf16.mxu0 0
      %494 = vmatpush1.bf16.msra.mxu0 0
      %495 = vmatprep.subr.bf16.mxu0 0
      %496 = vmatpush1.bf16.msra.mxu0 0
      %497 = vmatprep.subr.bf16.mxu0 0
      %498 = vmatpush1.bf16.msra.mxu0 0
      %499 = vmatprep.subr.bf16.mxu0 0
      %500 = vmatpush1.bf16.msra.mxu0 0
      %501 = vmatprep.subr.bf16.mxu0 0
      %502 = vmatpush1.bf16.msra.mxu0 0
      %503 = vmatprep.subr.bf16.mxu0 0
      %504 = vmatpush1.bf16.msra.mxu0 0
      %505 = vmatprep.subr.bf16.mxu0 0
      %506 = vmatpush1.bf16.msra.mxu0 0
      %507 = vmatprep.subr.bf16.mxu0 0
      %508 = vmatpush1.bf16.msra.mxu0 0
      %509 = vmatprep.subr.bf16.mxu0 0
      %510 = vmatpush1.bf16.msra.mxu0 0
      %511 = vmatprep.subr.bf16.mxu0 0
      %512 = vmatpush1.bf16.msra.mxu0 0
      %513 = vmatprep.subr.bf16.mxu0 0
      %514 = vmatpush1.bf16.msra.mxu0 0
      %515 = vmatprep.mubr.bf16.mxu0 0
      %516 = vmatmul.mubr.bf16.gmra.mrb[0].mxu0 %v407
      %v517 = vpop.f32.mrb[0].mxu0
      %v518 = vadd.f32 %v453, %v517
      %v519 = vpop.f32.mrb[0].mxu0
      %v520 = vpop.f32.mrb[0].mxu0
      %v521 = vadd.f32 %v456, %v520
      %v522 = vpop.f32.mrb[0].mxu0
      %523 = vmatprep.mubr.bf16.mxu0 0
      %524 = vmatmul.mubr.bf16.gmra.mrb[0].mxu0 %v410
      %v525 = vpop.f32.mrb[0].mxu0
      %v526 = vadd.f32 %v461, %v525
      %v527 = vpop.f32.mrb[0].mxu0
      %v528 = vpop.f32.mrb[0].mxu0
      %v529 = vadd.f32 %v464, %v528
      %v530 = vpop.f32.mrb[0].mxu0
      %531 = vmatprep.mubr.bf16.mxu0 0
      %532 = vmatmul.mubr.bf16.gmra.mrb[0].mxu0 %v413
      %v533 = vpop.f32.mrb[0].mxu0
      %v534 = vadd.f32 %v469, %v533
      %v535 = vpop.f32.mrb[0].mxu0
      %v536 = vpop.f32.mrb[0].mxu0
      %v537 = vadd.f32 %v472, %v536
      %v538 = vpop.f32.mrb[0].mxu0
      %539 = vmatprep.mubr.bf16.mxu0 0
      %540 = vmatmul.mubr.bf16.gmra.mrb[0].mxu0 %v416
      %v541 = vpop.f32.mrb[0].mxu0
      %v542 = vadd.f32 %v477, %v541
      %v543 = vpop.f32.mrb[0].mxu0
      %v544 = vpop.f32.mrb[0].mxu0
      %v545 = vadd.f32 %v480, %v544
      %v546 = vpop.f32.mrb[0].mxu0
      %547 = vdwg.mxu0
      %vm548 = vcmask 523264
      %v549 = vsel %vm548, %v518, 0.0
      %v550 = vsel %vm548, %v521, 0.0
      %v551 = vadd.f32 %v549, %v550
      %v552 = vsel %vm548, %v526, 0.0
      %v553 = vadd.f32 %v551, %v552
      %v554 = vsel %vm548, %v529, 0.0
      %v555 = vadd.f32 %v553, %v554
      %v556 = vsel %vm548, %v534, 0.0
      %v557 = vadd.f32 %v555, %v556
      %v558 = vsel %vm548, %v537, 0.0
      %v559 = vadd.f32 %v557, %v558
      %v560 = vsel %vm548, %v542, 0.0
      %v561 = vadd.f32 %v559, %v560
      %v562 = vsel %vm548, %v545, 0.0
      %v563 = vadd.f32 %v561, %v562
      %v564 = vrot.slane %v563, 4
      %v565 = vadd.f32 %v563, %v564
      %v566 = vrot.slane %v565, 2
      %v567 = vadd.f32 %v565, %v566
      %v568 = vrot.slane %v567, 1
      %v569 = vadd.f32 %v567, %v568
      %v570 = vrcp.pop 64.0
      %v571 = vmul.f32 %v569, %v570
      %v572 = vsub.f32 %v518, %v571
      %v573 = vsub.f32 %v521, %v571
      %v574 = vsub.f32 %v526, %v571
      %v575 = vsub.f32 %v529, %v571
      %v576 = vsub.f32 %v534, %v571
      %v577 = vsub.f32 %v537, %v571
      %v578 = vsub.f32 %v542, %v571
      %v579 = vsub.f32 %v545, %v571
      %v580 = vmul.f32 %v572, %v572
      %v581 = vmul.f32 %v573, %v573
      %v582 = vmul.f32 %v574, %v574
      %v583 = vmul.f32 %v575, %v575
      %v584 = vmul.f32 %v576, %v576
      %v585 = vmul.f32 %v577, %v577
      %v586 = vmul.f32 %v578, %v578
      %v587 = vmul.f32 %v579, %v579
      %v588 = vsel %vm548, %v580, 0.0
      %v589 = vsel %vm548, %v581, 0.0
      %v590 = vadd.f32 %v588, %v589
      %v591 = vsel %vm548, %v582, 0.0
      %v592 = vadd.f32 %v590, %v591
      %v593 = vsel %vm548, %v583, 0.0
      %v594 = vadd.f32 %v592, %v593
      %v595 = vsel %vm548, %v584, 0.0
      %v596 = vadd.f32 %v594, %v595
      %v597 = vsel %vm548, %v585, 0.0
      %v598 = vadd.f32 %v596, %v597
      %v599 = vsel %vm548, %v586, 0.0
      %v600 = vadd.f32 %v598, %v599
      %v601 = vsel %vm548, %v587, 0.0
      %v602 = vadd.f32 %v600, %v601
      %v603 = vrot.slane %v602, 4
      %v604 = vadd.f32 %v602, %v603
      %v605 = vrot.slane %v604, 2
      %v606 = vadd.f32 %v604, %v605
      %v607 = vrot.slane %v606, 1
      %v608 = vadd.f32 %v606, %v607
      %v609 = vmul.f32 %v608, %v570
      %v610 = vadd.f32 %v609, 1e-05
      %v611 = vrsqrt.pop %v610
      %v612 = vmul.f32 %v572, %v611
      %v613 = vmul.f32 %v573, %v611
      %v614 = vmul.f32 %v574, %v611
      %v615 = vmul.f32 %v575, %v611
      %v616 = vmul.f32 %v576, %v611
      %v617 = vmul.f32 %v577, %v611
      %v618 = vmul.f32 %v578, %v611
      %v619 = vmul.f32 %v579, %v611
      %v620 = vmax.f32 %v612, 0.0
      %v621 = vmax.f32 %v613, 0.0
      %v622 = vmax.f32 %v614, 0.0
      %v623 = vmax.f32 %v615, 0.0
      %v624 = vmax.f32 %v616, 0.0
      %v625 = vmax.f32 %v617, 0.0
      %v626 = vmax.f32 %v618, 0.0
      %v627 = vmax.f32 %v619, 0.0
      %628 = vst.msk [vmem:[%s175] sm:$0xff] %vm548, %v620
      %629 = vst.msk [vmem:[%s175 + $0x8] sm:$0xff] %vm548, %v621
      %630 = vst.msk [vmem:[%s175 + $0x10] sm:$0xff] %vm548, %v622
      %631 = vst.msk [vmem:[%s175 + $0x18] sm:$0xff] %vm548, %v623
      %632 = vst.msk [vmem:[%s175 + $0x20] sm:$0xff] %vm548, %v624
      %633 = vst.msk [vmem:[%s175 + $0x28] sm:$0xff] %vm548, %v625
      %634 = vst.msk [vmem:[%s175 + $0x30] sm:$0xff] %vm548, %v626
      %635 = vst.msk [vmem:[%s175 + $0x38] sm:$0xff] %vm548, %v627
      %s636 = smul.u32 8, %s14
      %p637 = scmp.lt.s32.totalorder %s636, 15
      %s638 = scalar_select %p637, %s636, 15
      %s639 = smul.addr %s638, 8
      %s640 = scalar_lea.vmem %s3, %s639
      // Predicated region
      $region33: #{generator_forward.25} parent=31 // pred_check
        %p641 = pneg %p100
      $region34: #{generator_forward.25} parent=31 // pred_check_branch
        %643 = sbr.rel (%p641) target = $region36
      $region35: #{generator_forward.25} parent=31 // pred_region
        %s644 = smul.u32 8, %s14
      $region36: #{generator_forward.25} parent=31 // pred_fallthru
        _
    $region32: #{generator_forward.25} parent=5 // pred_fallthru
      _
    %p645 = scmp.le.s32.totalorder 2, %s9
    // Predicated region
    $region37: #{generator_forward.25} parent=5 // pred_check
      %p646 = pneg %p645
    $region38: #{generator_forward.25} parent=5 // pred_check_branch
      %648 = sbr.rel (%p646) target = $region40
    $region39: #{generator_forward.25} parent=5 // pred_region
      %s649 = ssub.s32 %s9, 2
      // Predicated region
      $region41: #{generator_forward.25} parent=39 // pred_check
        %p650 = pneg %p106
      $region42: #{generator_forward.25} parent=39 // pred_check_branch
        %652 = sbr.rel (%p650) target = $region44
      $region43: #{generator_forward.25} parent=39 // pred_region
        %s653 = smul.u32 8, %s15
        %p654 = scmp.lt.s32.totalorder %s653, 15
        %s655 = scalar_select %p654, %s653, 15
        %s656 = smul.addr %s655, 8
        %s657 = scalar_lea.vmem %s3, %s656
      $region44: #{generator_forward.25} parent=39 // pred_fallthru
        _
    $region40: #{generator_forward.25} parent=5 // pred_fallthru
      _
  $region6: #{generator_forward.25} parent=0 // loop_footer
    %s13 = sadd.s32 1, %s9
  $region7: #{generator_forward.25} parent=0 // loop_footer_branch
    %8 = sbr.rel target = $region3
  $region8: #{generator_forward.25} parent=0 // loop_exit
    _

// kernel: generator_forward.26
$region0: #{generator_forward.26}
  #allocation0 [shape = 'u32[]', space=smem, size = 0x4, offset = 0x4, fixed_abs, tag = 'smem constant byte address 0x4 - core index']
  #allocation1 [shape = 'u32[144,128]{1,0:T(1,128)}', space=vmem, size = 0x12000, scoped, tag = 'internal scratch']
  %s0 = inlined_call_operand.vmem [shape: bf16[32,576], index: 0, kind: input, shape index: {}]
  %s1 = inlined_call_operand.vmem [shape: bf16[576,128], index: 1, kind: input, shape index: {}]
  %s2 = inlined_call_operand.vmem [shape: f32[1,128], index: 2, kind: input, shape index: {}]
  %s3 = inlined_call_operand.vmem [shape: f32[32,128], index: 3, kind: output, shape index: {}]
  %s4 = sld [smem:[#allocation0]]
  $region45: #{generator_forward.26} parent=0
    _
  %s6 = ssub.s32 1, %s4
  %s7 = scalar_select 0, %s6, %s4
  loop: start=0, step=1, limit=4
  $region2: #{generator_forward.26} parent=0 // loop_pre_header
    _
  $region3: #{generator_forward.26} parent=0 // loop_header
    %s9 = sphi 0, %s13
    %p10 = scmp.ge.s32.totalorder %s9, 4
    %s19 = sphi 0, %s21
    %s22 = sphi 0, %s19
    %s23 = sphi 0, %s22
    %s39 = sphi 0, %s23
    %s43 = sphi 0, %s43
    %s45 = sphi 0, %s43
    %s46 = sphi 0, %s45
    %s60 = sphi 0, %s46
    %s64 = sphi 0, %s64
    %s66 = sphi 0, %s64
    %s67 = sphi 0, %s66
    %s81 = sphi 0, %s67
    %s87 = sphi 0, %s89
    %s90 = sphi 0, %s87
    %s91 = sphi 0, %s90
    %s107 = sphi 0, %s91
  $region4: #{generator_forward.26} parent=0 // loop_header_branch
    %12 = sbr.rel (%p10) target = $region8
  $region5: #{generator_forward.26} parent=0 // loop_body
    %s14 = ssub.s32 %s9, 1
    %s15 = ssub.s32 %s9, 2
    %s16 = sadd.s32 %s9, 1
    %s17 = ssub.s32 %s9, %s16
    %p18 = scmp.eq.s32.totalorder %s17, 0
    %s20 = sadd.s32 %s19, 1
    %s21 = scalar_select %p18, %s19, %s20
    %p24 = pneg %p18
    %p25 = scmp.eq.s32.totalorder %s9, 1
    %p26 = por %p24, %p25
    %p27 = scmp.ne.s32.totalorder %s19, %s22
    %p28 = scmp.eq.s32.totalorder %s9, 0
    %p29 = por %p27, %p28
    %p30 = scmp.ne.s32.totalorder %s19, %s22
    %p31 = scmp.eq.s32.totalorder %s14, 1
    %p32 = por %p30, %p31
    %p33 = scmp.ne.s32.totalorder %s22, %s23
    %p34 = scmp.eq.s32.totalorder %s14, 0
    %p35 = por %p33, %p34
    %p36 = scmp.ne.s32.totalorder %s22, %s23
    %p37 = scmp.eq.s32.totalorder %s15, 1
    %p38 = por %p36, %p37
    %p40 = scmp.ne.s32.totalorder %s23, %s39
    %p41 = scmp.eq.s32.totalorder %s15, 0
    %p42 = por %p40, %p41
    %s44 = sadd.s32 %s43, 1
    %p47 = scmp.eq.s32.totalorder %s9, 1
    %p48 = scmp.ne.s32.totalorder %s43, %s45
    %p49 = scmp.eq.s32.totalorder %s9, 0
    %p50 = por %p48, %p49
    %p51 = scmp.ne.s32.totalorder %s43, %s45
    %p52 = scmp.eq.s32.totalorder %s14, 1
    %p53 = por %p51, %p52
    %p54 = scmp.ne.s32.totalorder %s45, %s46
    %p55 = scmp.eq.s32.totalorder %s14, 0
    %p56 = por %p54, %p55
    %p57 = scmp.ne.s32.totalorder %s45, %s46
    %p58 = scmp.eq.s32.totalorder %s15, 1
    %p59 = por %p57, %p58
    %p61 = scmp.ne.s32.totalorder %s46, %s60
    %p62 = scmp.eq.s32.totalorder %s15, 0
    %p63 = por %p61, %p62
    %s65 = sadd.s32 %s64, 1
    %p68 = scmp.eq.s32.totalorder %s9, 1
    %p69 = scmp.ne.s32.totalorder %s64, %s66
    %p70 = scmp.eq.s32.totalorder %s9, 0
    %p71 = por %p69, %p70
    %p72 = scmp.ne.s32.totalorder %s64, %s66
    %p73 = scmp.eq.s32.totalorder %s14, 1
    %p74 = por %p72, %p73
    %p75 = scmp.ne.s32.totalorder %s66, %s67
    %p76 = scmp.eq.s32.totalorder %s14, 0
    %p77 = por %p75, %p76
    %p78 = scmp.ne.s32.totalorder %s66, %s67
    %p79 = scmp.eq.s32.totalorder %s15, 1
    %p80 = por %p78, %p79
    %p82 = scmp.ne.s32.totalorder %s67, %s81
    %p83 = scmp.eq.s32.totalorder %s15, 0
    %p84 = por %p82, %p83
    %s85 = ssub.s32 %s9, %s16
    %p86 = scmp.eq.s32.totalorder %s85, 0
    %s88 = sadd.s32 %s87, 1
    %s89 = scalar_select %p86, %s87, %s88
    %p92 = pneg %p86
    %p93 = scmp.eq.s32.totalorder %s9, 1
    %p94 = por %p92, %p93
    %p95 = scmp.ne.s32.totalorder %s87, %s90
    %p96 = scmp.eq.s32.totalorder %s9, 0
    %p97 = por %p95, %p96
    %p98 = scmp.ne.s32.totalorder %s87, %s90
    %p99 = scmp.eq.s32.totalorder %s14, 1
    %p100 = por %p98, %p99
    %p101 = scmp.ne.s32.totalorder %s90, %s91
    %p102 = scmp.eq.s32.totalorder %s14, 0
    %p103 = por %p101, %p102
    %p104 = scmp.ne.s32.totalorder %s90, %s91
    %p105 = scmp.eq.s32.totalorder %s15, 1
    %p106 = por %p104, %p105
    %p108 = scmp.ne.s32.totalorder %s91, %s107
    %p109 = scmp.eq.s32.totalorder %s15, 0
    %p110 = por %p108, %p109
    %p111 = scmp.le.s32.totalorder 1, %s9
    %p112 = scmp.lt.s32.totalorder %s9, 3
    %p113 = pnand %p111, %p112
    %p114 = pneg %p113
    // Predicated region
    $region9: #{generator_forward.26} parent=5 // pred_check
      _
    $region10: #{generator_forward.26} parent=5 // pred_check_branch
      %116 = sbr.rel (%p113) target = $region12
    $region11: #{generator_forward.26} parent=5 // pred_region
      %s117 = ssub.s32 %s9, 1
      // Predicated region
      $region13: #{generator_forward.26} parent=11 // pred_check
        %p118 = pneg %p56
      $region14: #{generator_forward.26} parent=11 // pred_check_branch
        %120 = sbr.rel (%p118) target = $region16
      $region15: #{generator_forward.26} parent=11 // pred_region
        _
      $region16: #{generator_forward.26} parent=11 // pred_fallthru
        _
      // Predicated region
      $region17: #{generator_forward.26} parent=11 // pred_check
        %p121 = pneg %p77
      $region18: #{generator_forward.26} parent=11 // pred_check_branch
        %123 = sbr.rel (%p121) target = $region20
      $region19: #{generator_forward.26} parent=11 // pred_region
        _
      $region20: #{generator_forward.26} parent=11 // pred_fallthru
        _
    $region12: #{generator_forward.26} parent=5 // pred_fallthru
      _
    %p124 = scmp.lt.s32.totalorder %s9, 2
    // Predicated region
    $region21: #{generator_forward.26} parent=5 // pred_check
      %p125 = pneg %p124
    $region22: #{generator_forward.26} parent=5 // pred_check_branch
      %127 = sbr.rel (%p125) target = $region24
    $region23: #{generator_forward.26} parent=5 // pred_region
      // Predicated region
      $region25: #{generator_forward.26} parent=23 // pred_check
        %p128 = pneg %p29
      $region26: #{generator_forward.26} parent=23 // pred_check_branch
        %130 = sbr.rel (%p128) target = $region28
      $region27: #{generator_forward.26} parent=23 // pred_region
        %s131 = smul.u32 2, %s9
        %p132 = scmp.lt.s32.totalorder %s131, 3
        %s133 = scalar_select %p132, %s131, 3
        %s134 = smul.addr %s133, 5
        %s135 = smul.addr %s134, 4
        %s136 = scalar_lea.vmem %s0, %s135
        %s137 = smul.u32 2, %s9
      $region28: #{generator_forward.26} parent=23 // pred_fallthru
        _
    $region24: #{generator_forward.26} parent=5 // pred_fallthru
      _
    %p138 = scmp.le.s32.totalorder 1, %s9
    %p139 = scmp.lt.s32.totalorder %s9, 3
    %p140 = pnand %p138, %p139
    %p141 = pneg %p140
    // Predicated region
    $region29: #{generator_forward.26} parent=5 // pred_check
      _
    $region30: #{generator_forward.26} parent=5 // pred_check_branch
      %143 = sbr.rel (%p140) target = $region32
    $region31: #{generator_forward.26} parent=5 // pred_region
      %s144 = ssub.s32 %s9, 1
      %s145 = smul.u32 2, %s14
      %p146 = scmp.lt.s32.totalorder %s145, 3
      %s147 = scalar_select %p146, %s145, 3
      %s148 = smul.addr %s147, 5
      %s149 = smul.addr %s148, 4
      %s150 = scalar_lea.vmem %s0, %s149
      %p151 = pneg %p35
      %p152 = pneg %p32
      %p153 = pneg %p56
      %p154 = pneg %p53
      %p155 = pneg %p77
      %p156 = pneg %p74
      %p157 = pneg %p103
      %p158 = pneg %p100
      %s159 = smul.u32 2, %s14
      %p160 = scmp.lt.s32.totalorder %s159, 3
      %s161 = scalar_select %p160, %s159, 3
      %s162 = smul.addr %s161, 8
      %s163 = scalar_lea.vmem %s3, %s162
      %s164 = smul.u32 2, %s14
      %p165 = scmp.lt.s32.totalorder %s164, 3
      %s166 = scalar_select %p165, %s164, 3
      %s167 = smul.addr %s166, 5
      %s168 = smul.addr %s167, 4
      %s169 = scalar_lea.vmem %s0, %s168
      %s170 = smul.u32 2, %s14
      %s171 = smul.u32 2, %s14
      %p172 = scmp.lt.s32.totalorder %s171, 3
      %s173 = scalar_select %p172, %s171, 3
      %s174 = smul.addr %s173, 8
      %s175 = scalar_lea.vmem %s3, %s174
      %s176 = smul.u32 2, %s14
      %v178 = vld [vmem:[%s169] sm:$0xff]
      %v179 = vld [vmem:[%s169 + $0x8] sm:$0xff]
      %v180 = vld [vmem:[%s169 + $0x10] sm:$0xf]
      %v181 = vld [vmem:[%s169 + $0x14] sm:$0xff]
      %v182 = vld [vmem:[%s169 + $0x1c] sm:$0xff]
      %v183 = vld [vmem:[%s169 + $0x24] sm:$0xf]
      %v184 = vld [vmem:[%s1] sm:$0xf]
      %v185 = vld [vmem:[%s1 + $0x4] sm:$0xf]
      %v186 = vld [vmem:[%s1 + $0x8] sm:$0xf]
      %v187 = vld [vmem:[%s1 + $0xc] sm:$0xf]
      %v188 = vld [vmem:[%s1 + $0x10] sm:$0xf]
      %v189 = vld [vmem:[%s1 + $0x14] sm:$0xf]
      %v190 = vld [vmem:[%s1 + $0x18] sm:$0xf]
      %v191 = vld [vmem:[%s1 + $0x1c] sm:$0xf]
      %v192 = vld [vmem:[%s1 + $0x20] sm:$0xf]
      %v193 = vld [vmem:[%s1 + $0x24] sm:$0xf]
      %v194 = vld [vmem:[%s1 + $0x28] sm:$0xf]
      %v195 = vld [vmem:[%s1 + $0x2c] sm:$0xf]
      %v196 = vld [vmem:[%s1 + $0x30] sm:$0xf]
      %v197 = vld [vmem:[%s1 + $0x34] sm:$0xf]
      %v198 = vld [vmem:[%s1 + $0x38] sm:$0xf]
      %v199 = vld [vmem:[%s1 + $0x3c] sm:$0xf]
      %v200 = vld [vmem:[%s1 + $0x40] sm:$0xf]
      %v201 = vld [vmem:[%s1 + $0x44] sm:$0xf]
      %v202 = vld [vmem:[%s1 + $0x48] sm:$0xf]
      %v203 = vld [vmem:[%s1 + $0x4c] sm:$0xf]
      %v204 = vld [vmem:[%s1 + $0x50] sm:$0xf]
      %v205 = vld [vmem:[%s1 + $0x54] sm:$0xf]
      %v206 = vld [vmem:[%s1 + $0x58] sm:$0xf]
      %v207 = vld [vmem:[%s1 + $0x5c] sm:$0xf]
      %v208 = vld [vmem:[%s1 + $0x60] sm:$0xf]
      %v209 = vld [vmem:[%s1 + $0x64] sm:$0xf]
      %v210 = vld [vmem:[%s1 + $0x68] sm:$0xf]
      %v211 = vld [vmem:[%s1 + $0x6c] sm:$0xf]
      %v212 = vld [vmem:[%s1 + $0x70] sm:$0xf]
      %v213 = vld [vmem:[%s1 + $0x74] sm:$0xf]
      %v214 = vld [vmem:[%s1 + $0x78] sm:$0xf]
      %v215 = vld [vmem:[%s1 + $0x7c] sm:$0xf]
      %v216 = vld [vmem:[%s1 + $0x80] sm:$0xf]
      %v217 = vld [vmem:[%s1 + $0x84] sm:$0xf]
      %v218 = vld [vmem:[%s1 + $0x88] sm:$0xf]
      %v219 = vld [vmem:[%s1 + $0x8c] sm:$0xf]
      %v220 = vld [vmem:[%s1 + $0x90] sm:$0xf]
      %v221 = vld [vmem:[%s1 + $0x94] sm:$0xf]
      %v222 = vld [vmem:[%s1 + $0x98] sm:$0xf]
      %v223 = vld [vmem:[%s1 + $0x9c] sm:$0xf]
      %v224 = vld [vmem:[%s1 + $0xa0] sm:$0xf]
      %v225 = vld [vmem:[%s1 + $0xa4] sm:$0xf]
      %v226 = vld [vmem:[%s1 + $0xa8] sm:$0xf]
      %v227 = vld [vmem:[%s1 + $0xac] sm:$0xf]
      %v228 = vld [vmem:[%s1 + $0xb0] sm:$0xf]
      %v229 = vld [vmem:[%s1 + $0xb4] sm:$0xf]
      %v230 = vld [vmem:[%s1 + $0xb8] sm:$0xf]
      %v231 = vld [vmem:[%s1 + $0xbc] sm:$0xf]
      %v232 = vld [vmem:[%s1 + $0xc0] sm:$0xf]
      %v233 = vld [vmem:[%s1 + $0xc4] sm:$0xf]
      %v234 = vld [vmem:[%s1 + $0xc8] sm:$0xf]
      %v235 = vld [vmem:[%s1 + $0xcc] sm:$0xf]
      %v236 = vld [vmem:[%s1 + $0xd0] sm:$0xf]
      %v237 = vld [vmem:[%s1 + $0xd4] sm:$0xf]
      %v238 = vld [vmem:[%s1 + $0xd8] sm:$0xf]
      %v239 = vld [vmem:[%s1 + $0xdc] sm:$0xf]
      %v240 = vld [vmem:[%s1 + $0xe0] sm:$0xf]
      %v241 = vld [vmem:[%s1 + $0xe4] sm:$0xf]
      %v242 = vld [vmem:[%s1 + $0xe8] sm:$0xf]
      %v243 = vld [vmem:[%s1 + $0xec] sm:$0xf]
      %v244 = vld [vmem:[%s1 + $0xf0] sm:$0xf]
      %v245 = vld [vmem:[%s1 + $0xf4] sm:$0xf]
      %v246 = vld [vmem:[%s1 + $0xf8] sm:$0xf]
      %v247 = vld [vmem:[%s1 + $0xfc] sm:$0xf]
      %v248 = vld [vmem:[%s1 + $0x100] sm:$0xf]
      %v249 = vld [vmem:[%s1 + $0x104] sm:$0xf]
      %v250 = vld [vmem:[%s1 + $0x108] sm:$0xf]
      %v251 = vld [vmem:[%s1 + $0x10c] sm:$0xf]
      %v252 = vld [vmem:[%s1 + $0x110] sm:$0xf]
      %v253 = vld [vmem:[%s1 + $0x114] sm:$0xf]
      %v254 = vld [vmem:[%s1 + $0x118] sm:$0xf]
      %v255 = vld [vmem:[%s1 + $0x11c] sm:$0xf]
      %v256 = vld [vmem:[%s2] sm:$0x1]
      %v258 = vlaneseq
      %v259 = vshrl.u32 %v258, 7
      %v260 = vsub.s32 0, %v259
      %v261 = vrot.slane %v256, %v260
      %v269 = vunpack.c.l.b16 %v178
      %v270 = vunpack.c.h.b16 %v178
      %v271 = vunpack.c.l.b16 %v179
      %v272 = vunpack.c.h.b16 %v179
      %v273 = vunpack.c.l.b16 %v180
      %v274 = vunpack.c.l.b16 %v181
      %v275 = vunpack.c.h.b16 %v181
      %v276 = vunpack.c.l.b16 %v182
      %v277 = vunpack.c.h.b16 %v182
      %v278 = vunpack.c.l.b16 %v183
      %v279 = vpack.c.b16 %v274, %v269
      %v280 = vpack.c.b16 %v275, %v270
      %v281 = vpack.c.b16 %v276, %v271
      %v282 = vpack.c.b16 %v277, %v272
      %v283 = vpack.c.b16 %v278, %v273
      %v360 = vunpack.c.l.b16 %v184
      %v361 = vunpack.c.l.b16 %v185
      %v362 = vunpack.c.l.b16 %v186
      %v363 = vunpack.c.l.b16 %v187
      %v364 = vunpack.c.l.b16 %v188
      %v365 = vunpack.c.l.b16 %v189
      %v366 = vunpack.c.l.b16 %v190
      %v367 = vunpack.c.l.b16 %v191
      %v368 = vunpack.c.l.b16 %v192
      %v369 = vunpack.c.l.b16 %v193
      %v370 = vunpack.c.l.b16 %v194
      %v371 = vunpack.c.l.b16 %v195
      %v372 = vunpack.c.l.b16 %v196
      %v373 = vunpack.c.l.b16 %v197
      %v374 = vunpack.c.l.b16 %v198
      %v375 = vunpack.c.l.b16 %v199
      %v376 = vunpack.c.l.b16 %v200
      %v377 = vunpack.c.l.b16 %v201
      %v378 = vunpack.c.l.b16 %v202
      %v379 = vunpack.c.l.b16 %v203
      %v380 = vunpack.c.l.b16 %v204
      %v381 = vunpack.c.l.b16 %v205
      %v382 = vunpack.c.l.b16 %v206
      %v383 = vunpack.c.l.b16 %v207
      %v384 = vunpack.c.l.b16 %v208
      %v385 = vunpack.c.l.b16 %v209
      %v386 = vunpack.c.l.b16 %v210
      %v387 = vunpack.c.l.b16 %v211
      %v388 = vunpack.c.l.b16 %v212
      %v389 = vunpack.c.l.b16 %v213
      %v390 = vunpack.c.l.b16 %v214
      %v391 = vunpack.c.l.b16 %v215
      %v392 = vunpack.c.l.b16 %v216
      %v393 = vunpack.c.l.b16 %v217
      %v394 = vunpack.c.l.b16 %v218
      %v395 = vunpack.c.l.b16 %v219
      %v396 = vunpack.c.l.b16 %v220
      %v397 = vunpack.c.l.b16 %v221
      %v398 = vunpack.c.l.b16 %v222
      %v399 = vunpack.c.l.b16 %v223
      %v400 = vunpack.c.l.b16 %v224
      %v401 = vunpack.c.l.b16 %v225
      %v402 = vunpack.c.l.b16 %v226
      %v403 = vunpack.c.l.b16 %v227
      %v404 = vunpack.c.l.b16 %v228
      %v405 = vunpack.c.l.b16 %v229
      %v406 = vunpack.c.l.b16 %v230
      %v407 = vunpack.c.l.b16 %v231
      %v408 = vunpack.c.l.b16 %v232
      %v409 = vunpack.c.l.b16 %v233
      %v410 = vunpack.c.l.b16 %v234
      %v411 = vunpack.c.l.b16 %v235
      %v412 = vunpack.c.l.b16 %v236
      %v413 = vunpack.c.l.b16 %v237
      %v414 = vunpack.c.l.b16 %v238
      %v415 = vunpack.c.l.b16 %v239
      %v416 = vunpack.c.l.b16 %v240
      %v417 = vunpack.c.l.b16 %v241
      %v418 = vunpack.c.l.b16 %v242
      %v419 = vunpack.c.l.b16 %v243
      %v420 = vunpack.c.l.b16 %v244
      %v421 = vunpack.c.l.b16 %v245
      %v422 = vunpack.c.l.b16 %v246
      %v423 = vunpack.c.l.b16 %v247
      %v424 = vunpack.c.l.b16 %v248
      %v425 = vunpack.c.l.b16 %v249
      %v426 = vunpack.c.l.b16 %v250
      %v427 = vunpack.c.l.b16 %v251
      %v428 = vunpack.c.l.b16 %v252
      %v429 = vunpack.c.l.b16 %v253
      %v430 = vunpack.c.l.b16 %v254
      %v431 = vunpack.c.l.b16 %v255
      %v432 = vpack.c.b16 %v361, %v360
      %v433 = vpack.c.b16 %v363, %v362
      %v434 = vpack.c.b16 %v365, %v364
      %v435 = vpack.c.b16 %v367, %v366
      %v436 = vpack.c.b16 %v369, %v368
      %v437 = vpack.c.b16 %v371, %v370
      %v438 = vpack.c.b16 %v373, %v372
      %v439 = vpack.c.b16 %v375, %v374
      %v440 = vpack.c.b16 %v377, %v376
      %v441 = vpack.c.b16 %v379, %v378
      %v442 = vpack.c.b16 %v381, %v380
      %v443 = vpack.c.b16 %v383, %v382
      %v444 = vpack.c.b16 %v385, %v384
      %v445 = vpack.c.b16 %v387, %v386
      %v446 = vpack.c.b16 %v389, %v388
      %v447 = vpack.c.b16 %v391, %v390
      %v448 = vpack.c.b16 %v393, %v392
      %v449 = vpack.c.b16 %v395, %v394
      %v450 = vpack.c.b16 %v397, %v396
      %v451 = vpack.c.b16 %v399, %v398
      %v452 = vpack.c.b16 %v401, %v400
      %v453 = vpack.c.b16 %v403, %v402
      %v454 = vpack.c.b16 %v405, %v404
      %v455 = vpack.c.b16 %v407, %v406
      %v456 = vpack.c.b16 %v409, %v408
      %v457 = vpack.c.b16 %v411, %v410
      %v458 = vpack.c.b16 %v413, %v412
      %v459 = vpack.c.b16 %v415, %v414
      %v460 = vpack.c.b16 %v417, %v416
      %v461 = vpack.c.b16 %v419, %v418
      %v462 = vpack.c.b16 %v421, %v420
      %v463 = vpack.c.b16 %v423, %v422
      %v464 = vpack.c.b16 %v425, %v424
      %v465 = vpack.c.b16 %v427, %v426
      %v466 = vpack.c.b16 %v429, %v428
      %v467 = vpack.c.b16 %v431, %v430
      %vm504 = vcmask 523264
      %v506 = vsel %vm504, %v283, 0
      %508 = vmatprep.subr.bf16.mxu0 0
      %509 = vmatpush1.bf16.msra.mxu0 %v432
      %510 = vmatprep.subr.bf16.mxu0 0
      %511 = vmatpush1.bf16.msra.mxu0 %v433
      %512 = vmatprep.subr.bf16.mxu0 0
      %513 = vmatpush1.bf16.msra.mxu0 %v434
      %514 = vmatprep.subr.bf16.mxu0 0
      %515 = vmatpush1.bf16.msra.mxu0 %v435
      %516 = vmatprep.subr.bf16.mxu0 0
      %517 = vmatpush1.bf16.msra.mxu0 %v436
      %518 = vmatprep.subr.bf16.mxu0 0
      %519 = vmatpush1.bf16.msra.mxu0 %v437
      %520 = vmatprep.subr.bf16.mxu0 0
      %521 = vmatpush1.bf16.msra.mxu0 %v438
      %522 = vmatprep.subr.bf16.mxu0 0
      %523 = vmatpush1.bf16.msra.mxu0 %v439
      %524 = vmatprep.subr.bf16.mxu0 0
      %525 = vmatpush1.bf16.msra.mxu0 %v440
      %526 = vmatprep.subr.bf16.mxu0 0
      %527 = vmatpush1.bf16.msra.mxu0 %v441
      %528 = vmatprep.subr.bf16.mxu0 0
      %529 = vmatpush1.bf16.msra.mxu0 %v442
      %530 = vmatprep.subr.bf16.mxu0 0
      %531 = vmatpush1.bf16.msra.mxu0 %v443
      %532 = vmatprep.subr.bf16.mxu0 0
      %533 = vmatpush1.bf16.msra.mxu0 %v444
      %534 = vmatprep.subr.bf16.mxu0 0
      %535 = vmatpush1.bf16.msra.mxu0 %v445
      %536 = vmatprep.subr.bf16.mxu0 0
      %537 = vmatpush1.bf16.msra.mxu0 %v446
      %538 = vmatprep.subr.bf16.mxu0 0
      %539 = vmatpush1.bf16.msra.mxu0 %v447
      %540 = vmatprep.mubr.bf16.mxu0 %v280
      %541 = vmatmul.mubr.bf16.gmra.mrb[0].mxu0 %v279
      %v542 = vpop.f32.mrb[0].mxu0
      %v543 = vadd.f32 %v261, %v542
      %v544 = vpop.f32.mrb[0].mxu0
      %v545 = vpop.f32.mrb[0].mxu0
      %v546 = vadd.f32 %v261, %v545
      %v547 = vpop.f32.mrb[0].mxu0
      %548 = vdwg.mxu0
      %549 = vmatprep.subr.bf16.mxu0 0
      %550 = vmatpush1.bf16.msra.mxu0 %v448
      %551 = vmatprep.subr.bf16.mxu0 0
      %552 = vmatpush1.bf16.msra.mxu0 %v449
      %553 = vmatprep.subr.bf16.mxu0 0
      %554 = vmatpush1.bf16.msra.mxu0 %v450
      %555 = vmatprep.subr.bf16.mxu0 0
      %556 = vmatpush1.bf16.msra.mxu0 %v451
      %557 = vmatprep.subr.bf16.mxu0 0
      %558 = vmatpush1.bf16.msra.mxu0 %v452
      %559 = vmatprep.subr.bf16.mxu0 0
      %560 = vmatpush1.bf16.msra.mxu0 %v453
      %561 = vmatprep.subr.bf16.mxu0 0
      %562 = vmatpush1.bf16.msra.mxu0 %v454
      %563 = vmatprep.subr.bf16.mxu0 0
      %564 = vmatpush1.bf16.msra.mxu0 %v455
      %565 = vmatprep.subr.bf16.mxu0 0
      %566 = vmatpush1.bf16.msra.mxu0 %v456
      %567 = vmatprep.subr.bf16.mxu0 0
      %568 = vmatpush1.bf16.msra.mxu0 %v457
      %569 = vmatprep.subr.bf16.mxu0 0
      %570 = vmatpush1.bf16.msra.mxu0 %v458
      %571 = vmatprep.subr.bf16.mxu0 0
      %572 = vmatpush1.bf16.msra.mxu0 %v459
      %573 = vmatprep.subr.bf16.mxu0 0
      %574 = vmatpush1.bf16.msra.mxu0 %v460
      %575 = vmatprep.subr.bf16.mxu0 0
      %576 = vmatpush1.bf16.msra.mxu0 %v461
      %577 = vmatprep.subr.bf16.mxu0 0
      %578 = vmatpush1.bf16.msra.mxu0 %v462
      %579 = vmatprep.subr.bf16.mxu0 0
      %580 = vmatpush1.bf16.msra.mxu0 %v463
      %581 = vmatprep.mubr.bf16.mxu0 %v282
      %582 = vmatmul.mubr.bf16.gmra.mrb[0].mxu0 %v281
      %v583 = vpop.f32.mrb[0].mxu0
      %v584 = vadd.f32 %v543, %v583
      %v585 = vpop.f32.mrb[0].mxu0
      %v586 = vpop.f32.mrb[0].mxu0
      %v587 = vadd.f32 %v546, %v586
      %v588 = vpop.f32.mrb[0].mxu0
      %589 = vdwg.mxu0
      %590 = vmatprep.subr.bf16.mxu0 0
      %591 = vmatpush1.bf16.msra.mxu0 %v464
      %592 = vmatprep.subr.bf16.mxu0 0
      %593 = vmatpush1.bf16.msra.mxu0 %v465
      %594 = vmatprep.subr.bf16.mxu0 0
      %595 = vmatpush1.bf16.msra.mxu0 %v466
      %596 = vmatprep.subr.bf16.mxu0 0
      %597 = vmatpush1.bf16.msra.mxu0 %v467
      %598 = vmatprep.subr.bf16.mxu0 0
      %599 = vmatpush1.bf16.msra.mxu0 0
      %600 = vmatprep.subr.bf16.mxu0 0
      %601 = vmatpush1.bf16.msra.mxu0 0
      %602 = vmatprep.subr.bf16.mxu0 0
      %603 = vmatpush1.bf16.msra.mxu0 0
      %604 = vmatprep.subr.bf16.mxu0 0
      %605 = vmatpush1.bf16.msra.mxu0 0
      %606 = vmatprep.subr.bf16.mxu0 0
      %607 = vmatpush1.bf16.msra.mxu0 0
      %608 = vmatprep.subr.bf16.mxu0 0
      %609 = vmatpush1.bf16.msra.mxu0 0
      %610 = vmatprep.subr.bf16.mxu0 0
      %611 = vmatpush1.bf16.msra.mxu0 0
      %612 = vmatprep.subr.bf16.mxu0 0
      %613 = vmatpush1.bf16.msra.mxu0 0
      %614 = vmatprep.subr.bf16.mxu0 0
      %615 = vmatpush1.bf16.msra.mxu0 0
      %616 = vmatprep.subr.bf16.mxu0 0
      %617 = vmatpush1.bf16.msra.mxu0 0
      %618 = vmatprep.subr.bf16.mxu0 0
      %619 = vmatpush1.bf16.msra.mxu0 0
      %620 = vmatprep.subr.bf16.mxu0 0
      %621 = vmatpush1.bf16.msra.mxu0 0
      %622 = vmatprep.mubr.bf16.mxu0 0
      %623 = vmatmul.mubr.bf16.gmra.mrb[0].mxu0 %v506
      %v624 = vpop.f32.mrb[0].mxu0
      %v625 = vadd.f32 %v584, %v624
      %v626 = vpop.f32.mrb[0].mxu0
      %v627 = vpop.f32.mrb[0].mxu0
      %v628 = vadd.f32 %v587, %v627
      %v629 = vpop.f32.mrb[0].mxu0
      %630 = vdwg.mxu0
      %v631 = vadd.f32 %v625, %v628
      %v632 = vrot.slane %v631, 4
      %v633 = vadd.f32 %v631, %v632
      %v634 = vrot.slane %v633, 2
      %v635 = vadd.f32 %v633, %v634
      %v636 = vrot.slane %v635, 1
      %v637 = vadd.f32 %v635, %v636
      %v638 = vrcp.pop 16.0
      %v639 = vmul.f32 %v637, %v638
      %v640 = vsub.f32 %v625, %v639
      %v641 = vsub.f32 %v628, %v639
      %v642 = vmul.f32 %v640, %v640
      %v643 = vmul.f32 %v641, %v641
      %v644 = vadd.f32 %v642, %v643
      %v645 = vrot.slane %v644, 4
      %v646 = vadd.f32 %v644, %v645
      %v647 = vrot.slane %v646, 2
      %v648 = vadd.f32 %v646, %v647
      %v649 = vrot.slane %v648, 1
      %v650 = vadd.f32 %v648, %v649
      %v651 = vmul.f32 %v650, %v638
      %v652 = vadd.f32 %v651, 1e-05
      %v653 = vrsqrt.pop %v652
      %v654 = vmul.f32 %v640, %v653
      %v655 = vmul.f32 %v641, %v653
      %v656 = vmax.f32 %v654, 0.0
      %v657 = vmax.f32 %v655, 0.0
      %658 = vst [vmem:[%s175] sm:$0xff] %v656
      %659 = vst [vmem:[%s175 + $0x8] sm:$0xff] %v657
      %s660 = smul.u32 2, %s14
      %p661 = scmp.lt.s32.totalorder %s660, 3
      %s662 = scalar_select %p661, %s660, 3
      %s663 = smul.addr %s662, 8
      %s664 = scalar_lea.vmem %s3, %s663
      // Predicated region
      $region33: #{generator_forward.26} parent=31 // pred_check
        %p665 = pneg %p100
      $region34: #{generator_forward.26} parent=31 // pred_check_branch
        %667 = sbr.rel (%p665) target = $region36
      $region35: #{generator_forward.26} parent=31 // pred_region
        %s668 = smul.u32 2, %s14
      $region36: #{generator_forward.26} parent=31 // pred_fallthru
        _
    $region32: #{generator_forward.26} parent=5 // pred_fallthru
      _
    %p669 = scmp.le.s32.totalorder 2, %s9
    // Predicated region
    $region37: #{generator_forward.26} parent=5 // pred_check
      %p670 = pneg %p669
    $region38: #{generator_forward.26} parent=5 // pred_check_branch
      %672 = sbr.rel (%p670) target = $region40
    $region39: #{generator_forward.26} parent=5 // pred_region
      %s673 = ssub.s32 %s9, 2
      // Predicated region
      $region41: #{generator_forward.26} parent=39 // pred_check
        %p674 = pneg %p106
      $region42: #{generator_forward.26} parent=39 // pred_check_branch
        %676 = sbr.rel (%p674) target = $region44
      $region43: #{generator_forward.26} parent=39 // pred_region
        %s677 = smul.u32 2, %s15
        %p678 = scmp.lt.s32.totalorder %s677, 3
        %s679 = scalar_select %p678, %s677, 3
        %s680 = smul.addr %s679, 8
        %s681 = scalar_lea.vmem %s3, %s680
      $region44: #{generator_forward.26} parent=39 // pred_fallthru
        _
    $region40: #{generator_forward.26} parent=5 // pred_fallthru
      _
  $region6: #{generator_forward.26} parent=0 // loop_footer
    %s13 = sadd.s32 1, %s9
  $region7: #{generator_forward.26} parent=0 // loop_footer_branch
    %8 = sbr.rel target = $region3
  $region8: #{generator_forward.26} parent=0 // loop_exit
    _

// kernel: generator_forward.27
$region0: #{generator_forward.27}
  #allocation0 [shape = 'u32[]', space=smem, size = 0x4, offset = 0x4, fixed_abs, tag = 'smem constant byte address 0x4 - core index']
  #allocation1 [shape = 'u32[144,128]{1,0:T(1,128)}', space=vmem, size = 0x12000, scoped, tag = 'internal scratch']
  %s0 = inlined_call_operand.hbm [shape: bf16[32,1152], index: 0, kind: input, shape index: {}]
  %s1 = inlined_call_operand.vmem [shape: bf16[1152,128], index: 1, kind: input, shape index: {}]
  %s2 = inlined_call_operand.vmem [shape: f32[1,128], index: 2, kind: input, shape index: {}]
  %s3 = inlined_call_operand.vmem [shape: f32[32,128], index: 3, kind: output, shape index: {}]
  %s4 = sld [smem:[#allocation0]]
  $region49: #{generator_forward.27} parent=0
    _
  %s6 = ssub.s32 1, %s4
  %s7 = scalar_select 0, %s6, %s4
  $region1: #{generator_forward.27} parent=0
    #allocation2 [shape = 'u8[73728]{0}', space=vmem, size = 0x12000, scoped, tag = 'input window, operand 0']
    #allocation3 [shape = 's32[2]{0}', space=sflag, size = 0x8, scoped, tag = 'scoped memory for generator_forward.27']
    %8 = vsyncpa [#allocation3], 0
    %s9 = scalar_lea.sflag [#allocation3], 1
    %10 = vsyncpa %s9, 0
    loop: start=0, step=1, limit=4
    $region2: #{generator_forward.27} parent=1 // loop_pre_header
      _
    $region3: #{generator_forward.27} parent=1 // loop_header
      %s12 = sphi 0, %s16
      %p13 = scmp.ge.s32.totalorder %s12, 4
      %s22 = sphi 0, %s24
      %s25 = sphi 0, %s22
      %s26 = sphi 0, %s25
      %s42 = sphi 0, %s26
      %s46 = sphi 0, %s46
      %s48 = sphi 0, %s46
      %s49 = sphi 0, %s48
      %s63 = sphi 0, %s49
      %s67 = sphi 0, %s67
      %s69 = sphi 0, %s67
      %s70 = sphi 0, %s69
      %s84 = sphi 0, %s70
      %s90 = sphi 0, %s92
      %s93 = sphi 0, %s90
      %s94 = sphi 0, %s93
      %s110 = sphi 0, %s94
    $region4: #{generator_forward.27} parent=1 // loop_header_branch
      %15 = sbr.rel (%p13) target = $region8
    $region5: #{generator_forward.27} parent=1 // loop_body
      %s17 = ssub.s32 %s12, 1
      %s18 = ssub.s32 %s12, 2
      %s19 = sadd.s32 %s12, 1
      %s20 = ssub.s32 %s12, %s19
      %p21 = scmp.eq.s32.totalorder %s20, 0
      %s23 = sadd.s32 %s22, 1
      %s24 = scalar_select %p21, %s22, %s23
      %p27 = pneg %p21
      %p28 = scmp.eq.s32.totalorder %s12, 1
      %p29 = por %p27, %p28
      %p30 = scmp.ne.s32.totalorder %s22, %s25
      %p31 = scmp.eq.s32.totalorder %s12, 0
      %p32 = por %p30, %p31
      %p33 = scmp.ne.s32.totalorder %s22, %s25
      %p34 = scmp.eq.s32.totalorder %s17, 1
      %p35 = por %p33, %p34
      %p36 = scmp.ne.s32.totalorder %s25, %s26
      %p37 = scmp.eq.s32.totalorder %s17, 0
      %p38 = por %p36, %p37
      %p39 = scmp.ne.s32.totalorder %s25, %s26
      %p40 = scmp.eq.s32.totalorder %s18, 1
      %p41 = por %p39, %p40
      %p43 = scmp.ne.s32.totalorder %s26, %s42
      %p44 = scmp.eq.s32.totalorder %s18, 0
      %p45 = por %p43, %p44
      %s47 = sadd.s32 %s46, 1
      %p50 = scmp.eq.s32.totalorder %s12, 1
      %p51 = scmp.ne.s32.totalorder %s46, %s48
      %p52 = scmp.eq.s32.totalorder %s12, 0
      %p53 = por %p51, %p52
      %p54 = scmp.ne.s32.totalorder %s46, %s48
      %p55 = scmp.eq.s32.totalorder %s17, 1
      %p56 = por %p54, %p55
      %p57 = scmp.ne.s32.totalorder %s48, %s49
      %p58 = scmp.eq.s32.totalorder %s17, 0
      %p59 = por %p57, %p58
      %p60 = scmp.ne.s32.totalorder %s48, %s49
      %p61 = scmp.eq.s32.totalorder %s18, 1
      %p62 = por %p60, %p61
      %p64 = scmp.ne.s32.totalorder %s49, %s63
      %p65 = scmp.eq.s32.totalorder %s18, 0
      %p66 = por %p64, %p65
      %s68 = sadd.s32 %s67, 1
      %p71 = scmp.eq.s32.totalorder %s12, 1
      %p72 = scmp.ne.s32.totalorder %s67, %s69
      %p73 = scmp.eq.s32.totalorder %s12, 0
      %p74 = por %p72, %p73
      %p75 = scmp.ne.s32.totalorder %s67, %s69
      %p76 = scmp.eq.s32.totalorder %s17, 1
      %p77 = por %p75, %p76
      %p78 = scmp.ne.s32.totalorder %s69, %s70
      %p79 = scmp.eq.s32.totalorder %s17, 0
      %p80 = por %p78, %p79
      %p81 = scmp.ne.s32.totalorder %s69, %s70
      %p82 = scmp.eq.s32.totalorder %s18, 1
      %p83 = por %p81, %p82
      %p85 = scmp.ne.s32.totalorder %s70, %s84
      %p86 = scmp.eq.s32.totalorder %s18, 0
      %p87 = por %p85, %p86
      %s88 = ssub.s32 %s12, %s19
      %p89 = scmp.eq.s32.totalorder %s88, 0
      %s91 = sadd.s32 %s90, 1
      %s92 = scalar_select %p89, %s90, %s91
      %p95 = pneg %p89
      %p96 = scmp.eq.s32.totalorder %s12, 1
      %p97 = por %p95, %p96
      %p98 = scmp.ne.s32.totalorder %s90, %s93
      %p99 = scmp.eq.s32.totalorder %s12, 0
      %p100 = por %p98, %p99
      %p101 = scmp.ne.s32.totalorder %s90, %s93
      %p102 = scmp.eq.s32.totalorder %s17, 1
      %p103 = por %p101, %p102
      %p104 = scmp.ne.s32.totalorder %s93, %s94
      %p105 = scmp.eq.s32.totalorder %s17, 0
      %p106 = por %p104, %p105
      %p107 = scmp.ne.s32.totalorder %s93, %s94
      %p108 = scmp.eq.s32.totalorder %s18, 1
      %p109 = por %p107, %p108
      %p111 = scmp.ne.s32.totalorder %s94, %s110
      %p112 = scmp.eq.s32.totalorder %s18, 0
      %p113 = por %p111, %p112
      %p114 = scmp.le.s32.totalorder 1, %s12
      %p115 = scmp.lt.s32.totalorder %s12, 3
      %p116 = pnand %p114, %p115
      %p117 = pneg %p116
      // Predicated region
      $region9: #{generator_forward.27} parent=5 // pred_check
        _
      $region10: #{generator_forward.27} parent=5 // pred_check_branch
        %119 = sbr.rel (%p116) target = $region12
      $region11: #{generator_forward.27} parent=5 // pred_region
        %s120 = ssub.s32 %s12, 1
        // Predicated region
        $region13: #{generator_forward.27} parent=11 // pred_check
          %p121 = pneg %p59
        $region14: #{generator_forward.27} parent=11 // pred_check_branch
          %123 = sbr.rel (%p121) target = $region16
        $region15: #{generator_forward.27} parent=11 // pred_region
          _
        $region16: #{generator_forward.27} parent=11 // pred_fallthru
          _
        // Predicated region
        $region17: #{generator_forward.27} parent=11 // pred_check
          %p124 = pneg %p80
        $region18: #{generator_forward.27} parent=11 // pred_check_branch
          %126 = sbr.rel (%p124) target = $region20
        $region19: #{generator_forward.27} parent=11 // pred_region
          _
        $region20: #{generator_forward.27} parent=11 // pred_fallthru
          _
      $region12: #{generator_forward.27} parent=5 // pred_fallthru
        _
      %p127 = scmp.lt.s32.totalorder %s12, 2
      // Predicated region
      $region21: #{generator_forward.27} parent=5 // pred_check
        %p128 = pneg %p127
      $region22: #{generator_forward.27} parent=5 // pred_check_branch
        %130 = sbr.rel (%p128) target = $region24
      $region23: #{generator_forward.27} parent=5 // pred_region
        // Predicated region
        $region25: #{generator_forward.27} parent=23 // pred_check
          %p131 = pneg %p32
        $region26: #{generator_forward.27} parent=23 // pred_check_branch
          %133 = sbr.rel (%p131) target = $region28
        $region27: #{generator_forward.27} parent=23 // pred_region
          %s134 = sand.u32 %s22, 1
          %s135 = scalar_lea.sflag [#allocation3], %s134
          %s136 = sand.u32 %s22, 1
          %s137 = smul.addr %s136, 72
          %s138 = scalar_lea.vmem [#allocation2], %s137
          %s139 = smul.u32 2, %s12
          %s141 = ssub.s32 1152, 1152
          %142 = vsyncadd %s135, %s141
          %s143 = smul.addr %s139, 9
          %s144 = smul.addr %s143, 64
          %s145 = scalar_lea.hbm %s0, %s144
          %s146 = sshll.u32 %s138, 4
          %s147 = int_to_ptr.vmem [resolvable:$true] %s146
          %152 = dma.hbm_to_vmem [thread:$0]  %s145, 1152, %s147, %s135, 576, 576, 36
        $region28: #{generator_forward.27} parent=23 // pred_fallthru
          _
      $region24: #{generator_forward.27} parent=5 // pred_fallthru
        _
      %p153 = scmp.le.s32.totalorder 1, %s12
      %p154 = scmp.lt.s32.totalorder %s12, 3
      %p155 = pnand %p153, %p154
      %p156 = pneg %p155
      // Predicated region
      $region29: #{generator_forward.27} parent=5 // pred_check
        _
      $region30: #{generator_forward.27} parent=5 // pred_check_branch
        %158 = sbr.rel (%p155) target = $region32
      $region31: #{generator_forward.27} parent=5 // pred_region
        %s159 = ssub.s32 %s12, 1
        %s160 = sand.u32 %s25, 1
        %s161 = scalar_lea.sflag [#allocation3], %s160
        %s162 = sand.u32 %s25, 1
        %s163 = smul.addr %s162, 72
        %s164 = scalar_lea.vmem [#allocation2], %s163
        // Predicated region
        $region33: #{generator_forward.27} parent=31 // pred_check
          %p165 = pneg %p38
        $region34: #{generator_forward.27} parent=31 // pred_check_branch
          %167 = sbr.rel (%p165) target = $region36
        $region35: #{generator_forward.27} parent=31 // pred_region
          %168 = dma.done %s161, 1152
        $region36: #{generator_forward.27} parent=31 // pred_fallthru
          _
        %s169 = sand.u32 %s25, 1
        %s170 = scalar_lea.sflag [#allocation3], %s169
        %s171 = sand.u32 %s25, 1
        %s172 = smul.addr %s171, 72
        %s173 = scalar_lea.vmem [#allocation2], %s172
        %p174 = pneg %p38
        %p175 = pneg %p35
        %p176 = pneg %p59
        %p177 = pneg %p56
        %p178 = pneg %p80
        %p179 = pneg %p77
        %p180 = pneg %p106
        %p181 = pneg %p103
        %s182 = smul.u32 2, %s17
        %p183 = scmp.lt.s32.totalorder %s182, 3
        %s184 = scalar_select %p183, %s182, 3
        %s185 = smul.addr %s184, 8
        %s186 = scalar_lea.vmem %s3, %s185
        %s187 = smul.u32 2, %s17
        %s188 = smul.u32 2, %s17
        %p189 = scmp.lt.s32.totalorder %s188, 3
        %s190 = scalar_select %p189, %s188, 3
        %s191 = smul.addr %s190, 8
        %s192 = scalar_lea.vmem %s3, %s191
        %s193 = smul.u32 2, %s17
        %v195 = vld [vmem:[%s164] sm:$0xff]
        %v196 = vld [vmem:[%s164 + $0x8] sm:$0xff]
        %v197 = vld [vmem:[%s164 + $0x10] sm:$0xff]
        %v198 = vld [vmem:[%s164 + $0x18] sm:$0xff]
        %v199 = vld [vmem:[%s164 + $0x20] sm:$0xf]
        %v200 = vld [vmem:[%s164 + $0x24] sm:$0xff]
        %v201 = vld [vmem:[%s164 + $0x2c] sm:$0xff]
        %v202 = vld [vmem:[%s164 + $0x34] sm:$0xff]
        %v203 = vld [vmem:[%s164 + $0x3c] sm:$0xff]
        %v204 = vld [vmem:[%s164 + $0x44] sm:$0xf]
        %v205 = vld [vmem:[%s1] sm:$0xf]
        %v206 = vld [vmem:[%s1 + $0x4] sm:$0xf]
        %v207 = vld [vmem:[%s1 + $0x8] sm:$0xf]
        %v208 = vld [vmem:[%s1 + $0xc] sm:$0xf]
        %v209 = vld [vmem:[%s1 + $0x10] sm:$0xf]
        %v210 = vld [vmem:[%s1 + $0x14] sm:$0xf]
        %v211 = vld [vmem:[%s1 + $0x18] sm:$0xf]
        %v212 = vld [vmem:[%s1 + $0x1c] sm:$0xf]
        %v213 = vld [vmem:[%s1 + $0x20] sm:$0xf]
        %v214 = vld [vmem:[%s1 + $0x24] sm:$0xf]
        %v215 = vld [vmem:[%s1 + $0x28] sm:$0xf]
        %v216 = vld [vmem:[%s1 + $0x2c] sm:$0xf]
        %v217 = vld [vmem:[%s1 + $0x30] sm:$0xf]
        %v218 = vld [vmem:[%s1 + $0x34] sm:$0xf]
        %v219 = vld [vmem:[%s1 + $0x38] sm:$0xf]
        %v220 = vld [vmem:[%s1 + $0x3c] sm:$0xf]
        %v221 = vld [vmem:[%s1 + $0x40] sm:$0xf]
        %v222 = vld [vmem:[%s1 + $0x44] sm:$0xf]
        %v223 = vld [vmem:[%s1 + $0x48] sm:$0xf]
        %v224 = vld [vmem:[%s1 + $0x4c] sm:$0xf]
        %v225 = vld [vmem:[%s1 + $0x50] sm:$0xf]
        %v226 = vld [vmem:[%s1 + $0x54] sm:$0xf]
        %v227 = vld [vmem:[%s1 + $0x58] sm:$0xf]
        %v228 = vld [vmem:[%s1 + $0x5c] sm:$0xf]
        %v229 = vld [vmem:[%s1 + $0x60] sm:$0xf]
        %v230 = vld [vmem:[%s1 + $0x64] sm:$0xf]
        %v231 = vld [vmem:[%s1 + $0x68] sm:$0xf]
        %v232 = vld [vmem:[%s1 + $0x6c] sm:$0xf]
        %v233 = vld [vmem:[%s1 + $0x70] sm:$0xf]
        %v234 = vld [vmem:[%s1 + $0x74] sm:$0xf]
        %v235 = vld [vmem:[%s1 + $0x78] sm:$0xf]
        %v236 = vld [vmem:[%s1 + $0x7c] sm:$0xf]
        %v237 = vld [vmem:[%s1 + $0x80] sm:$0xf]
        %v238 = vld [vmem:[%s1 + $0x84] sm:$0xf]
        %v239 = vld [vmem:[%s1 + $0x88] sm:$0xf]
        %v240 = vld [vmem:[%s1 + $0x8c] sm:$0xf]
        %v241 = vld [vmem:[%s1 + $0x90] sm:$0xf]
        %v242 = vld [vmem:[%s1 + $0x94] sm:$0xf]
        %v243 = vld [vmem:[%s1 + $0x98] sm:$0xf]
        %v244 = vld [vmem:[%s1 + $0x9c] sm:$0xf]
        %v245 = vld [vmem:[%s1 + $0xa0] sm:$0xf]
        %v246 = vld [vmem:[%s1 + $0xa4] sm:$0xf]
        %v247 = vld [vmem:[%s1 + $0xa8] sm:$0xf]
        %v248 = vld [vmem:[%s1 + $0xac] sm:$0xf]
        %v249 = vld [vmem:[%s1 + $0xb0] sm:$0xf]
        %v250 = vld [vmem:[%s1 + $0xb4] sm:$0xf]
        %v251 = vld [vmem:[%s1 + $0xb8] sm:$0xf]
        %v252 = vld [vmem:[%s1 + $0xbc] sm:$0xf]
        %v253 = vld [vmem:[%s1 + $0xc0] sm:$0xf]
        %v254 = vld [vmem:[%s1 + $0xc4] sm:$0xf]
        %v255 = vld [vmem:[%s1 + $0xc8] sm:$0xf]
        %v256 = vld [vmem:[%s1 + $0xcc] sm:$0xf]
        %v257 = vld [vmem:[%s1 + $0xd0] sm:$0xf]
        %v258 = vld [vmem:[%s1 + $0xd4] sm:$0xf]
        %v259 = vld [vmem:[%s1 + $0xd8] sm:$0xf]
        %v260 = vld [vmem:[%s1 + $0xdc] sm:$0xf]
        %v261 = vld [vmem:[%s1 + $0xe0] sm:$0xf]
        %v262 = vld [vmem:[%s1 + $0xe4] sm:$0xf]
        %v263 = vld [vmem:[%s1 + $0xe8] sm:$0xf]
        %v264 = vld [vmem:[%s1 + $0xec] sm:$0xf]
        %v265 = vld [vmem:[%s1 + $0xf0] sm:$0xf]
        %v266 = vld [vmem:[%s1 + $0xf4] sm:$0xf]
        %v267 = vld [vmem:[%s1 + $0xf8] sm:$0xf]
        %v268 = vld [vmem:[%s1 + $0xfc] sm:$0xf]
        %v269 = vld [vmem:[%s1 + $0x100] sm:$0xf]
        %v270 = vld [vmem:[%s1 + $0x104] sm:$0xf]
        %v271 = vld [vmem:[%s1 + $0x108] sm:$0xf]
        %v272 = vld [vmem:[%s1 + $0x10c] sm:$0xf]
        %v273 = vld [vmem:[%s1 + $0x110] sm:$0xf]
        %v274 = vld [vmem:[%s1 + $0x114] sm:$0xf]
        %v275 = vld [vmem:[%s1 + $0x118] sm:$0xf]
        %v276 = vld [vmem:[%s1 + $0x11c] sm:$0xf]
        %v277 = vld [vmem:[%s1 + $0x120] sm:$0xf]
        %v278 = vld [vmem:[%s1 + $0x124] sm:$0xf]
        %v279 = vld [vmem:[%s1 + $0x128] sm:$0xf]
        %v280 = vld [vmem:[%s1 + $0x12c] sm:$0xf]
        %v281 = vld [vmem:[%s1 + $0x130] sm:$0xf]
        %v282 = vld [vmem:[%s1 + $0x134] sm:$0xf]
        %v283 = vld [vmem:[%s1 + $0x138] sm:$0xf]
        %v284 = vld [vmem:[%s1 + $0x13c] sm:$0xf]
        %v285 = vld [vmem:[%s1 + $0x140] sm:$0xf]
        %v286 = vld [vmem:[%s1 + $0x144] sm:$0xf]
        %v287 = vld [vmem:[%s1 + $0x148] sm:$0xf]
        %v288 = vld [vmem:[%s1 + $0x14c] sm:$0xf]
        %v289 = vld [vmem:[%s1 + $0x150] sm:$0xf]
        %v290 = vld [vmem:[%s1 + $0x154] sm:$0xf]
        %v291 = vld [vmem:[%s1 + $0x158] sm:$0xf]
        %v292 = vld [vmem:[%s1 + $0x15c] sm:$0xf]
        %v293 = vld [vmem:[%s1 + $0x160] sm:$0xf]
        %v294 = vld [vmem:[%s1 + $0x164] sm:$0xf]
        %v295 = vld [vmem:[%s1 + $0x168] sm:$0xf]
        %v296 = vld [vmem:[%s1 + $0x16c] sm:$0xf]
        %v297 = vld [vmem:[%s1 + $0x170] sm:$0xf]
        %v298 = vld [vmem:[%s1 + $0x174] sm:$0xf]
        %v299 = vld [vmem:[%s1 + $0x178] sm:$0xf]
        %v300 = vld [vmem:[%s1 + $0x17c] sm:$0xf]
        %v301 = vld [vmem:[%s1 + $0x180] sm:$0xf]
        %v302 = vld [vmem:[%s1 + $0x184] sm:$0xf]
        %v303 = vld [vmem:[%s1 + $0x188] sm:$0xf]
        %v304 = vld [vmem:[%s1 + $0x18c] sm:$0xf]
        %v305 = vld [vmem:[%s1 + $0x190] sm:$0xf]
        %v306 = vld [vmem:[%s1 + $0x194] sm:$0xf]
        %v307 = vld [vmem:[%s1 + $0x198] sm:$0xf]
        %v308 = vld [vmem:[%s1 + $0x19c] sm:$0xf]
        %v309 = vld [vmem:[%s1 + $0x1a0] sm:$0xf]
        %v310 = vld [vmem:[%s1 + $0x1a4] sm:$0xf]
        %v311 = vld [vmem:[%s1 + $0x1a8] sm:$0xf]
        %v312 = vld [vmem:[%s1 + $0x1ac] sm:$0xf]
        %v313 = vld [vmem:[%s1 + $0x1b0] sm:$0xf]
        %v314 = vld [vmem:[%s1 + $0x1b4] sm:$0xf]
        %v315 = vld [vmem:[%s1 + $0x1b8] sm:$0xf]
        %v316 = vld [vmem:[%s1 + $0x1bc] sm:$0xf]
        %v317 = vld [vmem:[%s1 + $0x1c0] sm:$0xf]
        %v318 = vld [vmem:[%s1 + $0x1c4] sm:$0xf]
        %v319 = vld [vmem:[%s1 + $0x1c8] sm:$0xf]
        %v320 = vld [vmem:[%s1 + $0x1cc] sm:$0xf]
        %v321 = vld [vmem:[%s1 + $0x1d0] sm:$0xf]
        %v322 = vld [vmem:[%s1 + $0x1d4] sm:$0xf]
        %v323 = vld [vmem:[%s1 + $0x1d8] sm:$0xf]
        %v324 = vld [vmem:[%s1 + $0x1dc] sm:$0xf]
        %v325 = vld [vmem:[%s1 + $0x1e0] sm:$0xf]
        %v326 = vld [vmem:[%s1 + $0x1e4] sm:$0xf]
        %v327 = vld [vmem:[%s1 + $0x1e8] sm:$0xf]
        %v328 = vld [vmem:[%s1 + $0x1ec] sm:$0xf]
        %v329 = vld [vmem:[%s1 + $0x1f0] sm:$0xf]
        %v330 = vld [vmem:[%s1 + $0x1f4] sm:$0xf]
        %v331 = vld [vmem:[%s1 + $0x1f8] sm:$0xf]
        %v332 = vld [vmem:[%s1 + $0x1fc] sm:$0xf]
        %v333 = vld [vmem:[%s1 + $0x200] sm:$0xf]
        %v334 = vld [vmem:[%s1 + $0x204] sm:$0xf]
        %v335 = vld [vmem:[%s1 + $0x208] sm:$0xf]
        %v336 = vld [vmem:[%s1 + $0x20c] sm:$0xf]
        %v337 = vld [vmem:[%s1 + $0x210] sm:$0xf]
        %v338 = vld [vmem:[%s1 + $0x214] sm:$0xf]
        %v339 = vld [vmem:[%s1 + $0x218] sm:$0xf]
        %v340 = vld [vmem:[%s1 + $0x21c] sm:$0xf]
        %v341 = vld [vmem:[%s1 + $0x220] sm:$0xf]
        %v342 = vld [vmem:[%s1 + $0x224] sm:$0xf]
        %v343 = vld [vmem:[%s1 + $0x228] sm:$0xf]
        %v344 = vld [vmem:[%s1 + $0x22c] sm:$0xf]
        %v345 = vld [vmem:[%s1 + $0x230] sm:$0xf]
        %v346 = vld [vmem:[%s1 + $0x234] sm:$0xf]
        %v347 = vld [vmem:[%s1 + $0x238] sm:$0xf]
        %v348 = vld [vmem:[%s1 + $0x23c] sm:$0xf]
        %v349 = vld [vmem:[%s2] sm:$0x1]
        %v351 = vlaneseq
        %v352 = vshrl.u32 %v351, 7
        %v353 = vsub.s32 0, %v352
        %v354 = vrot.slane %v349, %v353
        %v366 = vunpack.c.l.b16 %v195
        %v367 = vunpack.c.h.b16 %v195
        %v368 = vunpack.c.l.b16 %v196
        %v369 = vunpack.c.h.b16 %v196
        %v370 = vunpack.c.l.b16 %v197
        %v371 = vunpack.c.h.b16 %v197
        %v372 = vunpack.c.l.b16 %v198
        %v373 = vunpack.c.h.b16 %v198
        %v374 = vunpack.c.l.b16 %v199
        %v375 = vunpack.c.l.b16 %v200
        %v376 = vunpack.c.h.b16 %v200
        %v377 = vunpack.c.l.b16 %v201
        %v378 = vunpack.c.h.b16 %v201
        %v379 = vunpack.c.l.b16 %v202
        %v380 = vunpack.c.h.b16 %v202
        %v381 = vunpack.c.l.b16 %v203
        %v382 = vunpack.c.h.b16 %v203
        %v383 = vunpack.c.l.b16 %v204
        %v384 = vpack.c.b16 %v375, %v366
        %v385 = vpack.c.b16 %v376, %v367
        %v386 = vpack.c.b16 %v377, %v368
        %v387 = vpack.c.b16 %v378, %v369
        %v388 = vpack.c.b16 %v379, %v370
        %v389 = vpack.c.b16 %v380, %v371
        %v390 = vpack.c.b16 %v381, %v372
        %v391 = vpack.c.b16 %v382, %v373
        %v392 = vpack.c.b16 %v383, %v374
        %v546 = vunpack.c.l.b16 %v205
        %v547 = vunpack.c.l.b16 %v206
        %v548 = vunpack.c.l.b16 %v207
        %v549 = vunpack.c.l.b16 %v208
        %v550 = vunpack.c.l.b16 %v209
        %v551 = vunpack.c.l.b16 %v210
        %v552 = vunpack.c.l.b16 %v211
        %v553 = vunpack.c.l.b16 %v212
        %v554 = vunpack.c.l.b16 %v213
        %v555 = vunpack.c.l.b16 %v214
        %v556 = vunpack.c.l.b16 %v215
        %v557 = vunpack.c.l.b16 %v216
        %v558 = vunpack.c.l.b16 %v217
        %v559 = vunpack.c.l.b16 %v218
        %v560 = vunpack.c.l.b16 %v219
        %v561 = vunpack.c.l.b16 %v220
        %v562 = vunpack.c.l.b16 %v221
        %v563 = vunpack.c.l.b16 %v222
        %v564 = vunpack.c.l.b16 %v223
        %v565 = vunpack.c.l.b16 %v224
        %v566 = vunpack.c.l.b16 %v225
        %v567 = vunpack.c.l.b16 %v226
        %v568 = vunpack.c.l.b16 %v227
        %v569 = vunpack.c.l.b16 %v228
        %v570 = vunpack.c.l.b16 %v229
        %v571 = vunpack.c.l.b16 %v230
        %v572 = vunpack.c.l.b16 %v231
        %v573 = vunpack.c.l.b16 %v232
        %v574 = vunpack.c.l.b16 %v233
        %v575 = vunpack.c.l.b16 %v234
        %v576 = vunpack.c.l.b16 %v235
        %v577 = vunpack.c.l.b16 %v236
        %v578 = vunpack.c.l.b16 %v237
        %v579 = vunpack.c.l.b16 %v238
        %v580 = vunpack.c.l.b16 %v239
        %v581 = vunpack.c.l.b16 %v240
        %v582 = vunpack.c.l.b16 %v241
        %v583 = vunpack.c.l.b16 %v242
        %v584 = vunpack.c.l.b16 %v243
        %v585 = vunpack.c.l.b16 %v244
        %v586 = vunpack.c.l.b16 %v245
        %v587 = vunpack.c.l.b16 %v246
        %v588 = vunpack.c.l.b16 %v247
        %v589 = vunpack.c.l.b16 %v248
        %v590 = vunpack.c.l.b16 %v249
        %v591 = vunpack.c.l.b16 %v250
        %v592 = vunpack.c.l.b16 %v251
        %v593 = vunpack.c.l.b16 %v252
        %v594 = vunpack.c.l.b16 %v253
        %v595 = vunpack.c.l.b16 %v254
        %v596 = vunpack.c.l.b16 %v255
        %v597 = vunpack.c.l.b16 %v256
        %v598 = vunpack.c.l.b16 %v257
        %v599 = vunpack.c.l.b16 %v258
        %v600 = vunpack.c.l.b16 %v259
        %v601 = vunpack.c.l.b16 %v260
        %v602 = vunpack.c.l.b16 %v261
        %v603 = vunpack.c.l.b16 %v262
        %v604 = vunpack.c.l.b16 %v263
        %v605 = vunpack.c.l.b16 %v264
        %v606 = vunpack.c.l.b16 %v265
        %v607 = vunpack.c.l.b16 %v266
        %v608 = vunpack.c.l.b16 %v267
        %v609 = vunpack.c.l.b16 %v268
        %v610 = vunpack.c.l.b16 %v269
        %v611 = vunpack.c.l.b16 %v270
        %v612 = vunpack.c.l.b16 %v271
        %v613 = vunpack.c.l.b16 %v272
        %v614 = vunpack.c.l.b16 %v273
        %v615 = vunpack.c.l.b16 %v274
        %v616 = vunpack.c.l.b16 %v275
        %v617 = vunpack.c.l.b16 %v276
        %v618 = vunpack.c.l.b16 %v277
        %v619 = vunpack.c.l.b16 %v278
        %v620 = vunpack.c.l.b16 %v279
        %v621 = vunpack.c.l.b16 %v280
        %v622 = vunpack.c.l.b16 %v281
        %v623 = vunpack.c.l.b16 %v282
        %v624 = vunpack.c.l.b16 %v283
        %v625 = vunpack.c.l.b16 %v284
        %v626 = vunpack.c.l.b16 %v285
        %v627 = vunpack.c.l.b16 %v286
        %v628 = vunpack.c.l.b16 %v287
        %v629 = vunpack.c.l.b16 %v288
        %v630 = vunpack.c.l.b16 %v289
        %v631 = vunpack.c.l.b16 %v290
        %v632 = vunpack.c.l.b16 %v291
        %v633 = vunpack.c.l.b16 %v292
        %v634 = vunpack.c.l.b16 %v293
        %v635 = vunpack.c.l.b16 %v294
        %v636 = vunpack.c.l.b16 %v295
        %v637 = vunpack.c.l.b16 %v296
        %v638 = vunpack.c.l.b16 %v297
        %v639 = vunpack.c.l.b16 %v298
        %v640 = vunpack.c.l.b16 %v299
        %v641 = vunpack.c.l.b16 %v300
        %v642 = vunpack.c.l.b16 %v301
        %v643 = vunpack.c.l.b16 %v302
        %v644 = vunpack.c.l.b16 %v303
        %v645 = vunpack.c.l.b16 %v304
        %v646 = vunpack.c.l.b16 %v305
        %v647 = vunpack.c.l.b16 %v306
        %v648 = vunpack.c.l.b16 %v307
        %v649 = vunpack.c.l.b16 %v308
        %v650 = vunpack.c.l.b16 %v309
        %v651 = vunpack.c.l.b16 %v310
        %v652 = vunpack.c.l.b16 %v311
        %v653 = vunpack.c.l.b16 %v312
        %v654 = vunpack.c.l.b16 %v313
        %v655 = vunpack.c.l.b16 %v314
        %v656 = vunpack.c.l.b16 %v315
        %v657 = vunpack.c.l.b16 %v316
        %v658 = vunpack.c.l.b16 %v317
        %v659 = vunpack.c.l.b16 %v318
        %v660 = vunpack.c.l.b16 %v319
        %v661 = vunpack.c.l.b16 %v320
        %v662 = vunpack.c.l.b16 %v321
        %v663 = vunpack.c.l.b16 %v322
        %v664 = vunpack.c.l.b16 %v323
        %v665 = vunpack.c.l.b16 %v324
        %v666 = vunpack.c.l.b16 %v325
        %v667 = vunpack.c.l.b16 %v326
        %v668 = vunpack.c.l.b16 %v327
        %v669 = vunpack.c.l.b16 %v328
        %v670 = vunpack.c.l.b16 %v329
        %v671 = vunpack.c.l.b16 %v330
        %v672 = vunpack.c.l.b16 %v331
        %v673 = vunpack.c.l.b16 %v332
        %v674 = vunpack.c.l.b16 %v333
        %v675 = vunpack.c.l.b16 %v334
        %v676 = vunpack.c.l.b16 %v335
        %v677 = vunpack.c.l.b16 %v336
        %v678 = vunpack.c.l.b16 %v337
        %v679 = vunpack.c.l.b16 %v338
        %v680 = vunpack.c.l.b16 %v339
        %v681 = vunpack.c.l.b16 %v340
        %v682 = vunpack.c.l.b16 %v341
        %v683 = vunpack.c.l.b16 %v342
        %v684 = vunpack.c.l.b16 %v343
        %v685 = vunpack.c.l.b16 %v344
        %v686 = vunpack.c.l.b16 %v345
        %v687 = vunpack.c.l.b16 %v346
        %v688 = vunpack.c.l.b16 %v347
        %v689 = vunpack.c.l.b16 %v348
        %v690 = vpack.c.b16 %v547, %v546
        %v691 = vpack.c.b16 %v549, %v548
        %v692 = vpack.c.b16 %v551, %v550
        %v693 = vpack.c.b16 %v553, %v552
        %v694 = vpack.c.b16 %v555, %v554
        %v695 = vpack.c.b16 %v557, %v556
        %v696 = vpack.c.b16 %v559, %v558
        %v697 = vpack.c.b16 %v561, %v560
        %v698 = vpack.c.b16 %v563, %v562
        %v699 = vpack.c.b16 %v565, %v564
        %v700 = vpack.c.b16 %v567, %v566
        %v701 = vpack.c.b16 %v569, %v568
        %v702 = vpack.c.b16 %v571, %v570
        %v703 = vpack.c.b16 %v573, %v572
        %v704 = vpack.c.b16 %v575, %v574
        %v705 = vpack.c.b16 %v577, %v576
        %v706 = vpack.c.b16 %v579, %v578
        %v707 = vpack.c.b16 %v581, %v580
        %v708 = vpack.c.b16 %v583, %v582
        %v709 = vpack.c.b16 %v585, %v584
        %v710 = vpack.c.b16 %v587, %v586
        %v711 = vpack.c.b16 %v589, %v588
        %v712 = vpack.c.b16 %v591, %v590
        %v713 = vpack.c.b16 %v593, %v592
        %v714 = vpack.c.b16 %v595, %v594
        %v715 = vpack.c.b16 %v597, %v596
        %v716 = vpack.c.b16 %v599, %v598
        %v717 = vpack.c.b16 %v601, %v600
        %v718 = vpack.c.b16 %v603, %v602
        %v719 = vpack.c.b16 %v605, %v604
        %v720 = vpack.c.b16 %v607, %v606
        %v721 = vpack.c.b16 %v609, %v608
        %v722 = vpack.c.b16 %v611, %v610
        %v723 = vpack.c.b16 %v613, %v612
        %v724 = vpack.c.b16 %v615, %v614
        %v725 = vpack.c.b16 %v617, %v616
        %v726 = vpack.c.b16 %v619, %v618
        %v727 = vpack.c.b16 %v621, %v620
        %v728 = vpack.c.b16 %v623, %v622
        %v729 = vpack.c.b16 %v625, %v624
        %v730 = vpack.c.b16 %v627, %v626
        %v731 = vpack.c.b16 %v629, %v628
        %v732 = vpack.c.b16 %v631, %v630
        %v733 = vpack.c.b16 %v633, %v632
        %v734 = vpack.c.b16 %v635, %v634
        %v735 = vpack.c.b16 %v637, %v636
        %v736 = vpack.c.b16 %v639, %v638
        %v737 = vpack.c.b16 %v641, %v640
        %v738 = vpack.c.b16 %v643, %v642
        %v739 = vpack.c.b16 %v645, %v644
        %v740 = vpack.c.b16 %v647, %v646
        %v741 = vpack.c.b16 %v649, %v648
        %v742 = vpack.c.b16 %v651, %v650
        %v743 = vpack.c.b16 %v653, %v652
        %v744 = vpack.c.b16 %v655, %v654
        %v745 = vpack.c.b16 %v657, %v656
        %v746 = vpack.c.b16 %v659, %v658
        %v747 = vpack.c.b16 %v661, %v660
        %v748 = vpack.c.b16 %v663, %v662
        %v749 = vpack.c.b16 %v665, %v664
        %v750 = vpack.c.b16 %v667, %v666
        %v751 = vpack.c.b16 %v669, %v668
        %v752 = vpack.c.b16 %v671, %v670
        %v753 = vpack.c.b16 %v673, %v672
        %v754 = vpack.c.b16 %v675, %v674
        %v755 = vpack.c.b16 %v677, %v676
        %v756 = vpack.c.b16 %v679, %v678
        %v757 = vpack.c.b16 %v681, %v680
        %v758 = vpack.c.b16 %v683, %v682
        %v759 = vpack.c.b16 %v685, %v684
        %v760 = vpack.c.b16 %v687, %v686
        %v761 = vpack.c.b16 %v689, %v688
        %834 = vmatprep.subr.bf16.mxu0 0
        %835 = vmatpush1.bf16.msra.mxu0 %v690
        %836 = vmatprep.subr.bf16.mxu0 0
        %837 = vmatpush1.bf16.msra.mxu0 %v691
        %838 = vmatprep.subr.bf16.mxu0 0
        %839 = vmatpush1.bf16.msra.mxu0 %v692
        %840 = vmatprep.subr.bf16.mxu0 0
        %841 = vmatpush1.bf16.msra.mxu0 %v693
        %842 = vmatprep.subr.bf16.mxu0 0
        %843 = vmatpush1.bf16.msra.mxu0 %v694
        %844 = vmatprep.subr.bf16.mxu0 0
        %845 = vmatpush1.bf16.msra.mxu0 %v695
        %846 = vmatprep.subr.bf16.mxu0 0
        %847 = vmatpush1.bf16.msra.mxu0 %v696
        %848 = vmatprep.subr.bf16.mxu0 0
        %849 = vmatpush1.bf16.msra.mxu0 %v697
        %850 = vmatprep.subr.bf16.mxu0 0
        %851 = vmatpush1.bf16.msra.mxu0 %v698
        %852 = vmatprep.subr.bf16.mxu0 0
        %853 = vmatpush1.bf16.msra.mxu0 %v699
        %854 = vmatprep.subr.bf16.mxu0 0
        %855 = vmatpush1.bf16.msra.mxu0 %v700
        %856 = vmatprep.subr.bf16.mxu0 0
        %857 = vmatpush1.bf16.msra.mxu0 %v701
        %858 = vmatprep.subr.bf16.mxu0 0
        %859 = vmatpush1.bf16.msra.mxu0 %v702
        %860 = vmatprep.subr.bf16.mxu0 0
        %861 = vmatpush1.bf16.msra.mxu0 %v703
        %862 = vmatprep.subr.bf16.mxu0 0
        %863 = vmatpush1.bf16.msra.mxu0 %v704
        %864 = vmatprep.subr.bf16.mxu0 0
        %865 = vmatpush1.bf16.msra.mxu0 %v705
        %866 = vmatprep.mubr.bf16.mxu0 %v385
        %867 = vmatmul.mubr.bf16.gmra.mrb[0].mxu0 %v384
        %v868 = vpop.f32.mrb[0].mxu0
        %v869 = vadd.f32 %v354, %v868
        %v870 = vpop.f32.mrb[0].mxu0
        %v871 = vpop.f32.mrb[0].mxu0
        %v872 = vadd.f32 %v354, %v871
        %v873 = vpop.f32.mrb[0].mxu0
        %874 = vdwg.mxu0
        %875 = vmatprep.subr.bf16.mxu0 0
        %876 = vmatpush1.bf16.msra.mxu0 %v706
        %877 = vmatprep.subr.bf16.mxu0 0
        %878 = vmatpush1.bf16.msra.mxu0 %v707
        %879 = vmatprep.subr.bf16.mxu0 0
        %880 = vmatpush1.bf16.msra.mxu0 %v708
        %881 = vmatprep.subr.bf16.mxu0 0
        %882 = vmatpush1.bf16.msra.mxu0 %v709
        %883 = vmatprep.subr.bf16.mxu0 0
        %884 = vmatpush1.bf16.msra.mxu0 %v710
        %885 = vmatprep.subr.bf16.mxu0 0
        %886 = vmatpush1.bf16.msra.mxu0 %v711
        %887 = vmatprep.subr.bf16.mxu0 0
        %888 = vmatpush1.bf16.msra.mxu0 %v712
        %889 = vmatprep.subr.bf16.mxu0 0
        %890 = vmatpush1.bf16.msra.mxu0 %v713
        %891 = vmatprep.subr.bf16.mxu0 0
        %892 = vmatpush1.bf16.msra.mxu0 %v714
        %893 = vmatprep.subr.bf16.mxu0 0
        %894 = vmatpush1.bf16.msra.mxu0 %v715
        %895 = vmatprep.subr.bf16.mxu0 0
        %896 = vmatpush1.bf16.msra.mxu0 %v716
        %897 = vmatprep.subr.bf16.mxu0 0
        %898 = vmatpush1.bf16.msra.mxu0 %v717
        %899 = vmatprep.subr.bf16.mxu0 0
        %900 = vmatpush1.bf16.msra.mxu0 %v718
        %901 = vmatprep.subr.bf16.mxu0 0
        %902 = vmatpush1.bf16.msra.mxu0 %v719
        %903 = vmatprep.subr.bf16.mxu0 0
        %904 = vmatpush1.bf16.msra.mxu0 %v720
        %905 = vmatprep.subr.bf16.mxu0 0
        %906 = vmatpush1.bf16.msra.mxu0 %v721
        %907 = vmatprep.mubr.bf16.mxu0 %v387
        %908 = vmatmul.mubr.bf16.gmra.mrb[0].mxu0 %v386
        %v909 = vpop.f32.mrb[0].mxu0
        %v910 = vadd.f32 %v869, %v909
        %v911 = vpop.f32.mrb[0].mxu0
        %v912 = vpop.f32.mrb[0].mxu0
        %v913 = vadd.f32 %v872, %v912
        %v914 = vpop.f32.mrb[0].mxu0
        %915 = vdwg.mxu0
        %916 = vmatprep.subr.bf16.mxu0 0
        %917 = vmatpush1.bf16.msra.mxu0 %v722
        %918 = vmatprep.subr.bf16.mxu0 0
        %919 = vmatpush1.bf16.msra.mxu0 %v723
        %920 = vmatprep.subr.bf16.mxu0 0
        %921 = vmatpush1.bf16.msra.mxu0 %v724
        %922 = vmatprep.subr.bf16.mxu0 0
        %923 = vmatpush1.bf16.msra.mxu0 %v725
        %924 = vmatprep.subr.bf16.mxu0 0
        %925 = vmatpush1.bf16.msra.mxu0 %v726
        %926 = vmatprep.subr.bf16.mxu0 0
        %927 = vmatpush1.bf16.msra.mxu0 %v727
        %928 = vmatprep.subr.bf16.mxu0 0
        %929 = vmatpush1.bf16.msra.mxu0 %v728
        %930 = vmatprep.subr.bf16.mxu0 0
        %931 = vmatpush1.bf16.msra.mxu0 %v729
        %932 = vmatprep.subr.bf16.mxu0 0
        %933 = vmatpush1.bf16.msra.mxu0 %v730
        %934 = vmatprep.subr.bf16.mxu0 0
        %935 = vmatpush1.bf16.msra.mxu0 %v731
        %936 = vmatprep.subr.bf16.mxu0 0
        %937 = vmatpush1.bf16.msra.mxu0 %v732
        %938 = vmatprep.subr.bf16.mxu0 0
        %939 = vmatpush1.bf16.msra.mxu0 %v733
        %940 = vmatprep.subr.bf16.mxu0 0
        %941 = vmatpush1.bf16.msra.mxu0 %v734
        %942 = vmatprep.subr.bf16.mxu0 0
        %943 = vmatpush1.bf16.msra.mxu0 %v735
        %944 = vmatprep.subr.bf16.mxu0 0
        %945 = vmatpush1.bf16.msra.mxu0 %v736
        %946 = vmatprep.subr.bf16.mxu0 0
        %947 = vmatpush1.bf16.msra.mxu0 %v737
        %948 = vmatprep.mubr.bf16.mxu0 %v389
        %949 = vmatmul.mubr.bf16.gmra.mrb[0].mxu0 %v388
        %v950 = vpop.f32.mrb[0].mxu0
        %v951 = vadd.f32 %v910, %v950
        %v952 = vpop.f32.mrb[0].mxu0
        %v953 = vpop.f32.mrb[0].mxu0
        %v954 = vadd.f32 %v913, %v953
        %v955 = vpop.f32.mrb[0].mxu0
        %956 = vdwg.mxu0
        %957 = vmatprep.subr.bf16.mxu0 0
        %958 = vmatpush1.bf16.msra.mxu0 %v738
        %959 = vmatprep.subr.bf16.mxu0 0
        %960 = vmatpush1.bf16.msra.mxu0 %v739
        %961 = vmatprep.subr.bf16.mxu0 0
        %962 = vmatpush1.bf16.msra.mxu0 %v740
        %963 = vmatprep.subr.bf16.mxu0 0
        %964 = vmatpush1.bf16.msra.mxu0 %v741
        %965 = vmatprep.subr.bf16.mxu0 0
        %966 = vmatpush1.bf16.msra.mxu0 %v742
        %967 = vmatprep.subr.bf16.mxu0 0
        %968 = vmatpush1.bf16.msra.mxu0 %v743
        %969 = vmatprep.subr.bf16.mxu0 0
        %970 = vmatpush1.bf16.msra.mxu0 %v744
        %971 = vmatprep.subr.bf16.mxu0 0
        %972 = vmatpush1.bf16.msra.mxu0 %v745
        %973 = vmatprep.subr.bf16.mxu0 0
        %974 = vmatpush1.bf16.msra.mxu0 %v746
        %975 = vmatprep.subr.bf16.mxu0 0
        %976 = vmatpush1.bf16.msra.mxu0 %v747
        %977 = vmatprep.subr.bf16.mxu0 0
        %978 = vmatpush1.bf16.msra.mxu0 %v748
        %979 = vmatprep.subr.bf16.mxu0 0
        %980 = vmatpush1.bf16.msra.mxu0 %v749
        %981 = vmatprep.subr.bf16.mxu0 0
        %982 = vmatpush1.bf16.msra.mxu0 %v750
        %983 = vmatprep.subr.bf16.mxu0 0
        %984 = vmatpush1.bf16.msra.mxu0 %v751
        %985 = vmatprep.subr.bf16.mxu0 0
        %986 = vmatpush1.bf16.msra.mxu0 %v752
        %987 = vmatprep.subr.bf16.mxu0 0
        %988 = vmatpush1.bf16.msra.mxu0 %v753
        %989 = vmatprep.mubr.bf16.mxu0 %v391
        %990 = vmatmul.mubr.bf16.gmra.mrb[0].mxu0 %v390
        %v991 = vpop.f32.mrb[0].mxu0
        %v992 = vadd.f32 %v951, %v991
        %v993 = vpop.f32.mrb[0].mxu0
        %v994 = vpop.f32.mrb[0].mxu0
        %v995 = vadd.f32 %v954, %v994
        %v996 = vpop.f32.mrb[0].mxu0
        %997 = vdwg.mxu0
        %998 = vmatprep.subr.bf16.mxu0 0
        %999 = vmatpush1.bf16.msra.mxu0 %v754
        %1000 = vmatprep.subr.bf16.mxu0 0
        %1001 = vmatpush1.bf16.msra.mxu0 %v755
        %1002 = vmatprep.subr.bf16.mxu0 0
        %1003 = vmatpush1.bf16.msra.mxu0 %v756
        %1004 = vmatprep.subr.bf16.mxu0 0
        %1005 = vmatpush1.bf16.msra.mxu0 %v757
        %1006 = vmatprep.subr.bf16.mxu0 0
        %1007 = vmatpush1.bf16.msra.mxu0 %v758
        %1008 = vmatprep.subr.bf16.mxu0 0
        %1009 = vmatpush1.bf16.msra.mxu0 %v759
        %1010 = vmatprep.subr.bf16.mxu0 0
        %1011 = vmatpush1.bf16.msra.mxu0 %v760
        %1012 = vmatprep.subr.bf16.mxu0 0
        %1013 = vmatpush1.bf16.msra.mxu0 %v761
        %1014 = vmatprep.subr.bf16.mxu0 0
        %1015 = vmatpush1.bf16.msra.mxu0 0
        %1016 = vmatprep.subr.bf16.mxu0 0
        %1017 = vmatpush1.bf16.msra.mxu0 0
        %1018 = vmatprep.subr.bf16.mxu0 0
        %1019 = vmatpush1.bf16.msra.mxu0 0
        %1020 = vmatprep.subr.bf16.mxu0 0
        %1021 = vmatpush1.bf16.msra.mxu0 0
        %1022 = vmatprep.subr.bf16.mxu0 0
        %1023 = vmatpush1.bf16.msra.mxu0 0
        %1024 = vmatprep.subr.bf16.mxu0 0
        %1025 = vmatpush1.bf16.msra.mxu0 0
        %1026 = vmatprep.subr.bf16.mxu0 0
        %1027 = vmatpush1.bf16.msra.mxu0 0
        %1028 = vmatprep.subr.bf16.mxu0 0
        %1029 = vmatpush1.bf16.msra.mxu0 0
        %1030 = vmatprep.mubr.bf16.mxu0 0
        %1031 = vmatmul.mubr.bf16.gmra.mrb[0].mxu0 %v392
        %v1032 = vpop.f32.mrb[0].mxu0
        %v1033 = vadd.f32 %v992, %v1032
        %v1034 = vpop.f32.mrb[0].mxu0
        %v1035 = vpop.f32.mrb[0].mxu0
        %v1036 = vadd.f32 %v995, %v1035
        %v1037 = vpop.f32.mrb[0].mxu0
        %1038 = vdwg.mxu0
        %v1039 = vadd.f32 %v1033, %v1036
        %v1040 = vrot.slane %v1039, 4
        %v1041 = vadd.f32 %v1039, %v1040
        %v1042 = vrot.slane %v1041, 2
        %v1043 = vadd.f32 %v1041, %v1042
        %v1044 = vrot.slane %v1043, 1
        %v1045 = vadd.f32 %v1043, %v1044
        %v1046 = vrcp.pop 16.0
        %v1047 = vmul.f32 %v1045, %v1046
        %v1048 = vsub.f32 %v1033, %v1047
        %v1049 = vsub.f32 %v1036, %v1047
        %v1050 = vmul.f32 %v1048, %v1048
        %v1051 = vmul.f32 %v1049, %v1049
        %v1052 = vadd.f32 %v1050, %v1051
        %v1053 = vrot.slane %v1052, 4
        %v1054 = vadd.f32 %v1052, %v1053
        %v1055 = vrot.slane %v1054, 2
        %v1056 = vadd.f32 %v1054, %v1055
        %v1057 = vrot.slane %v1056, 1
        %v1058 = vadd.f32 %v1056, %v1057
        %v1059 = vmul.f32 %v1058, %v1046
        %v1060 = vadd.f32 %v1059, 1e-05
        %v1061 = vrsqrt.pop %v1060
        %v1062 = vmul.f32 %v1048, %v1061
        %v1063 = vmul.f32 %v1049, %v1061
        %v1064 = vmax.f32 %v1062, 0.0
        %v1065 = vmax.f32 %v1063, 0.0
        %1066 = vst [vmem:[%s192] sm:$0xff] %v1064
        %1067 = vst [vmem:[%s192 + $0x8] sm:$0xff] %v1065
        %s1068 = smul.u32 2, %s17
        %p1069 = scmp.lt.s32.totalorder %s1068, 3
        %s1070 = scalar_select %p1069, %s1068, 3
        %s1071 = smul.addr %s1070, 8
        %s1072 = scalar_lea.vmem %s3, %s1071
        // Predicated region
        $region37: #{generator_forward.27} parent=31 // pred_check
          %p1073 = pneg %p103
        $region38: #{generator_forward.27} parent=31 // pred_check_branch
          %1075 = sbr.rel (%p1073) target = $region40
        $region39: #{generator_forward.27} parent=31 // pred_region
          %s1076 = smul.u32 2, %s17
        $region40: #{generator_forward.27} parent=31 // pred_fallthru
          _
      $region32: #{generator_forward.27} parent=5 // pred_fallthru
        _
      %p1077 = scmp.le.s32.totalorder 2, %s12
      // Predicated region
      $region41: #{generator_forward.27} parent=5 // pred_check
        %p1078 = pneg %p1077
      $region42: #{generator_forward.27} parent=5 // pred_check_branch
        %1080 = sbr.rel (%p1078) target = $region44
      $region43: #{generator_forward.27} parent=5 // pred_region
        %s1081 = ssub.s32 %s12, 2
        // Predicated region
        $region45: #{generator_forward.27} parent=43 // pred_check
          %p1082 = pneg %p109
        $region46: #{generator_forward.27} parent=43 // pred_check_branch
          %1084 = sbr.rel (%p1082) target = $region48
        $region47: #{generator_forward.27} parent=43 // pred_region
          %s1085 = smul.u32 2, %s18
          %p1086 = scmp.lt.s32.totalorder %s1085, 3
          %s1087 = scalar_select %p1086, %s1085, 3
          %s1088 = smul.addr %s1087, 8
          %s1089 = scalar_lea.vmem %s3, %s1088
        $region48: #{generator_forward.27} parent=43 // pred_fallthru
          _
      $region44: #{generator_forward.27} parent=5 // pred_fallthru
        _
    $region6: #{generator_forward.27} parent=1 // loop_footer
      %s16 = sadd.s32 1, %s12
    $region7: #{generator_forward.27} parent=1 // loop_footer_branch
      %11 = sbr.rel target = $region3
    $region8: #{generator_forward.27} parent=1 // loop_exit
      _
    %1090 = vsyncpa [#allocation3], 1
    %s1091 = scalar_lea.sflag [#allocation3], 1
    %1092 = vsyncpa %s1091, 1

// kernel: generator_forward.28
$region0: #{generator_forward.28}
  #allocation0 [shape = 'u32[]', space=smem, size = 0x4, offset = 0x4, fixed_abs, tag = 'smem constant byte address 0x4 - core index']
  #allocation1 [shape = 'u32[144,128]{1,0:T(1,128)}', space=vmem, size = 0x12000, scoped, tag = 'internal scratch']
  %s0 = inlined_call_operand.hbm [shape: bf16[32,1152], index: 0, kind: input, shape index: {}]
  %s1 = inlined_call_operand.vmem [shape: bf16[1152,128], index: 1, kind: input, shape index: {}]
  %s2 = inlined_call_operand.vmem [shape: f32[1,128], index: 2, kind: input, shape index: {}]
  %s3 = inlined_call_operand.vmem [shape: f32[32,128], index: 3, kind: input, shape index: {}]
  %s4 = inlined_call_operand.vmem [shape: f32[32,128], index: 4, kind: output, shape index: {}]
  %s5 = sld [smem:[#allocation0]]
  $region53: #{generator_forward.28} parent=0
    _
  %s7 = ssub.s32 1, %s5
  %s8 = scalar_select 0, %s7, %s5
  $region1: #{generator_forward.28} parent=0
    #allocation2 [shape = 'u8[73728]{0}', space=vmem, size = 0x12000, scoped, tag = 'input window, operand 0']
    #allocation3 [shape = 's32[2]{0}', space=sflag, size = 0x8, scoped, tag = 'scoped memory for generator_forward.28']
    %9 = vsyncpa [#allocation3], 0
    %s10 = scalar_lea.sflag [#allocation3], 1
    %11 = vsyncpa %s10, 0
    loop: start=0, step=1, limit=4
    $region2: #{generator_forward.28} parent=1 // loop_pre_header
      _
    $region3: #{generator_forward.28} parent=1 // loop_header
      %s13 = sphi 0, %s17
      %p14 = scmp.ge.s32.totalorder %s13, 4
      %s23 = sphi 0, %s25
      %s26 = sphi 0, %s23
      %s27 = sphi 0, %s26
      %s43 = sphi 0, %s27
      %s47 = sphi 0, %s47
      %s49 = sphi 0, %s47
      %s50 = sphi 0, %s49
      %s64 = sphi 0, %s50
      %s68 = sphi 0, %s68
      %s70 = sphi 0, %s68
      %s71 = sphi 0, %s70
      %s85 = sphi 0, %s71
      %s91 = sphi 0, %s93
      %s94 = sphi 0, %s91
      %s95 = sphi 0, %s94
      %s111 = sphi 0, %s95
      %s117 = sphi 0, %s119
      %s120 = sphi 0, %s117
      %s121 = sphi 0, %s120
      %s137 = sphi 0, %s121
    $region4: #{generator_forward.28} parent=1 // loop_header_branch
      %16 = sbr.rel (%p14) target = $region8
    $region5: #{generator_forward.28} parent=1 // loop_body
      %s18 = ssub.s32 %s13, 1
      %s19 = ssub.s32 %s13, 2
      %s20 = sadd.s32 %s13, 1
      %s21 = ssub.s32 %s13, %s20
      %p22 = scmp.eq.s32.totalorder %s21, 0
      %s24 = sadd.s32 %s23, 1
      %s25 = scalar_select %p22, %s23, %s24
      %p28 = pneg %p22
      %p29 = scmp.eq.s32.totalorder %s13, 1
      %p30 = por %p28, %p29
      %p31 = scmp.ne.s32.totalorder %s23, %s26
      %p32 = scmp.eq.s32.totalorder %s13, 0
      %p33 = por %p31, %p32
      %p34 = scmp.ne.s32.totalorder %s23, %s26
      %p35 = scmp.eq.s32.totalorder %s18, 1
      %p36 = por %p34, %p35
      %p37 = scmp.ne.s32.totalorder %s26, %s27
      %p38 = scmp.eq.s32.totalorder %s18, 0
      %p39 = por %p37, %p38
      %p40 = scmp.ne.s32.totalorder %s26, %s27
      %p41 = scmp.eq.s32.totalorder %s19, 1
      %p42 = por %p40, %p41
      %p44 = scmp.ne.s32.totalorder %s27, %s43
      %p45 = scmp.eq.s32.totalorder %s19, 0
      %p46 = por %p44, %p45
      %s48 = sadd.s32 %s47, 1
      %p51 = scmp.eq.s32.totalorder %s13, 1
      %p52 = scmp.ne.s32.totalorder %s47, %s49
      %p53 = scmp.eq.s32.totalorder %s13, 0
      %p54 = por %p52, %p53
      %p55 = scmp.ne.s32.totalorder %s47, %s49
      %p56 = scmp.eq.s32.totalorder %s18, 1
      %p57 = por %p55, %p56
      %p58 = scmp.ne.s32.totalorder %s49, %s50
      %p59 = scmp.eq.s32.totalorder %s18, 0
      %p60 = por %p58, %p59
      %p61 = scmp.ne.s32.totalorder %s49, %s50
      %p62 = scmp.eq.s32.totalorder %s19, 1
      %p63 = por %p61, %p62
      %p65 = scmp.ne.s32.totalorder %s50, %s64
      %p66 = scmp.eq.s32.totalorder %s19, 0
      %p67 = por %p65, %p66
      %s69 = sadd.s32 %s68, 1
      %p72 = scmp.eq.s32.totalorder %s13, 1
      %p73 = scmp.ne.s32.totalorder %s68, %s70
      %p74 = scmp.eq.s32.totalorder %s13, 0
      %p75 = por %p73, %p74
      %p76 = scmp.ne.s32.totalorder %s68, %s70
      %p77 = scmp.eq.s32.totalorder %s18, 1
      %p78 = por %p76, %p77
      %p79 = scmp.ne.s32.totalorder %s70, %s71
      %p80 = scmp.eq.s32.totalorder %s18, 0
      %p81 = por %p79, %p80
      %p82 = scmp.ne.s32.totalorder %s70, %s71
      %p83 = scmp.eq.s32.totalorder %s19, 1
      %p84 = por %p82, %p83
      %p86 = scmp.ne.s32.totalorder %s71, %s85
      %p87 = scmp.eq.s32.totalorder %s19, 0
      %p88 = por %p86, %p87
      %s89 = ssub.s32 %s13, %s20
      %p90 = scmp.eq.s32.totalorder %s89, 0
      %s92 = sadd.s32 %s91, 1
      %s93 = scalar_select %p90, %s91, %s92
      %p96 = pneg %p90
      %p97 = scmp.eq.s32.totalorder %s13, 1
      %p98 = por %p96, %p97
      %p99 = scmp.ne.s32.totalorder %s91, %s94
      %p100 = scmp.eq.s32.totalorder %s13, 0
      %p101 = por %p99, %p100
      %p102 = scmp.ne.s32.totalorder %s91, %s94
      %p103 = scmp.eq.s32.totalorder %s18, 1
      %p104 = por %p102, %p103
      %p105 = scmp.ne.s32.totalorder %s94, %s95
      %p106 = scmp.eq.s32.totalorder %s18, 0
      %p107 = por %p105, %p106
      %p108 = scmp.ne.s32.totalorder %s94, %s95
      %p109 = scmp.eq.s32.totalorder %s19, 1
      %p110 = por %p108, %p109
      %p112 = scmp.ne.s32.totalorder %s95, %s111
      %p113 = scmp.eq.s32.totalorder %s19, 0
      %p114 = por %p112, %p113
      %s115 = ssub.s32 %s13, %s20
      %p116 = scmp.eq.s32.totalorder %s115, 0
      %s118 = sadd.s32 %s117, 1
      %s119 = scalar_select %p116, %s117, %s118
      %p122 = pneg %p116
      %p123 = scmp.eq.s32.totalorder %s13, 1
      %p124 = por %p122, %p123
      %p125 = scmp.ne.s32.totalorder %s117, %s120
      %p126 = scmp.eq.s32.totalorder %s13, 0
      %p127 = por %p125, %p126
      %p128 = scmp.ne.s32.totalorder %s117, %s120
      %p129 = scmp.eq.s32.totalorder %s18, 1
      %p130 = por %p128, %p129
      %p131 = scmp.ne.s32.totalorder %s120, %s121
      %p132 = scmp.eq.s32.totalorder %s18, 0
      %p133 = por %p131, %p132
      %p134 = scmp.ne.s32.totalorder %s120, %s121
      %p135 = scmp.eq.s32.totalorder %s19, 1
      %p136 = por %p134, %p135
      %p138 = scmp.ne.s32.totalorder %s121, %s137
      %p139 = scmp.eq.s32.totalorder %s19, 0
      %p140 = por %p138, %p139
      %p141 = scmp.le.s32.totalorder 1, %s13
      %p142 = scmp.lt.s32.totalorder %s13, 3
      %p143 = pnand %p141, %p142
      %p144 = pneg %p143
      // Predicated region
      $region9: #{generator_forward.28} parent=5 // pred_check
        _
      $region10: #{generator_forward.28} parent=5 // pred_check_branch
        %146 = sbr.rel (%p143) target = $region12
      $region11: #{generator_forward.28} parent=5 // pred_region
        %s147 = ssub.s32 %s13, 1
        // Predicated region
        $region13: #{generator_forward.28} parent=11 // pred_check
          %p148 = pneg %p60
        $region14: #{generator_forward.28} parent=11 // pred_check_branch
          %150 = sbr.rel (%p148) target = $region16
        $region15: #{generator_forward.28} parent=11 // pred_region
          _
        $region16: #{generator_forward.28} parent=11 // pred_fallthru
          _
        // Predicated region
        $region17: #{generator_forward.28} parent=11 // pred_check
          %p151 = pneg %p81
        $region18: #{generator_forward.28} parent=11 // pred_check_branch
          %153 = sbr.rel (%p151) target = $region20
        $region19: #{generator_forward.28} parent=11 // pred_region
          _
        $region20: #{generator_forward.28} parent=11 // pred_fallthru
          _
      $region12: #{generator_forward.28} parent=5 // pred_fallthru
        _
      %p154 = scmp.lt.s32.totalorder %s13, 2
      // Predicated region
      $region21: #{generator_forward.28} parent=5 // pred_check
        %p155 = pneg %p154
      $region22: #{generator_forward.28} parent=5 // pred_check_branch
        %157 = sbr.rel (%p155) target = $region24
      $region23: #{generator_forward.28} parent=5 // pred_region
        // Predicated region
        $region25: #{generator_forward.28} parent=23 // pred_check
          %p158 = pneg %p33
        $region26: #{generator_forward.28} parent=23 // pred_check_branch
          %160 = sbr.rel (%p158) target = $region28
        $region27: #{generator_forward.28} parent=23 // pred_region
          %s161 = sand.u32 %s23, 1
          %s162 = scalar_lea.sflag [#allocation3], %s161
          %s163 = sand.u32 %s23, 1
          %s164 = smul.addr %s163, 72
          %s165 = scalar_lea.vmem [#allocation2], %s164
          %s166 = smul.u32 2, %s13
          %s168 = ssub.s32 1152, 1152
          %169 = vsyncadd %s162, %s168
          %s170 = smul.addr %s166, 9
          %s171 = smul.addr %s170, 64
          %s172 = scalar_lea.hbm %s0, %s171
          %s173 = sshll.u32 %s165, 4
          %s174 = int_to_ptr.vmem [resolvable:$true] %s173
          %179 = dma.hbm_to_vmem [thread:$0]  %s172, 1152, %s174, %s162, 576, 576, 36
        $region28: #{generator_forward.28} parent=23 // pred_fallthru
          _
        // Predicated region
        $region29: #{generator_forward.28} parent=23 // pred_check
          %p180 = pneg %p101
        $region30: #{generator_forward.28} parent=23 // pred_check_branch
          %182 = sbr.rel (%p180) target = $region32
        $region31: #{generator_forward.28} parent=23 // pred_region
          %s183 = smul.u32 2, %s13
          %p184 = scmp.lt.s32.totalorder %s183, 3
          %s185 = scalar_select %p184, %s183, 3
          %s186 = smul.addr %s185, 8
          %s187 = scalar_lea.vmem %s3, %s186
          %s188 = smul.u32 2, %s13
        $region32: #{generator_forward.28} parent=23 // pred_fallthru
          _
      $region24: #{generator_forward.28} parent=5 // pred_fallthru
        _
      %p189 = scmp.le.s32.totalorder 1, %s13
      %p190 = scmp.lt.s32.totalorder %s13, 3
      %p191 = pnand %p189, %p190
      %p192 = pneg %p191
      // Predicated region
      $region33: #{generator_forward.28} parent=5 // pred_check
        _
      $region34: #{generator_forward.28} parent=5 // pred_check_branch
        %194 = sbr.rel (%p191) target = $region36
      $region35: #{generator_forward.28} parent=5 // pred_region
        %s195 = ssub.s32 %s13, 1
        %s196 = sand.u32 %s26, 1
        %s197 = scalar_lea.sflag [#allocation3], %s196
        %s198 = sand.u32 %s26, 1
        %s199 = smul.addr %s198, 72
        %s200 = scalar_lea.vmem [#allocation2], %s199
        // Predicated region
        $region37: #{generator_forward.28} parent=35 // pred_check
          %p201 = pneg %p39
        $region38: #{generator_forward.28} parent=35 // pred_check_branch
          %203 = sbr.rel (%p201) target = $region40
        $region39: #{generator_forward.28} parent=35 // pred_region
          %204 = dma.done %s197, 1152
        $region40: #{generator_forward.28} parent=35 // pred_fallthru
          _
        %s205 = sand.u32 %s26, 1
        %s206 = scalar_lea.sflag [#allocation3], %s205
        %s207 = sand.u32 %s26, 1
        %s208 = smul.addr %s207, 72
        %s209 = scalar_lea.vmem [#allocation2], %s208
        %p210 = pneg %p39
        %p211 = pneg %p36
        %p212 = pneg %p60
        %p213 = pneg %p57
        %p214 = pneg %p81
        %p215 = pneg %p78
        %s216 = smul.u32 2, %s18
        %p217 = scmp.lt.s32.totalorder %s216, 3
        %s218 = scalar_select %p217, %s216, 3
        %s219 = smul.addr %s218, 8
        %s220 = scalar_lea.vmem %s3, %s219
        %p221 = pneg %p107
        %p222 = pneg %p104
        %p223 = pneg %p133
        %p224 = pneg %p130
        %s225 = smul.u32 2, %s18
        %p226 = scmp.lt.s32.totalorder %s225, 3
        %s227 = scalar_select %p226, %s225, 3
        %s228 = smul.addr %s227, 8
        %s229 = scalar_lea.vmem %s4, %s228
        %s230 = smul.u32 2, %s18
        %s231 = smul.u32 2, %s18
        %p232 = scmp.lt.s32.totalorder %s231, 3
        %s233 = scalar_select %p232, %s231, 3
        %s234 = smul.addr %s233, 8
        %s235 = scalar_lea.vmem %s3, %s234
        %s236 = smul.u32 2, %s18
        %s237 = smul.u32 2, %s18
        %p238 = scmp.lt.s32.totalorder %s237, 3
        %s239 = scalar_select %p238, %s237, 3
        %s240 = smul.addr %s239, 8
        %s241 = scalar_lea.vmem %s4, %s240
        %s242 = smul.u32 2, %s18
        %v244 = vld [vmem:[%s200] sm:$0xff]
        %v245 = vld [vmem:[%s200 + $0x8] sm:$0xff]
        %v246 = vld [vmem:[%s200 + $0x10] sm:$0xff]
        %v247 = vld [vmem:[%s200 + $0x18] sm:$0xff]
        %v248 = vld [vmem:[%s200 + $0x20] sm:$0xf]
        %v249 = vld [vmem:[%s200 + $0x24] sm:$0xff]
        %v250 = vld [vmem:[%s200 + $0x2c] sm:$0xff]
        %v251 = vld [vmem:[%s200 + $0x34] sm:$0xff]
        %v252 = vld [vmem:[%s200 + $0x3c] sm:$0xff]
        %v253 = vld [vmem:[%s200 + $0x44] sm:$0xf]
        %v254 = vld [vmem:[%s1] sm:$0xf]
        %v255 = vld [vmem:[%s1 + $0x4] sm:$0xf]
        %v256 = vld [vmem:[%s1 + $0x8] sm:$0xf]
        %v257 = vld [vmem:[%s1 + $0xc] sm:$0xf]
        %v258 = vld [vmem:[%s1 + $0x10] sm:$0xf]
        %v259 = vld [vmem:[%s1 + $0x14] sm:$0xf]
        %v260 = vld [vmem:[%s1 + $0x18] sm:$0xf]
        %v261 = vld [vmem:[%s1 + $0x1c] sm:$0xf]
        %v262 = vld [vmem:[%s1 + $0x20] sm:$0xf]
        %v263 = vld [vmem:[%s1 + $0x24] sm:$0xf]
        %v264 = vld [vmem:[%s1 + $0x28] sm:$0xf]
        %v265 = vld [vmem:[%s1 + $0x2c] sm:$0xf]
        %v266 = vld [vmem:[%s1 + $0x30] sm:$0xf]
        %v267 = vld [vmem:[%s1 + $0x34] sm:$0xf]
        %v268 = vld [vmem:[%s1 + $0x38] sm:$0xf]
        %v269 = vld [vmem:[%s1 + $0x3c] sm:$0xf]
        %v270 = vld [vmem:[%s1 + $0x40] sm:$0xf]
        %v271 = vld [vmem:[%s1 + $0x44] sm:$0xf]
        %v272 = vld [vmem:[%s1 + $0x48] sm:$0xf]
        %v273 = vld [vmem:[%s1 + $0x4c] sm:$0xf]
        %v274 = vld [vmem:[%s1 + $0x50] sm:$0xf]
        %v275 = vld [vmem:[%s1 + $0x54] sm:$0xf]
        %v276 = vld [vmem:[%s1 + $0x58] sm:$0xf]
        %v277 = vld [vmem:[%s1 + $0x5c] sm:$0xf]
        %v278 = vld [vmem:[%s1 + $0x60] sm:$0xf]
        %v279 = vld [vmem:[%s1 + $0x64] sm:$0xf]
        %v280 = vld [vmem:[%s1 + $0x68] sm:$0xf]
        %v281 = vld [vmem:[%s1 + $0x6c] sm:$0xf]
        %v282 = vld [vmem:[%s1 + $0x70] sm:$0xf]
        %v283 = vld [vmem:[%s1 + $0x74] sm:$0xf]
        %v284 = vld [vmem:[%s1 + $0x78] sm:$0xf]
        %v285 = vld [vmem:[%s1 + $0x7c] sm:$0xf]
        %v286 = vld [vmem:[%s1 + $0x80] sm:$0xf]
        %v287 = vld [vmem:[%s1 + $0x84] sm:$0xf]
        %v288 = vld [vmem:[%s1 + $0x88] sm:$0xf]
        %v289 = vld [vmem:[%s1 + $0x8c] sm:$0xf]
        %v290 = vld [vmem:[%s1 + $0x90] sm:$0xf]
        %v291 = vld [vmem:[%s1 + $0x94] sm:$0xf]
        %v292 = vld [vmem:[%s1 + $0x98] sm:$0xf]
        %v293 = vld [vmem:[%s1 + $0x9c] sm:$0xf]
        %v294 = vld [vmem:[%s1 + $0xa0] sm:$0xf]
        %v295 = vld [vmem:[%s1 + $0xa4] sm:$0xf]
        %v296 = vld [vmem:[%s1 + $0xa8] sm:$0xf]
        %v297 = vld [vmem:[%s1 + $0xac] sm:$0xf]
        %v298 = vld [vmem:[%s1 + $0xb0] sm:$0xf]
        %v299 = vld [vmem:[%s1 + $0xb4] sm:$0xf]
        %v300 = vld [vmem:[%s1 + $0xb8] sm:$0xf]
        %v301 = vld [vmem:[%s1 + $0xbc] sm:$0xf]
        %v302 = vld [vmem:[%s1 + $0xc0] sm:$0xf]
        %v303 = vld [vmem:[%s1 + $0xc4] sm:$0xf]
        %v304 = vld [vmem:[%s1 + $0xc8] sm:$0xf]
        %v305 = vld [vmem:[%s1 + $0xcc] sm:$0xf]
        %v306 = vld [vmem:[%s1 + $0xd0] sm:$0xf]
        %v307 = vld [vmem:[%s1 + $0xd4] sm:$0xf]
        %v308 = vld [vmem:[%s1 + $0xd8] sm:$0xf]
        %v309 = vld [vmem:[%s1 + $0xdc] sm:$0xf]
        %v310 = vld [vmem:[%s1 + $0xe0] sm:$0xf]
        %v311 = vld [vmem:[%s1 + $0xe4] sm:$0xf]
        %v312 = vld [vmem:[%s1 + $0xe8] sm:$0xf]
        %v313 = vld [vmem:[%s1 + $0xec] sm:$0xf]
        %v314 = vld [vmem:[%s1 + $0xf0] sm:$0xf]
        %v315 = vld [vmem:[%s1 + $0xf4] sm:$0xf]
        %v316 = vld [vmem:[%s1 + $0xf8] sm:$0xf]
        %v317 = vld [vmem:[%s1 + $0xfc] sm:$0xf]
        %v318 = vld [vmem:[%s1 + $0x100] sm:$0xf]
        %v319 = vld [vmem:[%s1 + $0x104] sm:$0xf]
        %v320 = vld [vmem:[%s1 + $0x108] sm:$0xf]
        %v321 = vld [vmem:[%s1 + $0x10c] sm:$0xf]
        %v322 = vld [vmem:[%s1 + $0x110] sm:$0xf]
        %v323 = vld [vmem:[%s1 + $0x114] sm:$0xf]
        %v324 = vld [vmem:[%s1 + $0x118] sm:$0xf]
        %v325 = vld [vmem:[%s1 + $0x11c] sm:$0xf]
        %v326 = vld [vmem:[%s1 + $0x120] sm:$0xf]
        %v327 = vld [vmem:[%s1 + $0x124] sm:$0xf]
        %v328 = vld [vmem:[%s1 + $0x128] sm:$0xf]
        %v329 = vld [vmem:[%s1 + $0x12c] sm:$0xf]
        %v330 = vld [vmem:[%s1 + $0x130] sm:$0xf]
        %v331 = vld [vmem:[%s1 + $0x134] sm:$0xf]
        %v332 = vld [vmem:[%s1 + $0x138] sm:$0xf]
        %v333 = vld [vmem:[%s1 + $0x13c] sm:$0xf]
        %v334 = vld [vmem:[%s1 + $0x140] sm:$0xf]
        %v335 = vld [vmem:[%s1 + $0x144] sm:$0xf]
        %v336 = vld [vmem:[%s1 + $0x148] sm:$0xf]
        %v337 = vld [vmem:[%s1 + $0x14c] sm:$0xf]
        %v338 = vld [vmem:[%s1 + $0x150] sm:$0xf]
        %v339 = vld [vmem:[%s1 + $0x154] sm:$0xf]
        %v340 = vld [vmem:[%s1 + $0x158] sm:$0xf]
        %v341 = vld [vmem:[%s1 + $0x15c] sm:$0xf]
        %v342 = vld [vmem:[%s1 + $0x160] sm:$0xf]
        %v343 = vld [vmem:[%s1 + $0x164] sm:$0xf]
        %v344 = vld [vmem:[%s1 + $0x168] sm:$0xf]
        %v345 = vld [vmem:[%s1 + $0x16c] sm:$0xf]
        %v346 = vld [vmem:[%s1 + $0x170] sm:$0xf]
        %v347 = vld [vmem:[%s1 + $0x174] sm:$0xf]
        %v348 = vld [vmem:[%s1 + $0x178] sm:$0xf]
        %v349 = vld [vmem:[%s1 + $0x17c] sm:$0xf]
        %v350 = vld [vmem:[%s1 + $0x180] sm:$0xf]
        %v351 = vld [vmem:[%s1 + $0x184] sm:$0xf]
        %v352 = vld [vmem:[%s1 + $0x188] sm:$0xf]
        %v353 = vld [vmem:[%s1 + $0x18c] sm:$0xf]
        %v354 = vld [vmem:[%s1 + $0x190] sm:$0xf]
        %v355 = vld [vmem:[%s1 + $0x194] sm:$0xf]
        %v356 = vld [vmem:[%s1 + $0x198] sm:$0xf]
        %v357 = vld [vmem:[%s1 + $0x19c] sm:$0xf]
        %v358 = vld [vmem:[%s1 + $0x1a0] sm:$0xf]
        %v359 = vld [vmem:[%s1 + $0x1a4] sm:$0xf]
        %v360 = vld [vmem:[%s1 + $0x1a8] sm:$0xf]
        %v361 = vld [vmem:[%s1 + $0x1ac] sm:$0xf]
        %v362 = vld [vmem:[%s1 + $0x1b0] sm:$0xf]
        %v363 = vld [vmem:[%s1 + $0x1b4] sm:$0xf]
        %v364 = vld [vmem:[%s1 + $0x1b8] sm:$0xf]
        %v365 = vld [vmem:[%s1 + $0x1bc] sm:$0xf]
        %v366 = vld [vmem:[%s1 + $0x1c0] sm:$0xf]
        %v367 = vld [vmem:[%s1 + $0x1c4] sm:$0xf]
        %v368 = vld [vmem:[%s1 + $0x1c8] sm:$0xf]
        %v369 = vld [vmem:[%s1 + $0x1cc] sm:$0xf]
        %v370 = vld [vmem:[%s1 + $0x1d0] sm:$0xf]
        %v371 = vld [vmem:[%s1 + $0x1d4] sm:$0xf]
        %v372 = vld [vmem:[%s1 + $0x1d8] sm:$0xf]
        %v373 = vld [vmem:[%s1 + $0x1dc] sm:$0xf]
        %v374 = vld [vmem:[%s1 + $0x1e0] sm:$0xf]
        %v375 = vld [vmem:[%s1 + $0x1e4] sm:$0xf]
        %v376 = vld [vmem:[%s1 + $0x1e8] sm:$0xf]
        %v377 = vld [vmem:[%s1 + $0x1ec] sm:$0xf]
        %v378 = vld [vmem:[%s1 + $0x1f0] sm:$0xf]
        %v379 = vld [vmem:[%s1 + $0x1f4] sm:$0xf]
        %v380 = vld [vmem:[%s1 + $0x1f8] sm:$0xf]
        %v381 = vld [vmem:[%s1 + $0x1fc] sm:$0xf]
        %v382 = vld [vmem:[%s1 + $0x200] sm:$0xf]
        %v383 = vld [vmem:[%s1 + $0x204] sm:$0xf]
        %v384 = vld [vmem:[%s1 + $0x208] sm:$0xf]
        %v385 = vld [vmem:[%s1 + $0x20c] sm:$0xf]
        %v386 = vld [vmem:[%s1 + $0x210] sm:$0xf]
        %v387 = vld [vmem:[%s1 + $0x214] sm:$0xf]
        %v388 = vld [vmem:[%s1 + $0x218] sm:$0xf]
        %v389 = vld [vmem:[%s1 + $0x21c] sm:$0xf]
        %v390 = vld [vmem:[%s1 + $0x220] sm:$0xf]
        %v391 = vld [vmem:[%s1 + $0x224] sm:$0xf]
        %v392 = vld [vmem:[%s1 + $0x228] sm:$0xf]
        %v393 = vld [vmem:[%s1 + $0x22c] sm:$0xf]
        %v394 = vld [vmem:[%s1 + $0x230] sm:$0xf]
        %v395 = vld [vmem:[%s1 + $0x234] sm:$0xf]
        %v396 = vld [vmem:[%s1 + $0x238] sm:$0xf]
        %v397 = vld [vmem:[%s1 + $0x23c] sm:$0xf]
        %v398 = vld [vmem:[%s2] sm:$0x1]
        %v400 = vlaneseq
        %v401 = vshrl.u32 %v400, 7
        %v402 = vsub.s32 0, %v401
        %v403 = vrot.slane %v398, %v402
        %v415 = vunpack.c.l.b16 %v244
        %v416 = vunpack.c.h.b16 %v244
        %v417 = vunpack.c.l.b16 %v245
        %v418 = vunpack.c.h.b16 %v245
        %v419 = vunpack.c.l.b16 %v246
        %v420 = vunpack.c.h.b16 %v246
        %v421 = vunpack.c.l.b16 %v247
        %v422 = vunpack.c.h.b16 %v247
        %v423 = vunpack.c.l.b16 %v248
        %v424 = vunpack.c.l.b16 %v249
        %v425 = vunpack.c.h.b16 %v249
        %v426 = vunpack.c.l.b16 %v250
        %v427 = vunpack.c.h.b16 %v250
        %v428 = vunpack.c.l.b16 %v251
        %v429 = vunpack.c.h.b16 %v251
        %v430 = vunpack.c.l.b16 %v252
        %v431 = vunpack.c.h.b16 %v252
        %v432 = vunpack.c.l.b16 %v253
        %v433 = vpack.c.b16 %v424, %v415
        %v434 = vpack.c.b16 %v425, %v416
        %v435 = vpack.c.b16 %v426, %v417
        %v436 = vpack.c.b16 %v427, %v418
        %v437 = vpack.c.b16 %v428, %v419
        %v438 = vpack.c.b16 %v429, %v420
        %v439 = vpack.c.b16 %v430, %v421
        %v440 = vpack.c.b16 %v431, %v422
        %v441 = vpack.c.b16 %v432, %v423
        %v595 = vunpack.c.l.b16 %v254
        %v596 = vunpack.c.l.b16 %v255
        %v597 = vunpack.c.l.b16 %v256
        %v598 = vunpack.c.l.b16 %v257
        %v599 = vunpack.c.l.b16 %v258
        %v600 = vunpack.c.l.b16 %v259
        %v601 = vunpack.c.l.b16 %v260
        %v602 = vunpack.c.l.b16 %v261
        %v603 = vunpack.c.l.b16 %v262
        %v604 = vunpack.c.l.b16 %v263
        %v605 = vunpack.c.l.b16 %v264
        %v606 = vunpack.c.l.b16 %v265
        %v607 = vunpack.c.l.b16 %v266
        %v608 = vunpack.c.l.b16 %v267
        %v609 = vunpack.c.l.b16 %v268
        %v610 = vunpack.c.l.b16 %v269
        %v611 = vunpack.c.l.b16 %v270
        %v612 = vunpack.c.l.b16 %v271
        %v613 = vunpack.c.l.b16 %v272
        %v614 = vunpack.c.l.b16 %v273
        %v615 = vunpack.c.l.b16 %v274
        %v616 = vunpack.c.l.b16 %v275
        %v617 = vunpack.c.l.b16 %v276
        %v618 = vunpack.c.l.b16 %v277
        %v619 = vunpack.c.l.b16 %v278
        %v620 = vunpack.c.l.b16 %v279
        %v621 = vunpack.c.l.b16 %v280
        %v622 = vunpack.c.l.b16 %v281
        %v623 = vunpack.c.l.b16 %v282
        %v624 = vunpack.c.l.b16 %v283
        %v625 = vunpack.c.l.b16 %v284
        %v626 = vunpack.c.l.b16 %v285
        %v627 = vunpack.c.l.b16 %v286
        %v628 = vunpack.c.l.b16 %v287
        %v629 = vunpack.c.l.b16 %v288
        %v630 = vunpack.c.l.b16 %v289
        %v631 = vunpack.c.l.b16 %v290
        %v632 = vunpack.c.l.b16 %v291
        %v633 = vunpack.c.l.b16 %v292
        %v634 = vunpack.c.l.b16 %v293
        %v635 = vunpack.c.l.b16 %v294
        %v636 = vunpack.c.l.b16 %v295
        %v637 = vunpack.c.l.b16 %v296
        %v638 = vunpack.c.l.b16 %v297
        %v639 = vunpack.c.l.b16 %v298
        %v640 = vunpack.c.l.b16 %v299
        %v641 = vunpack.c.l.b16 %v300
        %v642 = vunpack.c.l.b16 %v301
        %v643 = vunpack.c.l.b16 %v302
        %v644 = vunpack.c.l.b16 %v303
        %v645 = vunpack.c.l.b16 %v304
        %v646 = vunpack.c.l.b16 %v305
        %v647 = vunpack.c.l.b16 %v306
        %v648 = vunpack.c.l.b16 %v307
        %v649 = vunpack.c.l.b16 %v308
        %v650 = vunpack.c.l.b16 %v309
        %v651 = vunpack.c.l.b16 %v310
        %v652 = vunpack.c.l.b16 %v311
        %v653 = vunpack.c.l.b16 %v312
        %v654 = vunpack.c.l.b16 %v313
        %v655 = vunpack.c.l.b16 %v314
        %v656 = vunpack.c.l.b16 %v315
        %v657 = vunpack.c.l.b16 %v316
        %v658 = vunpack.c.l.b16 %v317
        %v659 = vunpack.c.l.b16 %v318
        %v660 = vunpack.c.l.b16 %v319
        %v661 = vunpack.c.l.b16 %v320
        %v662 = vunpack.c.l.b16 %v321
        %v663 = vunpack.c.l.b16 %v322
        %v664 = vunpack.c.l.b16 %v323
        %v665 = vunpack.c.l.b16 %v324
        %v666 = vunpack.c.l.b16 %v325
        %v667 = vunpack.c.l.b16 %v326
        %v668 = vunpack.c.l.b16 %v327
        %v669 = vunpack.c.l.b16 %v328
        %v670 = vunpack.c.l.b16 %v329
        %v671 = vunpack.c.l.b16 %v330
        %v672 = vunpack.c.l.b16 %v331
        %v673 = vunpack.c.l.b16 %v332
        %v674 = vunpack.c.l.b16 %v333
        %v675 = vunpack.c.l.b16 %v334
        %v676 = vunpack.c.l.b16 %v335
        %v677 = vunpack.c.l.b16 %v336
        %v678 = vunpack.c.l.b16 %v337
        %v679 = vunpack.c.l.b16 %v338
        %v680 = vunpack.c.l.b16 %v339
        %v681 = vunpack.c.l.b16 %v340
        %v682 = vunpack.c.l.b16 %v341
        %v683 = vunpack.c.l.b16 %v342
        %v684 = vunpack.c.l.b16 %v343
        %v685 = vunpack.c.l.b16 %v344
        %v686 = vunpack.c.l.b16 %v345
        %v687 = vunpack.c.l.b16 %v346
        %v688 = vunpack.c.l.b16 %v347
        %v689 = vunpack.c.l.b16 %v348
        %v690 = vunpack.c.l.b16 %v349
        %v691 = vunpack.c.l.b16 %v350
        %v692 = vunpack.c.l.b16 %v351
        %v693 = vunpack.c.l.b16 %v352
        %v694 = vunpack.c.l.b16 %v353
        %v695 = vunpack.c.l.b16 %v354
        %v696 = vunpack.c.l.b16 %v355
        %v697 = vunpack.c.l.b16 %v356
        %v698 = vunpack.c.l.b16 %v357
        %v699 = vunpack.c.l.b16 %v358
        %v700 = vunpack.c.l.b16 %v359
        %v701 = vunpack.c.l.b16 %v360
        %v702 = vunpack.c.l.b16 %v361
        %v703 = vunpack.c.l.b16 %v362
        %v704 = vunpack.c.l.b16 %v363
        %v705 = vunpack.c.l.b16 %v364
        %v706 = vunpack.c.l.b16 %v365
        %v707 = vunpack.c.l.b16 %v366
        %v708 = vunpack.c.l.b16 %v367
        %v709 = vunpack.c.l.b16 %v368
        %v710 = vunpack.c.l.b16 %v369
        %v711 = vunpack.c.l.b16 %v370
        %v712 = vunpack.c.l.b16 %v371
        %v713 = vunpack.c.l.b16 %v372
        %v714 = vunpack.c.l.b16 %v373
        %v715 = vunpack.c.l.b16 %v374
        %v716 = vunpack.c.l.b16 %v375
        %v717 = vunpack.c.l.b16 %v376
        %v718 = vunpack.c.l.b16 %v377
        %v719 = vunpack.c.l.b16 %v378
        %v720 = vunpack.c.l.b16 %v379
        %v721 = vunpack.c.l.b16 %v380
        %v722 = vunpack.c.l.b16 %v381
        %v723 = vunpack.c.l.b16 %v382
        %v724 = vunpack.c.l.b16 %v383
        %v725 = vunpack.c.l.b16 %v384
        %v726 = vunpack.c.l.b16 %v385
        %v727 = vunpack.c.l.b16 %v386
        %v728 = vunpack.c.l.b16 %v387
        %v729 = vunpack.c.l.b16 %v388
        %v730 = vunpack.c.l.b16 %v389
        %v731 = vunpack.c.l.b16 %v390
        %v732 = vunpack.c.l.b16 %v391
        %v733 = vunpack.c.l.b16 %v392
        %v734 = vunpack.c.l.b16 %v393
        %v735 = vunpack.c.l.b16 %v394
        %v736 = vunpack.c.l.b16 %v395
        %v737 = vunpack.c.l.b16 %v396
        %v738 = vunpack.c.l.b16 %v397
        %v739 = vpack.c.b16 %v596, %v595
        %v740 = vpack.c.b16 %v598, %v597
        %v741 = vpack.c.b16 %v600, %v599
        %v742 = vpack.c.b16 %v602, %v601
        %v743 = vpack.c.b16 %v604, %v603
        %v744 = vpack.c.b16 %v606, %v605
        %v745 = vpack.c.b16 %v608, %v607
        %v746 = vpack.c.b16 %v610, %v609
        %v747 = vpack.c.b16 %v612, %v611
        %v748 = vpack.c.b16 %v614, %v613
        %v749 = vpack.c.b16 %v616, %v615
        %v750 = vpack.c.b16 %v618, %v617
        %v751 = vpack.c.b16 %v620, %v619
        %v752 = vpack.c.b16 %v622, %v621
        %v753 = vpack.c.b16 %v624, %v623
        %v754 = vpack.c.b16 %v626, %v625
        %v755 = vpack.c.b16 %v628, %v627
        %v756 = vpack.c.b16 %v630, %v629
        %v757 = vpack.c.b16 %v632, %v631
        %v758 = vpack.c.b16 %v634, %v633
        %v759 = vpack.c.b16 %v636, %v635
        %v760 = vpack.c.b16 %v638, %v637
        %v761 = vpack.c.b16 %v640, %v639
        %v762 = vpack.c.b16 %v642, %v641
        %v763 = vpack.c.b16 %v644, %v643
        %v764 = vpack.c.b16 %v646, %v645
        %v765 = vpack.c.b16 %v648, %v647
        %v766 = vpack.c.b16 %v650, %v649
        %v767 = vpack.c.b16 %v652, %v651
        %v768 = vpack.c.b16 %v654, %v653
        %v769 = vpack.c.b16 %v656, %v655
        %v770 = vpack.c.b16 %v658, %v657
        %v771 = vpack.c.b16 %v660, %v659
        %v772 = vpack.c.b16 %v662, %v661
        %v773 = vpack.c.b16 %v664, %v663
        %v774 = vpack.c.b16 %v666, %v665
        %v775 = vpack.c.b16 %v668, %v667
        %v776 = vpack.c.b16 %v670, %v669
        %v777 = vpack.c.b16 %v672, %v671
        %v778 = vpack.c.b16 %v674, %v673
        %v779 = vpack.c.b16 %v676, %v675
        %v780 = vpack.c.b16 %v678, %v677
        %v781 = vpack.c.b16 %v680, %v679
        %v782 = vpack.c.b16 %v682, %v681
        %v783 = vpack.c.b16 %v684, %v683
        %v784 = vpack.c.b16 %v686, %v685
        %v785 = vpack.c.b16 %v688, %v687
        %v786 = vpack.c.b16 %v690, %v689
        %v787 = vpack.c.b16 %v692, %v691
        %v788 = vpack.c.b16 %v694, %v693
        %v789 = vpack.c.b16 %v696, %v695
        %v790 = vpack.c.b16 %v698, %v697
        %v791 = vpack.c.b16 %v700, %v699
        %v792 = vpack.c.b16 %v702, %v701
        %v793 = vpack.c.b16 %v704, %v703
        %v794 = vpack.c.b16 %v706, %v705
        %v795 = vpack.c.b16 %v708, %v707
        %v796 = vpack.c.b16 %v710, %v709
        %v797 = vpack.c.b16 %v712, %v711
        %v798 = vpack.c.b16 %v714, %v713
        %v799 = vpack.c.b16 %v716, %v715
        %v800 = vpack.c.b16 %v718, %v717
        %v801 = vpack.c.b16 %v720, %v719
        %v802 = vpack.c.b16 %v722, %v721
        %v803 = vpack.c.b16 %v724, %v723
        %v804 = vpack.c.b16 %v726, %v725
        %v805 = vpack.c.b16 %v728, %v727
        %v806 = vpack.c.b16 %v730, %v729
        %v807 = vpack.c.b16 %v732, %v731
        %v808 = vpack.c.b16 %v734, %v733
        %v809 = vpack.c.b16 %v736, %v735
        %v810 = vpack.c.b16 %v738, %v737
        %883 = vmatprep.subr.bf16.mxu0 0
        %884 = vmatpush1.bf16.msra.mxu0 %v739
        %885 = vmatprep.subr.bf16.mxu0 0
        %886 = vmatpush1.bf16.msra.mxu0 %v740
        %887 = vmatprep.subr.bf16.mxu0 0
        %888 = vmatpush1.bf16.msra.mxu0 %v741
        %889 = vmatprep.subr.bf16.mxu0 0
        %890 = vmatpush1.bf16.msra.mxu0 %v742
        %891 = vmatprep.subr.bf16.mxu0 0
        %892 = vmatpush1.bf16.msra.mxu0 %v743
        %893 = vmatprep.subr.bf16.mxu0 0
        %894 = vmatpush1.bf16.msra.mxu0 %v744
        %895 = vmatprep.subr.bf16.mxu0 0
        %896 = vmatpush1.bf16.msra.mxu0 %v745
        %897 = vmatprep.subr.bf16.mxu0 0
        %898 = vmatpush1.bf16.msra.mxu0 %v746
        %899 = vmatprep.subr.bf16.mxu0 0
        %900 = vmatpush1.bf16.msra.mxu0 %v747
        %901 = vmatprep.subr.bf16.mxu0 0
        %902 = vmatpush1.bf16.msra.mxu0 %v748
        %903 = vmatprep.subr.bf16.mxu0 0
        %904 = vmatpush1.bf16.msra.mxu0 %v749
        %905 = vmatprep.subr.bf16.mxu0 0
        %906 = vmatpush1.bf16.msra.mxu0 %v750
        %907 = vmatprep.subr.bf16.mxu0 0
        %908 = vmatpush1.bf16.msra.mxu0 %v751
        %909 = vmatprep.subr.bf16.mxu0 0
        %910 = vmatpush1.bf16.msra.mxu0 %v752
        %911 = vmatprep.subr.bf16.mxu0 0
        %912 = vmatpush1.bf16.msra.mxu0 %v753
        %913 = vmatprep.subr.bf16.mxu0 0
        %914 = vmatpush1.bf16.msra.mxu0 %v754
        %915 = vmatprep.mubr.bf16.mxu0 %v434
        %916 = vmatmul.mubr.bf16.gmra.mrb[0].mxu0 %v433
        %v917 = vpop.f32.mrb[0].mxu0
        %v918 = vadd.f32 %v403, %v917
        %v919 = vpop.f32.mrb[0].mxu0
        %v920 = vpop.f32.mrb[0].mxu0
        %v921 = vadd.f32 %v403, %v920
        %v922 = vpop.f32.mrb[0].mxu0
        %923 = vdwg.mxu0
        %924 = vmatprep.subr.bf16.mxu0 0
        %925 = vmatpush1.bf16.msra.mxu0 %v755
        %926 = vmatprep.subr.bf16.mxu0 0
        %927 = vmatpush1.bf16.msra.mxu0 %v756
        %928 = vmatprep.subr.bf16.mxu0 0
        %929 = vmatpush1.bf16.msra.mxu0 %v757
        %930 = vmatprep.subr.bf16.mxu0 0
        %931 = vmatpush1.bf16.msra.mxu0 %v758
        %932 = vmatprep.subr.bf16.mxu0 0
        %933 = vmatpush1.bf16.msra.mxu0 %v759
        %934 = vmatprep.subr.bf16.mxu0 0
        %935 = vmatpush1.bf16.msra.mxu0 %v760
        %936 = vmatprep.subr.bf16.mxu0 0
        %937 = vmatpush1.bf16.msra.mxu0 %v761
        %938 = vmatprep.subr.bf16.mxu0 0
        %939 = vmatpush1.bf16.msra.mxu0 %v762
        %940 = vmatprep.subr.bf16.mxu0 0
        %941 = vmatpush1.bf16.msra.mxu0 %v763
        %942 = vmatprep.subr.bf16.mxu0 0
        %943 = vmatpush1.bf16.msra.mxu0 %v764
        %944 = vmatprep.subr.bf16.mxu0 0
        %945 = vmatpush1.bf16.msra.mxu0 %v765
        %946 = vmatprep.subr.bf16.mxu0 0
        %947 = vmatpush1.bf16.msra.mxu0 %v766
        %948 = vmatprep.subr.bf16.mxu0 0
        %949 = vmatpush1.bf16.msra.mxu0 %v767
        %950 = vmatprep.subr.bf16.mxu0 0
        %951 = vmatpush1.bf16.msra.mxu0 %v768
        %952 = vmatprep.subr.bf16.mxu0 0
        %953 = vmatpush1.bf16.msra.mxu0 %v769
        %954 = vmatprep.subr.bf16.mxu0 0
        %955 = vmatpush1.bf16.msra.mxu0 %v770
        %956 = vmatprep.mubr.bf16.mxu0 %v436
        %957 = vmatmul.mubr.bf16.gmra.mrb[0].mxu0 %v435
        %v958 = vpop.f32.mrb[0].mxu0
        %v959 = vadd.f32 %v918, %v958
        %v960 = vpop.f32.mrb[0].mxu0
        %v961 = vpop.f32.mrb[0].mxu0
        %v962 = vadd.f32 %v921, %v961
        %v963 = vpop.f32.mrb[0].mxu0
        %964 = vdwg.mxu0
        %965 = vmatprep.subr.bf16.mxu0 0
        %966 = vmatpush1.bf16.msra.mxu0 %v771
        %967 = vmatprep.subr.bf16.mxu0 0
        %968 = vmatpush1.bf16.msra.mxu0 %v772
        %969 = vmatprep.subr.bf16.mxu0 0
        %970 = vmatpush1.bf16.msra.mxu0 %v773
        %971 = vmatprep.subr.bf16.mxu0 0
        %972 = vmatpush1.bf16.msra.mxu0 %v774
        %973 = vmatprep.subr.bf16.mxu0 0
        %974 = vmatpush1.bf16.msra.mxu0 %v775
        %975 = vmatprep.subr.bf16.mxu0 0
        %976 = vmatpush1.bf16.msra.mxu0 %v776
        %977 = vmatprep.subr.bf16.mxu0 0
        %978 = vmatpush1.bf16.msra.mxu0 %v777
        %979 = vmatprep.subr.bf16.mxu0 0
        %980 = vmatpush1.bf16.msra.mxu0 %v778
        %981 = vmatprep.subr.bf16.mxu0 0
        %982 = vmatpush1.bf16.msra.mxu0 %v779
        %983 = vmatprep.subr.bf16.mxu0 0
        %984 = vmatpush1.bf16.msra.mxu0 %v780
        %985 = vmatprep.subr.bf16.mxu0 0
        %986 = vmatpush1.bf16.msra.mxu0 %v781
        %987 = vmatprep.subr.bf16.mxu0 0
        %988 = vmatpush1.bf16.msra.mxu0 %v782
        %989 = vmatprep.subr.bf16.mxu0 0
        %990 = vmatpush1.bf16.msra.mxu0 %v783
        %991 = vmatprep.subr.bf16.mxu0 0
        %992 = vmatpush1.bf16.msra.mxu0 %v784
        %993 = vmatprep.subr.bf16.mxu0 0
        %994 = vmatpush1.bf16.msra.mxu0 %v785
        %995 = vmatprep.subr.bf16.mxu0 0
        %996 = vmatpush1.bf16.msra.mxu0 %v786
        %997 = vmatprep.mubr.bf16.mxu0 %v438
        %998 = vmatmul.mubr.bf16.gmra.mrb[0].mxu0 %v437
        %v999 = vpop.f32.mrb[0].mxu0
        %v1000 = vadd.f32 %v959, %v999
        %v1001 = vpop.f32.mrb[0].mxu0
        %v1002 = vpop.f32.mrb[0].mxu0
        %v1003 = vadd.f32 %v962, %v1002
        %v1004 = vpop.f32.mrb[0].mxu0
        %1005 = vdwg.mxu0
        %1006 = vmatprep.subr.bf16.mxu0 0
        %1007 = vmatpush1.bf16.msra.mxu0 %v787
        %1008 = vmatprep.subr.bf16.mxu0 0
        %1009 = vmatpush1.bf16.msra.mxu0 %v788
        %1010 = vmatprep.subr.bf16.mxu0 0
        %1011 = vmatpush1.bf16.msra.mxu0 %v789
        %1012 = vmatprep.subr.bf16.mxu0 0
        %1013 = vmatpush1.bf16.msra.mxu0 %v790
        %1014 = vmatprep.subr.bf16.mxu0 0
        %1015 = vmatpush1.bf16.msra.mxu0 %v791
        %1016 = vmatprep.subr.bf16.mxu0 0
        %1017 = vmatpush1.bf16.msra.mxu0 %v792
        %1018 = vmatprep.subr.bf16.mxu0 0
        %1019 = vmatpush1.bf16.msra.mxu0 %v793
        %1020 = vmatprep.subr.bf16.mxu0 0
        %1021 = vmatpush1.bf16.msra.mxu0 %v794
        %1022 = vmatprep.subr.bf16.mxu0 0
        %1023 = vmatpush1.bf16.msra.mxu0 %v795
        %1024 = vmatprep.subr.bf16.mxu0 0
        %1025 = vmatpush1.bf16.msra.mxu0 %v796
        %1026 = vmatprep.subr.bf16.mxu0 0
        %1027 = vmatpush1.bf16.msra.mxu0 %v797
        %1028 = vmatprep.subr.bf16.mxu0 0
        %1029 = vmatpush1.bf16.msra.mxu0 %v798
        %1030 = vmatprep.subr.bf16.mxu0 0
        %1031 = vmatpush1.bf16.msra.mxu0 %v799
        %1032 = vmatprep.subr.bf16.mxu0 0
        %1033 = vmatpush1.bf16.msra.mxu0 %v800
        %1034 = vmatprep.subr.bf16.mxu0 0
        %1035 = vmatpush1.bf16.msra.mxu0 %v801
        %1036 = vmatprep.subr.bf16.mxu0 0
        %1037 = vmatpush1.bf16.msra.mxu0 %v802
        %1038 = vmatprep.mubr.bf16.mxu0 %v440
        %1039 = vmatmul.mubr.bf16.gmra.mrb[0].mxu0 %v439
        %v1040 = vpop.f32.mrb[0].mxu0
        %v1041 = vadd.f32 %v1000, %v1040
        %v1042 = vpop.f32.mrb[0].mxu0
        %v1043 = vpop.f32.mrb[0].mxu0
        %v1044 = vadd.f32 %v1003, %v1043
        %v1045 = vpop.f32.mrb[0].mxu0
        %1046 = vdwg.mxu0
        %1047 = vmatprep.subr.bf16.mxu0 0
        %1048 = vmatpush1.bf16.msra.mxu0 %v803
        %1049 = vmatprep.subr.bf16.mxu0 0
        %1050 = vmatpush1.bf16.msra.mxu0 %v804
        %1051 = vmatprep.subr.bf16.mxu0 0
        %1052 = vmatpush1.bf16.msra.mxu0 %v805
        %1053 = vmatprep.subr.bf16.mxu0 0
        %1054 = vmatpush1.bf16.msra.mxu0 %v806
        %1055 = vmatprep.subr.bf16.mxu0 0
        %1056 = vmatpush1.bf16.msra.mxu0 %v807
        %1057 = vmatprep.subr.bf16.mxu0 0
        %1058 = vmatpush1.bf16.msra.mxu0 %v808
        %1059 = vmatprep.subr.bf16.mxu0 0
        %1060 = vmatpush1.bf16.msra.mxu0 %v809
        %1061 = vmatprep.subr.bf16.mxu0 0
        %1062 = vmatpush1.bf16.msra.mxu0 %v810
        %1063 = vmatprep.subr.bf16.mxu0 0
        %1064 = vmatpush1.bf16.msra.mxu0 0
        %1065 = vmatprep.subr.bf16.mxu0 0
        %1066 = vmatpush1.bf16.msra.mxu0 0
        %1067 = vmatprep.subr.bf16.mxu0 0
        %1068 = vmatpush1.bf16.msra.mxu0 0
        %1069 = vmatprep.subr.bf16.mxu0 0
        %1070 = vmatpush1.bf16.msra.mxu0 0
        %1071 = vmatprep.subr.bf16.mxu0 0
        %1072 = vmatpush1.bf16.msra.mxu0 0
        %1073 = vmatprep.subr.bf16.mxu0 0
        %1074 = vmatpush1.bf16.msra.mxu0 0
        %1075 = vmatprep.subr.bf16.mxu0 0
        %1076 = vmatpush1.bf16.msra.mxu0 0
        %1077 = vmatprep.subr.bf16.mxu0 0
        %1078 = vmatpush1.bf16.msra.mxu0 0
        %1079 = vmatprep.mubr.bf16.mxu0 0
        %1080 = vmatmul.mubr.bf16.gmra.mrb[0].mxu0 %v441
        %v1081 = vpop.f32.mrb[0].mxu0
        %v1082 = vadd.f32 %v1041, %v1081
        %v1083 = vpop.f32.mrb[0].mxu0
        %v1084 = vpop.f32.mrb[0].mxu0
        %v1085 = vadd.f32 %v1044, %v1084
        %v1086 = vpop.f32.mrb[0].mxu0
        %1087 = vdwg.mxu0
        %v1088 = vadd.f32 %v1082, %v1085
        %v1089 = vrot.slane %v1088, 4
        %v1090 = vadd.f32 %v1088, %v1089
        %v1091 = vrot.slane %v1090, 2
        %v1092 = vadd.f32 %v1090, %v1091
        %v1093 = vrot.slane %v1092, 1
        %v1094 = vadd.f32 %v1092, %v1093
        %v1095 = vrcp.pop 16.0
        %v1096 = vmul.f32 %v1094, %v1095
        %v1097 = vsub.f32 %v1082, %v1096
        %v1098 = vsub.f32 %v1085, %v1096
        %v1099 = vmul.f32 %v1097, %v1097
        %v1100 = vmul.f32 %v1098, %v1098
        %v1101 = vadd.f32 %v1099, %v1100
        %v1102 = vrot.slane %v1101, 4
        %v1103 = vadd.f32 %v1101, %v1102
        %v1104 = vrot.slane %v1103, 2
        %v1105 = vadd.f32 %v1103, %v1104
        %v1106 = vrot.slane %v1105, 1
        %v1107 = vadd.f32 %v1105, %v1106
        %v1108 = vmul.f32 %v1107, %v1095
        %v1109 = vadd.f32 %v1108, 1e-05
        %v1110 = vrsqrt.pop %v1109
        %v1111 = vmul.f32 %v1097, %v1110
        %v1112 = vmul.f32 %v1098, %v1110
        %v1113 = vld [vmem:[%s235] sm:$0xff]
        %v1114 = vld [vmem:[%s235 + $0x8] sm:$0xff]
        %v1115 = vadd.f32 %v1111, %v1113
        %v1116 = vadd.f32 %v1112, %v1114
        %1117 = vst [vmem:[%s241] sm:$0xff] %v1115
        %1118 = vst [vmem:[%s241 + $0x8] sm:$0xff] %v1116
        %s1119 = smul.u32 2, %s18
        %p1120 = scmp.lt.s32.totalorder %s1119, 3
        %s1121 = scalar_select %p1120, %s1119, 3
        %s1122 = smul.addr %s1121, 8
        %s1123 = scalar_lea.vmem %s4, %s1122
        // Predicated region
        $region41: #{generator_forward.28} parent=35 // pred_check
          %p1124 = pneg %p130
        $region42: #{generator_forward.28} parent=35 // pred_check_branch
          %1126 = sbr.rel (%p1124) target = $region44
        $region43: #{generator_forward.28} parent=35 // pred_region
          %s1127 = smul.u32 2, %s18
        $region44: #{generator_forward.28} parent=35 // pred_fallthru
          _
      $region36: #{generator_forward.28} parent=5 // pred_fallthru
        _
      %p1128 = scmp.le.s32.totalorder 2, %s13
      // Predicated region
      $region45: #{generator_forward.28} parent=5 // pred_check
        %p1129 = pneg %p1128
      $region46: #{generator_forward.28} parent=5 // pred_check_branch
        %1131 = sbr.rel (%p1129) target = $region48
      $region47: #{generator_forward.28} parent=5 // pred_region
        %s1132 = ssub.s32 %s13, 2
        // Predicated region
        $region49: #{generator_forward.28} parent=47 // pred_check
          %p1133 = pneg %p136
        $region50: #{generator_forward.28} parent=47 // pred_check_branch
          %1135 = sbr.rel (%p1133) target = $region52
        $region51: #{generator_forward.28} parent=47 // pred_region
          %s1136 = smul.u32 2, %s19
          %p1137 = scmp.lt.s32.totalorder %s1136, 3
          %s1138 = scalar_select %p1137, %s1136, 3
          %s1139 = smul.addr %s1138, 8
          %s1140 = scalar_lea.vmem %s4, %s1139
        $region52: #{generator_forward.28} parent=47 // pred_fallthru
          _
      $region48: #{generator_forward.28} parent=5 // pred_fallthru
        _
    $region6: #{generator_forward.28} parent=1 // loop_footer
      %s17 = sadd.s32 1, %s13
    $region7: #{generator_forward.28} parent=1 // loop_footer_branch
      %12 = sbr.rel target = $region3
    $region8: #{generator_forward.28} parent=1 // loop_exit
      _
    %1141 = vsyncpa [#allocation3], 1
    %s1142 = scalar_lea.sflag [#allocation3], 1
    %1143 = vsyncpa %s1142, 1

// kernel: generator_forward.45
$region0: #{generator_forward.45}
  #allocation0 [shape = 'u32[]', space=smem, size = 0x4, offset = 0x4, fixed_abs, tag = 'smem constant byte address 0x4 - core index']
  #allocation1 [shape = 'u32[144,128]{1,0:T(1,128)}', space=vmem, size = 0x12000, scoped, tag = 'internal scratch']
  %s0 = inlined_call_operand.vmem [shape: bf16[128,512], index: 0, kind: input, shape index: {}]
  %s1 = inlined_call_operand.vmem [shape: bf16[4,512,64], index: 1, kind: input, shape index: {}]
  %s2 = inlined_call_operand.vmem [shape: f32[128,64], index: 2, kind: output, shape index: {}]
  %s3 = sld [smem:[#allocation0]]
  $region45: #{generator_forward.45} parent=0
    _
  %s5 = ssub.s32 1, %s3
  %s6 = scalar_select 0, %s5, %s3
  loop: start=0, step=1, limit=10
  $region2: #{generator_forward.45} parent=0 // loop_pre_header
    _
  $region3: #{generator_forward.45} parent=0 // loop_header
    %s8 = sphi 0, %s12
    %p9 = scmp.ge.s32.totalorder %s8, 10
    %s15 = sphi 0, %s27
    %s16 = sphi 0, %s23
    %s17 = sphi 0, %s15
    %s18 = sphi 0, %s16
    %s19 = sphi 0, %s17
    %s20 = sphi 0, %s18
    %s34 = sphi 0, %s36
    %s37 = sphi 0, %s34
    %s38 = sphi 0, %s37
    %s54 = sphi 0, %s38
    %s60 = sphi 0, %s62
    %s63 = sphi 0, %s60
    %s64 = sphi 0, %s63
    %s80 = sphi 0, %s64
    %s86 = sphi 0, %s88
    %s89 = sphi 0, %s86
    %s90 = sphi 0, %s89
    %s106 = sphi 0, %s90
  $region4: #{generator_forward.45} parent=0 // loop_header_branch
    %11 = sbr.rel (%p9) target = $region8
  $region5: #{generator_forward.45} parent=0 // loop_body
    %s13 = ssub.s32 %s8, 1
    %s14 = ssub.s32 %s8, 2
    %s21 = sadd.s32 1, %s16
    %p22 = scmp.ge.s32.totalorder %s21, 4
    %s23 = scalar_select %p22, 0, %s21
    %s24 = sadd.s32 1, %s15
    %s25 = scalar_select %p22, %s24, %s15
    %p26 = scmp.ge.s32.totalorder %s25, 2
    %s27 = scalar_select %p26, 0, %s25
    %s28 = smul.u32 %s15, 4
    %s29 = sadd.s32 %s28, %s16
    %s30 = smul.u32 %s27, 4
    %s31 = sadd.s32 %s30, %s23
    %s32 = ssub.s32 %s29, %s31
    %p33 = scmp.eq.s32.totalorder %s32, 0
    %s35 = sadd.s32 %s34, 1
    %s36 = scalar_select %p33, %s34, %s35
    %p39 = pneg %p33
    %p40 = scmp.eq.s32.totalorder %s8, 7
    %p41 = por %p39, %p40
    %p42 = scmp.ne.s32.totalorder %s34, %s37
    %p43 = scmp.eq.s32.totalorder %s8, 0
    %p44 = por %p42, %p43
    %p45 = scmp.ne.s32.totalorder %s34, %s37
    %p46 = scmp.eq.s32.totalorder %s13, 7
    %p47 = por %p45, %p46
    %p48 = scmp.ne.s32.totalorder %s37, %s38
    %p49 = scmp.eq.s32.totalorder %s13, 0
    %p50 = por %p48, %p49
    %p51 = scmp.ne.s32.totalorder %s37, %s38
    %p52 = scmp.eq.s32.totalorder %s14, 7
    %p53 = por %p51, %p52
    %p55 = scmp.ne.s32.totalorder %s38, %s54
    %p56 = scmp.eq.s32.totalorder %s14, 0
    %p57 = por %p55, %p56
    %s58 = ssub.s32 %s16, %s23
    %p59 = scmp.eq.s32.totalorder %s58, 0
    %s61 = sadd.s32 %s60, 1
    %s62 = scalar_select %p59, %s60, %s61
    %p65 = pneg %p59
    %p66 = scmp.eq.s32.totalorder %s8, 7
    %p67 = por %p65, %p66
    %p68 = scmp.ne.s32.totalorder %s60, %s63
    %p69 = scmp.eq.s32.totalorder %s8, 0
    %p70 = por %p68, %p69
    %p71 = scmp.ne.s32.totalorder %s60, %s63
    %p72 = scmp.eq.s32.totalorder %s13, 7
    %p73 = por %p71, %p72
    %p74 = scmp.ne.s32.totalorder %s63, %s64
    %p75 = scmp.eq.s32.totalorder %s13, 0
    %p76 = por %p74, %p75
    %p77 = scmp.ne.s32.totalorder %s63, %s64
    %p78 = scmp.eq.s32.totalorder %s14, 7
    %p79 = por %p77, %p78
    %p81 = scmp.ne.s32.totalorder %s64, %s80
    %p82 = scmp.eq.s32.totalorder %s14, 0
    %p83 = por %p81, %p82
    %s84 = ssub.s32 %s15, %s27
    %p85 = scmp.eq.s32.totalorder %s84, 0
    %s87 = sadd.s32 %s86, 1
    %s88 = scalar_select %p85, %s86, %s87
    %p91 = pneg %p85
    %p92 = scmp.eq.s32.totalorder %s8, 7
    %p93 = por %p91, %p92
    %p94 = scmp.ne.s32.totalorder %s86, %s89
    %p95 = scmp.eq.s32.totalorder %s8, 0
    %p96 = por %p94, %p95
    %p97 = scmp.ne.s32.totalorder %s86, %s89
    %p98 = scmp.eq.s32.totalorder %s13, 7
    %p99 = por %p97, %p98
    %p100 = scmp.ne.s32.totalorder %s89, %s90
    %p101 = scmp.eq.s32.totalorder %s13, 0
    %p102 = por %p100, %p101
    %p103 = scmp.ne.s32.totalorder %s89, %s90
    %p104 = scmp.eq.s32.totalorder %s14, 7
    %p105 = por %p103, %p104
    %p107 = scmp.ne.s32.totalorder %s90, %s106
    %p108 = scmp.eq.s32.totalorder %s14, 0
    %p109 = por %p107, %p108
    %p110 = scmp.le.s32.totalorder 1, %s8
    %p111 = scmp.lt.s32.totalorder %s8, 9
    %p112 = pnand %p110, %p111
    %p113 = pneg %p112
    // Predicated region
    $region9: #{generator_forward.45} parent=5 // pred_check
      _
    $region10: #{generator_forward.45} parent=5 // pred_check_branch
      %115 = sbr.rel (%p112) target = $region12
    $region11: #{generator_forward.45} parent=5 // pred_region
      %s116 = ssub.s32 %s8, 1
    $region12: #{generator_forward.45} parent=5 // pred_fallthru
      _
    %p117 = scmp.lt.s32.totalorder %s8, 8
    // Predicated region
    $region13: #{generator_forward.45} parent=5 // pred_check
      %p118 = pneg %p117
    $region14: #{generator_forward.45} parent=5 // pred_check_branch
      %120 = sbr.rel (%p118) target = $region16
    $region15: #{generator_forward.45} parent=5 // pred_region
      // Predicated region
      $region17: #{generator_forward.45} parent=15 // pred_check
        %p121 = pneg %p44
      $region18: #{generator_forward.45} parent=15 // pred_check_branch
        %123 = sbr.rel (%p121) target = $region20
      $region19: #{generator_forward.45} parent=15 // pred_region
        %s124 = smul.u32 %s15, 4
        %s125 = sadd.s32 %s124, %s16
        %s126 = smul.u32 2, %s125
        %p127 = scmp.lt.s32.totalorder %s126, 15
        %s128 = scalar_select %p127, %s126, 15
        %s129 = smul.addr %s128, 4
        %s130 = smul.addr %s129, 4
        %s131 = scalar_lea.vmem %s0, %s130
        %s132 = smul.u32 %s15, 4
        %s133 = sadd.s32 %s132, %s16
        %s134 = smul.u32 2, %s133
      $region20: #{generator_forward.45} parent=15 // pred_fallthru
        _
      // Predicated region
      $region21: #{generator_forward.45} parent=15 // pred_check
        %p135 = pneg %p70
      $region22: #{generator_forward.45} parent=15 // pred_check_branch
        %137 = sbr.rel (%p135) target = $region24
      $region23: #{generator_forward.45} parent=15 // pred_region
        %p138 = scmp.lt.s32.totalorder %s16, 3
        %s139 = scalar_select %p138, %s16, 3
        %s140 = smul.addr %s139, 64
        %s141 = smul.addr %s140, 4
        %s142 = scalar_lea.vmem %s1, %s141
      $region24: #{generator_forward.45} parent=15 // pred_fallthru
        _
    $region16: #{generator_forward.45} parent=5 // pred_fallthru
      _
    %p143 = scmp.le.s32.totalorder 1, %s8
    %p144 = scmp.lt.s32.totalorder %s8, 9
    %p145 = pnand %p143, %p144
    %p146 = pneg %p145
    // Predicated region
    $region25: #{generator_forward.45} parent=5 // pred_check
      _
    $region26: #{generator_forward.45} parent=5 // pred_check_branch
      %148 = sbr.rel (%p145) target = $region28
    $region27: #{generator_forward.45} parent=5 // pred_region
      %s149 = ssub.s32 %s8, 1
      %s150 = smul.u32 %s17, 4
      %s151 = sadd.s32 %s150, %s18
      %s152 = smul.u32 2, %s151
      %p153 = scmp.lt.s32.totalorder %s152, 15
      %s154 = scalar_select %p153, %s152, 15
      %s155 = smul.addr %s154, 4
      %s156 = smul.addr %s155, 4
      %s157 = scalar_lea.vmem %s0, %s156
      %p158 = pneg %p50
      %p159 = pneg %p47
      %p160 = scmp.lt.s32.totalorder %s18, 3
      %s161 = scalar_select %p160, %s18, 3
      %s162 = smul.addr %s161, 64
      %s163 = smul.addr %s162, 4
      %s164 = scalar_lea.vmem %s1, %s163
      %p165 = pneg %p76
      %p166 = pneg %p73
      %p167 = pneg %p102
      %p168 = pneg %p99
      %s169 = smul.u32 8, %s17
      %p170 = scmp.lt.s32.totalorder %s169, 15
      %s171 = scalar_select %p170, %s169, 15
      %s172 = smul.addr %s171, 8
      %s173 = scalar_lea.vmem %s2, %s172
      %s174 = smul.u32 %s17, 4
      %s175 = sadd.s32 %s174, %s18
      %s176 = smul.u32 2, %s175
      %p177 = scmp.lt.s32.totalorder %s176, 15
      %s178 = scalar_select %p177, %s176, 15
      %s179 = smul.addr %s178, 4
      %s180 = smul.addr %s179, 4
      %s181 = scalar_lea.vmem %s0, %s180
      %s182 = smul.u32 %s17, 4
      %s183 = sadd.s32 %s182, %s18
      %s184 = smul.u32 2, %s183
      %p185 = scmp.lt.s32.totalorder %s18, 3
      %s186 = scalar_select %p185, %s18, 3
      %s187 = smul.addr %s186, 64
      %s188 = smul.addr %s187, 4
      %s189 = scalar_lea.vmem %s1, %s188
      %s190 = smul.u32 8, %s17
      %p191 = scmp.lt.s32.totalorder %s190, 15
      %s192 = scalar_select %p191, %s190, 15
      %s193 = smul.addr %s192, 8
      %s194 = scalar_lea.vmem %s2, %s193
      %s195 = smul.u32 8, %s17
      %v197 = vld [vmem:[%s181] sm:$0xff]
      %v198 = vld [vmem:[%s181 + $0x8] sm:$0xff]
      %v199 = vld [vmem:[%s181 + $0x10] sm:$0xff]
      %v200 = vld [vmem:[%s181 + $0x18] sm:$0xff]
      %v201 = vld [vmem:[%s189] sm:$0xf]
      %v202 = vld [vmem:[%s189 + $0x4] sm:$0xf]
      %v203 = vld [vmem:[%s189 + $0x8] sm:$0xf]
      %v204 = vld [vmem:[%s189 + $0xc] sm:$0xf]
      %v205 = vld [vmem:[%s189 + $0x10] sm:$0xf]
      %v206 = vld [vmem:[%s189 + $0x14] sm:$0xf]
      %v207 = vld [vmem:[%s189 + $0x18] sm:$0xf]
      %v208 = vld [vmem:[%s189 + $0x1c] sm:$0xf]
      %v209 = vld [vmem:[%s189 + $0x20] sm:$0xf]
      %v210 = vld [vmem:[%s189 + $0x24] sm:$0xf]
      %v211 = vld [vmem:[%s189 + $0x28] sm:$0xf]
      %v212 = vld [vmem:[%s189 + $0x2c] sm:$0xf]
      %v213 = vld [vmem:[%s189 + $0x30] sm:$0xf]
      %v214 = vld [vmem:[%s189 + $0x34] sm:$0xf]
      %v215 = vld [vmem:[%s189 + $0x38] sm:$0xf]
      %v216 = vld [vmem:[%s189 + $0x3c] sm:$0xf]
      %v217 = vld [vmem:[%s189 + $0x40] sm:$0xf]
      %v218 = vld [vmem:[%s189 + $0x44] sm:$0xf]
      %v219 = vld [vmem:[%s189 + $0x48] sm:$0xf]
      %v220 = vld [vmem:[%s189 + $0x4c] sm:$0xf]
      %v221 = vld [vmem:[%s189 + $0x50] sm:$0xf]
      %v222 = vld [vmem:[%s189 + $0x54] sm:$0xf]
      %v223 = vld [vmem:[%s189 + $0x58] sm:$0xf]
      %v224 = vld [vmem:[%s189 + $0x5c] sm:$0xf]
      %v225 = vld [vmem:[%s189 + $0x60] sm:$0xf]
      %v226 = vld [vmem:[%s189 + $0x64] sm:$0xf]
      %v227 = vld [vmem:[%s189 + $0x68] sm:$0xf]
      %v228 = vld [vmem:[%s189 + $0x6c] sm:$0xf]
      %v229 = vld [vmem:[%s189 + $0x70] sm:$0xf]
      %v230 = vld [vmem:[%s189 + $0x74] sm:$0xf]
      %v231 = vld [vmem:[%s189 + $0x78] sm:$0xf]
      %v232 = vld [vmem:[%s189 + $0x7c] sm:$0xf]
      %v233 = vld [vmem:[%s189 + $0x80] sm:$0xf]
      %v234 = vld [vmem:[%s189 + $0x84] sm:$0xf]
      %v235 = vld [vmem:[%s189 + $0x88] sm:$0xf]
      %v236 = vld [vmem:[%s189 + $0x8c] sm:$0xf]
      %v237 = vld [vmem:[%s189 + $0x90] sm:$0xf]
      %v238 = vld [vmem:[%s189 + $0x94] sm:$0xf]
      %v239 = vld [vmem:[%s189 + $0x98] sm:$0xf]
      %v240 = vld [vmem:[%s189 + $0x9c] sm:$0xf]
      %v241 = vld [vmem:[%s189 + $0xa0] sm:$0xf]
      %v242 = vld [vmem:[%s189 + $0xa4] sm:$0xf]
      %v243 = vld [vmem:[%s189 + $0xa8] sm:$0xf]
      %v244 = vld [vmem:[%s189 + $0xac] sm:$0xf]
      %v245 = vld [vmem:[%s189 + $0xb0] sm:$0xf]
      %v246 = vld [vmem:[%s189 + $0xb4] sm:$0xf]
      %v247 = vld [vmem:[%s189 + $0xb8] sm:$0xf]
      %v248 = vld [vmem:[%s189 + $0xbc] sm:$0xf]
      %v249 = vld [vmem:[%s189 + $0xc0] sm:$0xf]
      %v250 = vld [vmem:[%s189 + $0xc4] sm:$0xf]
      %v251 = vld [vmem:[%s189 + $0xc8] sm:$0xf]
      %v252 = vld [vmem:[%s189 + $0xcc] sm:$0xf]
      %v253 = vld [vmem:[%s189 + $0xd0] sm:$0xf]
      %v254 = vld [vmem:[%s189 + $0xd4] sm:$0xf]
      %v255 = vld [vmem:[%s189 + $0xd8] sm:$0xf]
      %v256 = vld [vmem:[%s189 + $0xdc] sm:$0xf]
      %v257 = vld [vmem:[%s189 + $0xe0] sm:$0xf]
      %v258 = vld [vmem:[%s189 + $0xe4] sm:$0xf]
      %v259 = vld [vmem:[%s189 + $0xe8] sm:$0xf]
      %v260 = vld [vmem:[%s189 + $0xec] sm:$0xf]
      %v261 = vld [vmem:[%s189 + $0xf0] sm:$0xf]
      %v262 = vld [vmem:[%s189 + $0xf4] sm:$0xf]
      %v263 = vld [vmem:[%s189 + $0xf8] sm:$0xf]
      %v264 = vld [vmem:[%s189 + $0xfc] sm:$0xf]
      %v269 = vunpack.c.l.b16 %v197
      %v270 = vunpack.c.h.b16 %v197
      %v271 = vunpack.c.l.b16 %v198
      %v272 = vunpack.c.h.b16 %v198
      %v273 = vunpack.c.l.b16 %v199
      %v274 = vunpack.c.h.b16 %v199
      %v275 = vunpack.c.l.b16 %v200
      %v276 = vunpack.c.h.b16 %v200
      %v277 = vpack.c.b16 %v273, %v269
      %v278 = vpack.c.b16 %v274, %v270
      %v279 = vpack.c.b16 %v275, %v271
      %v280 = vpack.c.b16 %v276, %v272
      %v349 = vunpack.c.l.b16 %v201
      %v350 = vunpack.c.l.b16 %v202
      %v351 = vunpack.c.l.b16 %v203
      %v352 = vunpack.c.l.b16 %v204
      %v353 = vunpack.c.l.b16 %v205
      %v354 = vunpack.c.l.b16 %v206
      %v355 = vunpack.c.l.b16 %v207
      %v356 = vunpack.c.l.b16 %v208
      %v357 = vunpack.c.l.b16 %v209
      %v358 = vunpack.c.l.b16 %v210
      %v359 = vunpack.c.l.b16 %v211
      %v360 = vunpack.c.l.b16 %v212
      %v361 = vunpack.c.l.b16 %v213
      %v362 = vunpack.c.l.b16 %v214
      %v363 = vunpack.c.l.b16 %v215
      %v364 = vunpack.c.l.b16 %v216
      %v365 = vunpack.c.l.b16 %v217
      %v366 = vunpack.c.l.b16 %v218
      %v367 = vunpack.c.l.b16 %v219
      %v368 = vunpack.c.l.b16 %v220
      %v369 = vunpack.c.l.b16 %v221
      %v370 = vunpack.c.l.b16 %v222
      %v371 = vunpack.c.l.b16 %v223
      %v372 = vunpack.c.l.b16 %v224
      %v373 = vunpack.c.l.b16 %v225
      %v374 = vunpack.c.l.b16 %v226
      %v375 = vunpack.c.l.b16 %v227
      %v376 = vunpack.c.l.b16 %v228
      %v377 = vunpack.c.l.b16 %v229
      %v378 = vunpack.c.l.b16 %v230
      %v379 = vunpack.c.l.b16 %v231
      %v380 = vunpack.c.l.b16 %v232
      %v381 = vunpack.c.l.b16 %v233
      %v382 = vunpack.c.l.b16 %v234
      %v383 = vunpack.c.l.b16 %v235
      %v384 = vunpack.c.l.b16 %v236
      %v385 = vunpack.c.l.b16 %v237
      %v386 = vunpack.c.l.b16 %v238
      %v387 = vunpack.c.l.b16 %v239
      %v388 = vunpack.c.l.b16 %v240
      %v389 = vunpack.c.l.b16 %v241
      %v390 = vunpack.c.l.b16 %v242
      %v391 = vunpack.c.l.b16 %v243
      %v392 = vunpack.c.l.b16 %v244
      %v393 = vunpack.c.l.b16 %v245
      %v394 = vunpack.c.l.b16 %v246
      %v395 = vunpack.c.l.b16 %v247
      %v396 = vunpack.c.l.b16 %v248
      %v397 = vunpack.c.l.b16 %v249
      %v398 = vunpack.c.l.b16 %v250
      %v399 = vunpack.c.l.b16 %v251
      %v400 = vunpack.c.l.b16 %v252
      %v401 = vunpack.c.l.b16 %v253
      %v402 = vunpack.c.l.b16 %v254
      %v403 = vunpack.c.l.b16 %v255
      %v404 = vunpack.c.l.b16 %v256
      %v405 = vunpack.c.l.b16 %v257
      %v406 = vunpack.c.l.b16 %v258
      %v407 = vunpack.c.l.b16 %v259
      %v408 = vunpack.c.l.b16 %v260
      %v409 = vunpack.c.l.b16 %v261
      %v410 = vunpack.c.l.b16 %v262
      %v411 = vunpack.c.l.b16 %v263
      %v412 = vunpack.c.l.b16 %v264
      %v413 = vpack.c.b16 %v350, %v349
      %v414 = vpack.c.b16 %v352, %v351
      %v415 = vpack.c.b16 %v354, %v353
      %v416 = vpack.c.b16 %v356, %v355
      %v417 = vpack.c.b16 %v358, %v357
      %v418 = vpack.c.b16 %v360, %v359
      %v419 = vpack.c.b16 %v362, %v361
      %v420 = vpack.c.b16 %v364, %v363
      %v421 = vpack.c.b16 %v366, %v365
      %v422 = vpack.c.b16 %v368, %v367
      %v423 = vpack.c.b16 %v370, %v369
      %v424 = vpack.c.b16 %v372, %v371
      %v425 = vpack.c.b16 %v374, %v373
      %v426 = vpack.c.b16 %v376, %v375
      %v427 = vpack.c.b16 %v378, %v377
      %v428 = vpack.c.b16 %v380, %v379
      %v429 = vpack.c.b16 %v382, %v381
      %v430 = vpack.c.b16 %v384, %v383
      %v431 = vpack.c.b16 %v386, %v385
      %v432 = vpack.c.b16 %v388, %v387
      %v433 = vpack.c.b16 %v390, %v389
      %v434 = vpack.c.b16 %v392, %v391
      %v435 = vpack.c.b16 %v394, %v393
      %v436 = vpack.c.b16 %v396, %v395
      %v437 = vpack.c.b16 %v398, %v397
      %v438 = vpack.c.b16 %v400, %v399
      %v439 = vpack.c.b16 %v402, %v401
      %v440 = vpack.c.b16 %v404, %v403
      %v441 = vpack.c.b16 %v406, %v405
      %v442 = vpack.c.b16 %v408, %v407
      %v443 = vpack.c.b16 %v410, %v409
      %v444 = vpack.c.b16 %v412, %v411
      %477 = vmatprep.subr.bf16.mxu0 0
      %478 = vmatpush1.bf16.msra.mxu0 %v413
      %479 = vmatprep.subr.bf16.mxu0 0
      %480 = vmatpush1.bf16.msra.mxu0 %v414
      %481 = vmatprep.subr.bf16.mxu0 0
      %482 = vmatpush1.bf16.msra.mxu0 %v415
      %483 = vmatprep.subr.bf16.mxu0 0
      %484 = vmatpush1.bf16.msra.mxu0 %v416
      %485 = vmatprep.subr.bf16.mxu0 0
      %486 = vmatpush1.bf16.msra.mxu0 %v417
      %487 = vmatprep.subr.bf16.mxu0 0
      %488 = vmatpush1.bf16.msra.mxu0 %v418
      %489 = vmatprep.subr.bf16.mxu0 0
      %490 = vmatpush1.bf16.msra.mxu0 %v419
      %491 = vmatprep.subr.bf16.mxu0 0
      %492 = vmatpush1.bf16.msra.mxu0 %v420
      %493 = vmatprep.subr.bf16.mxu0 0
      %494 = vmatpush1.bf16.msra.mxu0 %v421
      %495 = vmatprep.subr.bf16.mxu0 0
      %496 = vmatpush1.bf16.msra.mxu0 %v422
      %497 = vmatprep.subr.bf16.mxu0 0
      %498 = vmatpush1.bf16.msra.mxu0 %v423
      %499 = vmatprep.subr.bf16.mxu0 0
      %500 = vmatpush1.bf16.msra.mxu0 %v424
      %501 = vmatprep.subr.bf16.mxu0 0
      %502 = vmatpush1.bf16.msra.mxu0 %v425
      %503 = vmatprep.subr.bf16.mxu0 0
      %504 = vmatpush1.bf16.msra.mxu0 %v426
      %505 = vmatprep.subr.bf16.mxu0 0
      %506 = vmatpush1.bf16.msra.mxu0 %v427
      %507 = vmatprep.subr.bf16.mxu0 0
      %508 = vmatpush1.bf16.msra.mxu0 %v428
      %509 = vmatprep.mubr.bf16.mxu0 %v278
      %510 = vmatmul.mubr.bf16.gmra.mrb[0].mxu0 %v277
      %v511 = vpop.f32.mrb[0].mxu0
      %v512 = vadd.f32 0.0, %v511
      %v513 = vpop.f32.mrb[0].mxu0
      %v514 = vpop.f32.mrb[0].mxu0
      %v515 = vadd.f32 0.0, %v514
      %v516 = vpop.f32.mrb[0].mxu0
      %517 = vdwg.mxu0
      %518 = vmatprep.subr.bf16.mxu0 0
      %519 = vmatpush1.bf16.msra.mxu0 %v429
      %520 = vmatprep.subr.bf16.mxu0 0
      %521 = vmatpush1.bf16.msra.mxu0 %v430
      %522 = vmatprep.subr.bf16.mxu0 0
      %523 = vmatpush1.bf16.msra.mxu0 %v431
      %524 = vmatprep.subr.bf16.mxu0 0
      %525 = vmatpush1.bf16.msra.mxu0 %v432
      %526 = vmatprep.subr.bf16.mxu0 0
      %527 = vmatpush1.bf16.msra.mxu0 %v433
      %528 = vmatprep.subr.bf16.mxu0 0
      %529 = vmatpush1.bf16.msra.mxu0 %v434
      %530 = vmatprep.subr.bf16.mxu0 0
      %531 = vmatpush1.bf16.msra.mxu0 %v435
      %532 = vmatprep.subr.bf16.mxu0 0
      %533 = vmatpush1.bf16.msra.mxu0 %v436
      %534 = vmatprep.subr.bf16.mxu0 0
      %535 = vmatpush1.bf16.msra.mxu0 %v437
      %536 = vmatprep.subr.bf16.mxu0 0
      %537 = vmatpush1.bf16.msra.mxu0 %v438
      %538 = vmatprep.subr.bf16.mxu0 0
      %539 = vmatpush1.bf16.msra.mxu0 %v439
      %540 = vmatprep.subr.bf16.mxu0 0
      %541 = vmatpush1.bf16.msra.mxu0 %v440
      %542 = vmatprep.subr.bf16.mxu0 0
      %543 = vmatpush1.bf16.msra.mxu0 %v441
      %544 = vmatprep.subr.bf16.mxu0 0
      %545 = vmatpush1.bf16.msra.mxu0 %v442
      %546 = vmatprep.subr.bf16.mxu0 0
      %547 = vmatpush1.bf16.msra.mxu0 %v443
      %548 = vmatprep.subr.bf16.mxu0 0
      %549 = vmatpush1.bf16.msra.mxu0 %v444
      %550 = vmatprep.mubr.bf16.mxu0 %v280
      %551 = vmatmul.mubr.bf16.gmra.mrb[0].mxu0 %v279
      %v552 = vpop.f32.mrb[0].mxu0
      %v553 = vadd.f32 %v512, %v552
      %v554 = vpop.f32.mrb[0].mxu0
      %v555 = vpop.f32.mrb[0].mxu0
      %v556 = vadd.f32 %v515, %v555
      %v557 = vpop.f32.mrb[0].mxu0
      %558 = vdwg.mxu0
      %s559 = smul.u32 %s18, 16
      %s560 = scalar_lea.vmem %s194, %s559
      %vm561 = vcmask 523264
      %562 = vst.msk [vmem:[%s560] sm:$0xff] %vm561, %v553
      %563 = vst.msk [vmem:[%s560 + $0x8] sm:$0xff] %vm561, %v556
      %p564 = scmp.eq.s32.totalorder %s18, 3
      // Predicated region
      $region29: #{generator_forward.45} parent=27 // pred_check
        %p565 = pneg %p564
      $region30: #{generator_forward.45} parent=27 // pred_check_branch
        %567 = sbr.rel (%p565) target = $region32
      $region31: #{generator_forward.45} parent=27 // pred_region
        %v568 = vld [vmem:[%s194] sm:$0xff]
        %v569 = vld [vmem:[%s194 + $0x8] sm:$0xff]
        %v570 = vld [vmem:[%s194 + $0x10] sm:$0xff]
        %v571 = vld [vmem:[%s194 + $0x18] sm:$0xff]
        %v572 = vld [vmem:[%s194 + $0x20] sm:$0xff]
        %v573 = vld [vmem:[%s194 + $0x28] sm:$0xff]
        %v574 = vld [vmem:[%s194 + $0x30] sm:$0xff]
        %v575 = vld [vmem:[%s194 + $0x38] sm:$0xff]
        %v576 = vsel %vm561, %v568, 0.0
        %v577 = vsel %vm561, %v569, 0.0
        %v578 = vadd.f32 %v576, %v577
        %v579 = vsel %vm561, %v570, 0.0
        %v580 = vadd.f32 %v578, %v579
        %v581 = vsel %vm561, %v571, 0.0
        %v582 = vadd.f32 %v580, %v581
        %v583 = vsel %vm561, %v572, 0.0
        %v584 = vadd.f32 %v582, %v583
        %v585 = vsel %vm561, %v573, 0.0
        %v586 = vadd.f32 %v584, %v585
        %v587 = vsel %vm561, %v574, 0.0
        %v588 = vadd.f32 %v586, %v587
        %v589 = vsel %vm561, %v575, 0.0
        %v590 = vadd.f32 %v588, %v589
        %v591 = vrot.slane %v590, 4
        %v592 = vadd.f32 %v590, %v591
        %v593 = vrot.slane %v592, 2
        %v594 = vadd.f32 %v592, %v593
        %v595 = vrot.slane %v594, 1
        %v596 = vadd.f32 %v594, %v595
        %v597 = vrcp.pop 64.0
        %v598 = vmul.f32 %v596, %v597
        %v599 = vsub.f32 %v568, %v598
        %v600 = vsub.f32 %v569, %v598
        %v601 = vsub.f32 %v570, %v598
        %v602 = vsub.f32 %v571, %v598
        %v603 = vsub.f32 %v572, %v598
        %v604 = vsub.f32 %v573, %v598
        %v605 = vsub.f32 %v574, %v598
        %v606 = vsub.f32 %v575, %v598
        %v607 = vmul.f32 %v599, %v599
        %v608 = vmul.f32 %v600, %v600
        %v609 = vmul.f32 %v601, %v601
        %v610 = vmul.f32 %v602, %v602
        %v611 = vmul.f32 %v603, %v603
        %v612 = vmul.f32 %v604, %v604
        %v613 = vmul.f32 %v605, %v605
        %v614 = vmul.f32 %v606, %v606
        %v615 = vsel %vm561, %v607, 0.0
        %v616 = vsel %vm561, %v608, 0.0
        %v617 = vadd.f32 %v615, %v616
        %v618 = vsel %vm561, %v609, 0.0
        %v619 = vadd.f32 %v617, %v618
        %v620 = vsel %vm561, %v610, 0.0
        %v621 = vadd.f32 %v619, %v620
        %v622 = vsel %vm561, %v611, 0.0
        %v623 = vadd.f32 %v621, %v622
        %v624 = vsel %vm561, %v612, 0.0
        %v625 = vadd.f32 %v623, %v624
        %v626 = vsel %vm561, %v613, 0.0
        %v627 = vadd.f32 %v625, %v626
        %v628 = vsel %vm561, %v614, 0.0
        %v629 = vadd.f32 %v627, %v628
        %v630 = vrot.slane %v629, 4
        %v631 = vadd.f32 %v629, %v630
        %v632 = vrot.slane %v631, 2
        %v633 = vadd.f32 %v631, %v632
        %v634 = vrot.slane %v633, 1
        %v635 = vadd.f32 %v633, %v634
        %v636 = vmul.f32 %v635, %v597
        %v637 = vadd.f32 %v636, 1e-05
        %v638 = vrsqrt.pop %v637
        %v639 = vmul.f32 %v599, %v638
        %v640 = vmul.f32 %v600, %v638
        %v641 = vmul.f32 %v601, %v638
        %v642 = vmul.f32 %v602, %v638
        %v643 = vmul.f32 %v603, %v638
        %v644 = vmul.f32 %v604, %v638
        %v645 = vmul.f32 %v605, %v638
        %v646 = vmul.f32 %v606, %v638
        %v647 = vmax.f32 %v639, 0.0
        %v648 = vmax.f32 %v640, 0.0
        %v649 = vmax.f32 %v641, 0.0
        %v650 = vmax.f32 %v642, 0.0
        %v651 = vmax.f32 %v643, 0.0
        %v652 = vmax.f32 %v644, 0.0
        %v653 = vmax.f32 %v645, 0.0
        %v654 = vmax.f32 %v646, 0.0
        %655 = vst.msk [vmem:[%s194] sm:$0xff] %vm561, %v647
        %656 = vst.msk [vmem:[%s194 + $0x8] sm:$0xff] %vm561, %v648
        %657 = vst.msk [vmem:[%s194 + $0x10] sm:$0xff] %vm561, %v649
        %658 = vst.msk [vmem:[%s194 + $0x18] sm:$0xff] %vm561, %v650
        %659 = vst.msk [vmem:[%s194 + $0x20] sm:$0xff] %vm561, %v651
        %660 = vst.msk [vmem:[%s194 + $0x28] sm:$0xff] %vm561, %v652
        %661 = vst.msk [vmem:[%s194 + $0x30] sm:$0xff] %vm561, %v653
        %662 = vst.msk [vmem:[%s194 + $0x38] sm:$0xff] %vm561, %v654
      $region32: #{generator_forward.45} parent=27 // pred_fallthru
        _
      %s663 = smul.u32 8, %s17
      %p664 = scmp.lt.s32.totalorder %s663, 15
      %s665 = scalar_select %p664, %s663, 15
      %s666 = smul.addr %s665, 8
      %s667 = scalar_lea.vmem %s2, %s666
      // Predicated region
      $region33: #{generator_forward.45} parent=27 // pred_check
        %p668 = pneg %p99
      $region34: #{generator_forward.45} parent=27 // pred_check_branch
        %670 = sbr.rel (%p668) target = $region36
      $region35: #{generator_forward.45} parent=27 // pred_region
        %s671 = smul.u32 8, %s17
      $region36: #{generator_forward.45} parent=27 // pred_fallthru
        _
    $region28: #{generator_forward.45} parent=5 // pred_fallthru
      _
    %p672 = scmp.le.s32.totalorder 2, %s8
    // Predicated region
    $region37: #{generator_forward.45} parent=5 // pred_check
      %p673 = pneg %p672
    $region38: #{generator_forward.45} parent=5 // pred_check_branch
      %675 = sbr.rel (%p673) target = $region40
    $region39: #{generator_forward.45} parent=5 // pred_region
      %s676 = ssub.s32 %s8, 2
      // Predicated region
      $region41: #{generator_forward.45} parent=39 // pred_check
        %p677 = pneg %p105
      $region42: #{generator_forward.45} parent=39 // pred_check_branch
        %679 = sbr.rel (%p677) target = $region44
      $region43: #{generator_forward.45} parent=39 // pred_region
        %s680 = smul.u32 8, %s19
        %p681 = scmp.lt.s32.totalorder %s680, 15
        %s682 = scalar_select %p681, %s680, 15
        %s683 = smul.addr %s682, 8
        %s684 = scalar_lea.vmem %s2, %s683
      $region44: #{generator_forward.45} parent=39 // pred_fallthru
        _
    $region40: #{generator_forward.45} parent=5 // pred_fallthru
      _
  $region6: #{generator_forward.45} parent=0 // loop_footer
    %s12 = sadd.s32 1, %s8
  $region7: #{generator_forward.45} parent=0 // loop_footer_branch
    %7 = sbr.rel target = $region3
  $region8: #{generator_forward.45} parent=0 // loop_exit
    _

// kernel: generator_forward.46
$region0: #{generator_forward.46}
  #allocation0 [shape = 'u32[]', space=smem, size = 0x4, offset = 0x4, fixed_abs, tag = 'smem constant byte address 0x4 - core index']
  #allocation1 [shape = 'u32[144,128]{1,0:T(1,128)}', space=vmem, size = 0x12000, scoped, tag = 'internal scratch']
  %s0 = inlined_call_operand.vmem [shape: bf16[512,256], index: 0, kind: input, shape index: {}]
  %s1 = inlined_call_operand.vmem [shape: bf16[4,256,32], index: 1, kind: input, shape index: {}]
  %s2 = inlined_call_operand.vmem [shape: f32[512,32], index: 2, kind: output, shape index: {}]
  %s3 = sld [smem:[#allocation0]]
  $region45: #{generator_forward.46} parent=0
    _
  %s5 = ssub.s32 1, %s3
  %s6 = scalar_select 0, %s5, %s3
  loop: start=0, step=1, limit=10
  $region2: #{generator_forward.46} parent=0 // loop_pre_header
    _
  $region3: #{generator_forward.46} parent=0 // loop_header
    %s8 = sphi 0, %s12
    %p9 = scmp.ge.s32.totalorder %s8, 10
    %s15 = sphi 0, %s27
    %s16 = sphi 0, %s23
    %s17 = sphi 0, %s15
    %s18 = sphi 0, %s16
    %s19 = sphi 0, %s17
    %s20 = sphi 0, %s18
    %s34 = sphi 0, %s36
    %s37 = sphi 0, %s34
    %s38 = sphi 0, %s37
    %s54 = sphi 0, %s38
    %s60 = sphi 0, %s62
    %s63 = sphi 0, %s60
    %s64 = sphi 0, %s63
    %s80 = sphi 0, %s64
    %s86 = sphi 0, %s88
    %s89 = sphi 0, %s86
    %s90 = sphi 0, %s89
    %s106 = sphi 0, %s90
  $region4: #{generator_forward.46} parent=0 // loop_header_branch
    %11 = sbr.rel (%p9) target = $region8
  $region5: #{generator_forward.46} parent=0 // loop_body
    %s13 = ssub.s32 %s8, 1
    %s14 = ssub.s32 %s8, 2
    %s21 = sadd.s32 1, %s16
    %p22 = scmp.ge.s32.totalorder %s21, 4
    %s23 = scalar_select %p22, 0, %s21
    %s24 = sadd.s32 1, %s15
    %s25 = scalar_select %p22, %s24, %s15
    %p26 = scmp.ge.s32.totalorder %s25, 2
    %s27 = scalar_select %p26, 0, %s25
    %s28 = smul.u32 %s15, 4
    %s29 = sadd.s32 %s28, %s16
    %s30 = smul.u32 %s27, 4
    %s31 = sadd.s32 %s30, %s23
    %s32 = ssub.s32 %s29, %s31
    %p33 = scmp.eq.s32.totalorder %s32, 0
    %s35 = sadd.s32 %s34, 1
    %s36 = scalar_select %p33, %s34, %s35
    %p39 = pneg %p33
    %p40 = scmp.eq.s32.totalorder %s8, 7
    %p41 = por %p39, %p40
    %p42 = scmp.ne.s32.totalorder %s34, %s37
    %p43 = scmp.eq.s32.totalorder %s8, 0
    %p44 = por %p42, %p43
    %p45 = scmp.ne.s32.totalorder %s34, %s37
    %p46 = scmp.eq.s32.totalorder %s13, 7
    %p47 = por %p45, %p46
    %p48 = scmp.ne.s32.totalorder %s37, %s38
    %p49 = scmp.eq.s32.totalorder %s13, 0
    %p50 = por %p48, %p49
    %p51 = scmp.ne.s32.totalorder %s37, %s38
    %p52 = scmp.eq.s32.totalorder %s14, 7
    %p53 = por %p51, %p52
    %p55 = scmp.ne.s32.totalorder %s38, %s54
    %p56 = scmp.eq.s32.totalorder %s14, 0
    %p57 = por %p55, %p56
    %s58 = ssub.s32 %s16, %s23
    %p59 = scmp.eq.s32.totalorder %s58, 0
    %s61 = sadd.s32 %s60, 1
    %s62 = scalar_select %p59, %s60, %s61
    %p65 = pneg %p59
    %p66 = scmp.eq.s32.totalorder %s8, 7
    %p67 = por %p65, %p66
    %p68 = scmp.ne.s32.totalorder %s60, %s63
    %p69 = scmp.eq.s32.totalorder %s8, 0
    %p70 = por %p68, %p69
    %p71 = scmp.ne.s32.totalorder %s60, %s63
    %p72 = scmp.eq.s32.totalorder %s13, 7
    %p73 = por %p71, %p72
    %p74 = scmp.ne.s32.totalorder %s63, %s64
    %p75 = scmp.eq.s32.totalorder %s13, 0
    %p76 = por %p74, %p75
    %p77 = scmp.ne.s32.totalorder %s63, %s64
    %p78 = scmp.eq.s32.totalorder %s14, 7
    %p79 = por %p77, %p78
    %p81 = scmp.ne.s32.totalorder %s64, %s80
    %p82 = scmp.eq.s32.totalorder %s14, 0
    %p83 = por %p81, %p82
    %s84 = ssub.s32 %s15, %s27
    %p85 = scmp.eq.s32.totalorder %s84, 0
    %s87 = sadd.s32 %s86, 1
    %s88 = scalar_select %p85, %s86, %s87
    %p91 = pneg %p85
    %p92 = scmp.eq.s32.totalorder %s8, 7
    %p93 = por %p91, %p92
    %p94 = scmp.ne.s32.totalorder %s86, %s89
    %p95 = scmp.eq.s32.totalorder %s8, 0
    %p96 = por %p94, %p95
    %p97 = scmp.ne.s32.totalorder %s86, %s89
    %p98 = scmp.eq.s32.totalorder %s13, 7
    %p99 = por %p97, %p98
    %p100 = scmp.ne.s32.totalorder %s89, %s90
    %p101 = scmp.eq.s32.totalorder %s13, 0
    %p102 = por %p100, %p101
    %p103 = scmp.ne.s32.totalorder %s89, %s90
    %p104 = scmp.eq.s32.totalorder %s14, 7
    %p105 = por %p103, %p104
    %p107 = scmp.ne.s32.totalorder %s90, %s106
    %p108 = scmp.eq.s32.totalorder %s14, 0
    %p109 = por %p107, %p108
    %p110 = scmp.le.s32.totalorder 1, %s8
    %p111 = scmp.lt.s32.totalorder %s8, 9
    %p112 = pnand %p110, %p111
    %p113 = pneg %p112
    // Predicated region
    $region9: #{generator_forward.46} parent=5 // pred_check
      _
    $region10: #{generator_forward.46} parent=5 // pred_check_branch
      %115 = sbr.rel (%p112) target = $region12
    $region11: #{generator_forward.46} parent=5 // pred_region
      %s116 = ssub.s32 %s8, 1
    $region12: #{generator_forward.46} parent=5 // pred_fallthru
      _
    %p117 = scmp.lt.s32.totalorder %s8, 8
    // Predicated region
    $region13: #{generator_forward.46} parent=5 // pred_check
      %p118 = pneg %p117
    $region14: #{generator_forward.46} parent=5 // pred_check_branch
      %120 = sbr.rel (%p118) target = $region16
    $region15: #{generator_forward.46} parent=5 // pred_region
      // Predicated region
      $region17: #{generator_forward.46} parent=15 // pred_check
        %p121 = pneg %p44
      $region18: #{generator_forward.46} parent=15 // pred_check_branch
        %123 = sbr.rel (%p121) target = $region20
      $region19: #{generator_forward.46} parent=15 // pred_region
        %s124 = smul.u32 %s15, 4
        %s125 = sadd.s32 %s124, %s16
        %s126 = smul.u32 8, %s125
        %p127 = scmp.lt.s32.totalorder %s126, 63
        %s128 = scalar_select %p127, %s126, 63
        %s129 = smul.addr %s128, 2
        %s130 = smul.addr %s129, 4
        %s131 = scalar_lea.vmem %s0, %s130
        %s132 = smul.u32 %s15, 4
        %s133 = sadd.s32 %s132, %s16
        %s134 = smul.u32 8, %s133
      $region20: #{generator_forward.46} parent=15 // pred_fallthru
        _
      // Predicated region
      $region21: #{generator_forward.46} parent=15 // pred_check
        %p135 = pneg %p70
      $region22: #{generator_forward.46} parent=15 // pred_check_branch
        %137 = sbr.rel (%p135) target = $region24
      $region23: #{generator_forward.46} parent=15 // pred_region
        %p138 = scmp.lt.s32.totalorder %s16, 3
        %s139 = scalar_select %p138, %s16, 3
        %s140 = smul.addr %s139, 32
        %s141 = smul.addr %s140, 4
        %s142 = scalar_lea.vmem %s1, %s141
      $region24: #{generator_forward.46} parent=15 // pred_fallthru
        _
    $region16: #{generator_forward.46} parent=5 // pred_fallthru
      _
    %p143 = scmp.le.s32.totalorder 1, %s8
    %p144 = scmp.lt.s32.totalorder %s8, 9
    %p145 = pnand %p143, %p144
    %p146 = pneg %p145
    // Predicated region
    $region25: #{generator_forward.46} parent=5 // pred_check
      _
    $region26: #{generator_forward.46} parent=5 // pred_check_branch
      %148 = sbr.rel (%p145) target = $region28
    $region27: #{generator_forward.46} parent=5 // pred_region
      %s149 = ssub.s32 %s8, 1
      %s150 = smul.u32 %s17, 4
      %s151 = sadd.s32 %s150, %s18
      %s152 = smul.u32 8, %s151
      %p153 = scmp.lt.s32.totalorder %s152, 63
      %s154 = scalar_select %p153, %s152, 63
      %s155 = smul.addr %s154, 2
      %s156 = smul.addr %s155, 4
      %s157 = scalar_lea.vmem %s0, %s156
      %p158 = pneg %p50
      %p159 = pneg %p47
      %p160 = scmp.lt.s32.totalorder %s18, 3
      %s161 = scalar_select %p160, %s18, 3
      %s162 = smul.addr %s161, 32
      %s163 = smul.addr %s162, 4
      %s164 = scalar_lea.vmem %s1, %s163
      %p165 = pneg %p76
      %p166 = pneg %p73
      %p167 = pneg %p102
      %p168 = pneg %p99
      %s169 = smul.u32 32, %s17
      %p170 = scmp.lt.s32.totalorder %s169, 63
      %s171 = scalar_select %p170, %s169, 63
      %s172 = smul.addr %s171, 8
      %s173 = scalar_lea.vmem %s2, %s172
      %s174 = smul.u32 %s17, 4
      %s175 = sadd.s32 %s174, %s18
      %s176 = smul.u32 8, %s175
      %p177 = scmp.lt.s32.totalorder %s176, 63
      %s178 = scalar_select %p177, %s176, 63
      %s179 = smul.addr %s178, 2
      %s180 = smul.addr %s179, 4
      %s181 = scalar_lea.vmem %s0, %s180
      %s182 = smul.u32 %s17, 4
      %s183 = sadd.s32 %s182, %s18
      %s184 = smul.u32 8, %s183
      %p185 = scmp.lt.s32.totalorder %s18, 3
      %s186 = scalar_select %p185, %s18, 3
      %s187 = smul.addr %s186, 32
      %s188 = smul.addr %s187, 4
      %s189 = scalar_lea.vmem %s1, %s188
      %s190 = smul.u32 32, %s17
      %p191 = scmp.lt.s32.totalorder %s190, 63
      %s192 = scalar_select %p191, %s190, 63
      %s193 = smul.addr %s192, 8
      %s194 = scalar_lea.vmem %s2, %s193
      %s195 = smul.u32 32, %s17
      %v197 = vld [vmem:[%s181] sm:$0xff]
      %v198 = vld [vmem:[%s181 + $0x8] sm:$0xff]
      %v199 = vld [vmem:[%s181 + $0x10] sm:$0xff]
      %v200 = vld [vmem:[%s181 + $0x18] sm:$0xff]
      %v201 = vld [vmem:[%s181 + $0x20] sm:$0xff]
      %v202 = vld [vmem:[%s181 + $0x28] sm:$0xff]
      %v203 = vld [vmem:[%s181 + $0x30] sm:$0xff]
      %v204 = vld [vmem:[%s181 + $0x38] sm:$0xff]
      %v205 = vld [vmem:[%s189] sm:$0xf]
      %v206 = vld [vmem:[%s189 + $0x4] sm:$0xf]
      %v207 = vld [vmem:[%s189 + $0x8] sm:$0xf]
      %v208 = vld [vmem:[%s189 + $0xc] sm:$0xf]
      %v209 = vld [vmem:[%s189 + $0x10] sm:$0xf]
      %v210 = vld [vmem:[%s189 + $0x14] sm:$0xf]
      %v211 = vld [vmem:[%s189 + $0x18] sm:$0xf]
      %v212 = vld [vmem:[%s189 + $0x1c] sm:$0xf]
      %v213 = vld [vmem:[%s189 + $0x20] sm:$0xf]
      %v214 = vld [vmem:[%s189 + $0x24] sm:$0xf]
      %v215 = vld [vmem:[%s189 + $0x28] sm:$0xf]
      %v216 = vld [vmem:[%s189 + $0x2c] sm:$0xf]
      %v217 = vld [vmem:[%s189 + $0x30] sm:$0xf]
      %v218 = vld [vmem:[%s189 + $0x34] sm:$0xf]
      %v219 = vld [vmem:[%s189 + $0x38] sm:$0xf]
      %v220 = vld [vmem:[%s189 + $0x3c] sm:$0xf]
      %v221 = vld [vmem:[%s189 + $0x40] sm:$0xf]
      %v222 = vld [vmem:[%s189 + $0x44] sm:$0xf]
      %v223 = vld [vmem:[%s189 + $0x48] sm:$0xf]
      %v224 = vld [vmem:[%s189 + $0x4c] sm:$0xf]
      %v225 = vld [vmem:[%s189 + $0x50] sm:$0xf]
      %v226 = vld [vmem:[%s189 + $0x54] sm:$0xf]
      %v227 = vld [vmem:[%s189 + $0x58] sm:$0xf]
      %v228 = vld [vmem:[%s189 + $0x5c] sm:$0xf]
      %v229 = vld [vmem:[%s189 + $0x60] sm:$0xf]
      %v230 = vld [vmem:[%s189 + $0x64] sm:$0xf]
      %v231 = vld [vmem:[%s189 + $0x68] sm:$0xf]
      %v232 = vld [vmem:[%s189 + $0x6c] sm:$0xf]
      %v233 = vld [vmem:[%s189 + $0x70] sm:$0xf]
      %v234 = vld [vmem:[%s189 + $0x74] sm:$0xf]
      %v235 = vld [vmem:[%s189 + $0x78] sm:$0xf]
      %v236 = vld [vmem:[%s189 + $0x7c] sm:$0xf]
      %v245 = vunpack.c.l.b16 %v197
      %v246 = vunpack.c.h.b16 %v197
      %v247 = vunpack.c.l.b16 %v198
      %v248 = vunpack.c.h.b16 %v198
      %v249 = vunpack.c.l.b16 %v199
      %v250 = vunpack.c.h.b16 %v199
      %v251 = vunpack.c.l.b16 %v200
      %v252 = vunpack.c.h.b16 %v200
      %v253 = vunpack.c.l.b16 %v201
      %v254 = vunpack.c.h.b16 %v201
      %v255 = vunpack.c.l.b16 %v202
      %v256 = vunpack.c.h.b16 %v202
      %v257 = vunpack.c.l.b16 %v203
      %v258 = vunpack.c.h.b16 %v203
      %v259 = vunpack.c.l.b16 %v204
      %v260 = vunpack.c.h.b16 %v204
      %v261 = vpack.c.b16 %v247, %v245
      %v262 = vpack.c.b16 %v248, %v246
      %v263 = vpack.c.b16 %v251, %v249
      %v264 = vpack.c.b16 %v252, %v250
      %v265 = vpack.c.b16 %v255, %v253
      %v266 = vpack.c.b16 %v256, %v254
      %v267 = vpack.c.b16 %v259, %v257
      %v268 = vpack.c.b16 %v260, %v258
      %v309 = vunpack.c.l.b16 %v205
      %v310 = vunpack.c.l.b16 %v206
      %v311 = vunpack.c.l.b16 %v207
      %v312 = vunpack.c.l.b16 %v208
      %v313 = vunpack.c.l.b16 %v209
      %v314 = vunpack.c.l.b16 %v210
      %v315 = vunpack.c.l.b16 %v211
      %v316 = vunpack.c.l.b16 %v212
      %v317 = vunpack.c.l.b16 %v213
      %v318 = vunpack.c.l.b16 %v214
      %v319 = vunpack.c.l.b16 %v215
      %v320 = vunpack.c.l.b16 %v216
      %v321 = vunpack.c.l.b16 %v217
      %v322 = vunpack.c.l.b16 %v218
      %v323 = vunpack.c.l.b16 %v219
      %v324 = vunpack.c.l.b16 %v220
      %v325 = vunpack.c.l.b16 %v221
      %v326 = vunpack.c.l.b16 %v222
      %v327 = vunpack.c.l.b16 %v223
      %v328 = vunpack.c.l.b16 %v224
      %v329 = vunpack.c.l.b16 %v225
      %v330 = vunpack.c.l.b16 %v226
      %v331 = vunpack.c.l.b16 %v227
      %v332 = vunpack.c.l.b16 %v228
      %v333 = vunpack.c.l.b16 %v229
      %v334 = vunpack.c.l.b16 %v230
      %v335 = vunpack.c.l.b16 %v231
      %v336 = vunpack.c.l.b16 %v232
      %v337 = vunpack.c.l.b16 %v233
      %v338 = vunpack.c.l.b16 %v234
      %v339 = vunpack.c.l.b16 %v235
      %v340 = vunpack.c.l.b16 %v236
      %v341 = vpack.c.b16 %v310, %v309
      %v342 = vpack.c.b16 %v312, %v311
      %v343 = vpack.c.b16 %v314, %v313
      %v344 = vpack.c.b16 %v316, %v315
      %v345 = vpack.c.b16 %v318, %v317
      %v346 = vpack.c.b16 %v320, %v319
      %v347 = vpack.c.b16 %v322, %v321
      %v348 = vpack.c.b16 %v324, %v323
      %v349 = vpack.c.b16 %v326, %v325
      %v350 = vpack.c.b16 %v328, %v327
      %v351 = vpack.c.b16 %v330, %v329
      %v352 = vpack.c.b16 %v332, %v331
      %v353 = vpack.c.b16 %v334, %v333
      %v354 = vpack.c.b16 %v336, %v335
      %v355 = vpack.c.b16 %v338, %v337
      %v356 = vpack.c.b16 %v340, %v339
      %373 = vmatprep.subr.bf16.mxu0 0
      %374 = vmatpush1.bf16.msra.mxu0 %v341
      %375 = vmatprep.subr.bf16.mxu0 0
      %376 = vmatpush1.bf16.msra.mxu0 %v342
      %377 = vmatprep.subr.bf16.mxu0 0
      %378 = vmatpush1.bf16.msra.mxu0 %v343
      %379 = vmatprep.subr.bf16.mxu0 0
      %380 = vmatpush1.bf16.msra.mxu0 %v344
      %381 = vmatprep.subr.bf16.mxu0 0
      %382 = vmatpush1.bf16.msra.mxu0 %v345
      %383 = vmatprep.subr.bf16.mxu0 0
      %384 = vmatpush1.bf16.msra.mxu0 %v346
      %385 = vmatprep.subr.bf16.mxu0 0
      %386 = vmatpush1.bf16.msra.mxu0 %v347
      %387 = vmatprep.subr.bf16.mxu0 0
      %388 = vmatpush1.bf16.msra.mxu0 %v348
      %389 = vmatprep.subr.bf16.mxu0 0
      %390 = vmatpush1.bf16.msra.mxu0 %v349
      %391 = vmatprep.subr.bf16.mxu0 0
      %392 = vmatpush1.bf16.msra.mxu0 %v350
      %393 = vmatprep.subr.bf16.mxu0 0
      %394 = vmatpush1.bf16.msra.mxu0 %v351
      %395 = vmatprep.subr.bf16.mxu0 0
      %396 = vmatpush1.bf16.msra.mxu0 %v352
      %397 = vmatprep.subr.bf16.mxu0 0
      %398 = vmatpush1.bf16.msra.mxu0 %v353
      %399 = vmatprep.subr.bf16.mxu0 0
      %400 = vmatpush1.bf16.msra.mxu0 %v354
      %401 = vmatprep.subr.bf16.mxu0 0
      %402 = vmatpush1.bf16.msra.mxu0 %v355
      %403 = vmatprep.subr.bf16.mxu0 0
      %404 = vmatpush1.bf16.msra.mxu0 %v356
      %405 = vmatprep.mubr.bf16.mxu0 %v262
      %406 = vmatmul.mubr.bf16.gmra.mrb[0].mxu0 %v261
      %v407 = vpop.f32.mrb[0].mxu0
      %v408 = vadd.f32 0.0, %v407
      %v409 = vpop.f32.mrb[0].mxu0
      %v410 = vpop.f32.mrb[0].mxu0
      %v411 = vadd.f32 0.0, %v410
      %v412 = vpop.f32.mrb[0].mxu0
      %413 = vmatprep.mubr.bf16.mxu0 %v264
      %414 = vmatmul.mubr.bf16.gmra.mrb[0].mxu0 %v263
      %v415 = vpop.f32.mrb[0].mxu0
      %v416 = vadd.f32 0.0, %v415
      %v417 = vpop.f32.mrb[0].mxu0
      %v418 = vpop.f32.mrb[0].mxu0
      %v419 = vadd.f32 0.0, %v418
      %v420 = vpop.f32.mrb[0].mxu0
      %421 = vmatprep.mubr.bf16.mxu0 %v266
      %422 = vmatmul.mubr.bf16.gmra.mrb[0].mxu0 %v265
      %v423 = vpop.f32.mrb[0].mxu0
      %v424 = vadd.f32 0.0, %v423
      %v425 = vpop.f32.mrb[0].mxu0
      %v426 = vpop.f32.mrb[0].mxu0
      %v427 = vadd.f32 0.0, %v426
      %v428 = vpop.f32.mrb[0].mxu0
      %429 = vmatprep.mubr.bf16.mxu0 %v268
      %430 = vmatmul.mubr.bf16.gmra.mrb[0].mxu0 %v267
      %v431 = vpop.f32.mrb[0].mxu0
      %v432 = vadd.f32 0.0, %v431
      %v433 = vpop.f32.mrb[0].mxu0
      %v434 = vpop.f32.mrb[0].mxu0
      %v435 = vadd.f32 0.0, %v434
      %v436 = vpop.f32.mrb[0].mxu0
      %437 = vdwg.mxu0
      %s438 = smul.u32 %s18, 64
      %s439 = scalar_lea.vmem %s194, %s438
      %vm440 = vcmask 261120
      %441 = vst.msk [vmem:[%s439] sm:$0xff] %vm440, %v408
      %442 = vst.msk [vmem:[%s439 + $0x8] sm:$0xff] %vm440, %v411
      %443 = vst.msk [vmem:[%s439 + $0x10] sm:$0xff] %vm440, %v416
      %444 = vst.msk [vmem:[%s439 + $0x18] sm:$0xff] %vm440, %v419
      %445 = vst.msk [vmem:[%s439 + $0x20] sm:$0xff] %vm440, %v424
      %446 = vst.msk [vmem:[%s439 + $0x28] sm:$0xff] %vm440, %v427
      %447 = vst.msk [vmem:[%s439 + $0x30] sm:$0xff] %vm440, %v432
      %448 = vst.msk [vmem:[%s439 + $0x38] sm:$0xff] %vm440, %v435
      %p449 = scmp.eq.s32.totalorder %s18, 3
      // Predicated region
      $region29: #{generator_forward.46} parent=27 // pred_check
        %p450 = pneg %p449
      $region30: #{generator_forward.46} parent=27 // pred_check_branch
        %452 = sbr.rel (%p450) target = $region32
      $region31: #{generator_forward.46} parent=27 // pred_region
        %v453 = vld [vmem:[%s194] sm:$0xff]
        %v454 = vld [vmem:[%s194 + $0x8] sm:$0xff]
        %v455 = vld [vmem:[%s194 + $0x10] sm:$0xff]
        %v456 = vld [vmem:[%s194 + $0x18] sm:$0xff]
        %v457 = vld [vmem:[%s194 + $0x20] sm:$0xff]
        %v458 = vld [vmem:[%s194 + $0x28] sm:$0xff]
        %v459 = vld [vmem:[%s194 + $0x30] sm:$0xff]
        %v460 = vld [vmem:[%s194 + $0x38] sm:$0xff]
        %v461 = vld [vmem:[%s194 + $0x40] sm:$0xff]
        %v462 = vld [vmem:[%s194 + $0x48] sm:$0xff]
        %v463 = vld [vmem:[%s194 + $0x50] sm:$0xff]
        %v464 = vld [vmem:[%s194 + $0x58] sm:$0xff]
        %v465 = vld [vmem:[%s194 + $0x60] sm:$0xff]
        %v466 = vld [vmem:[%s194 + $0x68] sm:$0xff]
        %v467 = vld [vmem:[%s194 + $0x70] sm:$0xff]
        %v468 = vld [vmem:[%s194 + $0x78] sm:$0xff]
        %v469 = vld [vmem:[%s194 + $0x80] sm:$0xff]
        %v470 = vld [vmem:[%s194 + $0x88] sm:$0xff]
        %v471 = vld [vmem:[%s194 + $0x90] sm:$0xff]
        %v472 = vld [vmem:[%s194 + $0x98] sm:$0xff]
        %v473 = vld [vmem:[%s194 + $0xa0] sm:$0xff]
        %v474 = vld [vmem:[%s194 + $0xa8] sm:$0xff]
        %v475 = vld [vmem:[%s194 + $0xb0] sm:$0xff]
        %v476 = vld [vmem:[%s194 + $0xb8] sm:$0xff]
        %v477 = vld [vmem:[%s194 + $0xc0] sm:$0xff]
        %v478 = vld [vmem:[%s194 + $0xc8] sm:$0xff]
        %v479 = vld [vmem:[%s194 + $0xd0] sm:$0xff]
        %v480 = vld [vmem:[%s194 + $0xd8] sm:$0xff]
        %v481 = vld [vmem:[%s194 + $0xe0] sm:$0xff]
        %v482 = vld [vmem:[%s194 + $0xe8] sm:$0xff]
        %v483 = vld [vmem:[%s194 + $0xf0] sm:$0xff]
        %v484 = vld [vmem:[%s194 + $0xf8] sm:$0xff]
        %v485 = vsel %vm440, %v453, 0.0
        %v486 = vsel %vm440, %v454, 0.0
        %v487 = vadd.f32 %v485, %v486
        %v488 = vsel %vm440, %v455, 0.0
        %v489 = vadd.f32 %v487, %v488
        %v490 = vsel %vm440, %v456, 0.0
        %v491 = vadd.f32 %v489, %v490
        %v492 = vsel %vm440, %v457, 0.0
        %v493 = vadd.f32 %v491, %v492
        %v494 = vsel %vm440, %v458, 0.0
        %v495 = vadd.f32 %v493, %v494
        %v496 = vsel %vm440, %v459, 0.0
        %v497 = vadd.f32 %v495, %v496
        %v498 = vsel %vm440, %v460, 0.0
        %v499 = vadd.f32 %v497, %v498
        %v500 = vsel %vm440, %v461, 0.0
        %v501 = vadd.f32 %v499, %v500
        %v502 = vsel %vm440, %v462, 0.0
        %v503 = vadd.f32 %v501, %v502
        %v504 = vsel %vm440, %v463, 0.0
        %v505 = vadd.f32 %v503, %v504
        %v506 = vsel %vm440, %v464, 0.0
        %v507 = vadd.f32 %v505, %v506
        %v508 = vsel %vm440, %v465, 0.0
        %v509 = vadd.f32 %v507, %v508
        %v510 = vsel %vm440, %v466, 0.0
        %v511 = vadd.f32 %v509, %v510
        %v512 = vsel %vm440, %v467, 0.0
        %v513 = vadd.f32 %v511, %v512
        %v514 = vsel %vm440, %v468, 0.0
        %v515 = vadd.f32 %v513, %v514
        %v516 = vsel %vm440, %v469, 0.0
        %v517 = vadd.f32 %v515, %v516
        %v518 = vsel %vm440, %v470, 0.0
        %v519 = vadd.f32 %v517, %v518
        %v520 = vsel %vm440, %v471, 0.0
        %v521 = vadd.f32 %v519, %v520
        %v522 = vsel %vm440, %v472, 0.0
        %v523 = vadd.f32 %v521, %v522
        %v524 = vsel %vm440, %v473, 0.0
        %v525 = vadd.f32 %v523, %v524
        %v526 = vsel %vm440, %v474, 0.0
        %v527 = vadd.f32 %v525, %v526
        %v528 = vsel %vm440, %v475, 0.0
        %v529 = vadd.f32 %v527, %v528
        %v530 = vsel %vm440, %v476, 0.0
        %v531 = vadd.f32 %v529, %v530
        %v532 = vsel %vm440, %v477, 0.0
        %v533 = vadd.f32 %v531, %v532
        %v534 = vsel %vm440, %v478, 0.0
        %v535 = vadd.f32 %v533, %v534
        %v536 = vsel %vm440, %v479, 0.0
        %v537 = vadd.f32 %v535, %v536
        %v538 = vsel %vm440, %v480, 0.0
        %v539 = vadd.f32 %v537, %v538
        %v540 = vsel %vm440, %v481, 0.0
        %v541 = vadd.f32 %v539, %v540
        %v542 = vsel %vm440, %v482, 0.0
        %v543 = vadd.f32 %v541, %v542
        %v544 = vsel %vm440, %v483, 0.0
        %v545 = vadd.f32 %v543, %v544
        %v546 = vsel %vm440, %v484, 0.0
        %v547 = vadd.f32 %v545, %v546
        %v548 = vrot.slane %v547, 4
        %v549 = vadd.f32 %v547, %v548
        %v550 = vrot.slane %v549, 2
        %v551 = vadd.f32 %v549, %v550
        %v552 = vrot.slane %v551, 1
        %v553 = vadd.f32 %v551, %v552
        %v554 = vrcp.pop 256.0
        %v555 = vmul.f32 %v553, %v554
        %v556 = vsub.f32 %v453, %v555
        %v557 = vsub.f32 %v454, %v555
        %v558 = vsub.f32 %v455, %v555
        %v559 = vsub.f32 %v456, %v555
        %v560 = vsub.f32 %v457, %v555
        %v561 = vsub.f32 %v458, %v555
        %v562 = vsub.f32 %v459, %v555
        %v563 = vsub.f32 %v460, %v555
        %v564 = vsub.f32 %v461, %v555
        %v565 = vsub.f32 %v462, %v555
        %v566 = vsub.f32 %v463, %v555
        %v567 = vsub.f32 %v464, %v555
        %v568 = vsub.f32 %v465, %v555
        %v569 = vsub.f32 %v466, %v555
        %v570 = vsub.f32 %v467, %v555
        %v571 = vsub.f32 %v468, %v555
        %v572 = vsub.f32 %v469, %v555
        %v573 = vsub.f32 %v470, %v555
        %v574 = vsub.f32 %v471, %v555
        %v575 = vsub.f32 %v472, %v555
        %v576 = vsub.f32 %v473, %v555
        %v577 = vsub.f32 %v474, %v555
        %v578 = vsub.f32 %v475, %v555
        %v579 = vsub.f32 %v476, %v555
        %v580 = vsub.f32 %v477, %v555
        %v581 = vsub.f32 %v478, %v555
        %v582 = vsub.f32 %v479, %v555
        %v583 = vsub.f32 %v480, %v555
        %v584 = vsub.f32 %v481, %v555
        %v585 = vsub.f32 %v482, %v555
        %v586 = vsub.f32 %v483, %v555
        %v587 = vsub.f32 %v484, %v555
        %v588 = vmul.f32 %v556, %v556
        %v589 = vmul.f32 %v557, %v557
        %v590 = vmul.f32 %v558, %v558
        %v591 = vmul.f32 %v559, %v559
        %v592 = vmul.f32 %v560, %v560
        %v593 = vmul.f32 %v561, %v561
        %v594 = vmul.f32 %v562, %v562
        %v595 = vmul.f32 %v563, %v563
        %v596 = vmul.f32 %v564, %v564
        %v597 = vmul.f32 %v565, %v565
        %v598 = vmul.f32 %v566, %v566
        %v599 = vmul.f32 %v567, %v567
        %v600 = vmul.f32 %v568, %v568
        %v601 = vmul.f32 %v569, %v569
        %v602 = vmul.f32 %v570, %v570
        %v603 = vmul.f32 %v571, %v571
        %v604 = vmul.f32 %v572, %v572
        %v605 = vmul.f32 %v573, %v573
        %v606 = vmul.f32 %v574, %v574
        %v607 = vmul.f32 %v575, %v575
        %v608 = vmul.f32 %v576, %v576
        %v609 = vmul.f32 %v577, %v577
        %v610 = vmul.f32 %v578, %v578
        %v611 = vmul.f32 %v579, %v579
        %v612 = vmul.f32 %v580, %v580
        %v613 = vmul.f32 %v581, %v581
        %v614 = vmul.f32 %v582, %v582
        %v615 = vmul.f32 %v583, %v583
        %v616 = vmul.f32 %v584, %v584
        %v617 = vmul.f32 %v585, %v585
        %v618 = vmul.f32 %v586, %v586
        %v619 = vmul.f32 %v587, %v587
        %v620 = vsel %vm440, %v588, 0.0
        %v621 = vsel %vm440, %v589, 0.0
        %v622 = vadd.f32 %v620, %v621
        %v623 = vsel %vm440, %v590, 0.0
        %v624 = vadd.f32 %v622, %v623
        %v625 = vsel %vm440, %v591, 0.0
        %v626 = vadd.f32 %v624, %v625
        %v627 = vsel %vm440, %v592, 0.0
        %v628 = vadd.f32 %v626, %v627
        %v629 = vsel %vm440, %v593, 0.0
        %v630 = vadd.f32 %v628, %v629
        %v631 = vsel %vm440, %v594, 0.0
        %v632 = vadd.f32 %v630, %v631
        %v633 = vsel %vm440, %v595, 0.0
        %v634 = vadd.f32 %v632, %v633
        %v635 = vsel %vm440, %v596, 0.0
        %v636 = vadd.f32 %v634, %v635
        %v637 = vsel %vm440, %v597, 0.0
        %v638 = vadd.f32 %v636, %v637
        %v639 = vsel %vm440, %v598, 0.0
        %v640 = vadd.f32 %v638, %v639
        %v641 = vsel %vm440, %v599, 0.0
        %v642 = vadd.f32 %v640, %v641
        %v643 = vsel %vm440, %v600, 0.0
        %v644 = vadd.f32 %v642, %v643
        %v645 = vsel %vm440, %v601, 0.0
        %v646 = vadd.f32 %v644, %v645
        %v647 = vsel %vm440, %v602, 0.0
        %v648 = vadd.f32 %v646, %v647
        %v649 = vsel %vm440, %v603, 0.0
        %v650 = vadd.f32 %v648, %v649
        %v651 = vsel %vm440, %v604, 0.0
        %v652 = vadd.f32 %v650, %v651
        %v653 = vsel %vm440, %v605, 0.0
        %v654 = vadd.f32 %v652, %v653
        %v655 = vsel %vm440, %v606, 0.0
        %v656 = vadd.f32 %v654, %v655
        %v657 = vsel %vm440, %v607, 0.0
        %v658 = vadd.f32 %v656, %v657
        %v659 = vsel %vm440, %v608, 0.0
        %v660 = vadd.f32 %v658, %v659
        %v661 = vsel %vm440, %v609, 0.0
        %v662 = vadd.f32 %v660, %v661
        %v663 = vsel %vm440, %v610, 0.0
        %v664 = vadd.f32 %v662, %v663
        %v665 = vsel %vm440, %v611, 0.0
        %v666 = vadd.f32 %v664, %v665
        %v667 = vsel %vm440, %v612, 0.0
        %v668 = vadd.f32 %v666, %v667
        %v669 = vsel %vm440, %v613, 0.0
        %v670 = vadd.f32 %v668, %v669
        %v671 = vsel %vm440, %v614, 0.0
        %v672 = vadd.f32 %v670, %v671
        %v673 = vsel %vm440, %v615, 0.0
        %v674 = vadd.f32 %v672, %v673
        %v675 = vsel %vm440, %v616, 0.0
        %v676 = vadd.f32 %v674, %v675
        %v677 = vsel %vm440, %v617, 0.0
        %v678 = vadd.f32 %v676, %v677
        %v679 = vsel %vm440, %v618, 0.0
        %v680 = vadd.f32 %v678, %v679
        %v681 = vsel %vm440, %v619, 0.0
        %v682 = vadd.f32 %v680, %v681
        %v683 = vrot.slane %v682, 4
        %v684 = vadd.f32 %v682, %v683
        %v685 = vrot.slane %v684, 2
        %v686 = vadd.f32 %v684, %v685
        %v687 = vrot.slane %v686, 1
        %v688 = vadd.f32 %v686, %v687
        %v689 = vmul.f32 %v688, %v554
        %v690 = vadd.f32 %v689, 1e-05
        %v691 = vrsqrt.pop %v690
        %v692 = vmul.f32 %v556, %v691
        %v693 = vmul.f32 %v557, %v691
        %v694 = vmul.f32 %v558, %v691
        %v695 = vmul.f32 %v559, %v691
        %v696 = vmul.f32 %v560, %v691
        %v697 = vmul.f32 %v561, %v691
        %v698 = vmul.f32 %v562, %v691
        %v699 = vmul.f32 %v563, %v691
        %v700 = vmul.f32 %v564, %v691
        %v701 = vmul.f32 %v565, %v691
        %v702 = vmul.f32 %v566, %v691
        %v703 = vmul.f32 %v567, %v691
        %v704 = vmul.f32 %v568, %v691
        %v705 = vmul.f32 %v569, %v691
        %v706 = vmul.f32 %v570, %v691
        %v707 = vmul.f32 %v571, %v691
        %v708 = vmul.f32 %v572, %v691
        %v709 = vmul.f32 %v573, %v691
        %v710 = vmul.f32 %v574, %v691
        %v711 = vmul.f32 %v575, %v691
        %v712 = vmul.f32 %v576, %v691
        %v713 = vmul.f32 %v577, %v691
        %v714 = vmul.f32 %v578, %v691
        %v715 = vmul.f32 %v579, %v691
        %v716 = vmul.f32 %v580, %v691
        %v717 = vmul.f32 %v581, %v691
        %v718 = vmul.f32 %v582, %v691
        %v719 = vmul.f32 %v583, %v691
        %v720 = vmul.f32 %v584, %v691
        %v721 = vmul.f32 %v585, %v691
        %v722 = vmul.f32 %v586, %v691
        %v723 = vmul.f32 %v587, %v691
        %v724 = vmax.f32 %v692, 0.0
        %v725 = vmax.f32 %v693, 0.0
        %v726 = vmax.f32 %v694, 0.0
        %v727 = vmax.f32 %v695, 0.0
        %v728 = vmax.f32 %v696, 0.0
        %v729 = vmax.f32 %v697, 0.0
        %v730 = vmax.f32 %v698, 0.0
        %v731 = vmax.f32 %v699, 0.0
        %v732 = vmax.f32 %v700, 0.0
        %v733 = vmax.f32 %v701, 0.0
        %v734 = vmax.f32 %v702, 0.0
        %v735 = vmax.f32 %v703, 0.0
        %v736 = vmax.f32 %v704, 0.0
        %v737 = vmax.f32 %v705, 0.0
        %v738 = vmax.f32 %v706, 0.0
        %v739 = vmax.f32 %v707, 0.0
        %v740 = vmax.f32 %v708, 0.0
        %v741 = vmax.f32 %v709, 0.0
        %v742 = vmax.f32 %v710, 0.0
        %v743 = vmax.f32 %v711, 0.0
        %v744 = vmax.f32 %v712, 0.0
        %v745 = vmax.f32 %v713, 0.0
        %v746 = vmax.f32 %v714, 0.0
        %v747 = vmax.f32 %v715, 0.0
        %v748 = vmax.f32 %v716, 0.0
        %v749 = vmax.f32 %v717, 0.0
        %v750 = vmax.f32 %v718, 0.0
        %v751 = vmax.f32 %v719, 0.0
        %v752 = vmax.f32 %v720, 0.0
        %v753 = vmax.f32 %v721, 0.0
        %v754 = vmax.f32 %v722, 0.0
        %v755 = vmax.f32 %v723, 0.0
        %756 = vst.msk [vmem:[%s194] sm:$0xff] %vm440, %v724
        %757 = vst.msk [vmem:[%s194 + $0x8] sm:$0xff] %vm440, %v725
        %758 = vst.msk [vmem:[%s194 + $0x10] sm:$0xff] %vm440, %v726
        %759 = vst.msk [vmem:[%s194 + $0x18] sm:$0xff] %vm440, %v727
        %760 = vst.msk [vmem:[%s194 + $0x20] sm:$0xff] %vm440, %v728
        %761 = vst.msk [vmem:[%s194 + $0x28] sm:$0xff] %vm440, %v729
        %762 = vst.msk [vmem:[%s194 + $0x30] sm:$0xff] %vm440, %v730
        %763 = vst.msk [vmem:[%s194 + $0x38] sm:$0xff] %vm440, %v731
        %764 = vst.msk [vmem:[%s194 + $0x40] sm:$0xff] %vm440, %v732
        %765 = vst.msk [vmem:[%s194 + $0x48] sm:$0xff] %vm440, %v733
        %766 = vst.msk [vmem:[%s194 + $0x50] sm:$0xff] %vm440, %v734
        %767 = vst.msk [vmem:[%s194 + $0x58] sm:$0xff] %vm440, %v735
        %768 = vst.msk [vmem:[%s194 + $0x60] sm:$0xff] %vm440, %v736
        %769 = vst.msk [vmem:[%s194 + $0x68] sm:$0xff] %vm440, %v737
        %770 = vst.msk [vmem:[%s194 + $0x70] sm:$0xff] %vm440, %v738
        %771 = vst.msk [vmem:[%s194 + $0x78] sm:$0xff] %vm440, %v739
        %772 = vst.msk [vmem:[%s194 + $0x80] sm:$0xff] %vm440, %v740
        %773 = vst.msk [vmem:[%s194 + $0x88] sm:$0xff] %vm440, %v741
        %774 = vst.msk [vmem:[%s194 + $0x90] sm:$0xff] %vm440, %v742
        %775 = vst.msk [vmem:[%s194 + $0x98] sm:$0xff] %vm440, %v743
        %776 = vst.msk [vmem:[%s194 + $0xa0] sm:$0xff] %vm440, %v744
        %777 = vst.msk [vmem:[%s194 + $0xa8] sm:$0xff] %vm440, %v745
        %778 = vst.msk [vmem:[%s194 + $0xb0] sm:$0xff] %vm440, %v746
        %779 = vst.msk [vmem:[%s194 + $0xb8] sm:$0xff] %vm440, %v747
        %780 = vst.msk [vmem:[%s194 + $0xc0] sm:$0xff] %vm440, %v748
        %781 = vst.msk [vmem:[%s194 + $0xc8] sm:$0xff] %vm440, %v749
        %782 = vst.msk [vmem:[%s194 + $0xd0] sm:$0xff] %vm440, %v750
        %783 = vst.msk [vmem:[%s194 + $0xd8] sm:$0xff] %vm440, %v751
        %784 = vst.msk [vmem:[%s194 + $0xe0] sm:$0xff] %vm440, %v752
        %785 = vst.msk [vmem:[%s194 + $0xe8] sm:$0xff] %vm440, %v753
        %786 = vst.msk [vmem:[%s194 + $0xf0] sm:$0xff] %vm440, %v754
        %787 = vst.msk [vmem:[%s194 + $0xf8] sm:$0xff] %vm440, %v755
      $region32: #{generator_forward.46} parent=27 // pred_fallthru
        _
      %s788 = smul.u32 32, %s17
      %p789 = scmp.lt.s32.totalorder %s788, 63
      %s790 = scalar_select %p789, %s788, 63
      %s791 = smul.addr %s790, 8
      %s792 = scalar_lea.vmem %s2, %s791
      // Predicated region
      $region33: #{generator_forward.46} parent=27 // pred_check
        %p793 = pneg %p99
      $region34: #{generator_forward.46} parent=27 // pred_check_branch
        %795 = sbr.rel (%p793) target = $region36
      $region35: #{generator_forward.46} parent=27 // pred_region
        %s796 = smul.u32 32, %s17
      $region36: #{generator_forward.46} parent=27 // pred_fallthru
        _
    $region28: #{generator_forward.46} parent=5 // pred_fallthru
      _
    %p797 = scmp.le.s32.totalorder 2, %s8
    // Predicated region
    $region37: #{generator_forward.46} parent=5 // pred_check
      %p798 = pneg %p797
    $region38: #{generator_forward.46} parent=5 // pred_check_branch
      %800 = sbr.rel (%p798) target = $region40
    $region39: #{generator_forward.46} parent=5 // pred_region
      %s801 = ssub.s32 %s8, 2
      // Predicated region
      $region41: #{generator_forward.46} parent=39 // pred_check
        %p802 = pneg %p105
      $region42: #{generator_forward.46} parent=39 // pred_check_branch
        %804 = sbr.rel (%p802) target = $region44
      $region43: #{generator_forward.46} parent=39 // pred_region
        %s805 = smul.u32 32, %s19
        %p806 = scmp.lt.s32.totalorder %s805, 63
        %s807 = scalar_select %p806, %s805, 63
        %s808 = smul.addr %s807, 8
        %s809 = scalar_lea.vmem %s2, %s808
      $region44: #{generator_forward.46} parent=39 // pred_fallthru
        _
    $region40: #{generator_forward.46} parent=5 // pred_fallthru
      _
  $region6: #{generator_forward.46} parent=0 // loop_footer
    %s12 = sadd.s32 1, %s8
  $region7: #{generator_forward.46} parent=0 // loop_footer_branch
    %7 = sbr.rel target = $region3
  $region8: #{generator_forward.46} parent=0 // loop_exit
    _

// kernel: generator_forward.47
$region0: #{generator_forward.47}
  #allocation0 [shape = 'u32[]', space=smem, size = 0x4, offset = 0x4, fixed_abs, tag = 'smem constant byte address 0x4 - core index']
  #allocation1 [shape = 'u32[144,128]{1,0:T(1,128)}', space=vmem, size = 0x12000, scoped, tag = 'internal scratch']
  %s0 = inlined_call_operand.vmem [shape: bf16[512,1568], index: 0, kind: input, shape index: {}]
  %s1 = inlined_call_operand.vmem [shape: bf16[1568,3], index: 1, kind: input, shape index: {}]
  %s2 = inlined_call_operand.vmem [shape: f32[1,3], index: 2, kind: input, shape index: {}]
  %s3 = inlined_call_operand.vmem [shape: f32[512,3], index: 3, kind: output, shape index: {}]
  %s4 = sld [smem:[#allocation0]]
  $region45: #{generator_forward.47} parent=0
    _
  %s6 = ssub.s32 1, %s4
  %s7 = scalar_select 0, %s6, %s4
  loop: start=0, step=1, limit=4
  $region2: #{generator_forward.47} parent=0 // loop_pre_header
    _
  $region3: #{generator_forward.47} parent=0 // loop_header
    %s9 = sphi 0, %s13
    %p10 = scmp.ge.s32.totalorder %s9, 4
    %s19 = sphi 0, %s21
    %s22 = sphi 0, %s19
    %s23 = sphi 0, %s22
    %s39 = sphi 0, %s23
    %s43 = sphi 0, %s43
    %s45 = sphi 0, %s43
    %s46 = sphi 0, %s45
    %s60 = sphi 0, %s46
    %s64 = sphi 0, %s64
    %s66 = sphi 0, %s64
    %s67 = sphi 0, %s66
    %s81 = sphi 0, %s67
    %s87 = sphi 0, %s89
    %s90 = sphi 0, %s87
    %s91 = sphi 0, %s90
    %s107 = sphi 0, %s91
  $region4: #{generator_forward.47} parent=0 // loop_header_branch
    %12 = sbr.rel (%p10) target = $region8
  $region5: #{generator_forward.47} parent=0 // loop_body
    %s14 = ssub.s32 %s9, 1
    %s15 = ssub.s32 %s9, 2
    %s16 = sadd.s32 %s9, 1
    %s17 = ssub.s32 %s9, %s16
    %p18 = scmp.eq.s32.totalorder %s17, 0
    %s20 = sadd.s32 %s19, 1
    %s21 = scalar_select %p18, %s19, %s20
    %p24 = pneg %p18
    %p25 = scmp.eq.s32.totalorder %s9, 1
    %p26 = por %p24, %p25
    %p27 = scmp.ne.s32.totalorder %s19, %s22
    %p28 = scmp.eq.s32.totalorder %s9, 0
    %p29 = por %p27, %p28
    %p30 = scmp.ne.s32.totalorder %s19, %s22
    %p31 = scmp.eq.s32.totalorder %s14, 1
    %p32 = por %p30, %p31
    %p33 = scmp.ne.s32.totalorder %s22, %s23
    %p34 = scmp.eq.s32.totalorder %s14, 0
    %p35 = por %p33, %p34
    %p36 = scmp.ne.s32.totalorder %s22, %s23
    %p37 = scmp.eq.s32.totalorder %s15, 1
    %p38 = por %p36, %p37
    %p40 = scmp.ne.s32.totalorder %s23, %s39
    %p41 = scmp.eq.s32.totalorder %s15, 0
    %p42 = por %p40, %p41
    %s44 = sadd.s32 %s43, 1
    %p47 = scmp.eq.s32.totalorder %s9, 1
    %p48 = scmp.ne.s32.totalorder %s43, %s45
    %p49 = scmp.eq.s32.totalorder %s9, 0
    %p50 = por %p48, %p49
    %p51 = scmp.ne.s32.totalorder %s43, %s45
    %p52 = scmp.eq.s32.totalorder %s14, 1
    %p53 = por %p51, %p52
    %p54 = scmp.ne.s32.totalorder %s45, %s46
    %p55 = scmp.eq.s32.totalorder %s14, 0
    %p56 = por %p54, %p55
    %p57 = scmp.ne.s32.totalorder %s45, %s46
    %p58 = scmp.eq.s32.totalorder %s15, 1
    %p59 = por %p57, %p58
    %p61 = scmp.ne.s32.totalorder %s46, %s60
    %p62 = scmp.eq.s32.totalorder %s15, 0
    %p63 = por %p61, %p62
    %s65 = sadd.s32 %s64, 1
    %p68 = scmp.eq.s32.totalorder %s9, 1
    %p69 = scmp.ne.s32.totalorder %s64, %s66
    %p70 = scmp.eq.s32.totalorder %s9, 0
    %p71 = por %p69, %p70
    %p72 = scmp.ne.s32.totalorder %s64, %s66
    %p73 = scmp.eq.s32.totalorder %s14, 1
    %p74 = por %p72, %p73
    %p75 = scmp.ne.s32.totalorder %s66, %s67
    %p76 = scmp.eq.s32.totalorder %s14, 0
    %p77 = por %p75, %p76
    %p78 = scmp.ne.s32.totalorder %s66, %s67
    %p79 = scmp.eq.s32.totalorder %s15, 1
    %p80 = por %p78, %p79
    %p82 = scmp.ne.s32.totalorder %s67, %s81
    %p83 = scmp.eq.s32.totalorder %s15, 0
    %p84 = por %p82, %p83
    %s85 = ssub.s32 %s9, %s16
    %p86 = scmp.eq.s32.totalorder %s85, 0
    %s88 = sadd.s32 %s87, 1
    %s89 = scalar_select %p86, %s87, %s88
    %p92 = pneg %p86
    %p93 = scmp.eq.s32.totalorder %s9, 1
    %p94 = por %p92, %p93
    %p95 = scmp.ne.s32.totalorder %s87, %s90
    %p96 = scmp.eq.s32.totalorder %s9, 0
    %p97 = por %p95, %p96
    %p98 = scmp.ne.s32.totalorder %s87, %s90
    %p99 = scmp.eq.s32.totalorder %s14, 1
    %p100 = por %p98, %p99
    %p101 = scmp.ne.s32.totalorder %s90, %s91
    %p102 = scmp.eq.s32.totalorder %s14, 0
    %p103 = por %p101, %p102
    %p104 = scmp.ne.s32.totalorder %s90, %s91
    %p105 = scmp.eq.s32.totalorder %s15, 1
    %p106 = por %p104, %p105
    %p108 = scmp.ne.s32.totalorder %s91, %s107
    %p109 = scmp.eq.s32.totalorder %s15, 0
    %p110 = por %p108, %p109
    %p111 = scmp.le.s32.totalorder 1, %s9
    %p112 = scmp.lt.s32.totalorder %s9, 3
    %p113 = pnand %p111, %p112
    %p114 = pneg %p113
    // Predicated region
    $region9: #{generator_forward.47} parent=5 // pred_check
      _
    $region10: #{generator_forward.47} parent=5 // pred_check_branch
      %116 = sbr.rel (%p113) target = $region12
    $region11: #{generator_forward.47} parent=5 // pred_region
      %s117 = ssub.s32 %s9, 1
      // Predicated region
      $region13: #{generator_forward.47} parent=11 // pred_check
        %p118 = pneg %p56
      $region14: #{generator_forward.47} parent=11 // pred_check_branch
        %120 = sbr.rel (%p118) target = $region16
      $region15: #{generator_forward.47} parent=11 // pred_region
        _
      $region16: #{generator_forward.47} parent=11 // pred_fallthru
        _
      // Predicated region
      $region17: #{generator_forward.47} parent=11 // pred_check
        %p121 = pneg %p77
      $region18: #{generator_forward.47} parent=11 // pred_check_branch
        %123 = sbr.rel (%p121) target = $region20
      $region19: #{generator_forward.47} parent=11 // pred_region
        _
      $region20: #{generator_forward.47} parent=11 // pred_fallthru
        _
    $region12: #{generator_forward.47} parent=5 // pred_fallthru
      _
    %p124 = scmp.lt.s32.totalorder %s9, 2
    // Predicated region
    $region21: #{generator_forward.47} parent=5 // pred_check
      %p125 = pneg %p124
    $region22: #{generator_forward.47} parent=5 // pred_check_branch
      %127 = sbr.rel (%p125) target = $region24
    $region23: #{generator_forward.47} parent=5 // pred_region
      // Predicated region
      $region25: #{generator_forward.47} parent=23 // pred_check
        %p128 = pneg %p29
      $region26: #{generator_forward.47} parent=23 // pred_check_branch
        %130 = sbr.rel (%p128) target = $region28
      $region27: #{generator_forward.47} parent=23 // pred_region
        %s131 = smul.u32 32, %s9
        %p132 = scmp.lt.s32.totalorder %s131, 63
        %s133 = scalar_select %p132, %s131, 63
        %s134 = smul.addr %s133, 13
        %s135 = smul.addr %s134, 4
        %s136 = scalar_lea.vmem %s0, %s135
        %s137 = smul.u32 32, %s9
      $region28: #{generator_forward.47} parent=23 // pred_fallthru
        _
    $region24: #{generator_forward.47} parent=5 // pred_fallthru
      _
    %p138 = scmp.le.s32.totalorder 1, %s9
    %p139 = scmp.lt.s32.totalorder %s9, 3
    %p140 = pnand %p138, %p139
    %p141 = pneg %p140
    // Predicated region
    $region29: #{generator_forward.47} parent=5 // pred_check
      _
    $region30: #{generator_forward.47} parent=5 // pred_check_branch
      %143 = sbr.rel (%p140) target = $region32
    $region31: #{generator_forward.47} parent=5 // pred_region
      %s144 = ssub.s32 %s9, 1
      %s145 = smul.u32 32, %s14
      %p146 = scmp.lt.s32.totalorder %s145, 63
      %s147 = scalar_select %p146, %s145, 63
      %s148 = smul.addr %s147, 13
      %s149 = smul.addr %s148, 4
      %s150 = scalar_lea.vmem %s0, %s149
      %p151 = pneg %p35
      %p152 = pneg %p32
      %p153 = pneg %p56
      %p154 = pneg %p53
      %p155 = pneg %p77
      %p156 = pneg %p74
      %p157 = pneg %p103
      %p158 = pneg %p100
      %s159 = smul.u32 32, %s14
      %p160 = scmp.lt.s32.totalorder %s159, 63
      %s161 = scalar_select %p160, %s159, 63
      %s162 = smul.addr %s161, 8
      %s163 = scalar_lea.vmem %s3, %s162
      %s164 = smul.u32 32, %s14
      %p165 = scmp.lt.s32.totalorder %s164, 63
      %s166 = scalar_select %p165, %s164, 63
      %s167 = smul.addr %s166, 13
      %s168 = smul.addr %s167, 4
      %s169 = scalar_lea.vmem %s0, %s168
      %s170 = smul.u32 32, %s14
      %s171 = smul.u32 32, %s14
      %p172 = scmp.lt.s32.totalorder %s171, 63
      %s173 = scalar_select %p172, %s171, 63
      %s174 = smul.addr %s173, 8
      %s175 = scalar_lea.vmem %s3, %s174
      %s176 = smul.u32 32, %s14
      %v178 = vld [vmem:[%s169] sm:$0xff]
      %v179 = vld [vmem:[%s169 + $0x8] sm:$0xff]
      %v180 = vld [vmem:[%s169 + $0x10] sm:$0xff]
      %v181 = vld [vmem:[%s169 + $0x18] sm:$0xff]
      %v182 = vld [vmem:[%s169 + $0x20] sm:$0xff]
      %v183 = vld [vmem:[%s169 + $0x28] sm:$0xff]
      %v184 = vld [vmem:[%s169 + $0x30] sm:$0xf]
      %v185 = vld [vmem:[%s169 + $0x34] sm:$0xff]
      %v186 = vld [vmem:[%s169 + $0x3c] sm:$0xff]
      %v187 = vld [vmem:[%s169 + $0x44] sm:$0xff]
      %v188 = vld [vmem:[%s169 + $0x4c] sm:$0xff]
      %v189 = vld [vmem:[%s169 + $0x54] sm:$0xff]
      %v190 = vld [vmem:[%s169 + $0x5c] sm:$0xff]
      %v191 = vld [vmem:[%s169 + $0x64] sm:$0xf]
      %v192 = vld [vmem:[%s169 + $0x68] sm:$0xff]
      %v193 = vld [vmem:[%s169 + $0x70] sm:$0xff]
      %v194 = vld [vmem:[%s169 + $0x78] sm:$0xff]
      %v195 = vld [vmem:[%s169 + $0x80] sm:$0xff]
      %v196 = vld [vmem:[%s169 + $0x88] sm:$0xff]
      %v197 = vld [vmem:[%s169 + $0x90] sm:$0xff]
      %v198 = vld [vmem:[%s169 + $0x98] sm:$0xf]
      %v199 = vld [vmem:[%s169 + $0x9c] sm:$0xff]
      %v200 = vld [vmem:[%s169 + $0xa4] sm:$0xff]
      %v201 = vld [vmem:[%s169 + $0xac] sm:$0xff]
      %v202 = vld [vmem:[%s169 + $0xb4] sm:$0xff]
      %v203 = vld [vmem:[%s169 + $0xbc] sm:$0xff]
      %v204 = vld [vmem:[%s169 + $0xc4] sm:$0xff]
      %v205 = vld [vmem:[%s169 + $0xcc] sm:$0xf]
      %v206 = vld [vmem:[%s169 + $0xd0] sm:$0xff]
      %v207 = vld [vmem:[%s169 + $0xd8] sm:$0xff]
      %v208 = vld [vmem:[%s169 + $0xe0] sm:$0xff]
      %v209 = vld [vmem:[%s169 + $0xe8] sm:$0xff]
      %v210 = vld [vmem:[%s169 + $0xf0] sm:$0xff]
      %v211 = vld [vmem:[%s169 + $0xf8] sm:$0xff]
      %v212 = vld [vmem:[%s169 + $0x100] sm:$0xf]
      %v213 = vld [vmem:[%s169 + $0x104] sm:$0xff]
      %v214 = vld [vmem:[%s169 + $0x10c] sm:$0xff]
      %v215 = vld [vmem:[%s169 + $0x114] sm:$0xff]
      %v216 = vld [vmem:[%s169 + $0x11c] sm:$0xff]
      %v217 = vld [vmem:[%s169 + $0x124] sm:$0xff]
      %v218 = vld [vmem:[%s169 + $0x12c] sm:$0xff]
      %v219 = vld [vmem:[%s169 + $0x134] sm:$0xf]
      %v220 = vld [vmem:[%s169 + $0x138] sm:$0xff]
      %v221 = vld [vmem:[%s169 + $0x140] sm:$0xff]
      %v222 = vld [vmem:[%s169 + $0x148] sm:$0xff]
      %v223 = vld [vmem:[%s169 + $0x150] sm:$0xff]
      %v224 = vld [vmem:[%s169 + $0x158] sm:$0xff]
      %v225 = vld [vmem:[%s169 + $0x160] sm:$0xff]
      %v226 = vld [vmem:[%s169 + $0x168] sm:$0xf]
      %v227 = vld [vmem:[%s169 + $0x16c] sm:$0xff]
      %v228 = vld [vmem:[%s169 + $0x174] sm:$0xff]
      %v229 = vld [vmem:[%s169 + $0x17c] sm:$0xff]
      %v230 = vld [vmem:[%s169 + $0x184] sm:$0xff]
      %v231 = vld [vmem:[%s169 + $0x18c] sm:$0xff]
      %v232 = vld [vmem:[%s169 + $0x194] sm:$0xff]
      %v233 = vld [vmem:[%s169 + $0x19c] sm:$0xf]
      %v234 = vld [vmem:[%s169 + $0x1a0] sm:$0xff]
      %v235 = vld [vmem:[%s169 + $0x1a8] sm:$0xff]
      %v236 = vld [vmem:[%s169 + $0x1b0] sm:$0xff]
      %v237 = vld [vmem:[%s169 + $0x1b8] sm:$0xff]
      %v238 = vld [vmem:[%s169 + $0x1c0] sm:$0xff]
      %v239 = vld [vmem:[%s169 + $0x1c8] sm:$0xff]
      %v240 = vld [vmem:[%s169 + $0x1d0] sm:$0xf]
      %v241 = vld [vmem:[%s169 + $0x1d4] sm:$0xff]
      %v242 = vld [vmem:[%s169 + $0x1dc] sm:$0xff]
      %v243 = vld [vmem:[%s169 + $0x1e4] sm:$0xff]
      %v244 = vld [vmem:[%s169 + $0x1ec] sm:$0xff]
      %v245 = vld [vmem:[%s169 + $0x1f4] sm:$0xff]
      %v246 = vld [vmem:[%s169 + $0x1fc] sm:$0xff]
      %v247 = vld [vmem:[%s169 + $0x204] sm:$0xf]
      %v248 = vld [vmem:[%s169 + $0x208] sm:$0xff]
      %v249 = vld [vmem:[%s169 + $0x210] sm:$0xff]
      %v250 = vld [vmem:[%s169 + $0x218] sm:$0xff]
      %v251 = vld [vmem:[%s169 + $0x220] sm:$0xff]
      %v252 = vld [vmem:[%s169 + $0x228] sm:$0xff]
      %v253 = vld [vmem:[%s169 + $0x230] sm:$0xff]
      %v254 = vld [vmem:[%s169 + $0x238] sm:$0xf]
      %v255 = vld [vmem:[%s169 + $0x23c] sm:$0xff]
      %v256 = vld [vmem:[%s169 + $0x244] sm:$0xff]
      %v257 = vld [vmem:[%s169 + $0x24c] sm:$0xff]
      %v258 = vld [vmem:[%s169 + $0x254] sm:$0xff]
      %v259 = vld [vmem:[%s169 + $0x25c] sm:$0xff]
      %v260 = vld [vmem:[%s169 + $0x264] sm:$0xff]
      %v261 = vld [vmem:[%s169 + $0x26c] sm:$0xf]
      %v262 = vld [vmem:[%s169 + $0x270] sm:$0xff]
      %v263 = vld [vmem:[%s169 + $0x278] sm:$0xff]
      %v264 = vld [vmem:[%s169 + $0x280] sm:$0xff]
      %v265 = vld [vmem:[%s169 + $0x288] sm:$0xff]
      %v266 = vld [vmem:[%s169 + $0x290] sm:$0xff]
      %v267 = vld [vmem:[%s169 + $0x298] sm:$0xff]
      %v268 = vld [vmem:[%s169 + $0x2a0] sm:$0xf]
      %v269 = vld [vmem:[%s169 + $0x2a4] sm:$0xff]
      %v270 = vld [vmem:[%s169 + $0x2ac] sm:$0xff]
      %v271 = vld [vmem:[%s169 + $0x2b4] sm:$0xff]
      %v272 = vld [vmem:[%s169 + $0x2bc] sm:$0xff]
      %v273 = vld [vmem:[%s169 + $0x2c4] sm:$0xff]
      %v274 = vld [vmem:[%s169 + $0x2cc] sm:$0xff]
      %v275 = vld [vmem:[%s169 + $0x2d4] sm:$0xf]
      %v276 = vld [vmem:[%s169 + $0x2d8] sm:$0xff]
      %v277 = vld [vmem:[%s169 + $0x2e0] sm:$0xff]
      %v278 = vld [vmem:[%s169 + $0x2e8] sm:$0xff]
      %v279 = vld [vmem:[%s169 + $0x2f0] sm:$0xff]
      %v280 = vld [vmem:[%s169 + $0x2f8] sm:$0xff]
      %v281 = vld [vmem:[%s169 + $0x300] sm:$0xff]
      %v282 = vld [vmem:[%s169 + $0x308] sm:$0xf]
      %v283 = vld [vmem:[%s169 + $0x30c] sm:$0xff]
      %v284 = vld [vmem:[%s169 + $0x314] sm:$0xff]
      %v285 = vld [vmem:[%s169 + $0x31c] sm:$0xff]
      %v286 = vld [vmem:[%s169 + $0x324] sm:$0xff]
      %v287 = vld [vmem:[%s169 + $0x32c] sm:$0xff]
      %v288 = vld [vmem:[%s169 + $0x334] sm:$0xff]
      %v289 = vld [vmem:[%s169 + $0x33c] sm:$0xf]
      %v290 = vld [vmem:[%s169 + $0x340] sm:$0xff]
      %v291 = vld [vmem:[%s169 + $0x348] sm:$0xff]
      %v292 = vld [vmem:[%s169 + $0x350] sm:$0xff]
      %v293 = vld [vmem:[%s169 + $0x358] sm:$0xff]
      %v294 = vld [vmem:[%s169 + $0x360] sm:$0xff]
      %v295 = vld [vmem:[%s169 + $0x368] sm:$0xff]
      %v296 = vld [vmem:[%s169 + $0x370] sm:$0xf]
      %v297 = vld [vmem:[%s169 + $0x374] sm:$0xff]
      %v298 = vld [vmem:[%s169 + $0x37c] sm:$0xff]
      %v299 = vld [vmem:[%s169 + $0x384] sm:$0xff]
      %v300 = vld [vmem:[%s169 + $0x38c] sm:$0xff]
      %v301 = vld [vmem:[%s169 + $0x394] sm:$0xff]
      %v302 = vld [vmem:[%s169 + $0x39c] sm:$0xff]
      %v303 = vld [vmem:[%s169 + $0x3a4] sm:$0xf]
      %v304 = vld [vmem:[%s169 + $0x3a8] sm:$0xff]
      %v305 = vld [vmem:[%s169 + $0x3b0] sm:$0xff]
      %v306 = vld [vmem:[%s169 + $0x3b8] sm:$0xff]
      %v307 = vld [vmem:[%s169 + $0x3c0] sm:$0xff]
      %v308 = vld [vmem:[%s169 + $0x3c8] sm:$0xff]
      %v309 = vld [vmem:[%s169 + $0x3d0] sm:$0xff]
      %v310 = vld [vmem:[%s169 + $0x3d8] sm:$0xf]
      %v311 = vld [vmem:[%s169 + $0x3dc] sm:$0xff]
      %v312 = vld [vmem:[%s169 + $0x3e4] sm:$0xff]
      %v313 = vld [vmem:[%s169 + $0x3ec] sm:$0xff]
      %v314 = vld [vmem:[%s169 + $0x3f4] sm:$0xff]
      %v315 = vld [vmem:[%s169 + $0x3fc] sm:$0xff]
      %v316 = vld [vmem:[%s169 + $0x404] sm:$0xff]
      %v317 = vld [vmem:[%s169 + $0x40c] sm:$0xf]
      %v318 = vld [vmem:[%s169 + $0x410] sm:$0xff]
      %v319 = vld [vmem:[%s169 + $0x418] sm:$0xff]
      %v320 = vld [vmem:[%s169 + $0x420] sm:$0xff]
      %v321 = vld [vmem:[%s169 + $0x428] sm:$0xff]
      %v322 = vld [vmem:[%s169 + $0x430] sm:$0xff]
      %v323 = vld [vmem:[%s169 + $0x438] sm:$0xff]
      %v324 = vld [vmem:[%s169 + $0x440] sm:$0xf]
      %v325 = vld [vmem:[%s169 + $0x444] sm:$0xff]
      %v326 = vld [vmem:[%s169 + $0x44c] sm:$0xff]
      %v327 = vld [vmem:[%s169 + $0x454] sm:$0xff]
      %v328 = vld [vmem:[%s169 + $0x45c] sm:$0xff]
      %v329 = vld [vmem:[%s169 + $0x464] sm:$0xff]
      %v330 = vld [vmem:[%s169 + $0x46c] sm:$0xff]
      %v331 = vld [vmem:[%s169 + $0x474] sm:$0xf]
      %v332 = vld [vmem:[%s169 + $0x478] sm:$0xff]
      %v333 = vld [vmem:[%s169 + $0x480] sm:$0xff]
      %v334 = vld [vmem:[%s169 + $0x488] sm:$0xff]
      %v335 = vld [vmem:[%s169 + $0x490] sm:$0xff]
      %v336 = vld [vmem:[%s169 + $0x498] sm:$0xff]
      %v337 = vld [vmem:[%s169 + $0x4a0] sm:$0xff]
      %v338 = vld [vmem:[%s169 + $0x4a8] sm:$0xf]
      %v339 = vld [vmem:[%s169 + $0x4ac] sm:$0xff]
      %v340 = vld [vmem:[%s169 + $0x4b4] sm:$0xff]
      %v341 = vld [vmem:[%s169 + $0x4bc] sm:$0xff]
      %v342 = vld [vmem:[%s169 + $0x4c4] sm:$0xff]
      %v343 = vld [vmem:[%s169 + $0x4cc] sm:$0xff]
      %v344 = vld [vmem:[%s169 + $0x4d4] sm:$0xff]
      %v345 = vld [vmem:[%s169 + $0x4dc] sm:$0xf]
      %v346 = vld [vmem:[%s169 + $0x4e0] sm:$0xff]
      %v347 = vld [vmem:[%s169 + $0x4e8] sm:$0xff]
      %v348 = vld [vmem:[%s169 + $0x4f0] sm:$0xff]
      %v349 = vld [vmem:[%s169 + $0x4f8] sm:$0xff]
      %v350 = vld [vmem:[%s169 + $0x500] sm:$0xff]
      %v351 = vld [vmem:[%s169 + $0x508] sm:$0xff]
      %v352 = vld [vmem:[%s169 + $0x510] sm:$0xf]
      %v353 = vld [vmem:[%s169 + $0x514] sm:$0xff]
      %v354 = vld [vmem:[%s169 + $0x51c] sm:$0xff]
      %v355 = vld [vmem:[%s169 + $0x524] sm:$0xff]
      %v356 = vld [vmem:[%s169 + $0x52c] sm:$0xff]
      %v357 = vld [vmem:[%s169 + $0x534] sm:$0xff]
      %v358 = vld [vmem:[%s169 + $0x53c] sm:$0xff]
      %v359 = vld [vmem:[%s169 + $0x544] sm:$0xf]
      %v360 = vld [vmem:[%s169 + $0x548] sm:$0xff]
      %v361 = vld [vmem:[%s169 + $0x550] sm:$0xff]
      %v362 = vld [vmem:[%s169 + $0x558] sm:$0xff]
      %v363 = vld [vmem:[%s169 + $0x560] sm:$0xff]
      %v364 = vld [vmem:[%s169 + $0x568] sm:$0xff]
      %v365 = vld [vmem:[%s169 + $0x570] sm:$0xff]
      %v366 = vld [vmem:[%s169 + $0x578] sm:$0xf]
      %v367 = vld [vmem:[%s169 + $0x57c] sm:$0xff]
      %v368 = vld [vmem:[%s169 + $0x584] sm:$0xff]
      %v369 = vld [vmem:[%s169 + $0x58c] sm:$0xff]
      %v370 = vld [vmem:[%s169 + $0x594] sm:$0xff]
      %v371 = vld [vmem:[%s169 + $0x59c] sm:$0xff]
      %v372 = vld [vmem:[%s169 + $0x5a4] sm:$0xff]
      %v373 = vld [vmem:[%s169 + $0x5ac] sm:$0xf]
      %v374 = vld [vmem:[%s169 + $0x5b0] sm:$0xff]
      %v375 = vld [vmem:[%s169 + $0x5b8] sm:$0xff]
      %v376 = vld [vmem:[%s169 + $0x5c0] sm:$0xff]
      %v377 = vld [vmem:[%s169 + $0x5c8] sm:$0xff]
      %v378 = vld [vmem:[%s169 + $0x5d0] sm:$0xff]
      %v379 = vld [vmem:[%s169 + $0x5d8] sm:$0xff]
      %v380 = vld [vmem:[%s169 + $0x5e0] sm:$0xf]
      %v381 = vld [vmem:[%s169 + $0x5e4] sm:$0xff]
      %v382 = vld [vmem:[%s169 + $0x5ec] sm:$0xff]
      %v383 = vld [vmem:[%s169 + $0x5f4] sm:$0xff]
      %v384 = vld [vmem:[%s169 + $0x5fc] sm:$0xff]
      %v385 = vld [vmem:[%s169 + $0x604] sm:$0xff]
      %v386 = vld [vmem:[%s169 + $0x60c] sm:$0xff]
      %v387 = vld [vmem:[%s169 + $0x614] sm:$0xf]
      %v388 = vld [vmem:[%s169 + $0x618] sm:$0xff]
      %v389 = vld [vmem:[%s169 + $0x620] sm:$0xff]
      %v390 = vld [vmem:[%s169 + $0x628] sm:$0xff]
      %v391 = vld [vmem:[%s169 + $0x630] sm:$0xff]
      %v392 = vld [vmem:[%s169 + $0x638] sm:$0xff]
      %v393 = vld [vmem:[%s169 + $0x640] sm:$0xff]
      %v394 = vld [vmem:[%s169 + $0x648] sm:$0xf]
      %v395 = vld [vmem:[%s169 + $0x64c] sm:$0xff]
      %v396 = vld [vmem:[%s169 + $0x654] sm:$0xff]
      %v397 = vld [vmem:[%s169 + $0x65c] sm:$0xff]
      %v398 = vld [vmem:[%s169 + $0x664] sm:$0xff]
      %v399 = vld [vmem:[%s169 + $0x66c] sm:$0xff]
      %v400 = vld [vmem:[%s169 + $0x674] sm:$0xff]
      %v401 = vld [vmem:[%s169 + $0x67c] sm:$0xf]
      %v402 = vld [vmem:[%s1] sm:$0xf]
      %v403 = vld [vmem:[%s1 + $0x4] sm:$0xf]
      %v404 = vld [vmem:[%s1 + $0x8] sm:$0xf]
      %v405 = vld [vmem:[%s1 + $0xc] sm:$0xf]
      %v406 = vld [vmem:[%s1 + $0x10] sm:$0xf]
      %v407 = vld [vmem:[%s1 + $0x14] sm:$0xf]
      %v408 = vld [vmem:[%s1 + $0x18] sm:$0xf]
      %v409 = vld [vmem:[%s1 + $0x1c] sm:$0xf]
      %v410 = vld [vmem:[%s1 + $0x20] sm:$0xf]
      %v411 = vld [vmem:[%s1 + $0x24] sm:$0xf]
      %v412 = vld [vmem:[%s1 + $0x28] sm:$0xf]
      %v413 = vld [vmem:[%s1 + $0x2c] sm:$0xf]
      %v414 = vld [vmem:[%s1 + $0x30] sm:$0xf]
      %v415 = vld [vmem:[%s1 + $0x34] sm:$0xf]
      %v416 = vld [vmem:[%s1 + $0x38] sm:$0xf]
      %v417 = vld [vmem:[%s1 + $0x3c] sm:$0xf]
      %v418 = vld [vmem:[%s1 + $0x40] sm:$0xf]
      %v419 = vld [vmem:[%s1 + $0x44] sm:$0xf]
      %v420 = vld [vmem:[%s1 + $0x48] sm:$0xf]
      %v421 = vld [vmem:[%s1 + $0x4c] sm:$0xf]
      %v422 = vld [vmem:[%s1 + $0x50] sm:$0xf]
      %v423 = vld [vmem:[%s1 + $0x54] sm:$0xf]
      %v424 = vld [vmem:[%s1 + $0x58] sm:$0xf]
      %v425 = vld [vmem:[%s1 + $0x5c] sm:$0xf]
      %v426 = vld [vmem:[%s1 + $0x60] sm:$0xf]
      %v427 = vld [vmem:[%s1 + $0x64] sm:$0xf]
      %v428 = vld [vmem:[%s1 + $0x68] sm:$0xf]
      %v429 = vld [vmem:[%s1 + $0x6c] sm:$0xf]
      %v430 = vld [vmem:[%s1 + $0x70] sm:$0xf]
      %v431 = vld [vmem:[%s1 + $0x74] sm:$0xf]
      %v432 = vld [vmem:[%s1 + $0x78] sm:$0xf]
      %v433 = vld [vmem:[%s1 + $0x7c] sm:$0xf]
      %v434 = vld [vmem:[%s1 + $0x80] sm:$0xf]
      %v435 = vld [vmem:[%s1 + $0x84] sm:$0xf]
      %v436 = vld [vmem:[%s1 + $0x88] sm:$0xf]
      %v437 = vld [vmem:[%s1 + $0x8c] sm:$0xf]
      %v438 = vld [vmem:[%s1 + $0x90] sm:$0xf]
      %v439 = vld [vmem:[%s1 + $0x94] sm:$0xf]
      %v440 = vld [vmem:[%s1 + $0x98] sm:$0xf]
      %v441 = vld [vmem:[%s1 + $0x9c] sm:$0xf]
      %v442 = vld [vmem:[%s1 + $0xa0] sm:$0xf]
      %v443 = vld [vmem:[%s1 + $0xa4] sm:$0xf]
      %v444 = vld [vmem:[%s1 + $0xa8] sm:$0xf]
      %v445 = vld [vmem:[%s1 + $0xac] sm:$0xf]
      %v446 = vld [vmem:[%s1 + $0xb0] sm:$0xf]
      %v447 = vld [vmem:[%s1 + $0xb4] sm:$0xf]
      %v448 = vld [vmem:[%s1 + $0xb8] sm:$0xf]
      %v449 = vld [vmem:[%s1 + $0xbc] sm:$0xf]
      %v450 = vld [vmem:[%s1 + $0xc0] sm:$0xf]
      %v451 = vld [vmem:[%s1 + $0xc4] sm:$0xf]
      %v452 = vld [vmem:[%s1 + $0xc8] sm:$0xf]
      %v453 = vld [vmem:[%s1 + $0xcc] sm:$0xf]
      %v454 = vld [vmem:[%s1 + $0xd0] sm:$0xf]
      %v455 = vld [vmem:[%s1 + $0xd4] sm:$0xf]
      %v456 = vld [vmem:[%s1 + $0xd8] sm:$0xf]
      %v457 = vld [vmem:[%s1 + $0xdc] sm:$0xf]
      %v458 = vld [vmem:[%s1 + $0xe0] sm:$0xf]
      %v459 = vld [vmem:[%s1 + $0xe4] sm:$0xf]
      %v460 = vld [vmem:[%s1 + $0xe8] sm:$0xf]
      %v461 = vld [vmem:[%s1 + $0xec] sm:$0xf]
      %v462 = vld [vmem:[%s1 + $0xf0] sm:$0xf]
      %v463 = vld [vmem:[%s1 + $0xf4] sm:$0xf]
      %v464 = vld [vmem:[%s1 + $0xf8] sm:$0xf]
      %v465 = vld [vmem:[%s1 + $0xfc] sm:$0xf]
      %v466 = vld [vmem:[%s1 + $0x100] sm:$0xf]
      %v467 = vld [vmem:[%s1 + $0x104] sm:$0xf]
      %v468 = vld [vmem:[%s1 + $0x108] sm:$0xf]
      %v469 = vld [vmem:[%s1 + $0x10c] sm:$0xf]
      %v470 = vld [vmem:[%s1 + $0x110] sm:$0xf]
      %v471 = vld [vmem:[%s1 + $0x114] sm:$0xf]
      %v472 = vld [vmem:[%s1 + $0x118] sm:$0xf]
      %v473 = vld [vmem:[%s1 + $0x11c] sm:$0xf]
      %v474 = vld [vmem:[%s1 + $0x120] sm:$0xf]
      %v475 = vld [vmem:[%s1 + $0x124] sm:$0xf]
      %v476 = vld [vmem:[%s1 + $0x128] sm:$0xf]
      %v477 = vld [vmem:[%s1 + $0x12c] sm:$0xf]
      %v478 = vld [vmem:[%s1 + $0x130] sm:$0xf]
      %v479 = vld [vmem:[%s1 + $0x134] sm:$0xf]
      %v480 = vld [vmem:[%s1 + $0x138] sm:$0xf]
      %v481 = vld [vmem:[%s1 + $0x13c] sm:$0xf]
      %v482 = vld [vmem:[%s1 + $0x140] sm:$0xf]
      %v483 = vld [vmem:[%s1 + $0x144] sm:$0xf]
      %v484 = vld [vmem:[%s1 + $0x148] sm:$0xf]
      %v485 = vld [vmem:[%s1 + $0x14c] sm:$0xf]
      %v486 = vld [vmem:[%s1 + $0x150] sm:$0xf]
      %v487 = vld [vmem:[%s1 + $0x154] sm:$0xf]
      %v488 = vld [vmem:[%s1 + $0x158] sm:$0xf]
      %v489 = vld [vmem:[%s1 + $0x15c] sm:$0xf]
      %v490 = vld [vmem:[%s1 + $0x160] sm:$0xf]
      %v491 = vld [vmem:[%s1 + $0x164] sm:$0xf]
      %v492 = vld [vmem:[%s1 + $0x168] sm:$0xf]
      %v493 = vld [vmem:[%s1 + $0x16c] sm:$0xf]
      %v494 = vld [vmem:[%s1 + $0x170] sm:$0xf]
      %v495 = vld [vmem:[%s1 + $0x174] sm:$0xf]
      %v496 = vld [vmem:[%s1 + $0x178] sm:$0xf]
      %v497 = vld [vmem:[%s1 + $0x17c] sm:$0xf]
      %v498 = vld [vmem:[%s1 + $0x180] sm:$0xf]
      %v499 = vld [vmem:[%s1 + $0x184] sm:$0xf]
      %v500 = vld [vmem:[%s1 + $0x188] sm:$0xf]
      %v501 = vld [vmem:[%s1 + $0x18c] sm:$0xf]
      %v502 = vld [vmem:[%s1 + $0x190] sm:$0xf]
      %v503 = vld [vmem:[%s1 + $0x194] sm:$0xf]
      %v504 = vld [vmem:[%s1 + $0x198] sm:$0xf]
      %v505 = vld [vmem:[%s1 + $0x19c] sm:$0xf]
      %v506 = vld [vmem:[%s1 + $0x1a0] sm:$0xf]
      %v507 = vld [vmem:[%s1 + $0x1a4] sm:$0xf]
      %v508 = vld [vmem:[%s1 + $0x1a8] sm:$0xf]
      %v509 = vld [vmem:[%s1 + $0x1ac] sm:$0xf]
      %v510 = vld [vmem:[%s1 + $0x1b0] sm:$0xf]
      %v511 = vld [vmem:[%s1 + $0x1b4] sm:$0xf]
      %v512 = vld [vmem:[%s1 + $0x1b8] sm:$0xf]
      %v513 = vld [vmem:[%s1 + $0x1bc] sm:$0xf]
      %v514 = vld [vmem:[%s1 + $0x1c0] sm:$0xf]
      %v515 = vld [vmem:[%s1 + $0x1c4] sm:$0xf]
      %v516 = vld [vmem:[%s1 + $0x1c8] sm:$0xf]
      %v517 = vld [vmem:[%s1 + $0x1cc] sm:$0xf]
      %v518 = vld [vmem:[%s1 + $0x1d0] sm:$0xf]
      %v519 = vld [vmem:[%s1 + $0x1d4] sm:$0xf]
      %v520 = vld [vmem:[%s1 + $0x1d8] sm:$0xf]
      %v521 = vld [vmem:[%s1 + $0x1dc] sm:$0xf]
      %v522 = vld [vmem:[%s1 + $0x1e0] sm:$0xf]
      %v523 = vld [vmem:[%s1 + $0x1e4] sm:$0xf]
      %v524 = vld [vmem:[%s1 + $0x1e8] sm:$0xf]
      %v525 = vld [vmem:[%s1 + $0x1ec] sm:$0xf]
      %v526 = vld [vmem:[%s1 + $0x1f0] sm:$0xf]
      %v527 = vld [vmem:[%s1 + $0x1f4] sm:$0xf]
      %v528 = vld [vmem:[%s1 + $0x1f8] sm:$0xf]
      %v529 = vld [vmem:[%s1 + $0x1fc] sm:$0xf]
      %v530 = vld [vmem:[%s1 + $0x200] sm:$0xf]
      %v531 = vld [vmem:[%s1 + $0x204] sm:$0xf]
      %v532 = vld [vmem:[%s1 + $0x208] sm:$0xf]
      %v533 = vld [vmem:[%s1 + $0x20c] sm:$0xf]
      %v534 = vld [vmem:[%s1 + $0x210] sm:$0xf]
      %v535 = vld [vmem:[%s1 + $0x214] sm:$0xf]
      %v536 = vld [vmem:[%s1 + $0x218] sm:$0xf]
      %v537 = vld [vmem:[%s1 + $0x21c] sm:$0xf]
      %v538 = vld [vmem:[%s1 + $0x220] sm:$0xf]
      %v539 = vld [vmem:[%s1 + $0x224] sm:$0xf]
      %v540 = vld [vmem:[%s1 + $0x228] sm:$0xf]
      %v541 = vld [vmem:[%s1 + $0x22c] sm:$0xf]
      %v542 = vld [vmem:[%s1 + $0x230] sm:$0xf]
      %v543 = vld [vmem:[%s1 + $0x234] sm:$0xf]
      %v544 = vld [vmem:[%s1 + $0x238] sm:$0xf]
      %v545 = vld [vmem:[%s1 + $0x23c] sm:$0xf]
      %v546 = vld [vmem:[%s1 + $0x240] sm:$0xf]
      %v547 = vld [vmem:[%s1 + $0x244] sm:$0xf]
      %v548 = vld [vmem:[%s1 + $0x248] sm:$0xf]
      %v549 = vld [vmem:[%s1 + $0x24c] sm:$0xf]
      %v550 = vld [vmem:[%s1 + $0x250] sm:$0xf]
      %v551 = vld [vmem:[%s1 + $0x254] sm:$0xf]
      %v552 = vld [vmem:[%s1 + $0x258] sm:$0xf]
      %v553 = vld [vmem:[%s1 + $0x25c] sm:$0xf]
      %v554 = vld [vmem:[%s1 + $0x260] sm:$0xf]
      %v555 = vld [vmem:[%s1 + $0x264] sm:$0xf]
      %v556 = vld [vmem:[%s1 + $0x268] sm:$0xf]
      %v557 = vld [vmem:[%s1 + $0x26c] sm:$0xf]
      %v558 = vld [vmem:[%s1 + $0x270] sm:$0xf]
      %v559 = vld [vmem:[%s1 + $0x274] sm:$0xf]
      %v560 = vld [vmem:[%s1 + $0x278] sm:$0xf]
      %v561 = vld [vmem:[%s1 + $0x27c] sm:$0xf]
      %v562 = vld [vmem:[%s1 + $0x280] sm:$0xf]
      %v563 = vld [vmem:[%s1 + $0x284] sm:$0xf]
      %v564 = vld [vmem:[%s1 + $0x288] sm:$0xf]
      %v565 = vld [vmem:[%s1 + $0x28c] sm:$0xf]
      %v566 = vld [vmem:[%s1 + $0x290] sm:$0xf]
      %v567 = vld [vmem:[%s1 + $0x294] sm:$0xf]
      %v568 = vld [vmem:[%s1 + $0x298] sm:$0xf]
      %v569 = vld [vmem:[%s1 + $0x29c] sm:$0xf]
      %v570 = vld [vmem:[%s1 + $0x2a0] sm:$0xf]
      %v571 = vld [vmem:[%s1 + $0x2a4] sm:$0xf]
      %v572 = vld [vmem:[%s1 + $0x2a8] sm:$0xf]
      %v573 = vld [vmem:[%s1 + $0x2ac] sm:$0xf]
      %v574 = vld [vmem:[%s1 + $0x2b0] sm:$0xf]
      %v575 = vld [vmem:[%s1 + $0x2b4] sm:$0xf]
      %v576 = vld [vmem:[%s1 + $0x2b8] sm:$0xf]
      %v577 = vld [vmem:[%s1 + $0x2bc] sm:$0xf]
      %v578 = vld [vmem:[%s1 + $0x2c0] sm:$0xf]
      %v579 = vld [vmem:[%s1 + $0x2c4] sm:$0xf]
      %v580 = vld [vmem:[%s1 + $0x2c8] sm:$0xf]
      %v581 = vld [vmem:[%s1 + $0x2cc] sm:$0xf]
      %v582 = vld [vmem:[%s1 + $0x2d0] sm:$0xf]
      %v583 = vld [vmem:[%s1 + $0x2d4] sm:$0xf]
      %v584 = vld [vmem:[%s1 + $0x2d8] sm:$0xf]
      %v585 = vld [vmem:[%s1 + $0x2dc] sm:$0xf]
      %v586 = vld [vmem:[%s1 + $0x2e0] sm:$0xf]
      %v587 = vld [vmem:[%s1 + $0x2e4] sm:$0xf]
      %v588 = vld [vmem:[%s1 + $0x2e8] sm:$0xf]
      %v589 = vld [vmem:[%s1 + $0x2ec] sm:$0xf]
      %v590 = vld [vmem:[%s1 + $0x2f0] sm:$0xf]
      %v591 = vld [vmem:[%s1 + $0x2f4] sm:$0xf]
      %v592 = vld [vmem:[%s1 + $0x2f8] sm:$0xf]
      %v593 = vld [vmem:[%s1 + $0x2fc] sm:$0xf]
      %v594 = vld [vmem:[%s1 + $0x300] sm:$0xf]
      %v595 = vld [vmem:[%s1 + $0x304] sm:$0xf]
      %v596 = vld [vmem:[%s1 + $0x308] sm:$0xf]
      %v597 = vld [vmem:[%s1 + $0x30c] sm:$0xf]
      %v598 = vld [vmem:[%s2] sm:$0x1]
      %v600 = vlaneseq
      %v601 = vshrl.u32 %v600, 7
      %v602 = vsub.s32 0, %v601
      %v603 = vrot.slane %v598, %v602
      %v829 = vunpack.c.l.b16 %v178
      %v830 = vunpack.c.h.b16 %v178
      %v831 = vunpack.c.l.b16 %v179
      %v832 = vunpack.c.h.b16 %v179
      %v833 = vunpack.c.l.b16 %v180
      %v834 = vunpack.c.h.b16 %v180
      %v835 = vunpack.c.l.b16 %v181
      %v836 = vunpack.c.h.b16 %v181
      %v837 = vunpack.c.l.b16 %v182
      %v838 = vunpack.c.h.b16 %v182
      %v839 = vunpack.c.l.b16 %v183
      %v840 = vunpack.c.h.b16 %v183
      %v841 = vunpack.c.l.b16 %v184
      %v842 = vunpack.c.l.b16 %v185
      %v843 = vunpack.c.h.b16 %v185
      %v844 = vunpack.c.l.b16 %v186
      %v845 = vunpack.c.h.b16 %v186
      %v846 = vunpack.c.l.b16 %v187
      %v847 = vunpack.c.h.b16 %v187
      %v848 = vunpack.c.l.b16 %v188
      %v849 = vunpack.c.h.b16 %v188
      %v850 = vunpack.c.l.b16 %v189
      %v851 = vunpack.c.h.b16 %v189
      %v852 = vunpack.c.l.b16 %v190
      %v853 = vunpack.c.h.b16 %v190
      %v854 = vunpack.c.l.b16 %v191
      %v855 = vunpack.c.l.b16 %v192
      %v856 = vunpack.c.h.b16 %v192
      %v857 = vunpack.c.l.b16 %v193
      %v858 = vunpack.c.h.b16 %v193
      %v859 = vunpack.c.l.b16 %v194
      %v860 = vunpack.c.h.b16 %v194
      %v861 = vunpack.c.l.b16 %v195
      %v862 = vunpack.c.h.b16 %v195
      %v863 = vunpack.c.l.b16 %v196
      %v864 = vunpack.c.h.b16 %v196
      %v865 = vunpack.c.l.b16 %v197
      %v866 = vunpack.c.h.b16 %v197
      %v867 = vunpack.c.l.b16 %v198
      %v868 = vunpack.c.l.b16 %v199
      %v869 = vunpack.c.h.b16 %v199
      %v870 = vunpack.c.l.b16 %v200
      %v871 = vunpack.c.h.b16 %v200
      %v872 = vunpack.c.l.b16 %v201
      %v873 = vunpack.c.h.b16 %v201
      %v874 = vunpack.c.l.b16 %v202
      %v875 = vunpack.c.h.b16 %v202
      %v876 = vunpack.c.l.b16 %v203
      %v877 = vunpack.c.h.b16 %v203
      %v878 = vunpack.c.l.b16 %v204
      %v879 = vunpack.c.h.b16 %v204
      %v880 = vunpack.c.l.b16 %v205
      %v881 = vunpack.c.l.b16 %v206
      %v882 = vunpack.c.h.b16 %v206
      %v883 = vunpack.c.l.b16 %v207
      %v884 = vunpack.c.h.b16 %v207
      %v885 = vunpack.c.l.b16 %v208
      %v886 = vunpack.c.h.b16 %v208
      %v887 = vunpack.c.l.b16 %v209
      %v888 = vunpack.c.h.b16 %v209
      %v889 = vunpack.c.l.b16 %v210
      %v890 = vunpack.c.h.b16 %v210
      %v891 = vunpack.c.l.b16 %v211
      %v892 = vunpack.c.h.b16 %v211
      %v893 = vunpack.c.l.b16 %v212
      %v894 = vunpack.c.l.b16 %v213
      %v895 = vunpack.c.h.b16 %v213
      %v896 = vunpack.c.l.b16 %v214
      %v897 = vunpack.c.h.b16 %v214
      %v898 = vunpack.c.l.b16 %v215
      %v899 = vunpack.c.h.b16 %v215
      %v900 = vunpack.c.l.b16 %v216
      %v901 = vunpack.c.h.b16 %v216
      %v902 = vunpack.c.l.b16 %v217
      %v903 = vunpack.c.h.b16 %v217
      %v904 = vunpack.c.l.b16 %v218
      %v905 = vunpack.c.h.b16 %v218
      %v906 = vunpack.c.l.b16 %v219
      %v907 = vunpack.c.l.b16 %v220
      %v908 = vunpack.c.h.b16 %v220
      %v909 = vunpack.c.l.b16 %v221
      %v910 = vunpack.c.h.b16 %v221
      %v911 = vunpack.c.l.b16 %v222
      %v912 = vunpack.c.h.b16 %v222
      %v913 = vunpack.c.l.b16 %v223
      %v914 = vunpack.c.h.b16 %v223
      %v915 = vunpack.c.l.b16 %v224
      %v916 = vunpack.c.h.b16 %v224
      %v917 = vunpack.c.l.b16 %v225
      %v918 = vunpack.c.h.b16 %v225
      %v919 = vunpack.c.l.b16 %v226
      %v920 = vunpack.c.l.b16 %v227
      %v921 = vunpack.c.h.b16 %v227
      %v922 = vunpack.c.l.b16 %v228
      %v923 = vunpack.c.h.b16 %v228
      %v924 = vunpack.c.l.b16 %v229
      %v925 = vunpack.c.h.b16 %v229
      %v926 = vunpack.c.l.b16 %v230
      %v927 = vunpack.c.h.b16 %v230
      %v928 = vunpack.c.l.b16 %v231
      %v929 = vunpack.c.h.b16 %v231
      %v930 = vunpack.c.l.b16 %v232
      %v931 = vunpack.c.h.b16 %v232
      %v932 = vunpack.c.l.b16 %v233
      %v933 = vunpack.c.l.b16 %v234
      %v934 = vunpack.c.h.b16 %v234
      %v935 = vunpack.c.l.b16 %v235
      %v936 = vunpack.c.h.b16 %v235
      %v937 = vunpack.c.l.b16 %v236
      %v938 = vunpack.c.h.b16 %v236
      %v939 = vunpack.c.l.b16 %v237
      %v940 = vunpack.c.h.b16 %v237
      %v941 = vunpack.c.l.b16 %v238
      %v942 = vunpack.c.h.b16 %v238
      %v943 = vunpack.c.l.b16 %v239
      %v944 = vunpack.c.h.b16 %v239
      %v945 = vunpack.c.l.b16 %v240
      %v946 = vunpack.c.l.b16 %v241
      %v947 = vunpack.c.h.b16 %v241
      %v948 = vunpack.c.l.b16 %v242
      %v949 = vunpack.c.h.b16 %v242
      %v950 = vunpack.c.l.b16 %v243
      %v951 = vunpack.c.h.b16 %v243
      %v952 = vunpack.c.l.b16 %v244
      %v953 = vunpack.c.h.b16 %v244
      %v954 = vunpack.c.l.b16 %v245
      %v955 = vunpack.c.h.b16 %v245
      %v956 = vunpack.c.l.b16 %v246
      %v957 = vunpack.c.h.b16 %v246
      %v958 = vunpack.c.l.b16 %v247
      %v959 = vunpack.c.l.b16 %v248
      %v960 = vunpack.c.h.b16 %v248
      %v961 = vunpack.c.l.b16 %v249
      %v962 = vunpack.c.h.b16 %v249
      %v963 = vunpack.c.l.b16 %v250
      %v964 = vunpack.c.h.b16 %v250
      %v965 = vunpack.c.l.b16 %v251
      %v966 = vunpack.c.h.b16 %v251
      %v967 = vunpack.c.l.b16 %v252
      %v968 = vunpack.c.h.b16 %v252
      %v969 = vunpack.c.l.b16 %v253
      %v970 = vunpack.c.h.b16 %v253
      %v971 = vunpack.c.l.b16 %v254
      %v972 = vunpack.c.l.b16 %v255
      %v973 = vunpack.c.h.b16 %v255
      %v974 = vunpack.c.l.b16 %v256
      %v975 = vunpack.c.h.b16 %v256
      %v976 = vunpack.c.l.b16 %v257
      %v977 = vunpack.c.h.b16 %v257
      %v978 = vunpack.c.l.b16 %v258
      %v979 = vunpack.c.h.b16 %v258
      %v980 = vunpack.c.l.b16 %v259
      %v981 = vunpack.c.h.b16 %v259
      %v982 = vunpack.c.l.b16 %v260
      %v983 = vunpack.c.h.b16 %v260
      %v984 = vunpack.c.l.b16 %v261
      %v985 = vunpack.c.l.b16 %v262
      %v986 = vunpack.c.h.b16 %v262
      %v987 = vunpack.c.l.b16 %v263
      %v988 = vunpack.c.h.b16 %v263
      %v989 = vunpack.c.l.b16 %v264
      %v990 = vunpack.c.h.b16 %v264
      %v991 = vunpack.c.l.b16 %v265
      %v992 = vunpack.c.h.b16 %v265
      %v993 = vunpack.c.l.b16 %v266
      %v994 = vunpack.c.h.b16 %v266
      %v995 = vunpack.c.l.b16 %v267
      %v996 = vunpack.c.h.b16 %v267
      %v997 = vunpack.c.l.b16 %v268
      %v998 = vunpack.c.l.b16 %v269
      %v999 = vunpack.c.h.b16 %v269
      %v1000 = vunpack.c.l.b16 %v270
      %v1001 = vunpack.c.h.b16 %v270
      %v1002 = vunpack.c.l.b16 %v271
      %v1003 = vunpack.c.h.b16 %v271
      %v1004 = vunpack.c.l.b16 %v272
      %v1005 = vunpack.c.h.b16 %v272
      %v1006 = vunpack.c.l.b16 %v273
      %v1007 = vunpack.c.h.b16 %v273
      %v1008 = vunpack.c.l.b16 %v274
      %v1009 = vunpack.c.h.b16 %v274
      %v1010 = vunpack.c.l.b16 %v275
      %v1011 = vunpack.c.l.b16 %v276
      %v1012 = vunpack.c.h.b16 %v276
      %v1013 = vunpack.c.l.b16 %v277
      %v1014 = vunpack.c.h.b16 %v277
      %v1015 = vunpack.c.l.b16 %v278
      %v1016 = vunpack.c.h.b16 %v278
      %v1017 = vunpack.c.l.b16 %v279
      %v1018 = vunpack.c.h.b16 %v279
      %v1019 = vunpack.c.l.b16 %v280
      %v1020 = vunpack.c.h.b16 %v280
      %v1021 = vunpack.c.l.b16 %v281
      %v1022 = vunpack.c.h.b16 %v281
      %v1023 = vunpack.c.l.b16 %v282
      %v1024 = vunpack.c.l.b16 %v283
      %v1025 = vunpack.c.h.b16 %v283
      %v1026 = vunpack.c.l.b16 %v284
      %v1027 = vunpack.c.h.b16 %v284
      %v1028 = vunpack.c.l.b16 %v285
      %v1029 = vunpack.c.h.b16 %v285
      %v1030 = vunpack.c.l.b16 %v286
      %v1031 = vunpack.c.h.b16 %v286
      %v1032 = vunpack.c.l.b16 %v287
      %v1033 = vunpack.c.h.b16 %v287
      %v1034 = vunpack.c.l.b16 %v288
      %v1035 = vunpack.c.h.b16 %v288
      %v1036 = vunpack.c.l.b16 %v289
      %v1037 = vunpack.c.l.b16 %v290
      %v1038 = vunpack.c.h.b16 %v290
      %v1039 = vunpack.c.l.b16 %v291
      %v1040 = vunpack.c.h.b16 %v291
      %v1041 = vunpack.c.l.b16 %v292
      %v1042 = vunpack.c.h.b16 %v292
      %v1043 = vunpack.c.l.b16 %v293
      %v1044 = vunpack.c.h.b16 %v293
      %v1045 = vunpack.c.l.b16 %v294
      %v1046 = vunpack.c.h.b16 %v294
      %v1047 = vunpack.c.l.b16 %v295
      %v1048 = vunpack.c.h.b16 %v295
      %v1049 = vunpack.c.l.b16 %v296
      %v1050 = vunpack.c.l.b16 %v297
      %v1051 = vunpack.c.h.b16 %v297
      %v1052 = vunpack.c.l.b16 %v298
      %v1053 = vunpack.c.h.b16 %v298
      %v1054 = vunpack.c.l.b16 %v299
      %v1055 = vunpack.c.h.b16 %v299
      %v1056 = vunpack.c.l.b16 %v300
      %v1057 = vunpack.c.h.b16 %v300
      %v1058 = vunpack.c.l.b16 %v301
      %v1059 = vunpack.c.h.b16 %v301
      %v1060 = vunpack.c.l.b16 %v302
      %v1061 = vunpack.c.h.b16 %v302
      %v1062 = vunpack.c.l.b16 %v303
      %v1063 = vunpack.c.l.b16 %v304
      %v1064 = vunpack.c.h.b16 %v304
      %v1065 = vunpack.c.l.b16 %v305
      %v1066 = vunpack.c.h.b16 %v305
      %v1067 = vunpack.c.l.b16 %v306
      %v1068 = vunpack.c.h.b16 %v306
      %v1069 = vunpack.c.l.b16 %v307
      %v1070 = vunpack.c.h.b16 %v307
      %v1071 = vunpack.c.l.b16 %v308
      %v1072 = vunpack.c.h.b16 %v308
      %v1073 = vunpack.c.l.b16 %v309
      %v1074 = vunpack.c.h.b16 %v309
      %v1075 = vunpack.c.l.b16 %v310
      %v1076 = vunpack.c.l.b16 %v311
      %v1077 = vunpack.c.h.b16 %v311
      %v1078 = vunpack.c.l.b16 %v312
      %v1079 = vunpack.c.h.b16 %v312
      %v1080 = vunpack.c.l.b16 %v313
      %v1081 = vunpack.c.h.b16 %v313
      %v1082 = vunpack.c.l.b16 %v314
      %v1083 = vunpack.c.h.b16 %v314
      %v1084 = vunpack.c.l.b16 %v315
      %v1085 = vunpack.c.h.b16 %v315
      %v1086 = vunpack.c.l.b16 %v316
      %v1087 = vunpack.c.h.b16 %v316
      %v1088 = vunpack.c.l.b16 %v317
      %v1089 = vunpack.c.l.b16 %v318
      %v1090 = vunpack.c.h.b16 %v318
      %v1091 = vunpack.c.l.b16 %v319
      %v1092 = vunpack.c.h.b16 %v319
      %v1093 = vunpack.c.l.b16 %v320
      %v1094 = vunpack.c.h.b16 %v320
      %v1095 = vunpack.c.l.b16 %v321
      %v1096 = vunpack.c.h.b16 %v321
      %v1097 = vunpack.c.l.b16 %v322
      %v1098 = vunpack.c.h.b16 %v322
      %v1099 = vunpack.c.l.b16 %v323
      %v1100 = vunpack.c.h.b16 %v323
      %v1101 = vunpack.c.l.b16 %v324
      %v1102 = vunpack.c.l.b16 %v325
      %v1103 = vunpack.c.h.b16 %v325
      %v1104 = vunpack.c.l.b16 %v326
      %v1105 = vunpack.c.h.b16 %v326
      %v1106 = vunpack.c.l.b16 %v327
      %v1107 = vunpack.c.h.b16 %v327
      %v1108 = vunpack.c.l.b16 %v328
      %v1109 = vunpack.c.h.b16 %v328
      %v1110 = vunpack.c.l.b16 %v329
      %v1111 = vunpack.c.h.b16 %v329
      %v1112 = vunpack.c.l.b16 %v330
      %v1113 = vunpack.c.h.b16 %v330
      %v1114 = vunpack.c.l.b16 %v331
      %v1115 = vunpack.c.l.b16 %v332
      %v1116 = vunpack.c.h.b16 %v332
      %v1117 = vunpack.c.l.b16 %v333
      %v1118 = vunpack.c.h.b16 %v333
      %v1119 = vunpack.c.l.b16 %v334
      %v1120 = vunpack.c.h.b16 %v334
      %v1121 = vunpack.c.l.b16 %v335
      %v1122 = vunpack.c.h.b16 %v335
      %v1123 = vunpack.c.l.b16 %v336
      %v1124 = vunpack.c.h.b16 %v336
      %v1125 = vunpack.c.l.b16 %v337
      %v1126 = vunpack.c.h.b16 %v337
      %v1127 = vunpack.c.l.b16 %v338
      %v1128 = vunpack.c.l.b16 %v339
      %v1129 = vunpack.c.h.b16 %v339
      %v1130 = vunpack.c.l.b16 %v340
      %v1131 = vunpack.c.h.b16 %v340
      %v1132 = vunpack.c.l.b16 %v341
      %v1133 = vunpack.c.h.b16 %v341
      %v1134 = vunpack.c.l.b16 %v342
      %v1135 = vunpack.c.h.b16 %v342
      %v1136 = vunpack.c.l.b16 %v343
      %v1137 = vunpack.c.h.b16 %v343
      %v1138 = vunpack.c.l.b16 %v344
      %v1139 = vunpack.c.h.b16 %v344
      %v1140 = vunpack.c.l.b16 %v345
      %v1141 = vunpack.c.l.b16 %v346
      %v1142 = vunpack.c.h.b16 %v346
      %v1143 = vunpack.c.l.b16 %v347
      %v1144 = vunpack.c.h.b16 %v347
      %v1145 = vunpack.c.l.b16 %v348
      %v1146 = vunpack.c.h.b16 %v348
      %v1147 = vunpack.c.l.b16 %v349
      %v1148 = vunpack.c.h.b16 %v349
      %v1149 = vunpack.c.l.b16 %v350
      %v1150 = vunpack.c.h.b16 %v350
      %v1151 = vunpack.c.l.b16 %v351
      %v1152 = vunpack.c.h.b16 %v351
      %v1153 = vunpack.c.l.b16 %v352
      %v1154 = vunpack.c.l.b16 %v353
      %v1155 = vunpack.c.h.b16 %v353
      %v1156 = vunpack.c.l.b16 %v354
      %v1157 = vunpack.c.h.b16 %v354
      %v1158 = vunpack.c.l.b16 %v355
      %v1159 = vunpack.c.h.b16 %v355
      %v1160 = vunpack.c.l.b16 %v356
      %v1161 = vunpack.c.h.b16 %v356
      %v1162 = vunpack.c.l.b16 %v357
      %v1163 = vunpack.c.h.b16 %v357
      %v1164 = vunpack.c.l.b16 %v358
      %v1165 = vunpack.c.h.b16 %v358
      %v1166 = vunpack.c.l.b16 %v359
      %v1167 = vunpack.c.l.b16 %v360
      %v1168 = vunpack.c.h.b16 %v360
      %v1169 = vunpack.c.l.b16 %v361
      %v1170 = vunpack.c.h.b16 %v361
      %v1171 = vunpack.c.l.b16 %v362
      %v1172 = vunpack.c.h.b16 %v362
      %v1173 = vunpack.c.l.b16 %v363
      %v1174 = vunpack.c.h.b16 %v363
      %v1175 = vunpack.c.l.b16 %v364
      %v1176 = vunpack.c.h.b16 %v364
      %v1177 = vunpack.c.l.b16 %v365
      %v1178 = vunpack.c.h.b16 %v365
      %v1179 = vunpack.c.l.b16 %v366
      %v1180 = vunpack.c.l.b16 %v367
      %v1181 = vunpack.c.h.b16 %v367
      %v1182 = vunpack.c.l.b16 %v368
      %v1183 = vunpack.c.h.b16 %v368
      %v1184 = vunpack.c.l.b16 %v369
      %v1185 = vunpack.c.h.b16 %v369
      %v1186 = vunpack.c.l.b16 %v370
      %v1187 = vunpack.c.h.b16 %v370
      %v1188 = vunpack.c.l.b16 %v371
      %v1189 = vunpack.c.h.b16 %v371
      %v1190 = vunpack.c.l.b16 %v372
      %v1191 = vunpack.c.h.b16 %v372
      %v1192 = vunpack.c.l.b16 %v373
      %v1193 = vunpack.c.l.b16 %v374
      %v1194 = vunpack.c.h.b16 %v374
      %v1195 = vunpack.c.l.b16 %v375
      %v1196 = vunpack.c.h.b16 %v375
      %v1197 = vunpack.c.l.b16 %v376
      %v1198 = vunpack.c.h.b16 %v376
      %v1199 = vunpack.c.l.b16 %v377
      %v1200 = vunpack.c.h.b16 %v377
      %v1201 = vunpack.c.l.b16 %v378
      %v1202 = vunpack.c.h.b16 %v378
      %v1203 = vunpack.c.l.b16 %v379
      %v1204 = vunpack.c.h.b16 %v379
      %v1205 = vunpack.c.l.b16 %v380
      %v1206 = vunpack.c.l.b16 %v381
      %v1207 = vunpack.c.h.b16 %v381
      %v1208 = vunpack.c.l.b16 %v382
      %v1209 = vunpack.c.h.b16 %v382
      %v1210 = vunpack.c.l.b16 %v383
      %v1211 = vunpack.c.h.b16 %v383
      %v1212 = vunpack.c.l.b16 %v384
      %v1213 = vunpack.c.h.b16 %v384
      %v1214 = vunpack.c.l.b16 %v385
      %v1215 = vunpack.c.h.b16 %v385
      %v1216 = vunpack.c.l.b16 %v386
      %v1217 = vunpack.c.h.b16 %v386
      %v1218 = vunpack.c.l.b16 %v387
      %v1219 = vunpack.c.l.b16 %v388
      %v1220 = vunpack.c.h.b16 %v388
      %v1221 = vunpack.c.l.b16 %v389
      %v1222 = vunpack.c.h.b16 %v389
      %v1223 = vunpack.c.l.b16 %v390
      %v1224 = vunpack.c.h.b16 %v390
      %v1225 = vunpack.c.l.b16 %v391
      %v1226 = vunpack.c.h.b16 %v391
      %v1227 = vunpack.c.l.b16 %v392
      %v1228 = vunpack.c.h.b16 %v392
      %v1229 = vunpack.c.l.b16 %v393
      %v1230 = vunpack.c.h.b16 %v393
      %v1231 = vunpack.c.l.b16 %v394
      %v1232 = vunpack.c.l.b16 %v395
      %v1233 = vunpack.c.h.b16 %v395
      %v1234 = vunpack.c.l.b16 %v396
      %v1235 = vunpack.c.h.b16 %v396
      %v1236 = vunpack.c.l.b16 %v397
      %v1237 = vunpack.c.h.b16 %v397
      %v1238 = vunpack.c.l.b16 %v398
      %v1239 = vunpack.c.h.b16 %v398
      %v1240 = vunpack.c.l.b16 %v399
      %v1241 = vunpack.c.h.b16 %v399
      %v1242 = vunpack.c.l.b16 %v400
      %v1243 = vunpack.c.h.b16 %v400
      %v1244 = vunpack.c.l.b16 %v401
      %v1245 = vpack.c.b16 %v842, %v829
      %v1246 = vpack.c.b16 %v843, %v830
      %v1247 = vpack.c.b16 %v844, %v831
      %v1248 = vpack.c.b16 %v845, %v832
      %v1249 = vpack.c.b16 %v846, %v833
      %v1250 = vpack.c.b16 %v847, %v834
      %v1251 = vpack.c.b16 %v848, %v835
      %v1252 = vpack.c.b16 %v849, %v836
      %v1253 = vpack.c.b16 %v850, %v837
      %v1254 = vpack.c.b16 %v851, %v838
      %v1255 = vpack.c.b16 %v852, %v839
      %v1256 = vpack.c.b16 %v853, %v840
      %v1257 = vpack.c.b16 %v854, %v841
      %v1258 = vpack.c.b16 %v868, %v855
      %v1259 = vpack.c.b16 %v869, %v856
      %v1260 = vpack.c.b16 %v870, %v857
      %v1261 = vpack.c.b16 %v871, %v858
      %v1262 = vpack.c.b16 %v872, %v859
      %v1263 = vpack.c.b16 %v873, %v860
      %v1264 = vpack.c.b16 %v874, %v861
      %v1265 = vpack.c.b16 %v875, %v862
      %v1266 = vpack.c.b16 %v876, %v863
      %v1267 = vpack.c.b16 %v877, %v864
      %v1268 = vpack.c.b16 %v878, %v865
      %v1269 = vpack.c.b16 %v879, %v866
      %v1270 = vpack.c.b16 %v880, %v867
      %v1271 = vpack.c.b16 %v894, %v881
      %v1272 = vpack.c.b16 %v895, %v882
      %v1273 = vpack.c.b16 %v896, %v883
      %v1274 = vpack.c.b16 %v897, %v884
      %v1275 = vpack.c.b16 %v898, %v885
      %v1276 = vpack.c.b16 %v899, %v886
      %v1277 = vpack.c.b16 %v900, %v887
      %v1278 = vpack.c.b16 %v901, %v888
      %v1279 = vpack.c.b16 %v902, %v889
      %v1280 = vpack.c.b16 %v903, %v890
      %v1281 = vpack.c.b16 %v904, %v891
      %v1282 = vpack.c.b16 %v905, %v892
      %v1283 = vpack.c.b16 %v906, %v893
      %v1284 = vpack.c.b16 %v920, %v907
      %v1285 = vpack.c.b16 %v921, %v908
      %v1286 = vpack.c.b16 %v922, %v909
      %v1287 = vpack.c.b16 %v923, %v910
      %v1288 = vpack.c.b16 %v924, %v911
      %v1289 = vpack.c.b16 %v925, %v912
      %v1290 = vpack.c.b16 %v926, %v913
      %v1291 = vpack.c.b16 %v927, %v914
      %v1292 = vpack.c.b16 %v928, %v915
      %v1293 = vpack.c.b16 %v929, %v916
      %v1294 = vpack.c.b16 %v930, %v917
      %v1295 = vpack.c.b16 %v931, %v918
      %v1296 = vpack.c.b16 %v932, %v919
      %v1297 = vpack.c.b16 %v946, %v933
      %v1298 = vpack.c.b16 %v947, %v934
      %v1299 = vpack.c.b16 %v948, %v935
      %v1300 = vpack.c.b16 %v949, %v936
      %v1301 = vpack.c.b16 %v950, %v937
      %v1302 = vpack.c.b16 %v951, %v938
      %v1303 = vpack.c.b16 %v952, %v939
      %v1304 = vpack.c.b16 %v953, %v940
      %v1305 = vpack.c.b16 %v954, %v941
      %v1306 = vpack.c.b16 %v955, %v942
      %v1307 = vpack.c.b16 %v956, %v943
      %v1308 = vpack.c.b16 %v957, %v944
      %v1309 = vpack.c.b16 %v958, %v945
      %v1310 = vpack.c.b16 %v972, %v959
      %v1311 = vpack.c.b16 %v973, %v960
      %v1312 = vpack.c.b16 %v974, %v961
      %v1313 = vpack.c.b16 %v975, %v962
      %v1314 = vpack.c.b16 %v976, %v963
      %v1315 = vpack.c.b16 %v977, %v964
      %v1316 = vpack.c.b16 %v978, %v965
      %v1317 = vpack.c.b16 %v979, %v966
      %v1318 = vpack.c.b16 %v980, %v967
      %v1319 = vpack.c.b16 %v981, %v968
      %v1320 = vpack.c.b16 %v982, %v969
      %v1321 = vpack.c.b16 %v983, %v970
      %v1322 = vpack.c.b16 %v984, %v971
      %v1323 = vpack.c.b16 %v998, %v985
      %v1324 = vpack.c.b16 %v999, %v986
      %v1325 = vpack.c.b16 %v1000, %v987
      %v1326 = vpack.c.b16 %v1001, %v988
      %v1327 = vpack.c.b16 %v1002, %v989
      %v1328 = vpack.c.b16 %v1003, %v990
      %v1329 = vpack.c.b16 %v1004, %v991
      %v1330 = vpack.c.b16 %v1005, %v992
      %v1331 = vpack.c.b16 %v1006, %v993
      %v1332 = vpack.c.b16 %v1007, %v994
      %v1333 = vpack.c.b16 %v1008, %v995
      %v1334 = vpack.c.b16 %v1009, %v996
      %v1335 = vpack.c.b16 %v1010, %v997
      %v1336 = vpack.c.b16 %v1024, %v1011
      %v1337 = vpack.c.b16 %v1025, %v1012
      %v1338 = vpack.c.b16 %v1026, %v1013
      %v1339 = vpack.c.b16 %v1027, %v1014
      %v1340 = vpack.c.b16 %v1028, %v1015
      %v1341 = vpack.c.b16 %v1029, %v1016
      %v1342 = vpack.c.b16 %v1030, %v1017
      %v1343 = vpack.c.b16 %v1031, %v1018
      %v1344 = vpack.c.b16 %v1032, %v1019
      %v1345 = vpack.c.b16 %v1033, %v1020
      %v1346 = vpack.c.b16 %v1034, %v1021
      %v1347 = vpack.c.b16 %v1035, %v1022
      %v1348 = vpack.c.b16 %v1036, %v1023
      %v1349 = vpack.c.b16 %v1050, %v1037
      %v1350 = vpack.c.b16 %v1051, %v1038
      %v1351 = vpack.c.b16 %v1052, %v1039
      %v1352 = vpack.c.b16 %v1053, %v1040
      %v1353 = vpack.c.b16 %v1054, %v1041
      %v1354 = vpack.c.b16 %v1055, %v1042
      %v1355 = vpack.c.b16 %v1056, %v1043
      %v1356 = vpack.c.b16 %v1057, %v1044
      %v1357 = vpack.c.b16 %v1058, %v1045
      %v1358 = vpack.c.b16 %v1059, %v1046
      %v1359 = vpack.c.b16 %v1060, %v1047
      %v1360 = vpack.c.b16 %v1061, %v1048
      %v1361 = vpack.c.b16 %v1062, %v1049
      %v1362 = vpack.c.b16 %v1076, %v1063
      %v1363 = vpack.c.b16 %v1077, %v1064
      %v1364 = vpack.c.b16 %v1078, %v1065
      %v1365 = vpack.c.b16 %v1079, %v1066
      %v1366 = vpack.c.b16 %v1080, %v1067
      %v1367 = vpack.c.b16 %v1081, %v1068
      %v1368 = vpack.c.b16 %v1082, %v1069
      %v1369 = vpack.c.b16 %v1083, %v1070
      %v1370 = vpack.c.b16 %v1084, %v1071
      %v1371 = vpack.c.b16 %v1085, %v1072
      %v1372 = vpack.c.b16 %v1086, %v1073
      %v1373 = vpack.c.b16 %v1087, %v1074
      %v1374 = vpack.c.b16 %v1088, %v1075
      %v1375 = vpack.c.b16 %v1102, %v1089
      %v1376 = vpack.c.b16 %v1103, %v1090
      %v1377 = vpack.c.b16 %v1104, %v1091
      %v1378 = vpack.c.b16 %v1105, %v1092
      %v1379 = vpack.c.b16 %v1106, %v1093
      %v1380 = vpack.c.b16 %v1107, %v1094
      %v1381 = vpack.c.b16 %v1108, %v1095
      %v1382 = vpack.c.b16 %v1109, %v1096
      %v1383 = vpack.c.b16 %v1110, %v1097
      %v1384 = vpack.c.b16 %v1111, %v1098
      %v1385 = vpack.c.b16 %v1112, %v1099
      %v1386 = vpack.c.b16 %v1113, %v1100
      %v1387 = vpack.c.b16 %v1114, %v1101
      %v1388 = vpack.c.b16 %v1128, %v1115
      %v1389 = vpack.c.b16 %v1129, %v1116
      %v1390 = vpack.c.b16 %v1130, %v1117
      %v1391 = vpack.c.b16 %v1131, %v1118
      %v1392 = vpack.c.b16 %v1132, %v1119
      %v1393 = vpack.c.b16 %v1133, %v1120
      %v1394 = vpack.c.b16 %v1134, %v1121
      %v1395 = vpack.c.b16 %v1135, %v1122
      %v1396 = vpack.c.b16 %v1136, %v1123
      %v1397 = vpack.c.b16 %v1137, %v1124
      %v1398 = vpack.c.b16 %v1138, %v1125
      %v1399 = vpack.c.b16 %v1139, %v1126
      %v1400 = vpack.c.b16 %v1140, %v1127
      %v1401 = vpack.c.b16 %v1154, %v1141
      %v1402 = vpack.c.b16 %v1155, %v1142
      %v1403 = vpack.c.b16 %v1156, %v1143
      %v1404 = vpack.c.b16 %v1157, %v1144
      %v1405 = vpack.c.b16 %v1158, %v1145
      %v1406 = vpack.c.b16 %v1159, %v1146
      %v1407 = vpack.c.b16 %v1160, %v1147
      %v1408 = vpack.c.b16 %v1161, %v1148
      %v1409 = vpack.c.b16 %v1162, %v1149
      %v1410 = vpack.c.b16 %v1163, %v1150
      %v1411 = vpack.c.b16 %v1164, %v1151
      %v1412 = vpack.c.b16 %v1165, %v1152
      %v1413 = vpack.c.b16 %v1166, %v1153
      %v1414 = vpack.c.b16 %v1180, %v1167
      %v1415 = vpack.c.b16 %v1181, %v1168
      %v1416 = vpack.c.b16 %v1182, %v1169
      %v1417 = vpack.c.b16 %v1183, %v1170
      %v1418 = vpack.c.b16 %v1184, %v1171
      %v1419 = vpack.c.b16 %v1185, %v1172
      %v1420 = vpack.c.b16 %v1186, %v1173
      %v1421 = vpack.c.b16 %v1187, %v1174
      %v1422 = vpack.c.b16 %v1188, %v1175
      %v1423 = vpack.c.b16 %v1189, %v1176
      %v1424 = vpack.c.b16 %v1190, %v1177
      %v1425 = vpack.c.b16 %v1191, %v1178
      %v1426 = vpack.c.b16 %v1192, %v1179
      %v1427 = vpack.c.b16 %v1206, %v1193
      %v1428 = vpack.c.b16 %v1207, %v1194
      %v1429 = vpack.c.b16 %v1208, %v1195
      %v1430 = vpack.c.b16 %v1209, %v1196
      %v1431 = vpack.c.b16 %v1210, %v1197
      %v1432 = vpack.c.b16 %v1211, %v1198
      %v1433 = vpack.c.b16 %v1212, %v1199
      %v1434 = vpack.c.b16 %v1213, %v1200
      %v1435 = vpack.c.b16 %v1214, %v1201
      %v1436 = vpack.c.b16 %v1215, %v1202
      %v1437 = vpack.c.b16 %v1216, %v1203
      %v1438 = vpack.c.b16 %v1217, %v1204
      %v1439 = vpack.c.b16 %v1218, %v1205
      %v1440 = vpack.c.b16 %v1232, %v1219
      %v1441 = vpack.c.b16 %v1233, %v1220
      %v1442 = vpack.c.b16 %v1234, %v1221
      %v1443 = vpack.c.b16 %v1235, %v1222
      %v1444 = vpack.c.b16 %v1236, %v1223
      %v1445 = vpack.c.b16 %v1237, %v1224
      %v1446 = vpack.c.b16 %v1238, %v1225
      %v1447 = vpack.c.b16 %v1239, %v1226
      %v1448 = vpack.c.b16 %v1240, %v1227
      %v1449 = vpack.c.b16 %v1241, %v1228
      %v1450 = vpack.c.b16 %v1242, %v1229
      %v1451 = vpack.c.b16 %v1243, %v1230
      %v1452 = vpack.c.b16 %v1244, %v1231
      %v1841 = vunpack.c.l.b16 %v402
      %v1842 = vunpack.c.l.b16 %v403
      %v1843 = vunpack.c.l.b16 %v404
      %v1844 = vunpack.c.l.b16 %v405
      %v1845 = vunpack.c.l.b16 %v406
      %v1846 = vunpack.c.l.b16 %v407
      %v1847 = vunpack.c.l.b16 %v408
      %v1848 = vunpack.c.l.b16 %v409
      %v1849 = vunpack.c.l.b16 %v410
      %v1850 = vunpack.c.l.b16 %v411
      %v1851 = vunpack.c.l.b16 %v412
      %v1852 = vunpack.c.l.b16 %v413
      %v1853 = vunpack.c.l.b16 %v414
      %v1854 = vunpack.c.l.b16 %v415
      %v1855 = vunpack.c.l.b16 %v416
      %v1856 = vunpack.c.l.b16 %v417
      %v1857 = vunpack.c.l.b16 %v418
      %v1858 = vunpack.c.l.b16 %v419
      %v1859 = vunpack.c.l.b16 %v420
      %v1860 = vunpack.c.l.b16 %v421
      %v1861 = vunpack.c.l.b16 %v422
      %v1862 = vunpack.c.l.b16 %v423
      %v1863 = vunpack.c.l.b16 %v424
      %v1864 = vunpack.c.l.b16 %v425
      %v1865 = vunpack.c.l.b16 %v426
      %v1866 = vunpack.c.l.b16 %v427
      %v1867 = vunpack.c.l.b16 %v428
      %v1868 = vunpack.c.l.b16 %v429
      %v1869 = vunpack.c.l.b16 %v430
      %v1870 = vunpack.c.l.b16 %v431
      %v1871 = vunpack.c.l.b16 %v432
      %v1872 = vunpack.c.l.b16 %v433
      %v1873 = vunpack.c.l.b16 %v434
      %v1874 = vunpack.c.l.b16 %v435
      %v1875 = vunpack.c.l.b16 %v436
      %v1876 = vunpack.c.l.b16 %v437
      %v1877 = vunpack.c.l.b16 %v438
      %v1878 = vunpack.c.l.b16 %v439
      %v1879 = vunpack.c.l.b16 %v440
      %v1880 = vunpack.c.l.b16 %v441
      %v1881 = vunpack.c.l.b16 %v442
      %v1882 = vunpack.c.l.b16 %v443
      %v1883 = vunpack.c.l.b16 %v444
      %v1884 = vunpack.c.l.b16 %v445
      %v1885 = vunpack.c.l.b16 %v446
      %v1886 = vunpack.c.l.b16 %v447
      %v1887 = vunpack.c.l.b16 %v448
      %v1888 = vunpack.c.l.b16 %v449
      %v1889 = vunpack.c.l.b16 %v450
      %v1890 = vunpack.c.l.b16 %v451
      %v1891 = vunpack.c.l.b16 %v452
      %v1892 = vunpack.c.l.b16 %v453
      %v1893 = vunpack.c.l.b16 %v454
      %v1894 = vunpack.c.l.b16 %v455
      %v1895 = vunpack.c.l.b16 %v456
      %v1896 = vunpack.c.l.b16 %v457
      %v1897 = vunpack.c.l.b16 %v458
      %v1898 = vunpack.c.l.b16 %v459
      %v1899 = vunpack.c.l.b16 %v460
      %v1900 = vunpack.c.l.b16 %v461
      %v1901 = vunpack.c.l.b16 %v462
      %v1902 = vunpack.c.l.b16 %v463
      %v1903 = vunpack.c.l.b16 %v464
      %v1904 = vunpack.c.l.b16 %v465
      %v1905 = vunpack.c.l.b16 %v466
      %v1906 = vunpack.c.l.b16 %v467
      %v1907 = vunpack.c.l.b16 %v468
      %v1908 = vunpack.c.l.b16 %v469
      %v1909 = vunpack.c.l.b16 %v470
      %v1910 = vunpack.c.l.b16 %v471
      %v1911 = vunpack.c.l.b16 %v472
      %v1912 = vunpack.c.l.b16 %v473
      %v1913 = vunpack.c.l.b16 %v474
      %v1914 = vunpack.c.l.b16 %v475
      %v1915 = vunpack.c.l.b16 %v476
      %v1916 = vunpack.c.l.b16 %v477
      %v1917 = vunpack.c.l.b16 %v478
      %v1918 = vunpack.c.l.b16 %v479
      %v1919 = vunpack.c.l.b16 %v480
      %v1920 = vunpack.c.l.b16 %v481
      %v1921 = vunpack.c.l.b16 %v482
      %v1922 = vunpack.c.l.b16 %v483
      %v1923 = vunpack.c.l.b16 %v484
      %v1924 = vunpack.c.l.b16 %v485
      %v1925 = vunpack.c.l.b16 %v486
      %v1926 = vunpack.c.l.b16 %v487
      %v1927 = vunpack.c.l.b16 %v488
      %v1928 = vunpack.c.l.b16 %v489
      %v1929 = vunpack.c.l.b16 %v490
      %v1930 = vunpack.c.l.b16 %v491
      %v1931 = vunpack.c.l.b16 %v492
      %v1932 = vunpack.c.l.b16 %v493
      %v1933 = vunpack.c.l.b16 %v494
      %v1934 = vunpack.c.l.b16 %v495
      %v1935 = vunpack.c.l.b16 %v496
      %v1936 = vunpack.c.l.b16 %v497
      %v1937 = vunpack.c.l.b16 %v498
      %v1938 = vunpack.c.l.b16 %v499
      %v1939 = vunpack.c.l.b16 %v500
      %v1940 = vunpack.c.l.b16 %v501
      %v1941 = vunpack.c.l.b16 %v502
      %v1942 = vunpack.c.l.b16 %v503
      %v1943 = vunpack.c.l.b16 %v504
      %v1944 = vunpack.c.l.b16 %v505
      %v1945 = vunpack.c.l.b16 %v506
      %v1946 = vunpack.c.l.b16 %v507
      %v1947 = vunpack.c.l.b16 %v508
      %v1948 = vunpack.c.l.b16 %v509
      %v1949 = vunpack.c.l.b16 %v510
      %v1950 = vunpack.c.l.b16 %v511
      %v1951 = vunpack.c.l.b16 %v512
      %v1952 = vunpack.c.l.b16 %v513
      %v1953 = vunpack.c.l.b16 %v514
      %v1954 = vunpack.c.l.b16 %v515
      %v1955 = vunpack.c.l.b16 %v516
      %v1956 = vunpack.c.l.b16 %v517
      %v1957 = vunpack.c.l.b16 %v518
      %v1958 = vunpack.c.l.b16 %v519
      %v1959 = vunpack.c.l.b16 %v520
      %v1960 = vunpack.c.l.b16 %v521
      %v1961 = vunpack.c.l.b16 %v522
      %v1962 = vunpack.c.l.b16 %v523
      %v1963 = vunpack.c.l.b16 %v524
      %v1964 = vunpack.c.l.b16 %v525
      %v1965 = vunpack.c.l.b16 %v526
      %v1966 = vunpack.c.l.b16 %v527
      %v1967 = vunpack.c.l.b16 %v528
      %v1968 = vunpack.c.l.b16 %v529
      %v1969 = vunpack.c.l.b16 %v530
      %v1970 = vunpack.c.l.b16 %v531
      %v1971 = vunpack.c.l.b16 %v532
      %v1972 = vunpack.c.l.b16 %v533
      %v1973 = vunpack.c.l.b16 %v534
      %v1974 = vunpack.c.l.b16 %v535
      %v1975 = vunpack.c.l.b16 %v536
      %v1976 = vunpack.c.l.b16 %v537
      %v1977 = vunpack.c.l.b16 %v538
      %v1978 = vunpack.c.l.b16 %v539
      %v1979 = vunpack.c.l.b16 %v540
      %v1980 = vunpack.c.l.b16 %v541
      %v1981 = vunpack.c.l.b16 %v542
      %v1982 = vunpack.c.l.b16 %v543
      %v1983 = vunpack.c.l.b16 %v544
      %v1984 = vunpack.c.l.b16 %v545
      %v1985 = vunpack.c.l.b16 %v546
      %v1986 = vunpack.c.l.b16 %v547
      %v1987 = vunpack.c.l.b16 %v548
      %v1988 = vunpack.c.l.b16 %v549
      %v1989 = vunpack.c.l.b16 %v550
      %v1990 = vunpack.c.l.b16 %v551
      %v1991 = vunpack.c.l.b16 %v552
      %v1992 = vunpack.c.l.b16 %v553
      %v1993 = vunpack.c.l.b16 %v554
      %v1994 = vunpack.c.l.b16 %v555
      %v1995 = vunpack.c.l.b16 %v556
      %v1996 = vunpack.c.l.b16 %v557
      %v1997 = vunpack.c.l.b16 %v558
      %v1998 = vunpack.c.l.b16 %v559
      %v1999 = vunpack.c.l.b16 %v560
      %v2000 = vunpack.c.l.b16 %v561
      %v2001 = vunpack.c.l.b16 %v562
      %v2002 = vunpack.c.l.b16 %v563
      %v2003 = vunpack.c.l.b16 %v564
      %v2004 = vunpack.c.l.b16 %v565
      %v2005 = vunpack.c.l.b16 %v566
      %v2006 = vunpack.c.l.b16 %v567
      %v2007 = vunpack.c.l.b16 %v568
      %v2008 = vunpack.c.l.b16 %v569
      %v2009 = vunpack.c.l.b16 %v570
      %v2010 = vunpack.c.l.b16 %v571
      %v2011 = vunpack.c.l.b16 %v572
      %v2012 = vunpack.c.l.b16 %v573
      %v2013 = vunpack.c.l.b16 %v574
      %v2014 = vunpack.c.l.b16 %v575
      %v2015 = vunpack.c.l.b16 %v576
      %v2016 = vunpack.c.l.b16 %v577
      %v2017 = vunpack.c.l.b16 %v578
      %v2018 = vunpack.c.l.b16 %v579
      %v2019 = vunpack.c.l.b16 %v580
      %v2020 = vunpack.c.l.b16 %v581
      %v2021 = vunpack.c.l.b16 %v582
      %v2022 = vunpack.c.l.b16 %v583
      %v2023 = vunpack.c.l.b16 %v584
      %v2024 = vunpack.c.l.b16 %v585
      %v2025 = vunpack.c.l.b16 %v586
      %v2026 = vunpack.c.l.b16 %v587
      %v2027 = vunpack.c.l.b16 %v588
      %v2028 = vunpack.c.l.b16 %v589
      %v2029 = vunpack.c.l.b16 %v590
      %v2030 = vunpack.c.l.b16 %v591
      %v2031 = vunpack.c.l.b16 %v592
      %v2032 = vunpack.c.l.b16 %v593
      %v2033 = vunpack.c.l.b16 %v594
      %v2034 = vunpack.c.l.b16 %v595
      %v2035 = vunpack.c.l.b16 %v596
      %v2036 = vunpack.c.l.b16 %v597
      %v2037 = vpack.c.b16 %v1842, %v1841
      %v2038 = vpack.c.b16 %v1844, %v1843
      %v2039 = vpack.c.b16 %v1846, %v1845
      %v2040 = vpack.c.b16 %v1848, %v1847
      %v2041 = vpack.c.b16 %v1850, %v1849
      %v2042 = vpack.c.b16 %v1852, %v1851
      %v2043 = vpack.c.b16 %v1854, %v1853
      %v2044 = vpack.c.b16 %v1856, %v1855
      %v2045 = vpack.c.b16 %v1858, %v1857
      %v2046 = vpack.c.b16 %v1860, %v1859
      %v2047 = vpack.c.b16 %v1862, %v1861
      %v2048 = vpack.c.b16 %v1864, %v1863
      %v2049 = vpack.c.b16 %v1866, %v1865
      %v2050 = vpack.c.b16 %v1868, %v1867
      %v2051 = vpack.c.b16 %v1870, %v1869
      %v2052 = vpack.c.b16 %v1872, %v1871
      %v2053 = vpack.c.b16 %v1874, %v1873
      %v2054 = vpack.c.b16 %v1876, %v1875
      %v2055 = vpack.c.b16 %v1878, %v1877
      %v2056 = vpack.c.b16 %v1880, %v1879
      %v2057 = vpack.c.b16 %v1882, %v1881
      %v2058 = vpack.c.b16 %v1884, %v1883
      %v2059 = vpack.c.b16 %v1886, %v1885
      %v2060 = vpack.c.b16 %v1888, %v1887
      %v2061 = vpack.c.b16 %v1890, %v1889
      %v2062 = vpack.c.b16 %v1892, %v1891
      %v2063 = vpack.c.b16 %v1894, %v1893
      %v2064 = vpack.c.b16 %v1896, %v1895
      %v2065 = vpack.c.b16 %v1898, %v1897
      %v2066 = vpack.c.b16 %v1900, %v1899
      %v2067 = vpack.c.b16 %v1902, %v1901
      %v2068 = vpack.c.b16 %v1904, %v1903
      %v2069 = vpack.c.b16 %v1906, %v1905
      %v2070 = vpack.c.b16 %v1908, %v1907
      %v2071 = vpack.c.b16 %v1910, %v1909
      %v2072 = vpack.c.b16 %v1912, %v1911
      %v2073 = vpack.c.b16 %v1914, %v1913
      %v2074 = vpack.c.b16 %v1916, %v1915
      %v2075 = vpack.c.b16 %v1918, %v1917
      %v2076 = vpack.c.b16 %v1920, %v1919
      %v2077 = vpack.c.b16 %v1922, %v1921
      %v2078 = vpack.c.b16 %v1924, %v1923
      %v2079 = vpack.c.b16 %v1926, %v1925
      %v2080 = vpack.c.b16 %v1928, %v1927
      %v2081 = vpack.c.b16 %v1930, %v1929
      %v2082 = vpack.c.b16 %v1932, %v1931
      %v2083 = vpack.c.b16 %v1934, %v1933
      %v2084 = vpack.c.b16 %v1936, %v1935
      %v2085 = vpack.c.b16 %v1938, %v1937
      %v2086 = vpack.c.b16 %v1940, %v1939
      %v2087 = vpack.c.b16 %v1942, %v1941
      %v2088 = vpack.c.b16 %v1944, %v1943
      %v2089 = vpack.c.b16 %v1946, %v1945
      %v2090 = vpack.c.b16 %v1948, %v1947
      %v2091 = vpack.c.b16 %v1950, %v1949
      %v2092 = vpack.c.b16 %v1952, %v1951
      %v2093 = vpack.c.b16 %v1954, %v1953
      %v2094 = vpack.c.b16 %v1956, %v1955
      %v2095 = vpack.c.b16 %v1958, %v1957
      %v2096 = vpack.c.b16 %v1960, %v1959
      %v2097 = vpack.c.b16 %v1962, %v1961
      %v2098 = vpack.c.b16 %v1964, %v1963
      %v2099 = vpack.c.b16 %v1966, %v1965
      %v2100 = vpack.c.b16 %v1968, %v1967
      %v2101 = vpack.c.b16 %v1970, %v1969
      %v2102 = vpack.c.b16 %v1972, %v1971
      %v2103 = vpack.c.b16 %v1974, %v1973
      %v2104 = vpack.c.b16 %v1976, %v1975
      %v2105 = vpack.c.b16 %v1978, %v1977
      %v2106 = vpack.c.b16 %v1980, %v1979
      %v2107 = vpack.c.b16 %v1982, %v1981
      %v2108 = vpack.c.b16 %v1984, %v1983
      %v2109 = vpack.c.b16 %v1986, %v1985
      %v2110 = vpack.c.b16 %v1988, %v1987
      %v2111 = vpack.c.b16 %v1990, %v1989
      %v2112 = vpack.c.b16 %v1992, %v1991
      %v2113 = vpack.c.b16 %v1994, %v1993
      %v2114 = vpack.c.b16 %v1996, %v1995
      %v2115 = vpack.c.b16 %v1998, %v1997
      %v2116 = vpack.c.b16 %v2000, %v1999
      %v2117 = vpack.c.b16 %v2002, %v2001
      %v2118 = vpack.c.b16 %v2004, %v2003
      %v2119 = vpack.c.b16 %v2006, %v2005
      %v2120 = vpack.c.b16 %v2008, %v2007
      %v2121 = vpack.c.b16 %v2010, %v2009
      %v2122 = vpack.c.b16 %v2012, %v2011
      %v2123 = vpack.c.b16 %v2014, %v2013
      %v2124 = vpack.c.b16 %v2016, %v2015
      %v2125 = vpack.c.b16 %v2018, %v2017
      %v2126 = vpack.c.b16 %v2020, %v2019
      %v2127 = vpack.c.b16 %v2022, %v2021
      %v2128 = vpack.c.b16 %v2024, %v2023
      %v2129 = vpack.c.b16 %v2026, %v2025
      %v2130 = vpack.c.b16 %v2028, %v2027
      %v2131 = vpack.c.b16 %v2030, %v2029
      %v2132 = vpack.c.b16 %v2032, %v2031
      %v2133 = vpack.c.b16 %v2034, %v2033
      %v2134 = vpack.c.b16 %v2036, %v2035
      %vm2233 = vcmask 261120
      %v2235 = vsel %vm2233, %v1257, 0
      %v2238 = vsel %vm2233, %v1270, 0
      %v2241 = vsel %vm2233, %v1283, 0
      %v2244 = vsel %vm2233, %v1296, 0
      %v2247 = vsel %vm2233, %v1309, 0
      %v2250 = vsel %vm2233, %v1322, 0
      %v2253 = vsel %vm2233, %v1335, 0
      %v2256 = vsel %vm2233, %v1348, 0
      %v2259 = vsel %vm2233, %v1361, 0
      %v2262 = vsel %vm2233, %v1374, 0
      %v2265 = vsel %vm2233, %v1387, 0
      %v2268 = vsel %vm2233, %v1400, 0
      %v2271 = vsel %vm2233, %v1413, 0
      %v2274 = vsel %vm2233, %v1426, 0
      %v2277 = vsel %vm2233, %v1439, 0
      %v2280 = vsel %vm2233, %v1452, 0
      %2282 = vmatprep.subr.bf16.mxu0 0
      %2283 = vmatpush1.bf16.msra.mxu0 %v2037
      %2284 = vmatprep.subr.bf16.mxu0 0
      %2285 = vmatpush1.bf16.msra.mxu0 %v2038
      %2286 = vmatprep.subr.bf16.mxu0 0
      %2287 = vmatpush1.bf16.msra.mxu0 %v2039
      %2288 = vmatprep.subr.bf16.mxu0 0
      %2289 = vmatpush1.bf16.msra.mxu0 %v2040
      %2290 = vmatprep.subr.bf16.mxu0 0
      %2291 = vmatpush1.bf16.msra.mxu0 %v2041
      %2292 = vmatprep.subr.bf16.mxu0 0
      %2293 = vmatpush1.bf16.msra.mxu0 %v2042
      %2294 = vmatprep.subr.bf16.mxu0 0
      %2295 = vmatpush1.bf16.msra.mxu0 %v2043
      %2296 = vmatprep.subr.bf16.mxu0 0
      %2297 = vmatpush1.bf16.msra.mxu0 %v2044
      %2298 = vmatprep.subr.bf16.mxu0 0
      %2299 = vmatpush1.bf16.msra.mxu0 %v2045
      %2300 = vmatprep.subr.bf16.mxu0 0
      %2301 = vmatpush1.bf16.msra.mxu0 %v2046
      %2302 = vmatprep.subr.bf16.mxu0 0
      %2303 = vmatpush1.bf16.msra.mxu0 %v2047
      %2304 = vmatprep.subr.bf16.mxu0 0
      %2305 = vmatpush1.bf16.msra.mxu0 %v2048
      %2306 = vmatprep.subr.bf16.mxu0 0
      %2307 = vmatpush1.bf16.msra.mxu0 %v2049
      %2308 = vmatprep.subr.bf16.mxu0 0
      %2309 = vmatpush1.bf16.msra.mxu0 %v2050
      %2310 = vmatprep.subr.bf16.mxu0 0
      %2311 = vmatpush1.bf16.msra.mxu0 %v2051
      %2312 = vmatprep.subr.bf16.mxu0 0
      %2313 = vmatpush1.bf16.msra.mxu0 %v2052
      %2314 = vmatprep.mubr.bf16.mxu0 %v1246
      %2315 = vmatmul.mubr.bf16.gmra.mrb[0].mxu0 %v1245
      %v2316 = vpop.f32.mrb[0].mxu0
      %v2317 = vadd.f32 %v603, %v2316
      %v2318 = vpop.f32.mrb[0].mxu0
      %v2319 = vpop.f32.mrb[0].mxu0
      %v2320 = vadd.f32 %v603, %v2319
      %v2321 = vpop.f32.mrb[0].mxu0
      %2322 = vmatprep.mubr.bf16.mxu0 %v1259
      %2323 = vmatmul.mubr.bf16.gmra.mrb[0].mxu0 %v1258
      %v2324 = vpop.f32.mrb[0].mxu0
      %v2325 = vadd.f32 %v603, %v2324
      %v2326 = vpop.f32.mrb[0].mxu0
      %v2327 = vpop.f32.mrb[0].mxu0
      %v2328 = vadd.f32 %v603, %v2327
      %v2329 = vpop.f32.mrb[0].mxu0
      %2330 = vmatprep.mubr.bf16.mxu0 %v1272
      %2331 = vmatmul.mubr.bf16.gmra.mrb[0].mxu0 %v1271
      %v2332 = vpop.f32.mrb[0].mxu0
      %v2333 = vadd.f32 %v603, %v2332
      %v2334 = vpop.f32.mrb[0].mxu0
      %v2335 = vpop.f32.mrb[0].mxu0
      %v2336 = vadd.f32 %v603, %v2335
      %v2337 = vpop.f32.mrb[0].mxu0
      %2338 = vmatprep.mubr.bf16.mxu0 %v1285
      %2339 = vmatmul.mubr.bf16.gmra.mrb[0].mxu0 %v1284
      %v2340 = vpop.f32.mrb[0].mxu0
      %v2341 = vadd.f32 %v603, %v2340
      %v2342 = vpop.f32.mrb[0].mxu0
      %v2343 = vpop.f32.mrb[0].mxu0
      %v2344 = vadd.f32 %v603, %v2343
      %v2345 = vpop.f32.mrb[0].mxu0
      %2346 = vmatprep.mubr.bf16.mxu0 %v1298
      %2347 = vmatmul.mubr.bf16.gmra.mrb[0].mxu0 %v1297
      %v2348 = vpop.f32.mrb[0].mxu0
      %v2349 = vadd.f32 %v603, %v2348
      %v2350 = vpop.f32.mrb[0].mxu0
      %v2351 = vpop.f32.mrb[0].mxu0
      %v2352 = vadd.f32 %v603, %v2351
      %v2353 = vpop.f32.mrb[0].mxu0
      %2354 = vmatprep.mubr.bf16.mxu0 %v1311
      %2355 = vmatmul.mubr.bf16.gmra.mrb[0].mxu0 %v1310
      %v2356 = vpop.f32.mrb[0].mxu0
      %v2357 = vadd.f32 %v603, %v2356
      %v2358 = vpop.f32.mrb[0].mxu0
      %v2359 = vpop.f32.mrb[0].mxu0
      %v2360 = vadd.f32 %v603, %v2359
      %v2361 = vpop.f32.mrb[0].mxu0
      %2362 = vmatprep.mubr.bf16.mxu0 %v1324
      %2363 = vmatmul.mubr.bf16.gmra.mrb[0].mxu0 %v1323
      %v2364 = vpop.f32.mrb[0].mxu0
      %v2365 = vadd.f32 %v603, %v2364
      %v2366 = vpop.f32.mrb[0].mxu0
      %v2367 = vpop.f32.mrb[0].mxu0
      %v2368 = vadd.f32 %v603, %v2367
      %v2369 = vpop.f32.mrb[0].mxu0
      %2370 = vmatprep.mubr.bf16.mxu0 %v1337
      %2371 = vmatmul.mubr.bf16.gmra.mrb[0].mxu0 %v1336
      %v2372 = vpop.f32.mrb[0].mxu0
      %v2373 = vadd.f32 %v603, %v2372
      %v2374 = vpop.f32.mrb[0].mxu0
      %v2375 = vpop.f32.mrb[0].mxu0
      %v2376 = vadd.f32 %v603, %v2375
      %v2377 = vpop.f32.mrb[0].mxu0
      %2378 = vmatprep.mubr.bf16.mxu0 %v1350
      %2379 = vmatmul.mubr.bf16.gmra.mrb[0].mxu0 %v1349
      %v2380 = vpop.f32.mrb[0].mxu0
      %v2381 = vadd.f32 %v603, %v2380
      %v2382 = vpop.f32.mrb[0].mxu0
      %v2383 = vpop.f32.mrb[0].mxu0
      %v2384 = vadd.f32 %v603, %v2383
      %v2385 = vpop.f32.mrb[0].mxu0
      %2386 = vmatprep.mubr.bf16.mxu0 %v1363
      %2387 = vmatmul.mubr.bf16.gmra.mrb[0].mxu0 %v1362
      %v2388 = vpop.f32.mrb[0].mxu0
      %v2389 = vadd.f32 %v603, %v2388
      %v2390 = vpop.f32.mrb[0].mxu0
      %v2391 = vpop.f32.mrb[0].mxu0
      %v2392 = vadd.f32 %v603, %v2391
      %v2393 = vpop.f32.mrb[0].mxu0
      %2394 = vmatprep.mubr.bf16.mxu0 %v1376
      %2395 = vmatmul.mubr.bf16.gmra.mrb[0].mxu0 %v1375
      %v2396 = vpop.f32.mrb[0].mxu0
      %v2397 = vadd.f32 %v603, %v2396
      %v2398 = vpop.f32.mrb[0].mxu0
      %v2399 = vpop.f32.mrb[0].mxu0
      %v2400 = vadd.f32 %v603, %v2399
      %v2401 = vpop.f32.mrb[0].mxu0
      %2402 = vmatprep.mubr.bf16.mxu0 %v1389
      %2403 = vmatmul.mubr.bf16.gmra.mrb[0].mxu0 %v1388
      %v2404 = vpop.f32.mrb[0].mxu0
      %v2405 = vadd.f32 %v603, %v2404
      %v2406 = vpop.f32.mrb[0].mxu0
      %v2407 = vpop.f32.mrb[0].mxu0
      %v2408 = vadd.f32 %v603, %v2407
      %v2409 = vpop.f32.mrb[0].mxu0
      %2410 = vmatprep.mubr.bf16.mxu0 %v1402
      %2411 = vmatmul.mubr.bf16.gmra.mrb[0].mxu0 %v1401
      %v2412 = vpop.f32.mrb[0].mxu0
      %v2413 = vadd.f32 %v603, %v2412
      %v2414 = vpop.f32.mrb[0].mxu0
      %v2415 = vpop.f32.mrb[0].mxu0
      %v2416 = vadd.f32 %v603, %v2415
      %v2417 = vpop.f32.mrb[0].mxu0
      %2418 = vmatprep.mubr.bf16.mxu0 %v1415
      %2419 = vmatmul.mubr.bf16.gmra.mrb[0].mxu0 %v1414
      %v2420 = vpop.f32.mrb[0].mxu0
      %v2421 = vadd.f32 %v603, %v2420
      %v2422 = vpop.f32.mrb[0].mxu0
      %v2423 = vpop.f32.mrb[0].mxu0
      %v2424 = vadd.f32 %v603, %v2423
      %v2425 = vpop.f32.mrb[0].mxu0
      %2426 = vmatprep.mubr.bf16.mxu0 %v1428
      %2427 = vmatmul.mubr.bf16.gmra.mrb[0].mxu0 %v1427
      %v2428 = vpop.f32.mrb[0].mxu0
      %v2429 = vadd.f32 %v603, %v2428
      %v2430 = vpop.f32.mrb[0].mxu0
      %v2431 = vpop.f32.mrb[0].mxu0
      %v2432 = vadd.f32 %v603, %v2431
      %v2433 = vpop.f32.mrb[0].mxu0
      %2434 = vmatprep.mubr.bf16.mxu0 %v1441
      %2435 = vmatmul.mubr.bf16.gmra.mrb[0].mxu0 %v1440
      %v2436 = vpop.f32.mrb[0].mxu0
      %v2437 = vadd.f32 %v603, %v2436
      %v2438 = vpop.f32.mrb[0].mxu0
      %v2439 = vpop.f32.mrb[0].mxu0
      %v2440 = vadd.f32 %v603, %v2439
      %v2441 = vpop.f32.mrb[0].mxu0
      %2442 = vdwg.mxu0
      %2443 = vmatprep.subr.bf16.mxu0 0
      %2444 = vmatpush1.bf16.msra.mxu0 %v2053
      %2445 = vmatprep.subr.bf16.mxu0 0
      %2446 = vmatpush1.bf16.msra.mxu0 %v2054
      %2447 = vmatprep.subr.bf16.mxu0 0
      %2448 = vmatpush1.bf16.msra.mxu0 %v2055
      %2449 = vmatprep.subr.bf16.mxu0 0
      %2450 = vmatpush1.bf16.msra.mxu0 %v2056
      %2451 = vmatprep.subr.bf16.mxu0 0
      %2452 = vmatpush1.bf16.msra.mxu0 %v2057
      %2453 = vmatprep.subr.bf16.mxu0 0
      %2454 = vmatpush1.bf16.msra.mxu0 %v2058
      %2455 = vmatprep.subr.bf16.mxu0 0
      %2456 = vmatpush1.bf16.msra.mxu0 %v2059
      %2457 = vmatprep.subr.bf16.mxu0 0
      %2458 = vmatpush1.bf16.msra.mxu0 %v2060
      %2459 = vmatprep.subr.bf16.mxu0 0
      %2460 = vmatpush1.bf16.msra.mxu0 %v2061
      %2461 = vmatprep.subr.bf16.mxu0 0
      %2462 = vmatpush1.bf16.msra.mxu0 %v2062
      %2463 = vmatprep.subr.bf16.mxu0 0
      %2464 = vmatpush1.bf16.msra.mxu0 %v2063
      %2465 = vmatprep.subr.bf16.mxu0 0
      %2466 = vmatpush1.bf16.msra.mxu0 %v2064
      %2467 = vmatprep.subr.bf16.mxu0 0
      %2468 = vmatpush1.bf16.msra.mxu0 %v2065
      %2469 = vmatprep.subr.bf16.mxu0 0
      %2470 = vmatpush1.bf16.msra.mxu0 %v2066
      %2471 = vmatprep.subr.bf16.mxu0 0
      %2472 = vmatpush1.bf16.msra.mxu0 %v2067
      %2473 = vmatprep.subr.bf16.mxu0 0
      %2474 = vmatpush1.bf16.msra.mxu0 %v2068
      %2475 = vmatprep.mubr.bf16.mxu0 %v1248
      %2476 = vmatmul.mubr.bf16.gmra.mrb[0].mxu0 %v1247
      %v2477 = vpop.f32.mrb[0].mxu0
      %v2478 = vadd.f32 %v2317, %v2477
      %v2479 = vpop.f32.mrb[0].mxu0
      %v2480 = vpop.f32.mrb[0].mxu0
      %v2481 = vadd.f32 %v2320, %v2480
      %v2482 = vpop.f32.mrb[0].mxu0
      %2483 = vmatprep.mubr.bf16.mxu0 %v1261
      %2484 = vmatmul.mubr.bf16.gmra.mrb[0].mxu0 %v1260
      %v2485 = vpop.f32.mrb[0].mxu0
      %v2486 = vadd.f32 %v2325, %v2485
      %v2487 = vpop.f32.mrb[0].mxu0
      %v2488 = vpop.f32.mrb[0].mxu0
      %v2489 = vadd.f32 %v2328, %v2488
      %v2490 = vpop.f32.mrb[0].mxu0
      %2491 = vmatprep.mubr.bf16.mxu0 %v1274
      %2492 = vmatmul.mubr.bf16.gmra.mrb[0].mxu0 %v1273
      %v2493 = vpop.f32.mrb[0].mxu0
      %v2494 = vadd.f32 %v2333, %v2493
      %v2495 = vpop.f32.mrb[0].mxu0
      %v2496 = vpop.f32.mrb[0].mxu0
      %v2497 = vadd.f32 %v2336, %v2496
      %v2498 = vpop.f32.mrb[0].mxu0
      %2499 = vmatprep.mubr.bf16.mxu0 %v1287
      %2500 = vmatmul.mubr.bf16.gmra.mrb[0].mxu0 %v1286
      %v2501 = vpop.f32.mrb[0].mxu0
      %v2502 = vadd.f32 %v2341, %v2501
      %v2503 = vpop.f32.mrb[0].mxu0
      %v2504 = vpop.f32.mrb[0].mxu0
      %v2505 = vadd.f32 %v2344, %v2504
      %v2506 = vpop.f32.mrb[0].mxu0
      %2507 = vmatprep.mubr.bf16.mxu0 %v1300
      %2508 = vmatmul.mubr.bf16.gmra.mrb[0].mxu0 %v1299
      %v2509 = vpop.f32.mrb[0].mxu0
      %v2510 = vadd.f32 %v2349, %v2509
      %v2511 = vpop.f32.mrb[0].mxu0
      %v2512 = vpop.f32.mrb[0].mxu0
      %v2513 = vadd.f32 %v2352, %v2512
      %v2514 = vpop.f32.mrb[0].mxu0
      %2515 = vmatprep.mubr.bf16.mxu0 %v1313
      %2516 = vmatmul.mubr.bf16.gmra.mrb[0].mxu0 %v1312
      %v2517 = vpop.f32.mrb[0].mxu0
      %v2518 = vadd.f32 %v2357, %v2517
      %v2519 = vpop.f32.mrb[0].mxu0
      %v2520 = vpop.f32.mrb[0].mxu0
      %v2521 = vadd.f32 %v2360, %v2520
      %v2522 = vpop.f32.mrb[0].mxu0
      %2523 = vmatprep.mubr.bf16.mxu0 %v1326
      %2524 = vmatmul.mubr.bf16.gmra.mrb[0].mxu0 %v1325
      %v2525 = vpop.f32.mrb[0].mxu0
      %v2526 = vadd.f32 %v2365, %v2525
      %v2527 = vpop.f32.mrb[0].mxu0
      %v2528 = vpop.f32.mrb[0].mxu0
      %v2529 = vadd.f32 %v2368, %v2528
      %v2530 = vpop.f32.mrb[0].mxu0
      %2531 = vmatprep.mubr.bf16.mxu0 %v1339
      %2532 = vmatmul.mubr.bf16.gmra.mrb[0].mxu0 %v1338
      %v2533 = vpop.f32.mrb[0].mxu0
      %v2534 = vadd.f32 %v2373, %v2533
      %v2535 = vpop.f32.mrb[0].mxu0
      %v2536 = vpop.f32.mrb[0].mxu0
      %v2537 = vadd.f32 %v2376, %v2536
      %v2538 = vpop.f32.mrb[0].mxu0
      %2539 = vmatprep.mubr.bf16.mxu0 %v1352
      %2540 = vmatmul.mubr.bf16.gmra.mrb[0].mxu0 %v1351
      %v2541 = vpop.f32.mrb[0].mxu0
      %v2542 = vadd.f32 %v2381, %v2541
      %v2543 = vpop.f32.mrb[0].mxu0
      %v2544 = vpop.f32.mrb[0].mxu0
      %v2545 = vadd.f32 %v2384, %v2544
      %v2546 = vpop.f32.mrb[0].mxu0
      %2547 = vmatprep.mubr.bf16.mxu0 %v1365
      %2548 = vmatmul.mubr.bf16.gmra.mrb[0].mxu0 %v1364
      %v2549 = vpop.f32.mrb[0].mxu0
      %v2550 = vadd.f32 %v2389, %v2549
      %v2551 = vpop.f32.mrb[0].mxu0
      %v2552 = vpop.f32.mrb[0].mxu0
      %v2553 = vadd.f32 %v2392, %v2552
      %v2554 = vpop.f32.mrb[0].mxu0
      %2555 = vmatprep.mubr.bf16.mxu0 %v1378
      %2556 = vmatmul.mubr.bf16.gmra.mrb[0].mxu0 %v1377
      %v2557 = vpop.f32.mrb[0].mxu0
      %v2558 = vadd.f32 %v2397, %v2557
      %v2559 = vpop.f32.mrb[0].mxu0
      %v2560 = vpop.f32.mrb[0].mxu0
      %v2561 = vadd.f32 %v2400, %v2560
      %v2562 = vpop.f32.mrb[0].mxu0
      %2563 = vmatprep.mubr.bf16.mxu0 %v1391
      %2564 = vmatmul.mubr.bf16.gmra.mrb[0].mxu0 %v1390
      %v2565 = vpop.f32.mrb[0].mxu0
      %v2566 = vadd.f32 %v2405, %v2565
      %v2567 = vpop.f32.mrb[0].mxu0
      %v2568 = vpop.f32.mrb[0].mxu0
      %v2569 = vadd.f32 %v2408, %v2568
      %v2570 = vpop.f32.mrb[0].mxu0
      %2571 = vmatprep.mubr.bf16.mxu0 %v1404
      %2572 = vmatmul.mubr.bf16.gmra.mrb[0].mxu0 %v1403
      %v2573 = vpop.f32.mrb[0].mxu0
      %v2574 = vadd.f32 %v2413, %v2573
      %v2575 = vpop.f32.mrb[0].mxu0
      %v2576 = vpop.f32.mrb[0].mxu0
      %v2577 = vadd.f32 %v2416, %v2576
      %v2578 = vpop.f32.mrb[0].mxu0
      %2579 = vmatprep.mubr.bf16.mxu0 %v1417
      %2580 = vmatmul.mubr.bf16.gmra.mrb[0].mxu0 %v1416
      %v2581 = vpop.f32.mrb[0].mxu0
      %v2582 = vadd.f32 %v2421, %v2581
      %v2583 = vpop.f32.mrb[0].mxu0
      %v2584 = vpop.f32.mrb[0].mxu0
      %v2585 = vadd.f32 %v2424, %v2584
      %v2586 = vpop.f32.mrb[0].mxu0
      %2587 = vmatprep.mubr.bf16.mxu0 %v1430
      %2588 = vmatmul.mubr.bf16.gmra.mrb[0].mxu0 %v1429
      %v2589 = vpop.f32.mrb[0].mxu0
      %v2590 = vadd.f32 %v2429, %v2589
      %v2591 = vpop.f32.mrb[0].mxu0
      %v2592 = vpop.f32.mrb[0].mxu0
      %v2593 = vadd.f32 %v2432, %v2592
      %v2594 = vpop.f32.mrb[0].mxu0
      %2595 = vmatprep.mubr.bf16.mxu0 %v1443
      %2596 = vmatmul.mubr.bf16.gmra.mrb[0].mxu0 %v1442
      %v2597 = vpop.f32.mrb[0].mxu0
      %v2598 = vadd.f32 %v2437, %v2597
      %v2599 = vpop.f32.mrb[0].mxu0
      %v2600 = vpop.f32.mrb[0].mxu0
      %v2601 = vadd.f32 %v2440, %v2600
      %v2602 = vpop.f32.mrb[0].mxu0
      %2603 = vdwg.mxu0
      %2604 = vmatprep.subr.bf16.mxu0 0
      %2605 = vmatpush1.bf16.msra.mxu0 %v2069
      %2606 = vmatprep.subr.bf16.mxu0 0
      %2607 = vmatpush1.bf16.msra.mxu0 %v2070
      %2608 = vmatprep.subr.bf16.mxu0 0
      %2609 = vmatpush1.bf16.msra.mxu0 %v2071
      %2610 = vmatprep.subr.bf16.mxu0 0
      %2611 = vmatpush1.bf16.msra.mxu0 %v2072
      %2612 = vmatprep.subr.bf16.mxu0 0
      %2613 = vmatpush1.bf16.msra.mxu0 %v2073
      %2614 = vmatprep.subr.bf16.mxu0 0
      %2615 = vmatpush1.bf16.msra.mxu0 %v2074
      %2616 = vmatprep.subr.bf16.mxu0 0
      %2617 = vmatpush1.bf16.msra.mxu0 %v2075
      %2618 = vmatprep.subr.bf16.mxu0 0
      %2619 = vmatpush1.bf16.msra.mxu0 %v2076
      %2620 = vmatprep.subr.bf16.mxu0 0
      %2621 = vmatpush1.bf16.msra.mxu0 %v2077
      %2622 = vmatprep.subr.bf16.mxu0 0
      %2623 = vmatpush1.bf16.msra.mxu0 %v2078
      %2624 = vmatprep.subr.bf16.mxu0 0
      %2625 = vmatpush1.bf16.msra.mxu0 %v2079
      %2626 = vmatprep.subr.bf16.mxu0 0
      %2627 = vmatpush1.bf16.msra.mxu0 %v2080
      %2628 = vmatprep.subr.bf16.mxu0 0
      %2629 = vmatpush1.bf16.msra.mxu0 %v2081
      %2630 = vmatprep.subr.bf16.mxu0 0
      %2631 = vmatpush1.bf16.msra.mxu0 %v2082
      %2632 = vmatprep.subr.bf16.mxu0 0
      %2633 = vmatpush1.bf16.msra.mxu0 %v2083
      %2634 = vmatprep.subr.bf16.mxu0 0
      %2635 = vmatpush1.bf16.msra.mxu0 %v2084
      %2636 = vmatprep.mubr.bf16.mxu0 %v1250
      %2637 = vmatmul.mubr.bf16.gmra.mrb[0].mxu0 %v1249
      %v2638 = vpop.f32.mrb[0].mxu0
      %v2639 = vadd.f32 %v2478, %v2638
      %v2640 = vpop.f32.mrb[0].mxu0
      %v2641 = vpop.f32.mrb[0].mxu0
      %v2642 = vadd.f32 %v2481, %v2641
      %v2643 = vpop.f32.mrb[0].mxu0
      %2644 = vmatprep.mubr.bf16.mxu0 %v1263
      %2645 = vmatmul.mubr.bf16.gmra.mrb[0].mxu0 %v1262
      %v2646 = vpop.f32.mrb[0].mxu0
      %v2647 = vadd.f32 %v2486, %v2646
      %v2648 = vpop.f32.mrb[0].mxu0
      %v2649 = vpop.f32.mrb[0].mxu0
      %v2650 = vadd.f32 %v2489, %v2649
      %v2651 = vpop.f32.mrb[0].mxu0
      %2652 = vmatprep.mubr.bf16.mxu0 %v1276
      %2653 = vmatmul.mubr.bf16.gmra.mrb[0].mxu0 %v1275
      %v2654 = vpop.f32.mrb[0].mxu0
      %v2655 = vadd.f32 %v2494, %v2654
      %v2656 = vpop.f32.mrb[0].mxu0
      %v2657 = vpop.f32.mrb[0].mxu0
      %v2658 = vadd.f32 %v2497, %v2657
      %v2659 = vpop.f32.mrb[0].mxu0
      %2660 = vmatprep.mubr.bf16.mxu0 %v1289
      %2661 = vmatmul.mubr.bf16.gmra.mrb[0].mxu0 %v1288
      %v2662 = vpop.f32.mrb[0].mxu0
      %v2663 = vadd.f32 %v2502, %v2662
      %v2664 = vpop.f32.mrb[0].mxu0
      %v2665 = vpop.f32.mrb[0].mxu0
      %v2666 = vadd.f32 %v2505, %v2665
      %v2667 = vpop.f32.mrb[0].mxu0
      %2668 = vmatprep.mubr.bf16.mxu0 %v1302
      %2669 = vmatmul.mubr.bf16.gmra.mrb[0].mxu0 %v1301
      %v2670 = vpop.f32.mrb[0].mxu0
      %v2671 = vadd.f32 %v2510, %v2670
      %v2672 = vpop.f32.mrb[0].mxu0
      %v2673 = vpop.f32.mrb[0].mxu0
      %v2674 = vadd.f32 %v2513, %v2673
      %v2675 = vpop.f32.mrb[0].mxu0
      %2676 = vmatprep.mubr.bf16.mxu0 %v1315
      %2677 = vmatmul.mubr.bf16.gmra.mrb[0].mxu0 %v1314
      %v2678 = vpop.f32.mrb[0].mxu0
      %v2679 = vadd.f32 %v2518, %v2678
      %v2680 = vpop.f32.mrb[0].mxu0
      %v2681 = vpop.f32.mrb[0].mxu0
      %v2682 = vadd.f32 %v2521, %v2681
      %v2683 = vpop.f32.mrb[0].mxu0
      %2684 = vmatprep.mubr.bf16.mxu0 %v1328
      %2685 = vmatmul.mubr.bf16.gmra.mrb[0].mxu0 %v1327
      %v2686 = vpop.f32.mrb[0].mxu0
      %v2687 = vadd.f32 %v2526, %v2686
      %v2688 = vpop.f32.mrb[0].mxu0
      %v2689 = vpop.f32.mrb[0].mxu0
      %v2690 = vadd.f32 %v2529, %v2689
      %v2691 = vpop.f32.mrb[0].mxu0
      %2692 = vmatprep.mubr.bf16.mxu0 %v1341
      %2693 = vmatmul.mubr.bf16.gmra.mrb[0].mxu0 %v1340
      %v2694 = vpop.f32.mrb[0].mxu0
      %v2695 = vadd.f32 %v2534, %v2694
      %v2696 = vpop.f32.mrb[0].mxu0
      %v2697 = vpop.f32.mrb[0].mxu0
      %v2698 = vadd.f32 %v2537, %v2697
      %v2699 = vpop.f32.mrb[0].mxu0
      %2700 = vmatprep.mubr.bf16.mxu0 %v1354
      %2701 = vmatmul.mubr.bf16.gmra.mrb[0].mxu0 %v1353
      %v2702 = vpop.f32.mrb[0].mxu0
      %v2703 = vadd.f32 %v2542, %v2702
      %v2704 = vpop.f32.mrb[0].mxu0
      %v2705 = vpop.f32.mrb[0].mxu0
      %v2706 = vadd.f32 %v2545, %v2705
      %v2707 = vpop.f32.mrb[0].mxu0
      %2708 = vmatprep.mubr.bf16.mxu0 %v1367
      %2709 = vmatmul.mubr.bf16.gmra.mrb[0].mxu0 %v1366
      %v2710 = vpop.f32.mrb[0].mxu0
      %v2711 = vadd.f32 %v2550, %v2710
      %v2712 = vpop.f32.mrb[0].mxu0
      %v2713 = vpop.f32.mrb[0].mxu0
      %v2714 = vadd.f32 %v2553, %v2713
      %v2715 = vpop.f32.mrb[0].mxu0
      %2716 = vmatprep.mubr.bf16.mxu0 %v1380
      %2717 = vmatmul.mubr.bf16.gmra.mrb[0].mxu0 %v1379
      %v2718 = vpop.f32.mrb[0].mxu0
      %v2719 = vadd.f32 %v2558, %v2718
      %v2720 = vpop.f32.mrb[0].mxu0
      %v2721 = vpop.f32.mrb[0].mxu0
      %v2722 = vadd.f32 %v2561, %v2721
      %v2723 = vpop.f32.mrb[0].mxu0
      %2724 = vmatprep.mubr.bf16.mxu0 %v1393
      %2725 = vmatmul.mubr.bf16.gmra.mrb[0].mxu0 %v1392
      %v2726 = vpop.f32.mrb[0].mxu0
      %v2727 = vadd.f32 %v2566, %v2726
      %v2728 = vpop.f32.mrb[0].mxu0
      %v2729 = vpop.f32.mrb[0].mxu0
      %v2730 = vadd.f32 %v2569, %v2729
      %v2731 = vpop.f32.mrb[0].mxu0
      %2732 = vmatprep.mubr.bf16.mxu0 %v1406
      %2733 = vmatmul.mubr.bf16.gmra.mrb[0].mxu0 %v1405
      %v2734 = vpop.f32.mrb[0].mxu0
      %v2735 = vadd.f32 %v2574, %v2734
      %v2736 = vpop.f32.mrb[0].mxu0
      %v2737 = vpop.f32.mrb[0].mxu0
      %v2738 = vadd.f32 %v2577, %v2737
      %v2739 = vpop.f32.mrb[0].mxu0
      %2740 = vmatprep.mubr.bf16.mxu0 %v1419
      %2741 = vmatmul.mubr.bf16.gmra.mrb[0].mxu0 %v1418
      %v2742 = vpop.f32.mrb[0].mxu0
      %v2743 = vadd.f32 %v2582, %v2742
      %v2744 = vpop.f32.mrb[0].mxu0
      %v2745 = vpop.f32.mrb[0].mxu0
      %v2746 = vadd.f32 %v2585, %v2745
      %v2747 = vpop.f32.mrb[0].mxu0
      %2748 = vmatprep.mubr.bf16.mxu0 %v1432
      %2749 = vmatmul.mubr.bf16.gmra.mrb[0].mxu0 %v1431
      %v2750 = vpop.f32.mrb[0].mxu0
      %v2751 = vadd.f32 %v2590, %v2750
      %v2752 = vpop.f32.mrb[0].mxu0
      %v2753 = vpop.f32.mrb[0].mxu0
      %v2754 = vadd.f32 %v2593, %v2753
      %v2755 = vpop.f32.mrb[0].mxu0
      %2756 = vmatprep.mubr.bf16.mxu0 %v1445
      %2757 = vmatmul.mubr.bf16.gmra.mrb[0].mxu0 %v1444
      %v2758 = vpop.f32.mrb[0].mxu0
      %v2759 = vadd.f32 %v2598, %v2758
      %v2760 = vpop.f32.mrb[0].mxu0
      %v2761 = vpop.f32.mrb[0].mxu0
      %v2762 = vadd.f32 %v2601, %v2761
      %v2763 = vpop.f32.mrb[0].mxu0
      %2764 = vdwg.mxu0
      %2765 = vmatprep.subr.bf16.mxu0 0
      %2766 = vmatpush1.bf16.msra.mxu0 %v2085
      %2767 = vmatprep.subr.bf16.mxu0 0
      %2768 = vmatpush1.bf16.msra.mxu0 %v2086
      %2769 = vmatprep.subr.bf16.mxu0 0
      %2770 = vmatpush1.bf16.msra.mxu0 %v2087
      %2771 = vmatprep.subr.bf16.mxu0 0
      %2772 = vmatpush1.bf16.msra.mxu0 %v2088
      %2773 = vmatprep.subr.bf16.mxu0 0
      %2774 = vmatpush1.bf16.msra.mxu0 %v2089
      %2775 = vmatprep.subr.bf16.mxu0 0
      %2776 = vmatpush1.bf16.msra.mxu0 %v2090
      %2777 = vmatprep.subr.bf16.mxu0 0
      %2778 = vmatpush1.bf16.msra.mxu0 %v2091
      %2779 = vmatprep.subr.bf16.mxu0 0
      %2780 = vmatpush1.bf16.msra.mxu0 %v2092
      %2781 = vmatprep.subr.bf16.mxu0 0
      %2782 = vmatpush1.bf16.msra.mxu0 %v2093
      %2783 = vmatprep.subr.bf16.mxu0 0
      %2784 = vmatpush1.bf16.msra.mxu0 %v2094
      %2785 = vmatprep.subr.bf16.mxu0 0
      %2786 = vmatpush1.bf16.msra.mxu0 %v2095
      %2787 = vmatprep.subr.bf16.mxu0 0
      %2788 = vmatpush1.bf16.msra.mxu0 %v2096
      %2789 = vmatprep.subr.bf16.mxu0 0
      %2790 = vmatpush1.bf16.msra.mxu0 %v2097
      %2791 = vmatprep.subr.bf16.mxu0 0
      %2792 = vmatpush1.bf16.msra.mxu0 %v2098
      %2793 = vmatprep.subr.bf16.mxu0 0
      %2794 = vmatpush1.bf16.msra.mxu0 %v2099
      %2795 = vmatprep.subr.bf16.mxu0 0
      %2796 = vmatpush1.bf16.msra.mxu0 %v2100
      %2797 = vmatprep.mubr.bf16.mxu0 %v1252
      %2798 = vmatmul.mubr.bf16.gmra.mrb[0].mxu0 %v1251
      %v2799 = vpop.f32.mrb[0].mxu0
      %v2800 = vadd.f32 %v2639, %v2799
      %v2801 = vpop.f32.mrb[0].mxu0
      %v2802 = vpop.f32.mrb[0].mxu0
      %v2803 = vadd.f32 %v2642, %v2802
      %v2804 = vpop.f32.mrb[0].mxu0
      %2805 = vmatprep.mubr.bf16.mxu0 %v1265
      %2806 = vmatmul.mubr.bf16.gmra.mrb[0].mxu0 %v1264
      %v2807 = vpop.f32.mrb[0].mxu0
      %v2808 = vadd.f32 %v2647, %v2807
      %v2809 = vpop.f32.mrb[0].mxu0
      %v2810 = vpop.f32.mrb[0].mxu0
      %v2811 = vadd.f32 %v2650, %v2810
      %v2812 = vpop.f32.mrb[0].mxu0
      %2813 = vmatprep.mubr.bf16.mxu0 %v1278
      %2814 = vmatmul.mubr.bf16.gmra.mrb[0].mxu0 %v1277
      %v2815 = vpop.f32.mrb[0].mxu0
      %v2816 = vadd.f32 %v2655, %v2815
      %v2817 = vpop.f32.mrb[0].mxu0
      %v2818 = vpop.f32.mrb[0].mxu0
      %v2819 = vadd.f32 %v2658, %v2818
      %v2820 = vpop.f32.mrb[0].mxu0
      %2821 = vmatprep.mubr.bf16.mxu0 %v1291
      %2822 = vmatmul.mubr.bf16.gmra.mrb[0].mxu0 %v1290
      %v2823 = vpop.f32.mrb[0].mxu0
      %v2824 = vadd.f32 %v2663, %v2823
      %v2825 = vpop.f32.mrb[0].mxu0
      %v2826 = vpop.f32.mrb[0].mxu0
      %v2827 = vadd.f32 %v2666, %v2826
      %v2828 = vpop.f32.mrb[0].mxu0
      %2829 = vmatprep.mubr.bf16.mxu0 %v1304
      %2830 = vmatmul.mubr.bf16.gmra.mrb[0].mxu0 %v1303
      %v2831 = vpop.f32.mrb[0].mxu0
      %v2832 = vadd.f32 %v2671, %v2831
      %v2833 = vpop.f32.mrb[0].mxu0
      %v2834 = vpop.f32.mrb[0].mxu0
      %v2835 = vadd.f32 %v2674, %v2834
      %v2836 = vpop.f32.mrb[0].mxu0
      %2837 = vmatprep.mubr.bf16.mxu0 %v1317
      %2838 = vmatmul.mubr.bf16.gmra.mrb[0].mxu0 %v1316
      %v2839 = vpop.f32.mrb[0].mxu0
      %v2840 = vadd.f32 %v2679, %v2839
      %v2841 = vpop.f32.mrb[0].mxu0
      %v2842 = vpop.f32.mrb[0].mxu0
      %v2843 = vadd.f32 %v2682, %v2842
      %v2844 = vpop.f32.mrb[0].mxu0
      %2845 = vmatprep.mubr.bf16.mxu0 %v1330
      %2846 = vmatmul.mubr.bf16.gmra.mrb[0].mxu0 %v1329
      %v2847 = vpop.f32.mrb[0].mxu0
      %v2848 = vadd.f32 %v2687, %v2847
      %v2849 = vpop.f32.mrb[0].mxu0
      %v2850 = vpop.f32.mrb[0].mxu0
      %v2851 = vadd.f32 %v2690, %v2850
      %v2852 = vpop.f32.mrb[0].mxu0
      %2853 = vmatprep.mubr.bf16.mxu0 %v1343
      %2854 = vmatmul.mubr.bf16.gmra.mrb[0].mxu0 %v1342
      %v2855 = vpop.f32.mrb[0].mxu0
      %v2856 = vadd.f32 %v2695, %v2855
      %v2857 = vpop.f32.mrb[0].mxu0
      %v2858 = vpop.f32.mrb[0].mxu0
      %v2859 = vadd.f32 %v2698, %v2858
      %v2860 = vpop.f32.mrb[0].mxu0
      %2861 = vmatprep.mubr.bf16.mxu0 %v1356
      %2862 = vmatmul.mubr.bf16.gmra.mrb[0].mxu0 %v1355
      %v2863 = vpop.f32.mrb[0].mxu0
      %v2864 = vadd.f32 %v2703, %v2863
      %v2865 = vpop.f32.mrb[0].mxu0
      %v2866 = vpop.f32.mrb[0].mxu0
      %v2867 = vadd.f32 %v2706, %v2866
      %v2868 = vpop.f32.mrb[0].mxu0
      %2869 = vmatprep.mubr.bf16.mxu0 %v1369
      %2870 = vmatmul.mubr.bf16.gmra.mrb[0].mxu0 %v1368
      %v2871 = vpop.f32.mrb[0].mxu0
      %v2872 = vadd.f32 %v2711, %v2871
      %v2873 = vpop.f32.mrb[0].mxu0
      %v2874 = vpop.f32.mrb[0].mxu0
      %v2875 = vadd.f32 %v2714, %v2874
      %v2876 = vpop.f32.mrb[0].mxu0
      %2877 = vmatprep.mubr.bf16.mxu0 %v1382
      %2878 = vmatmul.mubr.bf16.gmra.mrb[0].mxu0 %v1381
      %v2879 = vpop.f32.mrb[0].mxu0
      %v2880 = vadd.f32 %v2719, %v2879
      %v2881 = vpop.f32.mrb[0].mxu0
      %v2882 = vpop.f32.mrb[0].mxu0
      %v2883 = vadd.f32 %v2722, %v2882
      %v2884 = vpop.f32.mrb[0].mxu0
      %2885 = vmatprep.mubr.bf16.mxu0 %v1395
      %2886 = vmatmul.mubr.bf16.gmra.mrb[0].mxu0 %v1394
      %v2887 = vpop.f32.mrb[0].mxu0
      %v2888 = vadd.f32 %v2727, %v2887
      %v2889 = vpop.f32.mrb[0].mxu0
      %v2890 = vpop.f32.mrb[0].mxu0
      %v2891 = vadd.f32 %v2730, %v2890
      %v2892 = vpop.f32.mrb[0].mxu0
      %2893 = vmatprep.mubr.bf16.mxu0 %v1408
      %2894 = vmatmul.mubr.bf16.gmra.mrb[0].mxu0 %v1407
      %v2895 = vpop.f32.mrb[0].mxu0
      %v2896 = vadd.f32 %v2735, %v2895
      %v2897 = vpop.f32.mrb[0].mxu0
      %v2898 = vpop.f32.mrb[0].mxu0
      %v2899 = vadd.f32 %v2738, %v2898
      %v2900 = vpop.f32.mrb[0].mxu0
      %2901 = vmatprep.mubr.bf16.mxu0 %v1421
      %2902 = vmatmul.mubr.bf16.gmra.mrb[0].mxu0 %v1420
      %v2903 = vpop.f32.mrb[0].mxu0
      %v2904 = vadd.f32 %v2743, %v2903
      %v2905 = vpop.f32.mrb[0].mxu0
      %v2906 = vpop.f32.mrb[0].mxu0
      %v2907 = vadd.f32 %v2746, %v2906
      %v2908 = vpop.f32.mrb[0].mxu0
      %2909 = vmatprep.mubr.bf16.mxu0 %v1434
      %2910 = vmatmul.mubr.bf16.gmra.mrb[0].mxu0 %v1433
      %v2911 = vpop.f32.mrb[0].mxu0
      %v2912 = vadd.f32 %v2751, %v2911
      %v2913 = vpop.f32.mrb[0].mxu0
      %v2914 = vpop.f32.mrb[0].mxu0
      %v2915 = vadd.f32 %v2754, %v2914
      %v2916 = vpop.f32.mrb[0].mxu0
      %2917 = vmatprep.mubr.bf16.mxu0 %v1447
      %2918 = vmatmul.mubr.bf16.gmra.mrb[0].mxu0 %v1446
      %v2919 = vpop.f32.mrb[0].mxu0
      %v2920 = vadd.f32 %v2759, %v2919
      %v2921 = vpop.f32.mrb[0].mxu0
      %v2922 = vpop.f32.mrb[0].mxu0
      %v2923 = vadd.f32 %v2762, %v2922
      %v2924 = vpop.f32.mrb[0].mxu0
      %2925 = vdwg.mxu0
      %2926 = vmatprep.subr.bf16.mxu0 0
      %2927 = vmatpush1.bf16.msra.mxu0 %v2101
      %2928 = vmatprep.subr.bf16.mxu0 0
      %2929 = vmatpush1.bf16.msra.mxu0 %v2102
      %2930 = vmatprep.subr.bf16.mxu0 0
      %2931 = vmatpush1.bf16.msra.mxu0 %v2103
      %2932 = vmatprep.subr.bf16.mxu0 0
      %2933 = vmatpush1.bf16.msra.mxu0 %v2104
      %2934 = vmatprep.subr.bf16.mxu0 0
      %2935 = vmatpush1.bf16.msra.mxu0 %v2105
      %2936 = vmatprep.subr.bf16.mxu0 0
      %2937 = vmatpush1.bf16.msra.mxu0 %v2106
      %2938 = vmatprep.subr.bf16.mxu0 0
      %2939 = vmatpush1.bf16.msra.mxu0 %v2107
      %2940 = vmatprep.subr.bf16.mxu0 0
      %2941 = vmatpush1.bf16.msra.mxu0 %v2108
      %2942 = vmatprep.subr.bf16.mxu0 0
      %2943 = vmatpush1.bf16.msra.mxu0 %v2109
      %2944 = vmatprep.subr.bf16.mxu0 0
      %2945 = vmatpush1.bf16.msra.mxu0 %v2110
      %2946 = vmatprep.subr.bf16.mxu0 0
      %2947 = vmatpush1.bf16.msra.mxu0 %v2111
      %2948 = vmatprep.subr.bf16.mxu0 0
      %2949 = vmatpush1.bf16.msra.mxu0 %v2112
      %2950 = vmatprep.subr.bf16.mxu0 0
      %2951 = vmatpush1.bf16.msra.mxu0 %v2113
      %2952 = vmatprep.subr.bf16.mxu0 0
      %2953 = vmatpush1.bf16.msra.mxu0 %v2114
      %2954 = vmatprep.subr.bf16.mxu0 0
      %2955 = vmatpush1.bf16.msra.mxu0 %v2115
      %2956 = vmatprep.subr.bf16.mxu0 0
      %2957 = vmatpush1.bf16.msra.mxu0 %v2116
      %2958 = vmatprep.mubr.bf16.mxu0 %v1254
      %2959 = vmatmul.mubr.bf16.gmra.mrb[0].mxu0 %v1253
      %v2960 = vpop.f32.mrb[0].mxu0
      %v2961 = vadd.f32 %v2800, %v2960
      %v2962 = vpop.f32.mrb[0].mxu0
      %v2963 = vpop.f32.mrb[0].mxu0
      %v2964 = vadd.f32 %v2803, %v2963
      %v2965 = vpop.f32.mrb[0].mxu0
      %2966 = vmatprep.mubr.bf16.mxu0 %v1267
      %2967 = vmatmul.mubr.bf16.gmra.mrb[0].mxu0 %v1266
      %v2968 = vpop.f32.mrb[0].mxu0
      %v2969 = vadd.f32 %v2808, %v2968
      %v2970 = vpop.f32.mrb[0].mxu0
      %v2971 = vpop.f32.mrb[0].mxu0
      %v2972 = vadd.f32 %v2811, %v2971
      %v2973 = vpop.f32.mrb[0].mxu0
      %2974 = vmatprep.mubr.bf16.mxu0 %v1280
      %2975 = vmatmul.mubr.bf16.gmra.mrb[0].mxu0 %v1279
      %v2976 = vpop.f32.mrb[0].mxu0
      %v2977 = vadd.f32 %v2816, %v2976
      %v2978 = vpop.f32.mrb[0].mxu0
      %v2979 = vpop.f32.mrb[0].mxu0
      %v2980 = vadd.f32 %v2819, %v2979
      %v2981 = vpop.f32.mrb[0].mxu0
      %2982 = vmatprep.mubr.bf16.mxu0 %v1293
      %2983 = vmatmul.mubr.bf16.gmra.mrb[0].mxu0 %v1292
      %v2984 = vpop.f32.mrb[0].mxu0
      %v2985 = vadd.f32 %v2824, %v2984
      %v2986 = vpop.f32.mrb[0].mxu0
      %v2987 = vpop.f32.mrb[0].mxu0
      %v2988 = vadd.f32 %v2827, %v2987
      %v2989 = vpop.f32.mrb[0].mxu0
      %2990 = vmatprep.mubr.bf16.mxu0 %v1306
      %2991 = vmatmul.mubr.bf16.gmra.mrb[0].mxu0 %v1305
      %v2992 = vpop.f32.mrb[0].mxu0
      %v2993 = vadd.f32 %v2832, %v2992
      %v2994 = vpop.f32.mrb[0].mxu0
      %v2995 = vpop.f32.mrb[0].mxu0
      %v2996 = vadd.f32 %v2835, %v2995
      %v2997 = vpop.f32.mrb[0].mxu0
      %2998 = vmatprep.mubr.bf16.mxu0 %v1319
      %2999 = vmatmul.mubr.bf16.gmra.mrb[0].mxu0 %v1318
      %v3000 = vpop.f32.mrb[0].mxu0
      %v3001 = vadd.f32 %v2840, %v3000
      %v3002 = vpop.f32.mrb[0].mxu0
      %v3003 = vpop.f32.mrb[0].mxu0
      %v3004 = vadd.f32 %v2843, %v3003
      %v3005 = vpop.f32.mrb[0].mxu0
      %3006 = vmatprep.mubr.bf16.mxu0 %v1332
      %3007 = vmatmul.mubr.bf16.gmra.mrb[0].mxu0 %v1331
      %v3008 = vpop.f32.mrb[0].mxu0
      %v3009 = vadd.f32 %v2848, %v3008
      %v3010 = vpop.f32.mrb[0].mxu0
      %v3011 = vpop.f32.mrb[0].mxu0
      %v3012 = vadd.f32 %v2851, %v3011
      %v3013 = vpop.f32.mrb[0].mxu0
      %3014 = vmatprep.mubr.bf16.mxu0 %v1345
      %3015 = vmatmul.mubr.bf16.gmra.mrb[0].mxu0 %v1344
      %v3016 = vpop.f32.mrb[0].mxu0
      %v3017 = vadd.f32 %v2856, %v3016
      %v3018 = vpop.f32.mrb[0].mxu0
      %v3019 = vpop.f32.mrb[0].mxu0
      %v3020 = vadd.f32 %v2859, %v3019
      %v3021 = vpop.f32.mrb[0].mxu0
      %3022 = vmatprep.mubr.bf16.mxu0 %v1358
      %3023 = vmatmul.mubr.bf16.gmra.mrb[0].mxu0 %v1357
      %v3024 = vpop.f32.mrb[0].mxu0
      %v3025 = vadd.f32 %v2864, %v3024
      %v3026 = vpop.f32.mrb[0].mxu0
      %v3027 = vpop.f32.mrb[0].mxu0
      %v3028 = vadd.f32 %v2867, %v3027
      %v3029 = vpop.f32.mrb[0].mxu0
      %3030 = vmatprep.mubr.bf16.mxu0 %v1371
      %3031 = vmatmul.mubr.bf16.gmra.mrb[0].mxu0 %v1370
      %v3032 = vpop.f32.mrb[0].mxu0
      %v3033 = vadd.f32 %v2872, %v3032
      %v3034 = vpop.f32.mrb[0].mxu0
      %v3035 = vpop.f32.mrb[0].mxu0
      %v3036 = vadd.f32 %v2875, %v3035
      %v3037 = vpop.f32.mrb[0].mxu0
      %3038 = vmatprep.mubr.bf16.mxu0 %v1384
      %3039 = vmatmul.mubr.bf16.gmra.mrb[0].mxu0 %v1383
      %v3040 = vpop.f32.mrb[0].mxu0
      %v3041 = vadd.f32 %v2880, %v3040
      %v3042 = vpop.f32.mrb[0].mxu0
      %v3043 = vpop.f32.mrb[0].mxu0
      %v3044 = vadd.f32 %v2883, %v3043
      %v3045 = vpop.f32.mrb[0].mxu0
      %3046 = vmatprep.mubr.bf16.mxu0 %v1397
      %3047 = vmatmul.mubr.bf16.gmra.mrb[0].mxu0 %v1396
      %v3048 = vpop.f32.mrb[0].mxu0
      %v3049 = vadd.f32 %v2888, %v3048
      %v3050 = vpop.f32.mrb[0].mxu0
      %v3051 = vpop.f32.mrb[0].mxu0
      %v3052 = vadd.f32 %v2891, %v3051
      %v3053 = vpop.f32.mrb[0].mxu0
      %3054 = vmatprep.mubr.bf16.mxu0 %v1410
      %3055 = vmatmul.mubr.bf16.gmra.mrb[0].mxu0 %v1409
      %v3056 = vpop.f32.mrb[0].mxu0
      %v3057 = vadd.f32 %v2896, %v3056
      %v3058 = vpop.f32.mrb[0].mxu0
      %v3059 = vpop.f32.mrb[0].mxu0
      %v3060 = vadd.f32 %v2899, %v3059
      %v3061 = vpop.f32.mrb[0].mxu0
      %3062 = vmatprep.mubr.bf16.mxu0 %v1423
      %3063 = vmatmul.mubr.bf16.gmra.mrb[0].mxu0 %v1422
      %v3064 = vpop.f32.mrb[0].mxu0
      %v3065 = vadd.f32 %v2904, %v3064
      %v3066 = vpop.f32.mrb[0].mxu0
      %v3067 = vpop.f32.mrb[0].mxu0
      %v3068 = vadd.f32 %v2907, %v3067
      %v3069 = vpop.f32.mrb[0].mxu0
      %3070 = vmatprep.mubr.bf16.mxu0 %v1436
      %3071 = vmatmul.mubr.bf16.gmra.mrb[0].mxu0 %v1435
      %v3072 = vpop.f32.mrb[0].mxu0
      %v3073 = vadd.f32 %v2912, %v3072
      %v3074 = vpop.f32.mrb[0].mxu0
      %v3075 = vpop.f32.mrb[0].mxu0
      %v3076 = vadd.f32 %v2915, %v3075
      %v3077 = vpop.f32.mrb[0].mxu0
      %3078 = vmatprep.mubr.bf16.mxu0 %v1449
      %3079 = vmatmul.mubr.bf16.gmra.mrb[0].mxu0 %v1448
      %v3080 = vpop.f32.mrb[0].mxu0
      %v3081 = vadd.f32 %v2920, %v3080
      %v3082 = vpop.f32.mrb[0].mxu0
      %v3083 = vpop.f32.mrb[0].mxu0
      %v3084 = vadd.f32 %v2923, %v3083
      %v3085 = vpop.f32.mrb[0].mxu0
      %3086 = vdwg.mxu0
      %3087 = vmatprep.subr.bf16.mxu0 0
      %3088 = vmatpush1.bf16.msra.mxu0 %v2117
      %3089 = vmatprep.subr.bf16.mxu0 0
      %3090 = vmatpush1.bf16.msra.mxu0 %v2118
      %3091 = vmatprep.subr.bf16.mxu0 0
      %3092 = vmatpush1.bf16.msra.mxu0 %v2119
      %3093 = vmatprep.subr.bf16.mxu0 0
      %3094 = vmatpush1.bf16.msra.mxu0 %v2120
      %3095 = vmatprep.subr.bf16.mxu0 0
      %3096 = vmatpush1.bf16.msra.mxu0 %v2121
      %3097 = vmatprep.subr.bf16.mxu0 0
      %3098 = vmatpush1.bf16.msra.mxu0 %v2122
      %3099 = vmatprep.subr.bf16.mxu0 0
      %3100 = vmatpush1.bf16.msra.mxu0 %v2123
      %3101 = vmatprep.subr.bf16.mxu0 0
      %3102 = vmatpush1.bf16.msra.mxu0 %v2124
      %3103 = vmatprep.subr.bf16.mxu0 0
      %3104 = vmatpush1.bf16.msra.mxu0 %v2125
      %3105 = vmatprep.subr.bf16.mxu0 0
      %3106 = vmatpush1.bf16.msra.mxu0 %v2126
      %3107 = vmatprep.subr.bf16.mxu0 0
      %3108 = vmatpush1.bf16.msra.mxu0 %v2127
      %3109 = vmatprep.subr.bf16.mxu0 0
      %3110 = vmatpush1.bf16.msra.mxu0 %v2128
      %3111 = vmatprep.subr.bf16.mxu0 0
      %3112 = vmatpush1.bf16.msra.mxu0 %v2129
      %3113 = vmatprep.subr.bf16.mxu0 0
      %3114 = vmatpush1.bf16.msra.mxu0 %v2130
      %3115 = vmatprep.subr.bf16.mxu0 0
      %3116 = vmatpush1.bf16.msra.mxu0 %v2131
      %3117 = vmatprep.subr.bf16.mxu0 0
      %3118 = vmatpush1.bf16.msra.mxu0 %v2132
      %3119 = vmatprep.mubr.bf16.mxu0 %v1256
      %3120 = vmatmul.mubr.bf16.gmra.mrb[0].mxu0 %v1255
      %v3121 = vpop.f32.mrb[0].mxu0
      %v3122 = vadd.f32 %v2961, %v3121
      %v3123 = vpop.f32.mrb[0].mxu0
      %v3124 = vpop.f32.mrb[0].mxu0
      %v3125 = vadd.f32 %v2964, %v3124
      %v3126 = vpop.f32.mrb[0].mxu0
      %3127 = vmatprep.mubr.bf16.mxu0 %v1269
      %3128 = vmatmul.mubr.bf16.gmra.mrb[0].mxu0 %v1268
      %v3129 = vpop.f32.mrb[0].mxu0
      %v3130 = vadd.f32 %v2969, %v3129
      %v3131 = vpop.f32.mrb[0].mxu0
      %v3132 = vpop.f32.mrb[0].mxu0
      %v3133 = vadd.f32 %v2972, %v3132
      %v3134 = vpop.f32.mrb[0].mxu0
      %3135 = vmatprep.mubr.bf16.mxu0 %v1282
      %3136 = vmatmul.mubr.bf16.gmra.mrb[0].mxu0 %v1281
      %v3137 = vpop.f32.mrb[0].mxu0
      %v3138 = vadd.f32 %v2977, %v3137
      %v3139 = vpop.f32.mrb[0].mxu0
      %v3140 = vpop.f32.mrb[0].mxu0
      %v3141 = vadd.f32 %v2980, %v3140
      %v3142 = vpop.f32.mrb[0].mxu0
      %3143 = vmatprep.mubr.bf16.mxu0 %v1295
      %3144 = vmatmul.mubr.bf16.gmra.mrb[0].mxu0 %v1294
      %v3145 = vpop.f32.mrb[0].mxu0
      %v3146 = vadd.f32 %v2985, %v3145
      %v3147 = vpop.f32.mrb[0].mxu0
      %v3148 = vpop.f32.mrb[0].mxu0
      %v3149 = vadd.f32 %v2988, %v3148
      %v3150 = vpop.f32.mrb[0].mxu0
      %3151 = vmatprep.mubr.bf16.mxu0 %v1308
      %3152 = vmatmul.mubr.bf16.gmra.mrb[0].mxu0 %v1307
      %v3153 = vpop.f32.mrb[0].mxu0
      %v3154 = vadd.f32 %v2993, %v3153
      %v3155 = vpop.f32.mrb[0].mxu0
      %v3156 = vpop.f32.mrb[0].mxu0
      %v3157 = vadd.f32 %v2996, %v3156
      %v3158 = vpop.f32.mrb[0].mxu0
      %3159 = vmatprep.mubr.bf16.mxu0 %v1321
      %3160 = vmatmul.mubr.bf16.gmra.mrb[0].mxu0 %v1320
      %v3161 = vpop.f32.mrb[0].mxu0
      %v3162 = vadd.f32 %v3001, %v3161
      %v3163 = vpop.f32.mrb[0].mxu0
      %v3164 = vpop.f32.mrb[0].mxu0
      %v3165 = vadd.f32 %v3004, %v3164
      %v3166 = vpop.f32.mrb[0].mxu0
      %3167 = vmatprep.mubr.bf16.mxu0 %v1334
      %3168 = vmatmul.mubr.bf16.gmra.mrb[0].mxu0 %v1333
      %v3169 = vpop.f32.mrb[0].mxu0
      %v3170 = vadd.f32 %v3009, %v3169
      %v3171 = vpop.f32.mrb[0].mxu0
      %v3172 = vpop.f32.mrb[0].mxu0
      %v3173 = vadd.f32 %v3012, %v3172
      %v3174 = vpop.f32.mrb[0].mxu0
      %3175 = vmatprep.mubr.bf16.mxu0 %v1347
      %3176 = vmatmul.mubr.bf16.gmra.mrb[0].mxu0 %v1346
      %v3177 = vpop.f32.mrb[0].mxu0
      %v3178 = vadd.f32 %v3017, %v3177
      %v3179 = vpop.f32.mrb[0].mxu0
      %v3180 = vpop.f32.mrb[0].mxu0
      %v3181 = vadd.f32 %v3020, %v3180
      %v3182 = vpop.f32.mrb[0].mxu0
      %3183 = vmatprep.mubr.bf16.mxu0 %v1360
      %3184 = vmatmul.mubr.bf16.gmra.mrb[0].mxu0 %v1359
      %v3185 = vpop.f32.mrb[0].mxu0
      %v3186 = vadd.f32 %v3025, %v3185
      %v3187 = vpop.f32.mrb[0].mxu0
      %v3188 = vpop.f32.mrb[0].mxu0
      %v3189 = vadd.f32 %v3028, %v3188
      %v3190 = vpop.f32.mrb[0].mxu0
      %3191 = vmatprep.mubr.bf16.mxu0 %v1373
      %3192 = vmatmul.mubr.bf16.gmra.mrb[0].mxu0 %v1372
      %v3193 = vpop.f32.mrb[0].mxu0
      %v3194 = vadd.f32 %v3033, %v3193
      %v3195 = vpop.f32.mrb[0].mxu0
      %v3196 = vpop.f32.mrb[0].mxu0
      %v3197 = vadd.f32 %v3036, %v3196
      %v3198 = vpop.f32.mrb[0].mxu0
      %3199 = vmatprep.mubr.bf16.mxu0 %v1386
      %3200 = vmatmul.mubr.bf16.gmra.mrb[0].mxu0 %v1385
      %v3201 = vpop.f32.mrb[0].mxu0
      %v3202 = vadd.f32 %v3041, %v3201
      %v3203 = vpop.f32.mrb[0].mxu0
      %v3204 = vpop.f32.mrb[0].mxu0
      %v3205 = vadd.f32 %v3044, %v3204
      %v3206 = vpop.f32.mrb[0].mxu0
      %3207 = vmatprep.mubr.bf16.mxu0 %v1399
      %3208 = vmatmul.mubr.bf16.gmra.mrb[0].mxu0 %v1398
      %v3209 = vpop.f32.mrb[0].mxu0
      %v3210 = vadd.f32 %v3049, %v3209
      %v3211 = vpop.f32.mrb[0].mxu0
      %v3212 = vpop.f32.mrb[0].mxu0
      %v3213 = vadd.f32 %v3052, %v3212
      %v3214 = vpop.f32.mrb[0].mxu0
      %3215 = vmatprep.mubr.bf16.mxu0 %v1412
      %3216 = vmatmul.mubr.bf16.gmra.mrb[0].mxu0 %v1411
      %v3217 = vpop.f32.mrb[0].mxu0
      %v3218 = vadd.f32 %v3057, %v3217
      %v3219 = vpop.f32.mrb[0].mxu0
      %v3220 = vpop.f32.mrb[0].mxu0
      %v3221 = vadd.f32 %v3060, %v3220
      %v3222 = vpop.f32.mrb[0].mxu0
      %3223 = vmatprep.mubr.bf16.mxu0 %v1425
      %3224 = vmatmul.mubr.bf16.gmra.mrb[0].mxu0 %v1424
      %v3225 = vpop.f32.mrb[0].mxu0
      %v3226 = vadd.f32 %v3065, %v3225
      %v3227 = vpop.f32.mrb[0].mxu0
      %v3228 = vpop.f32.mrb[0].mxu0
      %v3229 = vadd.f32 %v3068, %v3228
      %v3230 = vpop.f32.mrb[0].mxu0
      %3231 = vmatprep.mubr.bf16.mxu0 %v1438
      %3232 = vmatmul.mubr.bf16.gmra.mrb[0].mxu0 %v1437
      %v3233 = vpop.f32.mrb[0].mxu0
      %v3234 = vadd.f32 %v3073, %v3233
      %v3235 = vpop.f32.mrb[0].mxu0
      %v3236 = vpop.f32.mrb[0].mxu0
      %v3237 = vadd.f32 %v3076, %v3236
      %v3238 = vpop.f32.mrb[0].mxu0
      %3239 = vmatprep.mubr.bf16.mxu0 %v1451
      %3240 = vmatmul.mubr.bf16.gmra.mrb[0].mxu0 %v1450
      %v3241 = vpop.f32.mrb[0].mxu0
      %v3242 = vadd.f32 %v3081, %v3241
      %v3243 = vpop.f32.mrb[0].mxu0
      %v3244 = vpop.f32.mrb[0].mxu0
      %v3245 = vadd.f32 %v3084, %v3244
      %v3246 = vpop.f32.mrb[0].mxu0
      %3247 = vdwg.mxu0
      %3248 = vmatprep.subr.bf16.mxu0 0
      %3249 = vmatpush1.bf16.msra.mxu0 %v2133
      %3250 = vmatprep.subr.bf16.mxu0 0
      %3251 = vmatpush1.bf16.msra.mxu0 %v2134
      %3252 = vmatprep.subr.bf16.mxu0 0
      %3253 = vmatpush1.bf16.msra.mxu0 0
      %3254 = vmatprep.subr.bf16.mxu0 0
      %3255 = vmatpush1.bf16.msra.mxu0 0
      %3256 = vmatprep.subr.bf16.mxu0 0
      %3257 = vmatpush1.bf16.msra.mxu0 0
      %3258 = vmatprep.subr.bf16.mxu0 0
      %3259 = vmatpush1.bf16.msra.mxu0 0
      %3260 = vmatprep.subr.bf16.mxu0 0
      %3261 = vmatpush1.bf16.msra.mxu0 0
      %3262 = vmatprep.subr.bf16.mxu0 0
      %3263 = vmatpush1.bf16.msra.mxu0 0
      %3264 = vmatprep.subr.bf16.mxu0 0
      %3265 = vmatpush1.bf16.msra.mxu0 0
      %3266 = vmatprep.subr.bf16.mxu0 0
      %3267 = vmatpush1.bf16.msra.mxu0 0
      %3268 = vmatprep.subr.bf16.mxu0 0
      %3269 = vmatpush1.bf16.msra.mxu0 0
      %3270 = vmatprep.subr.bf16.mxu0 0
      %3271 = vmatpush1.bf16.msra.mxu0 0
      %3272 = vmatprep.subr.bf16.mxu0 0
      %3273 = vmatpush1.bf16.msra.mxu0 0
      %3274 = vmatprep.subr.bf16.mxu0 0
      %3275 = vmatpush1.bf16.msra.mxu0 0
      %3276 = vmatprep.subr.bf16.mxu0 0
      %3277 = vmatpush1.bf16.msra.mxu0 0
      %3278 = vmatprep.subr.bf16.mxu0 0
      %3279 = vmatpush1.bf16.msra.mxu0 0
      %3280 = vmatprep.mubr.bf16.mxu0 0
      %3281 = vmatmul.mubr.bf16.gmra.mrb[0].mxu0 %v2235
      %v3282 = vpop.f32.mrb[0].mxu0
      %v3283 = vadd.f32 %v3122, %v3282
      %v3284 = vpop.f32.mrb[0].mxu0
      %v3285 = vpop.f32.mrb[0].mxu0
      %v3286 = vadd.f32 %v3125, %v3285
      %v3287 = vpop.f32.mrb[0].mxu0
      %3288 = vmatprep.mubr.bf16.mxu0 0
      %3289 = vmatmul.mubr.bf16.gmra.mrb[0].mxu0 %v2238
      %v3290 = vpop.f32.mrb[0].mxu0
      %v3291 = vadd.f32 %v3130, %v3290
      %v3292 = vpop.f32.mrb[0].mxu0
      %v3293 = vpop.f32.mrb[0].mxu0
      %v3294 = vadd.f32 %v3133, %v3293
      %v3295 = vpop.f32.mrb[0].mxu0
      %3296 = vmatprep.mubr.bf16.mxu0 0
      %3297 = vmatmul.mubr.bf16.gmra.mrb[0].mxu0 %v2241
      %v3298 = vpop.f32.mrb[0].mxu0
      %v3299 = vadd.f32 %v3138, %v3298
      %v3300 = vpop.f32.mrb[0].mxu0
      %v3301 = vpop.f32.mrb[0].mxu0
      %v3302 = vadd.f32 %v3141, %v3301
      %v3303 = vpop.f32.mrb[0].mxu0
      %3304 = vmatprep.mubr.bf16.mxu0 0
      %3305 = vmatmul.mubr.bf16.gmra.mrb[0].mxu0 %v2244
      %v3306 = vpop.f32.mrb[0].mxu0
      %v3307 = vadd.f32 %v3146, %v3306
      %v3308 = vpop.f32.mrb[0].mxu0
      %v3309 = vpop.f32.mrb[0].mxu0
      %v3310 = vadd.f32 %v3149, %v3309
      %v3311 = vpop.f32.mrb[0].mxu0
      %3312 = vmatprep.mubr.bf16.mxu0 0
      %3313 = vmatmul.mubr.bf16.gmra.mrb[0].mxu0 %v2247
      %v3314 = vpop.f32.mrb[0].mxu0
      %v3315 = vadd.f32 %v3154, %v3314
      %v3316 = vpop.f32.mrb[0].mxu0
      %v3317 = vpop.f32.mrb[0].mxu0
      %v3318 = vadd.f32 %v3157, %v3317
      %v3319 = vpop.f32.mrb[0].mxu0
      %3320 = vmatprep.mubr.bf16.mxu0 0
      %3321 = vmatmul.mubr.bf16.gmra.mrb[0].mxu0 %v2250
      %v3322 = vpop.f32.mrb[0].mxu0
      %v3323 = vadd.f32 %v3162, %v3322
      %v3324 = vpop.f32.mrb[0].mxu0
      %v3325 = vpop.f32.mrb[0].mxu0
      %v3326 = vadd.f32 %v3165, %v3325
      %v3327 = vpop.f32.mrb[0].mxu0
      %3328 = vmatprep.mubr.bf16.mxu0 0
      %3329 = vmatmul.mubr.bf16.gmra.mrb[0].mxu0 %v2253
      %v3330 = vpop.f32.mrb[0].mxu0
      %v3331 = vadd.f32 %v3170, %v3330
      %v3332 = vpop.f32.mrb[0].mxu0
      %v3333 = vpop.f32.mrb[0].mxu0
      %v3334 = vadd.f32 %v3173, %v3333
      %v3335 = vpop.f32.mrb[0].mxu0
      %3336 = vmatprep.mubr.bf16.mxu0 0
      %3337 = vmatmul.mubr.bf16.gmra.mrb[0].mxu0 %v2256
      %v3338 = vpop.f32.mrb[0].mxu0
      %v3339 = vadd.f32 %v3178, %v3338
      %v3340 = vpop.f32.mrb[0].mxu0
      %v3341 = vpop.f32.mrb[0].mxu0
      %v3342 = vadd.f32 %v3181, %v3341
      %v3343 = vpop.f32.mrb[0].mxu0
      %3344 = vmatprep.mubr.bf16.mxu0 0
      %3345 = vmatmul.mubr.bf16.gmra.mrb[0].mxu0 %v2259
      %v3346 = vpop.f32.mrb[0].mxu0
      %v3347 = vadd.f32 %v3186, %v3346
      %v3348 = vpop.f32.mrb[0].mxu0
      %v3349 = vpop.f32.mrb[0].mxu0
      %v3350 = vadd.f32 %v3189, %v3349
      %v3351 = vpop.f32.mrb[0].mxu0
      %3352 = vmatprep.mubr.bf16.mxu0 0
      %3353 = vmatmul.mubr.bf16.gmra.mrb[0].mxu0 %v2262
      %v3354 = vpop.f32.mrb[0].mxu0
      %v3355 = vadd.f32 %v3194, %v3354
      %v3356 = vpop.f32.mrb[0].mxu0
      %v3357 = vpop.f32.mrb[0].mxu0
      %v3358 = vadd.f32 %v3197, %v3357
      %v3359 = vpop.f32.mrb[0].mxu0
      %3360 = vmatprep.mubr.bf16.mxu0 0
      %3361 = vmatmul.mubr.bf16.gmra.mrb[0].mxu0 %v2265
      %v3362 = vpop.f32.mrb[0].mxu0
      %v3363 = vadd.f32 %v3202, %v3362
      %v3364 = vpop.f32.mrb[0].mxu0
      %v3365 = vpop.f32.mrb[0].mxu0
      %v3366 = vadd.f32 %v3205, %v3365
      %v3367 = vpop.f32.mrb[0].mxu0
      %3368 = vmatprep.mubr.bf16.mxu0 0
      %3369 = vmatmul.mubr.bf16.gmra.mrb[0].mxu0 %v2268
      %v3370 = vpop.f32.mrb[0].mxu0
      %v3371 = vadd.f32 %v3210, %v3370
      %v3372 = vpop.f32.mrb[0].mxu0
      %v3373 = vpop.f32.mrb[0].mxu0
      %v3374 = vadd.f32 %v3213, %v3373
      %v3375 = vpop.f32.mrb[0].mxu0
      %3376 = vmatprep.mubr.bf16.mxu0 0
      %3377 = vmatmul.mubr.bf16.gmra.mrb[0].mxu0 %v2271
      %v3378 = vpop.f32.mrb[0].mxu0
      %v3379 = vadd.f32 %v3218, %v3378
      %v3380 = vpop.f32.mrb[0].mxu0
      %v3381 = vpop.f32.mrb[0].mxu0
      %v3382 = vadd.f32 %v3221, %v3381
      %v3383 = vpop.f32.mrb[0].mxu0
      %3384 = vmatprep.mubr.bf16.mxu0 0
      %3385 = vmatmul.mubr.bf16.gmra.mrb[0].mxu0 %v2274
      %v3386 = vpop.f32.mrb[0].mxu0
      %v3387 = vadd.f32 %v3226, %v3386
      %v3388 = vpop.f32.mrb[0].mxu0
      %v3389 = vpop.f32.mrb[0].mxu0
      %v3390 = vadd.f32 %v3229, %v3389
      %v3391 = vpop.f32.mrb[0].mxu0
      %3392 = vmatprep.mubr.bf16.mxu0 0
      %3393 = vmatmul.mubr.bf16.gmra.mrb[0].mxu0 %v2277
      %v3394 = vpop.f32.mrb[0].mxu0
      %v3395 = vadd.f32 %v3234, %v3394
      %v3396 = vpop.f32.mrb[0].mxu0
      %v3397 = vpop.f32.mrb[0].mxu0
      %v3398 = vadd.f32 %v3237, %v3397
      %v3399 = vpop.f32.mrb[0].mxu0
      %3400 = vmatprep.mubr.bf16.mxu0 0
      %3401 = vmatmul.mubr.bf16.gmra.mrb[0].mxu0 %v2280
      %v3402 = vpop.f32.mrb[0].mxu0
      %v3403 = vadd.f32 %v3242, %v3402
      %v3404 = vpop.f32.mrb[0].mxu0
      %v3405 = vpop.f32.mrb[0].mxu0
      %v3406 = vadd.f32 %v3245, %v3405
      %v3407 = vpop.f32.mrb[0].mxu0
      %3408 = vdwg.mxu0
      %v3409 = vtanh.pop %v3283
      %v3410 = vtanh.pop %v3286
      %v3411 = vtanh.pop %v3291
      %v3412 = vtanh.pop %v3294
      %v3413 = vtanh.pop %v3299
      %v3414 = vtanh.pop %v3302
      %v3415 = vtanh.pop %v3307
      %v3416 = vtanh.pop %v3310
      %v3417 = vtanh.pop %v3315
      %v3418 = vtanh.pop %v3318
      %v3419 = vtanh.pop %v3323
      %v3420 = vtanh.pop %v3326
      %v3421 = vtanh.pop %v3331
      %v3422 = vtanh.pop %v3334
      %v3423 = vtanh.pop %v3339
      %v3424 = vtanh.pop %v3342
      %v3425 = vtanh.pop %v3347
      %v3426 = vtanh.pop %v3350
      %v3427 = vtanh.pop %v3355
      %v3428 = vtanh.pop %v3358
      %v3429 = vtanh.pop %v3363
      %v3430 = vtanh.pop %v3366
      %v3431 = vtanh.pop %v3371
      %v3432 = vtanh.pop %v3374
      %v3433 = vtanh.pop %v3379
      %v3434 = vtanh.pop %v3382
      %v3435 = vtanh.pop %v3387
      %v3436 = vtanh.pop %v3390
      %v3437 = vtanh.pop %v3395
      %v3438 = vtanh.pop %v3398
      %v3439 = vtanh.pop %v3403
      %v3440 = vtanh.pop %v3406
      %vm3441 = vcmask 23552
      %3442 = vst.msk [vmem:[%s175] sm:$0xff] %vm3441, %v3409
      %3443 = vst.msk [vmem:[%s175 + $0x8] sm:$0xff] %vm3441, %v3410
      %3444 = vst.msk [vmem:[%s175 + $0x10] sm:$0xff] %vm3441, %v3411
      %3445 = vst.msk [vmem:[%s175 + $0x18] sm:$0xff] %vm3441, %v3412
      %3446 = vst.msk [vmem:[%s175 + $0x20] sm:$0xff] %vm3441, %v3413
      %3447 = vst.msk [vmem:[%s175 + $0x28] sm:$0xff] %vm3441, %v3414
      %3448 = vst.msk [vmem:[%s175 + $0x30] sm:$0xff] %vm3441, %v3415
      %3449 = vst.msk [vmem:[%s175 + $0x38] sm:$0xff] %vm3441, %v3416
      %3450 = vst.msk [vmem:[%s175 + $0x40] sm:$0xff] %vm3441, %v3417
      %3451 = vst.msk [vmem:[%s175 + $0x48] sm:$0xff] %vm3441, %v3418
      %3452 = vst.msk [vmem:[%s175 + $0x50] sm:$0xff] %vm3441, %v3419
      %3453 = vst.msk [vmem:[%s175 + $0x58] sm:$0xff] %vm3441, %v3420
      %3454 = vst.msk [vmem:[%s175 + $0x60] sm:$0xff] %vm3441, %v3421
      %3455 = vst.msk [vmem:[%s175 + $0x68] sm:$0xff] %vm3441, %v3422
      %3456 = vst.msk [vmem:[%s175 + $0x70] sm:$0xff] %vm3441, %v3423
      %3457 = vst.msk [vmem:[%s175 + $0x78] sm:$0xff] %vm3441, %v3424
      %3458 = vst.msk [vmem:[%s175 + $0x80] sm:$0xff] %vm3441, %v3425
      %3459 = vst.msk [vmem:[%s175 + $0x88] sm:$0xff] %vm3441, %v3426
      %3460 = vst.msk [vmem:[%s175 + $0x90] sm:$0xff] %vm3441, %v3427
      %3461 = vst.msk [vmem:[%s175 + $0x98] sm:$0xff] %vm3441, %v3428
      %3462 = vst.msk [vmem:[%s175 + $0xa0] sm:$0xff] %vm3441, %v3429
      %3463 = vst.msk [vmem:[%s175 + $0xa8] sm:$0xff] %vm3441, %v3430
      %3464 = vst.msk [vmem:[%s175 + $0xb0] sm:$0xff] %vm3441, %v3431
      %3465 = vst.msk [vmem:[%s175 + $0xb8] sm:$0xff] %vm3441, %v3432
      %3466 = vst.msk [vmem:[%s175 + $0xc0] sm:$0xff] %vm3441, %v3433
      %3467 = vst.msk [vmem:[%s175 + $0xc8] sm:$0xff] %vm3441, %v3434
      %3468 = vst.msk [vmem:[%s175 + $0xd0] sm:$0xff] %vm3441, %v3435
      %3469 = vst.msk [vmem:[%s175 + $0xd8] sm:$0xff] %vm3441, %v3436
      %3470 = vst.msk [vmem:[%s175 + $0xe0] sm:$0xff] %vm3441, %v3437
      %3471 = vst.msk [vmem:[%s175 + $0xe8] sm:$0xff] %vm3441, %v3438
      %3472 = vst.msk [vmem:[%s175 + $0xf0] sm:$0xff] %vm3441, %v3439
      %3473 = vst.msk [vmem:[%s175 + $0xf8] sm:$0xff] %vm3441, %v3440
      %s3474 = smul.u32 32, %s14
      %p3475 = scmp.lt.s32.totalorder %s3474, 63
      %s3476 = scalar_select %p3475, %s3474, 63
      %s3477 = smul.addr %s3476, 8
      %s3478 = scalar_lea.vmem %s3, %s3477
      // Predicated region
      $region33: #{generator_forward.47} parent=31 // pred_check
        %p3479 = pneg %p100
      $region34: #{generator_forward.47} parent=31 // pred_check_branch
        %3481 = sbr.rel (%p3479) target = $region36
      $region35: #{generator_forward.47} parent=31 // pred_region
        %s3482 = smul.u32 32, %s14
      $region36: #{generator_forward.47} parent=31 // pred_fallthru
        _
    $region32: #{generator_forward.47} parent=5 // pred_fallthru
      _
    %p3483 = scmp.le.s32.totalorder 2, %s9
    // Predicated region
    $region37: #{generator_forward.47} parent=5 // pred_check
      %p3484 = pneg %p3483
    $region38: #{generator_forward.47} parent=5 // pred_check_branch
      %3486 = sbr.rel (%p3484) target = $region40
    $region39: #{generator_forward.47} parent=5 // pred_region
      %s3487 = ssub.s32 %s9, 2
      // Predicated region
      $region41: #{generator_forward.47} parent=39 // pred_check
        %p3488 = pneg %p106
      $region42: #{generator_forward.47} parent=39 // pred_check_branch
        %3490 = sbr.rel (%p3488) target = $region44
      $region43: #{generator_forward.47} parent=39 // pred_region
        %s3491 = smul.u32 32, %s15
        %p3492 = scmp.lt.s32.totalorder %s3491, 63
        %s3493 = scalar_select %p3492, %s3491, 63
        %s3494 = smul.addr %s3493, 8
        %s3495 = scalar_lea.vmem %s3, %s3494
      $region44: #{generator_forward.47} parent=39 // pred_fallthru
        _
    $region40: #{generator_forward.47} parent=5 // pred_fallthru
      _
  $region6: #{generator_forward.47} parent=0 // loop_footer
    %s13 = sadd.s32 1, %s9
  $region7: #{generator_forward.47} parent=0 // loop_footer_branch
    %8 = sbr.rel target = $region3
  $region8: #{generator_forward.47} parent=0 // loop_exit
    _

</llo_original>
